<compile_context>
chip_gen: v7x
topology: tpu7x:2x2x1
jax: 0.10.0
libtpu: 0.0.40
codegen_flags: <defaults>
</compile_context>

<pallas_src>
import functools

import jax
import jax.numpy as jnp
from jax.experimental import pallas as pl
from jax.experimental.pallas import tpu as pltpu

ORIGINAL_DIM = 28 * 28
LATENT_DIM = 20
ENCODER_DIMS = (400, 200, 100)
NEG_SLOPE = 0.01          # PyTorch nn.LeakyReLU default negative_slope
LANE = 128                # TPU lane width
RECON_PAD = 896           # 7 * 128, lane-dense padded recon width


def _round_up(x, m):
    return ((x + m - 1) // m) * m


def _preferred_batch_tile():
    """Generation-tuned batch tile: 128 for 128-wide MXUs, 256 for v6e/v7x."""
    try:
        kind = jax.devices()[0].device_kind.lower()
    except Exception:
        return 256
    if any(tag in kind for tag in ("v2", "v3", "v4", "v5")):
        return 128
    return 256


# ----------------------------------------------------------------------------
# Fused Pallas kernel: whole VAE forward for one batch tile
# ----------------------------------------------------------------------------
def _leaky_relu(x):
    return jnp.where(x >= 0.0, x, NEG_SLOPE * x)


def _vae_kernel(x_ref, eps_ref,
                w1_ref, b1_ref, w2_ref, b2_ref, w3_ref, b3_ref,
                wv_ref, bv_ref,
                dw1_ref, db1_ref, dw2_ref, db2_ref, dw3_ref, db3_ref,
                dwo_ref, dbo_ref,
                recon_ref, musig_ref):
    def dense(h, w_ref, b_ref, act):
        acc = jnp.dot(h, w_ref[...], preferred_element_type=jnp.float32)
        acc = acc + b_ref[...]
        if act:
            acc = _leaky_relu(acc)
        return acc

    # ---- encoder (bf16 matmul inputs, f32 accumulation) ----
    h = x_ref[...]                                               # (TB, 784) bf16
    h = dense(h, w1_ref, b1_ref, True).astype(jnp.bfloat16)      # (TB, 400)
    h = dense(h, w2_ref, b2_ref, True).astype(jnp.bfloat16)      # (TB, 200)
    h = dense(h, w3_ref, b3_ref, True).astype(jnp.bfloat16)      # (TB, 128) padded

    # ---- merged variational head: one (128, 256) matmul, lane-aligned split ----
    # TODO(synk): VariationalLayer internals not in the spec; assumes two Linear
    #             heads with sigma = exp(0.5 * log_var) reparameterization.
    mv = dense(h, wv_ref, bv_ref, False)                         # (TB, 256) f32
    mu = mv[:, :LANE]                                            # lanes 0..127 (mu in 0..19)
    logvar = mv[:, LANE:]                                        # lanes 128..255
    sigma = jnp.exp(0.5 * logvar)                                # f32 (EUP)
    z = mu + sigma * eps_ref[...]                                # eps zero-padded -> z pad = 0

    musig_ref[:, :LANE] = mu.astype(musig_ref.dtype)             # unmasked full-lane store
    musig_ref[:, LANE:] = sigma.astype(musig_ref.dtype)

    # ---- decoder ----
    d = z.astype(jnp.bfloat16)                                   # (TB, 128)
    d = dense(d, dw1_ref, db1_ref, True).astype(jnp.bfloat16)    # (TB, 128) padded
    d = dense(d, dw2_ref, db2_ref, True).astype(jnp.bfloat16)    # (TB, 200)
    d = dense(d, dw3_ref, db3_ref, True).astype(jnp.bfloat16)    # (TB, 400)
    # TODO(synk): VariationalDecoderOutput internals not in the spec; assumes a
    #             plain Linear mean head with no output activation.
    recon_ref[...] = dense(d, dwo_ref, dbo_ref, False).astype(recon_ref.dtype)  # (TB, 896)


# ----------------------------------------------------------------------------
# Parameters (stored as (in, out) matrices, f32; packed/padded at call time)
# ----------------------------------------------------------------------------
def init_params(key, original_dim=ORIGINAL_DIM, latent_dim=LATENT_DIM,
                encoder_dims=ENCODER_DIMS):
    e1, e2, e3 = encoder_dims
    layer_dims = [
        ("enc1", original_dim, e1), ("enc2", e1, e2), ("enc3", e2, e3),
        ("mu", e3, latent_dim), ("logvar", e3, latent_dim),
        ("dec1", latent_dim, e3), ("dec2", e3, e2), ("dec3", e2, e1),
        ("out", e1, original_dim),
    ]
    keys = jax.random.split(key, 2 * len(layer_dims))
    params = {}
    for i, (name, fan_in, fan_out) in enumerate(layer_dims):
        bound = fan_in ** -0.5
        w = jax.random.uniform(keys[2 * i], (fan_in, fan_out),
                               minval=-bound, maxval=bound, dtype=jnp.float32)
        b = jax.random.uniform(keys[2 * i + 1], (fan_out,),
                               minval=-bound, maxval=bound, dtype=jnp.float32)
        params[name] = (w, b)
    return params


# ----------------------------------------------------------------------------
# Forward pass wrapper (one pallas_call for the whole network)
# ----------------------------------------------------------------------------
def deep_dense_vae_mark_iv(params, x_in, eps, *, latent_dim=LATENT_DIM,
                           encoder_dims=ENCODER_DIMS, batch_tile=None):
    assert latent_dim <= LANE, "lane-packed head assumes latent_dim <= 128"
    e1, e2, e3 = encoder_dims
    assert e3 <= LANE, "lane padding assumes encoder_dims[2] <= 128"

    B = x_in.shape[0]
    D = ORIGINAL_DIM
    if batch_tile is None:
        batch_tile = _preferred_batch_tile()

    # Flatten(out_features=original_dim) + stream x as bf16 (kernel matmuls in bf16).
    x = x_in.reshape(B, D).astype(jnp.bfloat16)
    # Reparameterization noise, zero-padded to a full 128-lane block.
    eps_p = jnp.zeros((B, LANE), jnp.float32).at[:, :latent_dim].set(
        eps.astype(jnp.float32))

    # Pad batch up to a multiple of the batch tile (padded rows sliced off below).
    Bp = _round_up(B, batch_tile)
    if Bp != B:
        x = jnp.pad(x, ((0, Bp - B), (0, 0)))
        eps_p = jnp.pad(eps_p, ((0, Bp - B), (0, 0)))

    def wb(name, k_pad=None, n_pad=None):
        w, b = params[name]
        kin, nout = w.shape
        k_pad = kin if k_pad is None else k_pad
        n_pad = nout if n_pad is None else n_pad
        w = jnp.pad(w, ((0, k_pad - kin), (0, n_pad - nout)))
        b = jnp.pad(b, ((0, n_pad - nout),))
        return w.astype(jnp.bfloat16), b.reshape(1, -1).astype(jnp.float32)

    w1, b1 = wb("enc1")                                 # (784, 400)
    w2, b2 = wb("enc2")                                 # (400, 200)
    w3, b3 = wb("enc3", n_pad=LANE)                     # (200, 128) [100 -> 128]
    # Fused, lane-aligned (mu | log_var) head: K 100 -> 128, mu in cols 0:128,
    # logvar in cols 128:256.
    wmu, bmu = params["mu"]
    wlv, blv = params["logvar"]
    wv = jnp.zeros((LANE, 2 * LANE), jnp.float32)
    wv = wv.at[:e3, :latent_dim].set(wmu).at[:e3, LANE:LANE + latent_dim].set(wlv)
    wv = wv.astype(jnp.bfloat16)
    bv = jnp.zeros((1, 2 * LANE), jnp.float32)
    bv = bv.at[0, :latent_dim].set(bmu).at[0, LANE:LANE + latent_dim].set(blv)
    dw1, db1 = wb("dec1", k_pad=LANE, n_pad=LANE)       # (128, 128) [20x100 -> padded]
    dw2, db2 = wb("dec2", k_pad=LANE)                   # (128, 200)
    dw3, db3 = wb("dec3")                               # (200, 400)
    dwo, dbo = wb("out", n_pad=RECON_PAD)               # (400, 896) [784 -> 896]

    weights = [w1, b1, w2, b2, w3, b3, wv, bv,
               dw1, db1, dw2, db2, dw3, db3, dwo, dbo]

    def batch_spec(n):
        return pl.BlockSpec((batch_tile, n), lambda i: (i, 0))

    def const_spec(shape):
        return pl.BlockSpec(shape, lambda i: (0, 0))

    in_specs = [batch_spec(D), batch_spec(LANE)]
    in_specs += [const_spec(a.shape) for a in weights]
    out_specs = (batch_spec(RECON_PAD), batch_spec(2 * LANE))

    weight_mats = weights[::2]
    flops = 2 * Bp * sum(w.shape[0] * w.shape[1] for w in weight_mats)
    bytes_accessed = sum(int(a.size) * a.dtype.itemsize
                         for a in [x, eps_p] + weights)
    bytes_accessed += Bp * (RECON_PAD + 2 * LANE) * 4   # outputs

    recon_p, musig = pl.pallas_call(
        _vae_kernel,
        out_shape=(jax.ShapeDtypeStruct((Bp, RECON_PAD), jnp.float32),
                   jax.ShapeDtypeStruct((Bp, 2 * LANE), jnp.float32)),
        grid=(Bp // batch_tile,),
        in_specs=in_specs,
        out_specs=out_specs,
        compiler_params=pltpu.CompilerParams(
            dimension_semantics=("parallel",),
            vmem_limit_bytes=32 * 1024 * 1024),
        cost_estimate=pl.CostEstimate(
            flops=int(flops),
            transcendentals=int(Bp * LANE),
            bytes_accessed=int(bytes_accessed)),
    )(x, eps_p, *weights)

    recon = recon_p[:B, :D]
    mu = musig[:B, :latent_dim]
    sigma = musig[:B, LANE:LANE + latent_dim]
    return recon, mu, sigma


# ----------------------------------------------------------------------------
if __name__ == "__main__":
    key = jax.random.PRNGKey(0)
    k_param, k_x, k_eps = jax.random.split(key, 3)

    params = init_params(k_param)

    batch = 2
    x_in = jax.random.normal(k_x, (batch, 1, 28, 28), dtype=jnp.float32)
    # Explicit reparameterization noise (torch.randn_like inside VariationalLayer).
    eps = jax.random.normal(k_eps, (batch, LATENT_DIM), dtype=jnp.float32)

    fwd = jax.jit(deep_dense_vae_mark_iv)
    recon, mu, sigma = fwd(params, x_in, eps)
    jax.block_until_ready((recon, mu, sigma))

    assert recon.shape == (batch, ORIGINAL_DIM)
    assert mu.shape == (batch, LATENT_DIM)
    assert sigma.shape == (batch, LATENT_DIM)
    assert bool(jnp.all(jnp.isfinite(recon)))
    assert bool(jnp.all(jnp.isfinite(mu)))
    assert bool(jnp.all(sigma > 0.0))
    print("KERNEL_OK")
</pallas_src>

<mosaic_0001>
module attributes {stable_mosaic.version = 11 : i64} {
  func.func @_vae_kernel(%arg0: i32, %arg1: memref<256x784xbf16, #tpu.memory_space<vmem>>, %arg2: memref<256x128xf32, #tpu.memory_space<vmem>>, %arg3: memref<784x400xbf16, #tpu.memory_space<vmem>>, %arg4: memref<1x400xf32, #tpu.memory_space<vmem>>, %arg5: memref<400x200xbf16, #tpu.memory_space<vmem>>, %arg6: memref<1x200xf32, #tpu.memory_space<vmem>>, %arg7: memref<200x128xbf16, #tpu.memory_space<vmem>>, %arg8: memref<1x128xf32, #tpu.memory_space<vmem>>, %arg9: memref<128x256xbf16, #tpu.memory_space<vmem>>, %arg10: memref<1x256xf32, #tpu.memory_space<vmem>>, %arg11: memref<128x128xbf16, #tpu.memory_space<vmem>>, %arg12: memref<1x128xf32, #tpu.memory_space<vmem>>, %arg13: memref<128x200xbf16, #tpu.memory_space<vmem>>, %arg14: memref<1x200xf32, #tpu.memory_space<vmem>>, %arg15: memref<200x400xbf16, #tpu.memory_space<vmem>>, %arg16: memref<1x400xf32, #tpu.memory_space<vmem>>, %arg17: memref<400x896xbf16, #tpu.memory_space<vmem>>, %arg18: memref<1x896xf32, #tpu.memory_space<vmem>>, %arg19: memref<256x896xf32, #tpu.memory_space<vmem>>, %arg20: memref<256x256xf32, #tpu.memory_space<vmem>>) attributes {dimension_semantics = [#tpu.dimension_semantics<parallel>], iteration_bounds = array<i64: 1>, scalar_prefetch = 0 : i64, scratch_operands = 0 : i64, tpu.core_type = #tpu.core_type<tc>, window_params = [{transform_indices = @transform_0, window_bounds = array<i64: 256, 784>}, {transform_indices = @transform_1, window_bounds = array<i64: 256, 128>}, {pipeline_mode = #tpu.pipeline_mode<synchronous>, transform_indices = @transform_2, window_bounds = array<i64: 784, 400>}, {pipeline_mode = #tpu.pipeline_mode<synchronous>, transform_indices = @transform_3, window_bounds = array<i64: 1, 400>}, {pipeline_mode = #tpu.pipeline_mode<synchronous>, transform_indices = @transform_4, window_bounds = array<i64: 400, 200>}, {pipeline_mode = #tpu.pipeline_mode<synchronous>, transform_indices = @transform_5, window_bounds = array<i64: 1, 200>}, {pipeline_mode = #tpu.pipeline_mode<synchronous>, transform_indices = @transform_6, window_bounds = array<i64: 200, 128>}, {pipeline_mode = #tpu.pipeline_mode<synchronous>, transform_indices = @transform_7, window_bounds = array<i64: 1, 128>}, {pipeline_mode = #tpu.pipeline_mode<synchronous>, transform_indices = @transform_8, window_bounds = array<i64: 128, 256>}, {pipeline_mode = #tpu.pipeline_mode<synchronous>, transform_indices = @transform_9, window_bounds = array<i64: 1, 256>}, {pipeline_mode = #tpu.pipeline_mode<synchronous>, transform_indices = @transform_10, window_bounds = array<i64: 128, 128>}, {pipeline_mode = #tpu.pipeline_mode<synchronous>, transform_indices = @transform_11, window_bounds = array<i64: 1, 128>}, {pipeline_mode = #tpu.pipeline_mode<synchronous>, transform_indices = @transform_12, window_bounds = array<i64: 128, 200>}, {pipeline_mode = #tpu.pipeline_mode<synchronous>, transform_indices = @transform_13, window_bounds = array<i64: 1, 200>}, {pipeline_mode = #tpu.pipeline_mode<synchronous>, transform_indices = @transform_14, window_bounds = array<i64: 200, 400>}, {pipeline_mode = #tpu.pipeline_mode<synchronous>, transform_indices = @transform_15, window_bounds = array<i64: 1, 400>}, {pipeline_mode = #tpu.pipeline_mode<synchronous>, transform_indices = @transform_16, window_bounds = array<i64: 400, 896>}, {pipeline_mode = #tpu.pipeline_mode<synchronous>, transform_indices = @transform_17, window_bounds = array<i64: 1, 896>}, {transform_indices = @transform_18, window_bounds = array<i64: 256, 896>}, {transform_indices = @transform_19, window_bounds = array<i64: 256, 256>}]} {
    %c0 = arith.constant 0 : index
    %c0_0 = arith.constant 0 : index
    %0 = vector.load %arg1[%c0, %c0_0] : memref<256x784xbf16, #tpu.memory_space<vmem>>, vector<256x784xbf16>
    %c0_1 = arith.constant 0 : index
    %c0_2 = arith.constant 0 : index
    %1 = vector.load %arg3[%c0_1, %c0_2] : memref<784x400xbf16, #tpu.memory_space<vmem>>, vector<784x400xbf16>
    %cst = arith.constant dense<0.000000e+00> : vector<256x400xf32>
    %2 = tpu.matmul %0, %1, %cst {dimension_numbers = #tpu.dot_dimension_numbers<[1], [0], [0], [1], [0, 0, 1, 1], [], []>} : vector<256x784xbf16>, vector<784x400xbf16>, vector<256x400xf32> -> vector<256x400xf32>
    %c0_3 = arith.constant 0 : index
    %c0_4 = arith.constant 0 : index
    %3 = vector.load %arg4[%c0_3, %c0_4] : memref<1x400xf32, #tpu.memory_space<vmem>>, vector<1x400xf32>
    %4 = vector.broadcast %3 : vector<1x400xf32> to vector<256x400xf32>
    %5 = arith.addf %2, %4 : vector<256x400xf32>
    %cst_5 = arith.constant 0.000000e+00 : f32
    %6 = vector.broadcast %cst_5 : f32 to vector<256x400xf32>
    %7 = arith.cmpf oge, %5, %6 : vector<256x400xf32>
    %cst_6 = arith.constant 0.00999999977 : f32
    %8 = vector.broadcast %cst_6 : f32 to vector<256x400xf32>
    %9 = arith.mulf %8, %5 : vector<256x400xf32>
    %10 = arith.select %7, %5, %9 : vector<256x400xi1>, vector<256x400xf32>
    %11 = arith.truncf %10 : vector<256x400xf32> to vector<256x400xbf16>
    %c0_7 = arith.constant 0 : index
    %c0_8 = arith.constant 0 : index
    %12 = vector.load %arg5[%c0_7, %c0_8] : memref<400x200xbf16, #tpu.memory_space<vmem>>, vector<400x200xbf16>
    %cst_9 = arith.constant dense<0.000000e+00> : vector<256x200xf32>
    %13 = tpu.matmul %11, %12, %cst_9 {dimension_numbers = #tpu.dot_dimension_numbers<[1], [0], [0], [1], [0, 0, 1, 1], [], []>} : vector<256x400xbf16>, vector<400x200xbf16>, vector<256x200xf32> -> vector<256x200xf32>
    %c0_10 = arith.constant 0 : index
    %c0_11 = arith.constant 0 : index
    %14 = vector.load %arg6[%c0_10, %c0_11] : memref<1x200xf32, #tpu.memory_space<vmem>>, vector<1x200xf32>
    %15 = vector.broadcast %14 : vector<1x200xf32> to vector<256x200xf32>
    %16 = arith.addf %13, %15 : vector<256x200xf32>
    %cst_12 = arith.constant 0.000000e+00 : f32
    %17 = vector.broadcast %cst_12 : f32 to vector<256x200xf32>
    %18 = arith.cmpf oge, %16, %17 : vector<256x200xf32>
    %cst_13 = arith.constant 0.00999999977 : f32
    %19 = vector.broadcast %cst_13 : f32 to vector<256x200xf32>
    %20 = arith.mulf %19, %16 : vector<256x200xf32>
    %21 = arith.select %18, %16, %20 : vector<256x200xi1>, vector<256x200xf32>
    %22 = arith.truncf %21 : vector<256x200xf32> to vector<256x200xbf16>
    %c0_14 = arith.constant 0 : index
    %c0_15 = arith.constant 0 : index
    %23 = vector.load %arg7[%c0_14, %c0_15] : memref<200x128xbf16, #tpu.memory_space<vmem>>, vector<200x128xbf16>
    %cst_16 = arith.constant dense<0.000000e+00> : vector<256x128xf32>
    %24 = tpu.matmul %22, %23, %cst_16 {dimension_numbers = #tpu.dot_dimension_numbers<[1], [0], [0], [1], [0, 0, 1, 1], [], []>} : vector<256x200xbf16>, vector<200x128xbf16>, vector<256x128xf32> -> vector<256x128xf32>
    %c0_17 = arith.constant 0 : index
    %c0_18 = arith.constant 0 : index
    %25 = vector.load %arg8[%c0_17, %c0_18] : memref<1x128xf32, #tpu.memory_space<vmem>>, vector<1x128xf32>
    %26 = vector.broadcast %25 : vector<1x128xf32> to vector<256x128xf32>
    %27 = arith.addf %24, %26 : vector<256x128xf32>
    %cst_19 = arith.constant 0.000000e+00 : f32
    %28 = vector.broadcast %cst_19 : f32 to vector<256x128xf32>
    %29 = arith.cmpf oge, %27, %28 : vector<256x128xf32>
    %cst_20 = arith.constant 0.00999999977 : f32
    %30 = vector.broadcast %cst_20 : f32 to vector<256x128xf32>
    %31 = arith.mulf %30, %27 : vector<256x128xf32>
    %32 = arith.select %29, %27, %31 : vector<256x128xi1>, vector<256x128xf32>
    %33 = arith.truncf %32 : vector<256x128xf32> to vector<256x128xbf16>
    %c0_21 = arith.constant 0 : index
    %c0_22 = arith.constant 0 : index
    %34 = vector.load %arg9[%c0_21, %c0_22] : memref<128x256xbf16, #tpu.memory_space<vmem>>, vector<128x256xbf16>
    %cst_23 = arith.constant dense<0.000000e+00> : vector<256x256xf32>
    %35 = tpu.matmul %33, %34, %cst_23 {dimension_numbers = #tpu.dot_dimension_numbers<[1], [0], [0], [1], [0, 0, 1, 1], [], []>} : vector<256x128xbf16>, vector<128x256xbf16>, vector<256x256xf32> -> vector<256x256xf32>
    %c0_24 = arith.constant 0 : index
    %c0_25 = arith.constant 0 : index
    %36 = vector.load %arg10[%c0_24, %c0_25] : memref<1x256xf32, #tpu.memory_space<vmem>>, vector<1x256xf32>
    %37 = vector.broadcast %36 : vector<1x256xf32> to vector<256x256xf32>
    %38 = arith.addf %35, %37 : vector<256x256xf32>
    %39 = vector.extract_strided_slice %38 {offsets = [0, 0], sizes = [256, 128], strides = [1, 1]} : vector<256x256xf32> to vector<256x128xf32>
    %40 = vector.extract_strided_slice %38 {offsets = [0, 128], sizes = [256, 128], strides = [1, 1]} : vector<256x256xf32> to vector<256x128xf32>
    %cst_26 = arith.constant 5.000000e-01 : f32
    %41 = vector.broadcast %cst_26 : f32 to vector<256x128xf32>
    %42 = arith.mulf %41, %40 : vector<256x128xf32>
    %43 = math.exp %42 : vector<256x128xf32>
    %c0_27 = arith.constant 0 : index
    %c0_28 = arith.constant 0 : index
    %44 = vector.load %arg2[%c0_27, %c0_28] : memref<256x128xf32, #tpu.memory_space<vmem>>, vector<256x128xf32>
    %45 = arith.mulf %43, %44 : vector<256x128xf32>
    %46 = arith.addf %39, %45 : vector<256x128xf32>
    %c0_29 = arith.constant 0 : index
    %c0_30 = arith.constant 0 : index
    %47 = vector.load %arg20[%c0_29, %c0_30] : memref<256x256xf32, #tpu.memory_space<vmem>>, vector<256x128xf32>
    tpu.vector_store %arg20[%c0_29, %c0_30], %39 {strides = array<i32>} : memref<256x256xf32, #tpu.memory_space<vmem>>, vector<256x128xf32>,
    %c0_31 = arith.constant 0 : index
    %c128 = arith.constant 128 : index
    %48 = vector.load %arg20[%c0_31, %c128] : memref<256x256xf32, #tpu.memory_space<vmem>>, vector<256x128xf32>
    tpu.vector_store %arg20[%c0_31, %c128], %43 {strides = array<i32>} : memref<256x256xf32, #tpu.memory_space<vmem>>, vector<256x128xf32>,
    %49 = arith.truncf %46 : vector<256x128xf32> to vector<256x128xbf16>
    %c0_32 = arith.constant 0 : index
    %c0_33 = arith.constant 0 : index
    %50 = vector.load %arg11[%c0_32, %c0_33] : memref<128x128xbf16, #tpu.memory_space<vmem>>, vector<128x128xbf16>
    %cst_34 = arith.constant dense<0.000000e+00> : vector<256x128xf32>
    %51 = tpu.matmul %49, %50, %cst_34 {dimension_numbers = #tpu.dot_dimension_numbers<[1], [0], [0], [1], [0, 0, 1, 1], [], []>} : vector<256x128xbf16>, vector<128x128xbf16>, vector<256x128xf32> -> vector<256x128xf32>
    %c0_35 = arith.constant 0 : index
    %c0_36 = arith.constant 0 : index
    %52 = vector.load %arg12[%c0_35, %c0_36] : memref<1x128xf32, #tpu.memory_space<vmem>>, vector<1x128xf32>
    %53 = vector.broadcast %52 : vector<1x128xf32> to vector<256x128xf32>
    %54 = arith.addf %51, %53 : vector<256x128xf32>
    %cst_37 = arith.constant 0.000000e+00 : f32
    %55 = vector.broadcast %cst_37 : f32 to vector<256x128xf32>
    %56 = arith.cmpf oge, %54, %55 : vector<256x128xf32>
    %cst_38 = arith.constant 0.00999999977 : f32
    %57 = vector.broadcast %cst_38 : f32 to vector<256x128xf32>
    %58 = arith.mulf %57, %54 : vector<256x128xf32>
    %59 = arith.select %56, %54, %58 : vector<256x128xi1>, vector<256x128xf32>
    %60 = arith.truncf %59 : vector<256x128xf32> to vector<256x128xbf16>
    %c0_39 = arith.constant 0 : index
    %c0_40 = arith.constant 0 : index
    %61 = vector.load %arg13[%c0_39, %c0_40] : memref<128x200xbf16, #tpu.memory_space<vmem>>, vector<128x200xbf16>
    %cst_41 = arith.constant dense<0.000000e+00> : vector<256x200xf32>
    %62 = tpu.matmul %60, %61, %cst_41 {dimension_numbers = #tpu.dot_dimension_numbers<[1], [0], [0], [1], [0, 0, 1, 1], [], []>} : vector<256x128xbf16>, vector<128x200xbf16>, vector<256x200xf32> -> vector<256x200xf32>
    %c0_42 = arith.constant 0 : index
    %c0_43 = arith.constant 0 : index
    %63 = vector.load %arg14[%c0_42, %c0_43] : memref<1x200xf32, #tpu.memory_space<vmem>>, vector<1x200xf32>
    %64 = vector.broadcast %63 : vector<1x200xf32> to vector<256x200xf32>
    %65 = arith.addf %62, %64 : vector<256x200xf32>
    %cst_44 = arith.constant 0.000000e+00 : f32
    %66 = vector.broadcast %cst_44 : f32 to vector<256x200xf32>
    %67 = arith.cmpf oge, %65, %66 : vector<256x200xf32>
    %cst_45 = arith.constant 0.00999999977 : f32
    %68 = vector.broadcast %cst_45 : f32 to vector<256x200xf32>
    %69 = arith.mulf %68, %65 : vector<256x200xf32>
    %70 = arith.select %67, %65, %69 : vector<256x200xi1>, vector<256x200xf32>
    %71 = arith.truncf %70 : vector<256x200xf32> to vector<256x200xbf16>
    %c0_46 = arith.constant 0 : index
    %c0_47 = arith.constant 0 : index
    %72 = vector.load %arg15[%c0_46, %c0_47] : memref<200x400xbf16, #tpu.memory_space<vmem>>, vector<200x400xbf16>
    %cst_48 = arith.constant dense<0.000000e+00> : vector<256x400xf32>
    %73 = tpu.matmul %71, %72, %cst_48 {dimension_numbers = #tpu.dot_dimension_numbers<[1], [0], [0], [1], [0, 0, 1, 1], [], []>} : vector<256x200xbf16>, vector<200x400xbf16>, vector<256x400xf32> -> vector<256x400xf32>
    %c0_49 = arith.constant 0 : index
    %c0_50 = arith.constant 0 : index
    %74 = vector.load %arg16[%c0_49, %c0_50] : memref<1x400xf32, #tpu.memory_space<vmem>>, vector<1x400xf32>
    %75 = vector.broadcast %74 : vector<1x400xf32> to vector<256x400xf32>
    %76 = arith.addf %73, %75 : vector<256x400xf32>
    %cst_51 = arith.constant 0.000000e+00 : f32
    %77 = vector.broadcast %cst_51 : f32 to vector<256x400xf32>
    %78 = arith.cmpf oge, %76, %77 : vector<256x400xf32>
    %cst_52 = arith.constant 0.00999999977 : f32
    %79 = vector.broadcast %cst_52 : f32 to vector<256x400xf32>
    %80 = arith.mulf %79, %76 : vector<256x400xf32>
    %81 = arith.select %78, %76, %80 : vector<256x400xi1>, vector<256x400xf32>
    %82 = arith.truncf %81 : vector<256x400xf32> to vector<256x400xbf16>
    %c0_53 = arith.constant 0 : index
    %c0_54 = arith.constant 0 : index
    %83 = vector.load %arg17[%c0_53, %c0_54] : memref<400x896xbf16, #tpu.memory_space<vmem>>, vector<400x896xbf16>
    %cst_55 = arith.constant dense<0.000000e+00> : vector<256x896xf32>
    %84 = tpu.matmul %82, %83, %cst_55 {dimension_numbers = #tpu.dot_dimension_numbers<[1], [0], [0], [1], [0, 0, 1, 1], [], []>} : vector<256x400xbf16>, vector<400x896xbf16>, vector<256x896xf32> -> vector<256x896xf32>
    %c0_56 = arith.constant 0 : index
    %c0_57 = arith.constant 0 : index
    %85 = vector.load %arg18[%c0_56, %c0_57] : memref<1x896xf32, #tpu.memory_space<vmem>>, vector<1x896xf32>
    %86 = vector.broadcast %85 : vector<1x896xf32> to vector<256x896xf32>
    %87 = arith.addf %84, %86 : vector<256x896xf32>
    %c0_58 = arith.constant 0 : index
    %c0_59 = arith.constant 0 : index
    %88 = vector.load %arg19[%c0_58, %c0_59] : memref<256x896xf32, #tpu.memory_space<vmem>>, vector<256x896xf32>
    tpu.vector_store %arg19[%c0_58, %c0_59], %87 {strides = array<i32>} : memref<256x896xf32, #tpu.memory_space<vmem>>, vector<256x896xf32>,
    return
  }
  func.func @transform_0(%arg0: i32) -> (i32, i32) {
    %c0_i32 = arith.constant 0 : i32
    %c0_i32_0 = arith.constant 0 : i32
    return %arg0, %c0_i32 : i32, i32
  }
  func.func @transform_1(%arg0: i32) -> (i32, i32) {
    %c0_i32 = arith.constant 0 : i32
    %c0_i32_0 = arith.constant 0 : i32
    return %arg0, %c0_i32 : i32, i32
  }
  func.func @transform_2(%arg0: i32) -> (i32, i32) {
    %c0_i32 = arith.constant 0 : i32
    %c0_i32_0 = arith.constant 0 : i32
    %c0_i32_1 = arith.constant 0 : i32
    return %c0_i32, %c0_i32_0 : i32, i32
  }
  func.func @transform_3(%arg0: i32) -> (i32, i32) {
    %c0_i32 = arith.constant 0 : i32
    %c0_i32_0 = arith.constant 0 : i32
    %c0_i32_1 = arith.constant 0 : i32
    return %c0_i32, %c0_i32_0 : i32, i32
  }
  func.func @transform_4(%arg0: i32) -> (i32, i32) {
    %c0_i32 = arith.constant 0 : i32
    %c0_i32_0 = arith.constant 0 : i32
    %c0_i32_1 = arith.constant 0 : i32
    return %c0_i32, %c0_i32_0 : i32, i32
  }
  func.func @transform_5(%arg0: i32) -> (i32, i32) {
    %c0_i32 = arith.constant 0 : i32
    %c0_i32_0 = arith.constant 0 : i32
    %c0_i32_1 = arith.constant 0 : i32
    return %c0_i32, %c0_i32_0 : i32, i32
  }
  func.func @transform_6(%arg0: i32) -> (i32, i32) {
    %c0_i32 = arith.constant 0 : i32
    %c0_i32_0 = arith.constant 0 : i32
    %c0_i32_1 = arith.constant 0 : i32
    return %c0_i32, %c0_i32_0 : i32, i32
  }
  func.func @transform_7(%arg0: i32) -> (i32, i32) {
    %c0_i32 = arith.constant 0 : i32
    %c0_i32_0 = arith.constant 0 : i32
    %c0_i32_1 = arith.constant 0 : i32
    return %c0_i32, %c0_i32_0 : i32, i32
  }
  func.func @transform_8(%arg0: i32) -> (i32, i32) {
    %c0_i32 = arith.constant 0 : i32
    %c0_i32_0 = arith.constant 0 : i32
    %c0_i32_1 = arith.constant 0 : i32
    return %c0_i32, %c0_i32_0 : i32, i32
  }
  func.func @transform_9(%arg0: i32) -> (i32, i32) {
    %c0_i32 = arith.constant 0 : i32
    %c0_i32_0 = arith.constant 0 : i32
    %c0_i32_1 = arith.constant 0 : i32
    return %c0_i32, %c0_i32_0 : i32, i32
  }
  func.func @transform_10(%arg0: i32) -> (i32, i32) {
    %c0_i32 = arith.constant 0 : i32
    %c0_i32_0 = arith.constant 0 : i32
    %c0_i32_1 = arith.constant 0 : i32
    return %c0_i32, %c0_i32_0 : i32, i32
  }
  func.func @transform_11(%arg0: i32) -> (i32, i32) {
    %c0_i32 = arith.constant 0 : i32
    %c0_i32_0 = arith.constant 0 : i32
    %c0_i32_1 = arith.constant 0 : i32
    return %c0_i32, %c0_i32_0 : i32, i32
  }
  func.func @transform_12(%arg0: i32) -> (i32, i32) {
    %c0_i32 = arith.constant 0 : i32
    %c0_i32_0 = arith.constant 0 : i32
    %c0_i32_1 = arith.constant 0 : i32
    return %c0_i32, %c0_i32_0 : i32, i32
  }
  func.func @transform_13(%arg0: i32) -> (i32, i32) {
    %c0_i32 = arith.constant 0 : i32
    %c0_i32_0 = arith.constant 0 : i32
    %c0_i32_1 = arith.constant 0 : i32
    return %c0_i32, %c0_i32_0 : i32, i32
  }
  func.func @transform_14(%arg0: i32) -> (i32, i32) {
    %c0_i32 = arith.constant 0 : i32
    %c0_i32_0 = arith.constant 0 : i32
    %c0_i32_1 = arith.constant 0 : i32
    return %c0_i32, %c0_i32_0 : i32, i32
  }
  func.func @transform_15(%arg0: i32) -> (i32, i32) {
    %c0_i32 = arith.constant 0 : i32
    %c0_i32_0 = arith.constant 0 : i32
    %c0_i32_1 = arith.constant 0 : i32
    return %c0_i32, %c0_i32_0 : i32, i32
  }
  func.func @transform_16(%arg0: i32) -> (i32, i32) {
    %c0_i32 = arith.constant 0 : i32
    %c0_i32_0 = arith.constant 0 : i32
    %c0_i32_1 = arith.constant 0 : i32
    return %c0_i32, %c0_i32_0 : i32, i32
  }
  func.func @transform_17(%arg0: i32) -> (i32, i32) {
    %c0_i32 = arith.constant 0 : i32
    %c0_i32_0 = arith.constant 0 : i32
    %c0_i32_1 = arith.constant 0 : i32
    return %c0_i32, %c0_i32_0 : i32, i32
  }
  func.func @transform_18(%arg0: i32) -> (i32, i32) {
    %c0_i32 = arith.constant 0 : i32
    %c0_i32_0 = arith.constant 0 : i32
    return %arg0, %c0_i32 : i32, i32
  }
  func.func @transform_19(%arg0: i32) -> (i32, i32) {
    %c0_i32 = arith.constant 0 : i32
    %c0_i32_0 = arith.constant 0 : i32
    return %arg0, %c0_i32 : i32, i32
  }
}

</mosaic_0001>

<llo_original>
// kernel: deep_dense_vae_mark_iv.1
$region0: #{deep_dense_vae_mark_iv.1}
  #allocation0 [shape = 'u32[]', space=smem, size = 0x4, offset = 0x4, fixed_abs, tag = 'smem constant byte address 0x4 - core index']
  #allocation1 [shape = 'u32[144,128]{1,0:T(1,128)}', space=vmem, size = 0x12000, scoped, tag = 'internal scratch']
  %s0 = inlined_call_operand.vmem [shape: bf16[256,784], index: 0, kind: input, shape index: {}]
  %s1 = inlined_call_operand.vmem [shape: f32[256,128], index: 1, kind: input, shape index: {}]
  %s2 = inlined_call_operand.vmem [shape: bf16[784,400], index: 2, kind: input, shape index: {}]
  %s3 = inlined_call_operand.vmem [shape: f32[1,400], index: 3, kind: input, shape index: {}]
  %s4 = inlined_call_operand.vmem [shape: bf16[400,200], index: 4, kind: input, shape index: {}]
  %s5 = inlined_call_operand.vmem [shape: f32[1,200], index: 5, kind: input, shape index: {}]
  %s6 = inlined_call_operand.vmem [shape: bf16[200,128], index: 6, kind: input, shape index: {}]
  %s7 = inlined_call_operand.vmem [shape: f32[1,128], index: 7, kind: input, shape index: {}]
  %s8 = inlined_call_operand.vmem [shape: bf16[128,256], index: 8, kind: input, shape index: {}]
  %s9 = inlined_call_operand.vmem [shape: f32[1,256], index: 9, kind: input, shape index: {}]
  %s10 = inlined_call_operand.vmem [shape: bf16[128,128], index: 10, kind: input, shape index: {}]
  %s11 = inlined_call_operand.vmem [shape: f32[1,128], index: 11, kind: input, shape index: {}]
  %s12 = inlined_call_operand.vmem [shape: bf16[128,200], index: 12, kind: input, shape index: {}]
  %s13 = inlined_call_operand.vmem [shape: f32[1,200], index: 13, kind: input, shape index: {}]
  %s14 = inlined_call_operand.vmem [shape: bf16[200,400], index: 14, kind: input, shape index: {}]
  %s15 = inlined_call_operand.vmem [shape: f32[1,400], index: 15, kind: input, shape index: {}]
  %s16 = inlined_call_operand.vmem [shape: bf16[400,896], index: 16, kind: input, shape index: {}]
  %s17 = inlined_call_operand.vmem [shape: f32[1,896], index: 17, kind: input, shape index: {}]
  %s18 = inlined_call_operand.vmem [shape: f32[256,896], index: 18, kind: output, shape index: {0}]
  %s19 = inlined_call_operand.vmem [shape: f32[256,256], index: 19, kind: output, shape index: {1}]
  %20 = xla_tuple %s18, %s19
  %s21 = sld [smem:[#allocation0]]
  $region90: #{deep_dense_vae_mark_iv.1} parent=0
    _
  %s23 = ssub.s32 1, %s21
  %s24 = scalar_select 0, %s23, %s21
  // Predicated region
  $region2: #{deep_dense_vae_mark_iv.1} parent=0 // pred_check
    _
  $region3: #{deep_dense_vae_mark_iv.1} parent=0 // pred_check_branch
    %26 = sbr.rel (0) target = $region5
  $region4: #{deep_dense_vae_mark_iv.1} parent=0 // pred_region
    _
  $region5: #{deep_dense_vae_mark_iv.1} parent=0 // pred_fallthru
    _
  // Predicated region
  $region6: #{deep_dense_vae_mark_iv.1} parent=0 // pred_check
    _
  $region7: #{deep_dense_vae_mark_iv.1} parent=0 // pred_check_branch
    %28 = sbr.rel (0) target = $region9
  $region8: #{deep_dense_vae_mark_iv.1} parent=0 // pred_region
    _
  $region9: #{deep_dense_vae_mark_iv.1} parent=0 // pred_fallthru
    _
  // Predicated region
  $region10: #{deep_dense_vae_mark_iv.1} parent=0 // pred_check
    _
  $region11: #{deep_dense_vae_mark_iv.1} parent=0 // pred_check_branch
    %30 = sbr.rel (0) target = $region13
  $region12: #{deep_dense_vae_mark_iv.1} parent=0 // pred_region
    _
  $region13: #{deep_dense_vae_mark_iv.1} parent=0 // pred_fallthru
    _
  // Predicated region
  $region14: #{deep_dense_vae_mark_iv.1} parent=0 // pred_check
    _
  $region15: #{deep_dense_vae_mark_iv.1} parent=0 // pred_check_branch
    %32 = sbr.rel (0) target = $region17
  $region16: #{deep_dense_vae_mark_iv.1} parent=0 // pred_region
    _
  $region17: #{deep_dense_vae_mark_iv.1} parent=0 // pred_fallthru
    _
  // Predicated region
  $region18: #{deep_dense_vae_mark_iv.1} parent=0 // pred_check
    _
  $region19: #{deep_dense_vae_mark_iv.1} parent=0 // pred_check_branch
    %34 = sbr.rel (0) target = $region21
  $region20: #{deep_dense_vae_mark_iv.1} parent=0 // pred_region
    _
  $region21: #{deep_dense_vae_mark_iv.1} parent=0 // pred_fallthru
    _
  // Predicated region
  $region22: #{deep_dense_vae_mark_iv.1} parent=0 // pred_check
    _
  $region23: #{deep_dense_vae_mark_iv.1} parent=0 // pred_check_branch
    %36 = sbr.rel (0) target = $region25
  $region24: #{deep_dense_vae_mark_iv.1} parent=0 // pred_region
    _
  $region25: #{deep_dense_vae_mark_iv.1} parent=0 // pred_fallthru
    _
  // Predicated region
  $region26: #{deep_dense_vae_mark_iv.1} parent=0 // pred_check
    _
  $region27: #{deep_dense_vae_mark_iv.1} parent=0 // pred_check_branch
    %38 = sbr.rel (0) target = $region29
  $region28: #{deep_dense_vae_mark_iv.1} parent=0 // pred_region
    _
  $region29: #{deep_dense_vae_mark_iv.1} parent=0 // pred_fallthru
    _
  // Predicated region
  $region30: #{deep_dense_vae_mark_iv.1} parent=0 // pred_check
    _
  $region31: #{deep_dense_vae_mark_iv.1} parent=0 // pred_check_branch
    %40 = sbr.rel (0) target = $region33
  $region32: #{deep_dense_vae_mark_iv.1} parent=0 // pred_region
    _
  $region33: #{deep_dense_vae_mark_iv.1} parent=0 // pred_fallthru
    _
  // Predicated region
  $region34: #{deep_dense_vae_mark_iv.1} parent=0 // pred_check
    _
  $region35: #{deep_dense_vae_mark_iv.1} parent=0 // pred_check_branch
    %42 = sbr.rel (0) target = $region37
  $region36: #{deep_dense_vae_mark_iv.1} parent=0 // pred_region
    _
  $region37: #{deep_dense_vae_mark_iv.1} parent=0 // pred_fallthru
    _
  // Predicated region
  $region38: #{deep_dense_vae_mark_iv.1} parent=0 // pred_check
    _
  $region39: #{deep_dense_vae_mark_iv.1} parent=0 // pred_check_branch
    %44 = sbr.rel (0) target = $region41
  $region40: #{deep_dense_vae_mark_iv.1} parent=0 // pred_region
    _
  $region41: #{deep_dense_vae_mark_iv.1} parent=0 // pred_fallthru
    _
  // Predicated region
  $region42: #{deep_dense_vae_mark_iv.1} parent=0 // pred_check
    _
  $region43: #{deep_dense_vae_mark_iv.1} parent=0 // pred_check_branch
    %46 = sbr.rel (0) target = $region45
  $region44: #{deep_dense_vae_mark_iv.1} parent=0 // pred_region
    _
  $region45: #{deep_dense_vae_mark_iv.1} parent=0 // pred_fallthru
    _
  // Predicated region
  $region46: #{deep_dense_vae_mark_iv.1} parent=0 // pred_check
    _
  $region47: #{deep_dense_vae_mark_iv.1} parent=0 // pred_check_branch
    %48 = sbr.rel (0) target = $region49
  $region48: #{deep_dense_vae_mark_iv.1} parent=0 // pred_region
    _
  $region49: #{deep_dense_vae_mark_iv.1} parent=0 // pred_fallthru
    _
  // Predicated region
  $region50: #{deep_dense_vae_mark_iv.1} parent=0 // pred_check
    _
  $region51: #{deep_dense_vae_mark_iv.1} parent=0 // pred_check_branch
    %50 = sbr.rel (0) target = $region53
  $region52: #{deep_dense_vae_mark_iv.1} parent=0 // pred_region
    _
  $region53: #{deep_dense_vae_mark_iv.1} parent=0 // pred_fallthru
    _
  // Predicated region
  $region54: #{deep_dense_vae_mark_iv.1} parent=0 // pred_check
    _
  $region55: #{deep_dense_vae_mark_iv.1} parent=0 // pred_check_branch
    %52 = sbr.rel (0) target = $region57
  $region56: #{deep_dense_vae_mark_iv.1} parent=0 // pred_region
    _
  $region57: #{deep_dense_vae_mark_iv.1} parent=0 // pred_fallthru
    _
  // Predicated region
  $region58: #{deep_dense_vae_mark_iv.1} parent=0 // pred_check
    _
  $region59: #{deep_dense_vae_mark_iv.1} parent=0 // pred_check_branch
    %54 = sbr.rel (0) target = $region61
  $region60: #{deep_dense_vae_mark_iv.1} parent=0 // pred_region
    _
  $region61: #{deep_dense_vae_mark_iv.1} parent=0 // pred_fallthru
    _
  // Predicated region
  $region62: #{deep_dense_vae_mark_iv.1} parent=0 // pred_check
    _
  $region63: #{deep_dense_vae_mark_iv.1} parent=0 // pred_check_branch
    %56 = sbr.rel (0) target = $region65
  $region64: #{deep_dense_vae_mark_iv.1} parent=0 // pred_region
    _
  $region65: #{deep_dense_vae_mark_iv.1} parent=0 // pred_fallthru
    _
  // Predicated region
  $region66: #{deep_dense_vae_mark_iv.1} parent=0 // pred_check
    _
  $region67: #{deep_dense_vae_mark_iv.1} parent=0 // pred_check_branch
    %58 = sbr.rel (0) target = $region69
  $region68: #{deep_dense_vae_mark_iv.1} parent=0 // pred_region
    _
  $region69: #{deep_dense_vae_mark_iv.1} parent=0 // pred_fallthru
    _
  // Predicated region
  $region70: #{deep_dense_vae_mark_iv.1} parent=0 // pred_check
    _
  $region71: #{deep_dense_vae_mark_iv.1} parent=0 // pred_check_branch
    %60 = sbr.rel (0) target = $region73
  $region72: #{deep_dense_vae_mark_iv.1} parent=0 // pred_region
    _
  $region73: #{deep_dense_vae_mark_iv.1} parent=0 // pred_fallthru
    _
  %v62 = vld [vmem:[%s0] sm:$0xff]
  %v63 = vld [vmem:[%s0 + $0x8] sm:$0xff]
  %v64 = vld [vmem:[%s0 + $0x10] sm:$0xff]
  %v65 = vld [vmem:[%s0 + $0x18] sm:$0xf]
  %v66 = vld [vmem:[%s0 + $0x1c] sm:$0xff]
  %v67 = vld [vmem:[%s0 + $0x24] sm:$0xff]
  %v68 = vld [vmem:[%s0 + $0x2c] sm:$0xff]
  %v69 = vld [vmem:[%s0 + $0x34] sm:$0xf]
  %v70 = vld [vmem:[%s0 + $0x38] sm:$0xff]
  %v71 = vld [vmem:[%s0 + $0x40] sm:$0xff]
  %v72 = vld [vmem:[%s0 + $0x48] sm:$0xff]
  %v73 = vld [vmem:[%s0 + $0x50] sm:$0xf]
  %v74 = vld [vmem:[%s0 + $0x54] sm:$0xff]
  %v75 = vld [vmem:[%s0 + $0x5c] sm:$0xff]
  %v76 = vld [vmem:[%s0 + $0x64] sm:$0xff]
  %v77 = vld [vmem:[%s0 + $0x6c] sm:$0xf]
  %v78 = vld [vmem:[%s0 + $0x70] sm:$0xff]
  %v79 = vld [vmem:[%s0 + $0x78] sm:$0xff]
  %v80 = vld [vmem:[%s0 + $0x80] sm:$0xff]
  %v81 = vld [vmem:[%s0 + $0x88] sm:$0xf]
  %v82 = vld [vmem:[%s0 + $0x8c] sm:$0xff]
  %v83 = vld [vmem:[%s0 + $0x94] sm:$0xff]
  %v84 = vld [vmem:[%s0 + $0x9c] sm:$0xff]
  %v85 = vld [vmem:[%s0 + $0xa4] sm:$0xf]
  %v86 = vld [vmem:[%s0 + $0xa8] sm:$0xff]
  %v87 = vld [vmem:[%s0 + $0xb0] sm:$0xff]
  %v88 = vld [vmem:[%s0 + $0xb8] sm:$0xff]
  %v89 = vld [vmem:[%s0 + $0xc0] sm:$0xf]
  %v90 = vld [vmem:[%s0 + $0xc4] sm:$0xff]
  %v91 = vld [vmem:[%s0 + $0xcc] sm:$0xff]
  %v92 = vld [vmem:[%s0 + $0xd4] sm:$0xff]
  %v93 = vld [vmem:[%s0 + $0xdc] sm:$0xf]
  %v94 = vld [vmem:[%s0 + $0xe0] sm:$0xff]
  %v95 = vld [vmem:[%s0 + $0xe8] sm:$0xff]
  %v96 = vld [vmem:[%s0 + $0xf0] sm:$0xff]
  %v97 = vld [vmem:[%s0 + $0xf8] sm:$0xf]
  %v98 = vld [vmem:[%s0 + $0xfc] sm:$0xff]
  %v99 = vld [vmem:[%s0 + $0x104] sm:$0xff]
  %v100 = vld [vmem:[%s0 + $0x10c] sm:$0xff]
  %v101 = vld [vmem:[%s0 + $0x114] sm:$0xf]
  %v102 = vld [vmem:[%s0 + $0x118] sm:$0xff]
  %v103 = vld [vmem:[%s0 + $0x120] sm:$0xff]
  %v104 = vld [vmem:[%s0 + $0x128] sm:$0xff]
  %v105 = vld [vmem:[%s0 + $0x130] sm:$0xf]
  %v106 = vld [vmem:[%s0 + $0x134] sm:$0xff]
  %v107 = vld [vmem:[%s0 + $0x13c] sm:$0xff]
  %v108 = vld [vmem:[%s0 + $0x144] sm:$0xff]
  %v109 = vld [vmem:[%s0 + $0x14c] sm:$0xf]
  %v110 = vld [vmem:[%s0 + $0x150] sm:$0xff]
  %v111 = vld [vmem:[%s0 + $0x158] sm:$0xff]
  %v112 = vld [vmem:[%s0 + $0x160] sm:$0xff]
  %v113 = vld [vmem:[%s0 + $0x168] sm:$0xf]
  %v114 = vld [vmem:[%s0 + $0x16c] sm:$0xff]
  %v115 = vld [vmem:[%s0 + $0x174] sm:$0xff]
  %v116 = vld [vmem:[%s0 + $0x17c] sm:$0xff]
  %v117 = vld [vmem:[%s0 + $0x184] sm:$0xf]
  %v118 = vld [vmem:[%s0 + $0x188] sm:$0xff]
  %v119 = vld [vmem:[%s0 + $0x190] sm:$0xff]
  %v120 = vld [vmem:[%s0 + $0x198] sm:$0xff]
  %v121 = vld [vmem:[%s0 + $0x1a0] sm:$0xf]
  %v122 = vld [vmem:[%s0 + $0x1a4] sm:$0xff]
  %v123 = vld [vmem:[%s0 + $0x1ac] sm:$0xff]
  %v124 = vld [vmem:[%s0 + $0x1b4] sm:$0xff]
  %v125 = vld [vmem:[%s0 + $0x1bc] sm:$0xf]
  %v126 = vld [vmem:[%s0 + $0x1c0] sm:$0xff]
  %v127 = vld [vmem:[%s0 + $0x1c8] sm:$0xff]
  %v128 = vld [vmem:[%s0 + $0x1d0] sm:$0xff]
  %v129 = vld [vmem:[%s0 + $0x1d8] sm:$0xf]
  %v130 = vld [vmem:[%s0 + $0x1dc] sm:$0xff]
  %v131 = vld [vmem:[%s0 + $0x1e4] sm:$0xff]
  %v132 = vld [vmem:[%s0 + $0x1ec] sm:$0xff]
  %v133 = vld [vmem:[%s0 + $0x1f4] sm:$0xf]
  %v134 = vld [vmem:[%s0 + $0x1f8] sm:$0xff]
  %v135 = vld [vmem:[%s0 + $0x200] sm:$0xff]
  %v136 = vld [vmem:[%s0 + $0x208] sm:$0xff]
  %v137 = vld [vmem:[%s0 + $0x210] sm:$0xf]
  %v138 = vld [vmem:[%s0 + $0x214] sm:$0xff]
  %v139 = vld [vmem:[%s0 + $0x21c] sm:$0xff]
  %v140 = vld [vmem:[%s0 + $0x224] sm:$0xff]
  %v141 = vld [vmem:[%s0 + $0x22c] sm:$0xf]
  %v142 = vld [vmem:[%s0 + $0x230] sm:$0xff]
  %v143 = vld [vmem:[%s0 + $0x238] sm:$0xff]
  %v144 = vld [vmem:[%s0 + $0x240] sm:$0xff]
  %v145 = vld [vmem:[%s0 + $0x248] sm:$0xf]
  %v146 = vld [vmem:[%s0 + $0x24c] sm:$0xff]
  %v147 = vld [vmem:[%s0 + $0x254] sm:$0xff]
  %v148 = vld [vmem:[%s0 + $0x25c] sm:$0xff]
  %v149 = vld [vmem:[%s0 + $0x264] sm:$0xf]
  %v150 = vld [vmem:[%s0 + $0x268] sm:$0xff]
  %v151 = vld [vmem:[%s0 + $0x270] sm:$0xff]
  %v152 = vld [vmem:[%s0 + $0x278] sm:$0xff]
  %v153 = vld [vmem:[%s0 + $0x280] sm:$0xf]
  %v154 = vld [vmem:[%s0 + $0x284] sm:$0xff]
  %v155 = vld [vmem:[%s0 + $0x28c] sm:$0xff]
  %v156 = vld [vmem:[%s0 + $0x294] sm:$0xff]
  %v157 = vld [vmem:[%s0 + $0x29c] sm:$0xf]
  %v158 = vld [vmem:[%s0 + $0x2a0] sm:$0xff]
  %v159 = vld [vmem:[%s0 + $0x2a8] sm:$0xff]
  %v160 = vld [vmem:[%s0 + $0x2b0] sm:$0xff]
  %v161 = vld [vmem:[%s0 + $0x2b8] sm:$0xf]
  %v162 = vld [vmem:[%s0 + $0x2bc] sm:$0xff]
  %v163 = vld [vmem:[%s0 + $0x2c4] sm:$0xff]
  %v164 = vld [vmem:[%s0 + $0x2cc] sm:$0xff]
  %v165 = vld [vmem:[%s0 + $0x2d4] sm:$0xf]
  %v166 = vld [vmem:[%s0 + $0x2d8] sm:$0xff]
  %v167 = vld [vmem:[%s0 + $0x2e0] sm:$0xff]
  %v168 = vld [vmem:[%s0 + $0x2e8] sm:$0xff]
  %v169 = vld [vmem:[%s0 + $0x2f0] sm:$0xf]
  %v170 = vld [vmem:[%s0 + $0x2f4] sm:$0xff]
  %v171 = vld [vmem:[%s0 + $0x2fc] sm:$0xff]
  %v172 = vld [vmem:[%s0 + $0x304] sm:$0xff]
  %v173 = vld [vmem:[%s0 + $0x30c] sm:$0xf]
  %v174 = vld [vmem:[%s0 + $0x310] sm:$0xff]
  %v175 = vld [vmem:[%s0 + $0x318] sm:$0xff]
  %v176 = vld [vmem:[%s0 + $0x320] sm:$0xff]
  %v177 = vld [vmem:[%s0 + $0x328] sm:$0xf]
  %v178 = vld [vmem:[%s0 + $0x32c] sm:$0xff]
  %v179 = vld [vmem:[%s0 + $0x334] sm:$0xff]
  %v180 = vld [vmem:[%s0 + $0x33c] sm:$0xff]
  %v181 = vld [vmem:[%s0 + $0x344] sm:$0xf]
  %v182 = vld [vmem:[%s0 + $0x348] sm:$0xff]
  %v183 = vld [vmem:[%s0 + $0x350] sm:$0xff]
  %v184 = vld [vmem:[%s0 + $0x358] sm:$0xff]
  %v185 = vld [vmem:[%s0 + $0x360] sm:$0xf]
  %v186 = vld [vmem:[%s0 + $0x364] sm:$0xff]
  %v187 = vld [vmem:[%s0 + $0x36c] sm:$0xff]
  %v188 = vld [vmem:[%s0 + $0x374] sm:$0xff]
  %v189 = vld [vmem:[%s0 + $0x37c] sm:$0xf]
  %v190 = vld [vmem:[%s2] sm:$0xff]
  %v191 = vld [vmem:[%s2 + $0x8] sm:$0xff]
  %v192 = vld [vmem:[%s2 + $0x10] sm:$0xff]
  %v193 = vld [vmem:[%s2 + $0x18] sm:$0xff]
  %v194 = vld [vmem:[%s2 + $0x20] sm:$0xff]
  %v195 = vld [vmem:[%s2 + $0x28] sm:$0xff]
  %v196 = vld [vmem:[%s2 + $0x30] sm:$0xff]
  %v197 = vld [vmem:[%s2 + $0x38] sm:$0xff]
  %v198 = vld [vmem:[%s2 + $0x40] sm:$0xff]
  %v199 = vld [vmem:[%s2 + $0x48] sm:$0xff]
  %v200 = vld [vmem:[%s2 + $0x50] sm:$0xff]
  %v201 = vld [vmem:[%s2 + $0x58] sm:$0xff]
  %v202 = vld [vmem:[%s2 + $0x60] sm:$0xff]
  %v203 = vld [vmem:[%s2 + $0x68] sm:$0xff]
  %v204 = vld [vmem:[%s2 + $0x70] sm:$0xff]
  %v205 = vld [vmem:[%s2 + $0x78] sm:$0xff]
  %v206 = vld [vmem:[%s2 + $0x80] sm:$0xff]
  %v207 = vld [vmem:[%s2 + $0x88] sm:$0xff]
  %v208 = vld [vmem:[%s2 + $0x90] sm:$0xff]
  %v209 = vld [vmem:[%s2 + $0x98] sm:$0xff]
  %v210 = vld [vmem:[%s2 + $0xa0] sm:$0xff]
  %v211 = vld [vmem:[%s2 + $0xa8] sm:$0xff]
  %v212 = vld [vmem:[%s2 + $0xb0] sm:$0xff]
  %v213 = vld [vmem:[%s2 + $0xb8] sm:$0xff]
  %v214 = vld [vmem:[%s2 + $0xc0] sm:$0xff]
  %v215 = vld [vmem:[%s2 + $0xc8] sm:$0xff]
  %v216 = vld [vmem:[%s2 + $0xd0] sm:$0xff]
  %v217 = vld [vmem:[%s2 + $0xd8] sm:$0xff]
  %v218 = vld [vmem:[%s2 + $0xe0] sm:$0xff]
  %v219 = vld [vmem:[%s2 + $0xe8] sm:$0xff]
  %v220 = vld [vmem:[%s2 + $0xf0] sm:$0xff]
  %v221 = vld [vmem:[%s2 + $0xf8] sm:$0xff]
  %v222 = vld [vmem:[%s2 + $0x100] sm:$0xff]
  %v223 = vld [vmem:[%s2 + $0x108] sm:$0xff]
  %v224 = vld [vmem:[%s2 + $0x110] sm:$0xff]
  %v225 = vld [vmem:[%s2 + $0x118] sm:$0xff]
  %v226 = vld [vmem:[%s2 + $0x120] sm:$0xff]
  %v227 = vld [vmem:[%s2 + $0x128] sm:$0xff]
  %v228 = vld [vmem:[%s2 + $0x130] sm:$0xff]
  %v229 = vld [vmem:[%s2 + $0x138] sm:$0xff]
  %v230 = vld [vmem:[%s2 + $0x140] sm:$0xff]
  %v231 = vld [vmem:[%s2 + $0x148] sm:$0xff]
  %v232 = vld [vmem:[%s2 + $0x150] sm:$0xff]
  %v233 = vld [vmem:[%s2 + $0x158] sm:$0xff]
  %v234 = vld [vmem:[%s2 + $0x160] sm:$0xff]
  %v235 = vld [vmem:[%s2 + $0x168] sm:$0xff]
  %v236 = vld [vmem:[%s2 + $0x170] sm:$0xff]
  %v237 = vld [vmem:[%s2 + $0x178] sm:$0xff]
  %v238 = vld [vmem:[%s2 + $0x180] sm:$0xff]
  %v239 = vld [vmem:[%s2 + $0x188] sm:$0xff]
  %v240 = vld [vmem:[%s2 + $0x190] sm:$0xff]
  %v241 = vld [vmem:[%s2 + $0x198] sm:$0xff]
  %v242 = vld [vmem:[%s2 + $0x1a0] sm:$0xff]
  %v243 = vld [vmem:[%s2 + $0x1a8] sm:$0xff]
  %v244 = vld [vmem:[%s2 + $0x1b0] sm:$0xff]
  %v245 = vld [vmem:[%s2 + $0x1b8] sm:$0xff]
  %v246 = vld [vmem:[%s2 + $0x1c0] sm:$0xff]
  %v247 = vld [vmem:[%s2 + $0x1c8] sm:$0xff]
  %v248 = vld [vmem:[%s2 + $0x1d0] sm:$0xff]
  %v249 = vld [vmem:[%s2 + $0x1d8] sm:$0xff]
  %v250 = vld [vmem:[%s2 + $0x1e0] sm:$0xff]
  %v251 = vld [vmem:[%s2 + $0x1e8] sm:$0xff]
  %v252 = vld [vmem:[%s2 + $0x1f0] sm:$0xff]
  %v253 = vld [vmem:[%s2 + $0x1f8] sm:$0xff]
  %v254 = vld [vmem:[%s2 + $0x200] sm:$0xff]
  %v255 = vld [vmem:[%s2 + $0x208] sm:$0xff]
  %v256 = vld [vmem:[%s2 + $0x210] sm:$0xff]
  %v257 = vld [vmem:[%s2 + $0x218] sm:$0xff]
  %v258 = vld [vmem:[%s2 + $0x220] sm:$0xff]
  %v259 = vld [vmem:[%s2 + $0x228] sm:$0xff]
  %v260 = vld [vmem:[%s2 + $0x230] sm:$0xff]
  %v261 = vld [vmem:[%s2 + $0x238] sm:$0xff]
  %v262 = vld [vmem:[%s2 + $0x240] sm:$0xff]
  %v263 = vld [vmem:[%s2 + $0x248] sm:$0xff]
  %v264 = vld [vmem:[%s2 + $0x250] sm:$0xff]
  %v265 = vld [vmem:[%s2 + $0x258] sm:$0xff]
  %v266 = vld [vmem:[%s2 + $0x260] sm:$0xff]
  %v267 = vld [vmem:[%s2 + $0x268] sm:$0xff]
  %v268 = vld [vmem:[%s2 + $0x270] sm:$0xff]
  %v269 = vld [vmem:[%s2 + $0x278] sm:$0xff]
  %v270 = vld [vmem:[%s2 + $0x280] sm:$0xff]
  %v271 = vld [vmem:[%s2 + $0x288] sm:$0xff]
  %v272 = vld [vmem:[%s2 + $0x290] sm:$0xff]
  %v273 = vld [vmem:[%s2 + $0x298] sm:$0xff]
  %v274 = vld [vmem:[%s2 + $0x2a0] sm:$0xff]
  %v275 = vld [vmem:[%s2 + $0x2a8] sm:$0xff]
  %v276 = vld [vmem:[%s2 + $0x2b0] sm:$0xff]
  %v277 = vld [vmem:[%s2 + $0x2b8] sm:$0xff]
  %v278 = vld [vmem:[%s2 + $0x2c0] sm:$0xff]
  %v279 = vld [vmem:[%s2 + $0x2c8] sm:$0xff]
  %v280 = vld [vmem:[%s2 + $0x2d0] sm:$0xff]
  %v281 = vld [vmem:[%s2 + $0x2d8] sm:$0xff]
  %v282 = vld [vmem:[%s2 + $0x2e0] sm:$0xff]
  %v283 = vld [vmem:[%s2 + $0x2e8] sm:$0xff]
  %v284 = vld [vmem:[%s2 + $0x2f0] sm:$0xff]
  %v285 = vld [vmem:[%s2 + $0x2f8] sm:$0xff]
  %v286 = vld [vmem:[%s2 + $0x300] sm:$0xff]
  %v287 = vld [vmem:[%s2 + $0x308] sm:$0xff]
  %v288 = vld [vmem:[%s2 + $0x310] sm:$0xff]
  %v289 = vld [vmem:[%s2 + $0x318] sm:$0xff]
  %v290 = vld [vmem:[%s2 + $0x320] sm:$0xff]
  %v291 = vld [vmem:[%s2 + $0x328] sm:$0xff]
  %v292 = vld [vmem:[%s2 + $0x330] sm:$0xff]
  %v293 = vld [vmem:[%s2 + $0x338] sm:$0xff]
  %v294 = vld [vmem:[%s2 + $0x340] sm:$0xff]
  %v295 = vld [vmem:[%s2 + $0x348] sm:$0xff]
  %v296 = vld [vmem:[%s2 + $0x350] sm:$0xff]
  %v297 = vld [vmem:[%s2 + $0x358] sm:$0xff]
  %v298 = vld [vmem:[%s2 + $0x360] sm:$0xff]
  %v299 = vld [vmem:[%s2 + $0x368] sm:$0xff]
  %v300 = vld [vmem:[%s2 + $0x370] sm:$0xff]
  %v301 = vld [vmem:[%s2 + $0x378] sm:$0xff]
  %v302 = vld [vmem:[%s2 + $0x380] sm:$0xff]
  %v303 = vld [vmem:[%s2 + $0x388] sm:$0xff]
  %v304 = vld [vmem:[%s2 + $0x390] sm:$0xff]
  %v305 = vld [vmem:[%s2 + $0x398] sm:$0xff]
  %v306 = vld [vmem:[%s2 + $0x3a0] sm:$0xff]
  %v307 = vld [vmem:[%s2 + $0x3a8] sm:$0xff]
  %v308 = vld [vmem:[%s2 + $0x3b0] sm:$0xff]
  %v309 = vld [vmem:[%s2 + $0x3b8] sm:$0xff]
  %v310 = vld [vmem:[%s2 + $0x3c0] sm:$0xff]
  %v311 = vld [vmem:[%s2 + $0x3c8] sm:$0xff]
  %v312 = vld [vmem:[%s2 + $0x3d0] sm:$0xff]
  %v313 = vld [vmem:[%s2 + $0x3d8] sm:$0xff]
  %v314 = vld [vmem:[%s2 + $0x3e0] sm:$0xff]
  %v315 = vld [vmem:[%s2 + $0x3e8] sm:$0xff]
  %v316 = vld [vmem:[%s2 + $0x3f0] sm:$0xff]
  %v317 = vld [vmem:[%s2 + $0x3f8] sm:$0xff]
  %v318 = vld [vmem:[%s2 + $0x400] sm:$0xff]
  %v319 = vld [vmem:[%s2 + $0x408] sm:$0xff]
  %v320 = vld [vmem:[%s2 + $0x410] sm:$0xff]
  %v321 = vld [vmem:[%s2 + $0x418] sm:$0xff]
  %v322 = vld [vmem:[%s2 + $0x420] sm:$0xff]
  %v323 = vld [vmem:[%s2 + $0x428] sm:$0xff]
  %v324 = vld [vmem:[%s2 + $0x430] sm:$0xff]
  %v325 = vld [vmem:[%s2 + $0x438] sm:$0xff]
  %v326 = vld [vmem:[%s2 + $0x440] sm:$0xff]
  %v327 = vld [vmem:[%s2 + $0x448] sm:$0xff]
  %v328 = vld [vmem:[%s2 + $0x450] sm:$0xff]
  %v329 = vld [vmem:[%s2 + $0x458] sm:$0xff]
  %v330 = vld [vmem:[%s2 + $0x460] sm:$0xff]
  %v331 = vld [vmem:[%s2 + $0x468] sm:$0xff]
  %v332 = vld [vmem:[%s2 + $0x470] sm:$0xff]
  %v333 = vld [vmem:[%s2 + $0x478] sm:$0xff]
  %v334 = vld [vmem:[%s2 + $0x480] sm:$0xff]
  %v335 = vld [vmem:[%s2 + $0x488] sm:$0xff]
  %v336 = vld [vmem:[%s2 + $0x490] sm:$0xff]
  %v337 = vld [vmem:[%s2 + $0x498] sm:$0xff]
  %v338 = vld [vmem:[%s2 + $0x4a0] sm:$0xff]
  %v339 = vld [vmem:[%s2 + $0x4a8] sm:$0xff]
  %v340 = vld [vmem:[%s2 + $0x4b0] sm:$0xff]
  %v341 = vld [vmem:[%s2 + $0x4b8] sm:$0xff]
  %v342 = vld [vmem:[%s2 + $0x4c0] sm:$0xff]
  %v343 = vld [vmem:[%s2 + $0x4c8] sm:$0xff]
  %v344 = vld [vmem:[%s2 + $0x4d0] sm:$0xff]
  %v345 = vld [vmem:[%s2 + $0x4d8] sm:$0xff]
  %v346 = vld [vmem:[%s2 + $0x4e0] sm:$0xff]
  %v347 = vld [vmem:[%s2 + $0x4e8] sm:$0xff]
  %v348 = vld [vmem:[%s2 + $0x4f0] sm:$0xff]
  %v349 = vld [vmem:[%s2 + $0x4f8] sm:$0xff]
  %v350 = vld [vmem:[%s2 + $0x500] sm:$0xff]
  %v351 = vld [vmem:[%s2 + $0x508] sm:$0xff]
  %v352 = vld [vmem:[%s2 + $0x510] sm:$0xff]
  %v353 = vld [vmem:[%s2 + $0x518] sm:$0xff]
  %v354 = vld [vmem:[%s2 + $0x520] sm:$0xff]
  %v355 = vld [vmem:[%s2 + $0x528] sm:$0xff]
  %v356 = vld [vmem:[%s2 + $0x530] sm:$0xff]
  %v357 = vld [vmem:[%s2 + $0x538] sm:$0xff]
  %v358 = vld [vmem:[%s2 + $0x540] sm:$0xff]
  %v359 = vld [vmem:[%s2 + $0x548] sm:$0xff]
  %v360 = vld [vmem:[%s2 + $0x550] sm:$0xff]
  %v361 = vld [vmem:[%s2 + $0x558] sm:$0xff]
  %v362 = vld [vmem:[%s2 + $0x560] sm:$0xff]
  %v363 = vld [vmem:[%s2 + $0x568] sm:$0xff]
  %v364 = vld [vmem:[%s2 + $0x570] sm:$0xff]
  %v365 = vld [vmem:[%s2 + $0x578] sm:$0xff]
  %v366 = vld [vmem:[%s2 + $0x580] sm:$0xff]
  %v367 = vld [vmem:[%s2 + $0x588] sm:$0xff]
  %v368 = vld [vmem:[%s2 + $0x590] sm:$0xff]
  %v369 = vld [vmem:[%s2 + $0x598] sm:$0xff]
  %v370 = vld [vmem:[%s2 + $0x5a0] sm:$0xff]
  %v371 = vld [vmem:[%s2 + $0x5a8] sm:$0xff]
  %v372 = vld [vmem:[%s2 + $0x5b0] sm:$0xff]
  %v373 = vld [vmem:[%s2 + $0x5b8] sm:$0xff]
  %v374 = vld [vmem:[%s2 + $0x5c0] sm:$0xff]
  %v375 = vld [vmem:[%s2 + $0x5c8] sm:$0xff]
  %v376 = vld [vmem:[%s2 + $0x5d0] sm:$0xff]
  %v377 = vld [vmem:[%s2 + $0x5d8] sm:$0xff]
  %v378 = vld [vmem:[%s2 + $0x5e0] sm:$0xff]
  %v379 = vld [vmem:[%s2 + $0x5e8] sm:$0xff]
  %v380 = vld [vmem:[%s2 + $0x5f0] sm:$0xff]
  %v381 = vld [vmem:[%s2 + $0x5f8] sm:$0xff]
  %v382 = vld [vmem:[%s2 + $0x600] sm:$0xff]
  %v383 = vld [vmem:[%s2 + $0x608] sm:$0xff]
  %v384 = vld [vmem:[%s2 + $0x610] sm:$0xff]
  %v385 = vld [vmem:[%s2 + $0x618] sm:$0xff]
  %v386 = vld [vmem:[%s3] sm:$0xf]
  %v388 = vlaneseq
  %v389 = vshrl.u32 %v388, 7
  %v390 = vsub.s32 0, %v389
  %v391 = vrot.slane %v386, %v390
  %v392 = vlaneseq
  %v393 = vshrl.u32 %v392, 7
  %v394 = vsub.s32 1, %v393
  %v395 = vrot.slane %v386, %v394
  %v396 = vlaneseq
  %v397 = vshrl.u32 %v396, 7
  %v398 = vsub.s32 2, %v397
  %v399 = vrot.slane %v386, %v398
  %v400 = vlaneseq
  %v401 = vshrl.u32 %v400, 7
  %v402 = vsub.s32 3, %v401
  %v403 = vrot.slane %v386, %v402
  %v536 = vunpack.c.l.b16 %v62
  %v537 = vunpack.c.h.b16 %v62
  %v538 = vunpack.c.l.b16 %v63
  %v539 = vunpack.c.h.b16 %v63
  %v540 = vunpack.c.l.b16 %v64
  %v541 = vunpack.c.h.b16 %v64
  %v542 = vunpack.c.l.b16 %v65
  %v543 = vunpack.c.l.b16 %v66
  %v544 = vunpack.c.h.b16 %v66
  %v545 = vunpack.c.l.b16 %v67
  %v546 = vunpack.c.h.b16 %v67
  %v547 = vunpack.c.l.b16 %v68
  %v548 = vunpack.c.h.b16 %v68
  %v549 = vunpack.c.l.b16 %v69
  %v550 = vunpack.c.l.b16 %v70
  %v551 = vunpack.c.h.b16 %v70
  %v552 = vunpack.c.l.b16 %v71
  %v553 = vunpack.c.h.b16 %v71
  %v554 = vunpack.c.l.b16 %v72
  %v555 = vunpack.c.h.b16 %v72
  %v556 = vunpack.c.l.b16 %v73
  %v557 = vunpack.c.l.b16 %v74
  %v558 = vunpack.c.h.b16 %v74
  %v559 = vunpack.c.l.b16 %v75
  %v560 = vunpack.c.h.b16 %v75
  %v561 = vunpack.c.l.b16 %v76
  %v562 = vunpack.c.h.b16 %v76
  %v563 = vunpack.c.l.b16 %v77
  %v564 = vunpack.c.l.b16 %v78
  %v565 = vunpack.c.h.b16 %v78
  %v566 = vunpack.c.l.b16 %v79
  %v567 = vunpack.c.h.b16 %v79
  %v568 = vunpack.c.l.b16 %v80
  %v569 = vunpack.c.h.b16 %v80
  %v570 = vunpack.c.l.b16 %v81
  %v571 = vunpack.c.l.b16 %v82
  %v572 = vunpack.c.h.b16 %v82
  %v573 = vunpack.c.l.b16 %v83
  %v574 = vunpack.c.h.b16 %v83
  %v575 = vunpack.c.l.b16 %v84
  %v576 = vunpack.c.h.b16 %v84
  %v577 = vunpack.c.l.b16 %v85
  %v578 = vunpack.c.l.b16 %v86
  %v579 = vunpack.c.h.b16 %v86
  %v580 = vunpack.c.l.b16 %v87
  %v581 = vunpack.c.h.b16 %v87
  %v582 = vunpack.c.l.b16 %v88
  %v583 = vunpack.c.h.b16 %v88
  %v584 = vunpack.c.l.b16 %v89
  %v585 = vunpack.c.l.b16 %v90
  %v586 = vunpack.c.h.b16 %v90
  %v587 = vunpack.c.l.b16 %v91
  %v588 = vunpack.c.h.b16 %v91
  %v589 = vunpack.c.l.b16 %v92
  %v590 = vunpack.c.h.b16 %v92
  %v591 = vunpack.c.l.b16 %v93
  %v592 = vunpack.c.l.b16 %v94
  %v593 = vunpack.c.h.b16 %v94
  %v594 = vunpack.c.l.b16 %v95
  %v595 = vunpack.c.h.b16 %v95
  %v596 = vunpack.c.l.b16 %v96
  %v597 = vunpack.c.h.b16 %v96
  %v598 = vunpack.c.l.b16 %v97
  %v599 = vunpack.c.l.b16 %v98
  %v600 = vunpack.c.h.b16 %v98
  %v601 = vunpack.c.l.b16 %v99
  %v602 = vunpack.c.h.b16 %v99
  %v603 = vunpack.c.l.b16 %v100
  %v604 = vunpack.c.h.b16 %v100
  %v605 = vunpack.c.l.b16 %v101
  %v606 = vunpack.c.l.b16 %v102
  %v607 = vunpack.c.h.b16 %v102
  %v608 = vunpack.c.l.b16 %v103
  %v609 = vunpack.c.h.b16 %v103
  %v610 = vunpack.c.l.b16 %v104
  %v611 = vunpack.c.h.b16 %v104
  %v612 = vunpack.c.l.b16 %v105
  %v613 = vunpack.c.l.b16 %v106
  %v614 = vunpack.c.h.b16 %v106
  %v615 = vunpack.c.l.b16 %v107
  %v616 = vunpack.c.h.b16 %v107
  %v617 = vunpack.c.l.b16 %v108
  %v618 = vunpack.c.h.b16 %v108
  %v619 = vunpack.c.l.b16 %v109
  %v620 = vunpack.c.l.b16 %v110
  %v621 = vunpack.c.h.b16 %v110
  %v622 = vunpack.c.l.b16 %v111
  %v623 = vunpack.c.h.b16 %v111
  %v624 = vunpack.c.l.b16 %v112
  %v625 = vunpack.c.h.b16 %v112
  %v626 = vunpack.c.l.b16 %v113
  %v627 = vunpack.c.l.b16 %v114
  %v628 = vunpack.c.h.b16 %v114
  %v629 = vunpack.c.l.b16 %v115
  %v630 = vunpack.c.h.b16 %v115
  %v631 = vunpack.c.l.b16 %v116
  %v632 = vunpack.c.h.b16 %v116
  %v633 = vunpack.c.l.b16 %v117
  %v634 = vunpack.c.l.b16 %v118
  %v635 = vunpack.c.h.b16 %v118
  %v636 = vunpack.c.l.b16 %v119
  %v637 = vunpack.c.h.b16 %v119
  %v638 = vunpack.c.l.b16 %v120
  %v639 = vunpack.c.h.b16 %v120
  %v640 = vunpack.c.l.b16 %v121
  %v641 = vunpack.c.l.b16 %v122
  %v642 = vunpack.c.h.b16 %v122
  %v643 = vunpack.c.l.b16 %v123
  %v644 = vunpack.c.h.b16 %v123
  %v645 = vunpack.c.l.b16 %v124
  %v646 = vunpack.c.h.b16 %v124
  %v647 = vunpack.c.l.b16 %v125
  %v648 = vunpack.c.l.b16 %v126
  %v649 = vunpack.c.h.b16 %v126
  %v650 = vunpack.c.l.b16 %v127
  %v651 = vunpack.c.h.b16 %v127
  %v652 = vunpack.c.l.b16 %v128
  %v653 = vunpack.c.h.b16 %v128
  %v654 = vunpack.c.l.b16 %v129
  %v655 = vunpack.c.l.b16 %v130
  %v656 = vunpack.c.h.b16 %v130
  %v657 = vunpack.c.l.b16 %v131
  %v658 = vunpack.c.h.b16 %v131
  %v659 = vunpack.c.l.b16 %v132
  %v660 = vunpack.c.h.b16 %v132
  %v661 = vunpack.c.l.b16 %v133
  %v662 = vunpack.c.l.b16 %v134
  %v663 = vunpack.c.h.b16 %v134
  %v664 = vunpack.c.l.b16 %v135
  %v665 = vunpack.c.h.b16 %v135
  %v666 = vunpack.c.l.b16 %v136
  %v667 = vunpack.c.h.b16 %v136
  %v668 = vunpack.c.l.b16 %v137
  %v669 = vunpack.c.l.b16 %v138
  %v670 = vunpack.c.h.b16 %v138
  %v671 = vunpack.c.l.b16 %v139
  %v672 = vunpack.c.h.b16 %v139
  %v673 = vunpack.c.l.b16 %v140
  %v674 = vunpack.c.h.b16 %v140
  %v675 = vunpack.c.l.b16 %v141
  %v676 = vunpack.c.l.b16 %v142
  %v677 = vunpack.c.h.b16 %v142
  %v678 = vunpack.c.l.b16 %v143
  %v679 = vunpack.c.h.b16 %v143
  %v680 = vunpack.c.l.b16 %v144
  %v681 = vunpack.c.h.b16 %v144
  %v682 = vunpack.c.l.b16 %v145
  %v683 = vunpack.c.l.b16 %v146
  %v684 = vunpack.c.h.b16 %v146
  %v685 = vunpack.c.l.b16 %v147
  %v686 = vunpack.c.h.b16 %v147
  %v687 = vunpack.c.l.b16 %v148
  %v688 = vunpack.c.h.b16 %v148
  %v689 = vunpack.c.l.b16 %v149
  %v690 = vunpack.c.l.b16 %v150
  %v691 = vunpack.c.h.b16 %v150
  %v692 = vunpack.c.l.b16 %v151
  %v693 = vunpack.c.h.b16 %v151
  %v694 = vunpack.c.l.b16 %v152
  %v695 = vunpack.c.h.b16 %v152
  %v696 = vunpack.c.l.b16 %v153
  %v697 = vunpack.c.l.b16 %v154
  %v698 = vunpack.c.h.b16 %v154
  %v699 = vunpack.c.l.b16 %v155
  %v700 = vunpack.c.h.b16 %v155
  %v701 = vunpack.c.l.b16 %v156
  %v702 = vunpack.c.h.b16 %v156
  %v703 = vunpack.c.l.b16 %v157
  %v704 = vunpack.c.l.b16 %v158
  %v705 = vunpack.c.h.b16 %v158
  %v706 = vunpack.c.l.b16 %v159
  %v707 = vunpack.c.h.b16 %v159
  %v708 = vunpack.c.l.b16 %v160
  %v709 = vunpack.c.h.b16 %v160
  %v710 = vunpack.c.l.b16 %v161
  %v711 = vunpack.c.l.b16 %v162
  %v712 = vunpack.c.h.b16 %v162
  %v713 = vunpack.c.l.b16 %v163
  %v714 = vunpack.c.h.b16 %v163
  %v715 = vunpack.c.l.b16 %v164
  %v716 = vunpack.c.h.b16 %v164
  %v717 = vunpack.c.l.b16 %v165
  %v718 = vunpack.c.l.b16 %v166
  %v719 = vunpack.c.h.b16 %v166
  %v720 = vunpack.c.l.b16 %v167
  %v721 = vunpack.c.h.b16 %v167
  %v722 = vunpack.c.l.b16 %v168
  %v723 = vunpack.c.h.b16 %v168
  %v724 = vunpack.c.l.b16 %v169
  %v725 = vunpack.c.l.b16 %v170
  %v726 = vunpack.c.h.b16 %v170
  %v727 = vunpack.c.l.b16 %v171
  %v728 = vunpack.c.h.b16 %v171
  %v729 = vunpack.c.l.b16 %v172
  %v730 = vunpack.c.h.b16 %v172
  %v731 = vunpack.c.l.b16 %v173
  %v732 = vunpack.c.l.b16 %v174
  %v733 = vunpack.c.h.b16 %v174
  %v734 = vunpack.c.l.b16 %v175
  %v735 = vunpack.c.h.b16 %v175
  %v736 = vunpack.c.l.b16 %v176
  %v737 = vunpack.c.h.b16 %v176
  %v738 = vunpack.c.l.b16 %v177
  %v739 = vunpack.c.l.b16 %v178
  %v740 = vunpack.c.h.b16 %v178
  %v741 = vunpack.c.l.b16 %v179
  %v742 = vunpack.c.h.b16 %v179
  %v743 = vunpack.c.l.b16 %v180
  %v744 = vunpack.c.h.b16 %v180
  %v745 = vunpack.c.l.b16 %v181
  %v746 = vunpack.c.l.b16 %v182
  %v747 = vunpack.c.h.b16 %v182
  %v748 = vunpack.c.l.b16 %v183
  %v749 = vunpack.c.h.b16 %v183
  %v750 = vunpack.c.l.b16 %v184
  %v751 = vunpack.c.h.b16 %v184
  %v752 = vunpack.c.l.b16 %v185
  %v753 = vunpack.c.l.b16 %v186
  %v754 = vunpack.c.h.b16 %v186
  %v755 = vunpack.c.l.b16 %v187
  %v756 = vunpack.c.h.b16 %v187
  %v757 = vunpack.c.l.b16 %v188
  %v758 = vunpack.c.h.b16 %v188
  %v759 = vunpack.c.l.b16 %v189
  %v760 = vpack.c.b16 %v543, %v536
  %v761 = vpack.c.b16 %v544, %v537
  %v762 = vpack.c.b16 %v545, %v538
  %v763 = vpack.c.b16 %v546, %v539
  %v764 = vpack.c.b16 %v547, %v540
  %v765 = vpack.c.b16 %v548, %v541
  %v766 = vpack.c.b16 %v549, %v542
  %v767 = vpack.c.b16 %v557, %v550
  %v768 = vpack.c.b16 %v558, %v551
  %v769 = vpack.c.b16 %v559, %v552
  %v770 = vpack.c.b16 %v560, %v553
  %v771 = vpack.c.b16 %v561, %v554
  %v772 = vpack.c.b16 %v562, %v555
  %v773 = vpack.c.b16 %v563, %v556
  %v774 = vpack.c.b16 %v571, %v564
  %v775 = vpack.c.b16 %v572, %v565
  %v776 = vpack.c.b16 %v573, %v566
  %v777 = vpack.c.b16 %v574, %v567
  %v778 = vpack.c.b16 %v575, %v568
  %v779 = vpack.c.b16 %v576, %v569
  %v780 = vpack.c.b16 %v577, %v570
  %v781 = vpack.c.b16 %v585, %v578
  %v782 = vpack.c.b16 %v586, %v579
  %v783 = vpack.c.b16 %v587, %v580
  %v784 = vpack.c.b16 %v588, %v581
  %v785 = vpack.c.b16 %v589, %v582
  %v786 = vpack.c.b16 %v590, %v583
  %v787 = vpack.c.b16 %v591, %v584
  %v788 = vpack.c.b16 %v599, %v592
  %v789 = vpack.c.b16 %v600, %v593
  %v790 = vpack.c.b16 %v601, %v594
  %v791 = vpack.c.b16 %v602, %v595
  %v792 = vpack.c.b16 %v603, %v596
  %v793 = vpack.c.b16 %v604, %v597
  %v794 = vpack.c.b16 %v605, %v598
  %v795 = vpack.c.b16 %v613, %v606
  %v796 = vpack.c.b16 %v614, %v607
  %v797 = vpack.c.b16 %v615, %v608
  %v798 = vpack.c.b16 %v616, %v609
  %v799 = vpack.c.b16 %v617, %v610
  %v800 = vpack.c.b16 %v618, %v611
  %v801 = vpack.c.b16 %v619, %v612
  %v802 = vpack.c.b16 %v627, %v620
  %v803 = vpack.c.b16 %v628, %v621
  %v804 = vpack.c.b16 %v629, %v622
  %v805 = vpack.c.b16 %v630, %v623
  %v806 = vpack.c.b16 %v631, %v624
  %v807 = vpack.c.b16 %v632, %v625
  %v808 = vpack.c.b16 %v633, %v626
  %v809 = vpack.c.b16 %v641, %v634
  %v810 = vpack.c.b16 %v642, %v635
  %v811 = vpack.c.b16 %v643, %v636
  %v812 = vpack.c.b16 %v644, %v637
  %v813 = vpack.c.b16 %v645, %v638
  %v814 = vpack.c.b16 %v646, %v639
  %v815 = vpack.c.b16 %v647, %v640
  %v816 = vpack.c.b16 %v655, %v648
  %v817 = vpack.c.b16 %v656, %v649
  %v818 = vpack.c.b16 %v657, %v650
  %v819 = vpack.c.b16 %v658, %v651
  %v820 = vpack.c.b16 %v659, %v652
  %v821 = vpack.c.b16 %v660, %v653
  %v822 = vpack.c.b16 %v661, %v654
  %v823 = vpack.c.b16 %v669, %v662
  %v824 = vpack.c.b16 %v670, %v663
  %v825 = vpack.c.b16 %v671, %v664
  %v826 = vpack.c.b16 %v672, %v665
  %v827 = vpack.c.b16 %v673, %v666
  %v828 = vpack.c.b16 %v674, %v667
  %v829 = vpack.c.b16 %v675, %v668
  %v830 = vpack.c.b16 %v683, %v676
  %v831 = vpack.c.b16 %v684, %v677
  %v832 = vpack.c.b16 %v685, %v678
  %v833 = vpack.c.b16 %v686, %v679
  %v834 = vpack.c.b16 %v687, %v680
  %v835 = vpack.c.b16 %v688, %v681
  %v836 = vpack.c.b16 %v689, %v682
  %v837 = vpack.c.b16 %v697, %v690
  %v838 = vpack.c.b16 %v698, %v691
  %v839 = vpack.c.b16 %v699, %v692
  %v840 = vpack.c.b16 %v700, %v693
  %v841 = vpack.c.b16 %v701, %v694
  %v842 = vpack.c.b16 %v702, %v695
  %v843 = vpack.c.b16 %v703, %v696
  %v844 = vpack.c.b16 %v711, %v704
  %v845 = vpack.c.b16 %v712, %v705
  %v846 = vpack.c.b16 %v713, %v706
  %v847 = vpack.c.b16 %v714, %v707
  %v848 = vpack.c.b16 %v715, %v708
  %v849 = vpack.c.b16 %v716, %v709
  %v850 = vpack.c.b16 %v717, %v710
  %v851 = vpack.c.b16 %v725, %v718
  %v852 = vpack.c.b16 %v726, %v719
  %v853 = vpack.c.b16 %v727, %v720
  %v854 = vpack.c.b16 %v728, %v721
  %v855 = vpack.c.b16 %v729, %v722
  %v856 = vpack.c.b16 %v730, %v723
  %v857 = vpack.c.b16 %v731, %v724
  %v858 = vpack.c.b16 %v739, %v732
  %v859 = vpack.c.b16 %v740, %v733
  %v860 = vpack.c.b16 %v741, %v734
  %v861 = vpack.c.b16 %v742, %v735
  %v862 = vpack.c.b16 %v743, %v736
  %v863 = vpack.c.b16 %v744, %v737
  %v864 = vpack.c.b16 %v745, %v738
  %v865 = vpack.c.b16 %v753, %v746
  %v866 = vpack.c.b16 %v754, %v747
  %v867 = vpack.c.b16 %v755, %v748
  %v868 = vpack.c.b16 %v756, %v749
  %v869 = vpack.c.b16 %v757, %v750
  %v870 = vpack.c.b16 %v758, %v751
  %v871 = vpack.c.b16 %v759, %v752
  %v1164 = vunpack.c.l.b16 %v190
  %v1165 = vunpack.c.h.b16 %v190
  %v1166 = vunpack.c.l.b16 %v191
  %v1167 = vunpack.c.h.b16 %v191
  %v1168 = vunpack.c.l.b16 %v192
  %v1169 = vunpack.c.h.b16 %v192
  %v1170 = vunpack.c.l.b16 %v193
  %v1171 = vunpack.c.h.b16 %v193
  %v1172 = vunpack.c.l.b16 %v194
  %v1173 = vunpack.c.h.b16 %v194
  %v1174 = vunpack.c.l.b16 %v195
  %v1175 = vunpack.c.h.b16 %v195
  %v1176 = vunpack.c.l.b16 %v196
  %v1177 = vunpack.c.h.b16 %v196
  %v1178 = vunpack.c.l.b16 %v197
  %v1179 = vunpack.c.h.b16 %v197
  %v1180 = vunpack.c.l.b16 %v198
  %v1181 = vunpack.c.h.b16 %v198
  %v1182 = vunpack.c.l.b16 %v199
  %v1183 = vunpack.c.h.b16 %v199
  %v1184 = vunpack.c.l.b16 %v200
  %v1185 = vunpack.c.h.b16 %v200
  %v1186 = vunpack.c.l.b16 %v201
  %v1187 = vunpack.c.h.b16 %v201
  %v1188 = vunpack.c.l.b16 %v202
  %v1189 = vunpack.c.h.b16 %v202
  %v1190 = vunpack.c.l.b16 %v203
  %v1191 = vunpack.c.h.b16 %v203
  %v1192 = vunpack.c.l.b16 %v204
  %v1193 = vunpack.c.h.b16 %v204
  %v1194 = vunpack.c.l.b16 %v205
  %v1195 = vunpack.c.h.b16 %v205
  %v1196 = vunpack.c.l.b16 %v206
  %v1197 = vunpack.c.h.b16 %v206
  %v1198 = vunpack.c.l.b16 %v207
  %v1199 = vunpack.c.h.b16 %v207
  %v1200 = vunpack.c.l.b16 %v208
  %v1201 = vunpack.c.h.b16 %v208
  %v1202 = vunpack.c.l.b16 %v209
  %v1203 = vunpack.c.h.b16 %v209
  %v1204 = vunpack.c.l.b16 %v210
  %v1205 = vunpack.c.h.b16 %v210
  %v1206 = vunpack.c.l.b16 %v211
  %v1207 = vunpack.c.h.b16 %v211
  %v1208 = vunpack.c.l.b16 %v212
  %v1209 = vunpack.c.h.b16 %v212
  %v1210 = vunpack.c.l.b16 %v213
  %v1211 = vunpack.c.h.b16 %v213
  %v1212 = vunpack.c.l.b16 %v214
  %v1213 = vunpack.c.h.b16 %v214
  %v1214 = vunpack.c.l.b16 %v215
  %v1215 = vunpack.c.h.b16 %v215
  %v1216 = vunpack.c.l.b16 %v216
  %v1217 = vunpack.c.h.b16 %v216
  %v1218 = vunpack.c.l.b16 %v217
  %v1219 = vunpack.c.h.b16 %v217
  %v1220 = vunpack.c.l.b16 %v218
  %v1221 = vunpack.c.h.b16 %v218
  %v1222 = vunpack.c.l.b16 %v219
  %v1223 = vunpack.c.h.b16 %v219
  %v1224 = vunpack.c.l.b16 %v220
  %v1225 = vunpack.c.h.b16 %v220
  %v1226 = vunpack.c.l.b16 %v221
  %v1227 = vunpack.c.h.b16 %v221
  %v1228 = vunpack.c.l.b16 %v222
  %v1229 = vunpack.c.h.b16 %v222
  %v1230 = vunpack.c.l.b16 %v223
  %v1231 = vunpack.c.h.b16 %v223
  %v1232 = vunpack.c.l.b16 %v224
  %v1233 = vunpack.c.h.b16 %v224
  %v1234 = vunpack.c.l.b16 %v225
  %v1235 = vunpack.c.h.b16 %v225
  %v1236 = vunpack.c.l.b16 %v226
  %v1237 = vunpack.c.h.b16 %v226
  %v1238 = vunpack.c.l.b16 %v227
  %v1239 = vunpack.c.h.b16 %v227
  %v1240 = vunpack.c.l.b16 %v228
  %v1241 = vunpack.c.h.b16 %v228
  %v1242 = vunpack.c.l.b16 %v229
  %v1243 = vunpack.c.h.b16 %v229
  %v1244 = vunpack.c.l.b16 %v230
  %v1245 = vunpack.c.h.b16 %v230
  %v1246 = vunpack.c.l.b16 %v231
  %v1247 = vunpack.c.h.b16 %v231
  %v1248 = vunpack.c.l.b16 %v232
  %v1249 = vunpack.c.h.b16 %v232
  %v1250 = vunpack.c.l.b16 %v233
  %v1251 = vunpack.c.h.b16 %v233
  %v1252 = vunpack.c.l.b16 %v234
  %v1253 = vunpack.c.h.b16 %v234
  %v1254 = vunpack.c.l.b16 %v235
  %v1255 = vunpack.c.h.b16 %v235
  %v1256 = vunpack.c.l.b16 %v236
  %v1257 = vunpack.c.h.b16 %v236
  %v1258 = vunpack.c.l.b16 %v237
  %v1259 = vunpack.c.h.b16 %v237
  %v1260 = vunpack.c.l.b16 %v238
  %v1261 = vunpack.c.h.b16 %v238
  %v1262 = vunpack.c.l.b16 %v239
  %v1263 = vunpack.c.h.b16 %v239
  %v1264 = vunpack.c.l.b16 %v240
  %v1265 = vunpack.c.h.b16 %v240
  %v1266 = vunpack.c.l.b16 %v241
  %v1267 = vunpack.c.h.b16 %v241
  %v1268 = vunpack.c.l.b16 %v242
  %v1269 = vunpack.c.h.b16 %v242
  %v1270 = vunpack.c.l.b16 %v243
  %v1271 = vunpack.c.h.b16 %v243
  %v1272 = vunpack.c.l.b16 %v244
  %v1273 = vunpack.c.h.b16 %v244
  %v1274 = vunpack.c.l.b16 %v245
  %v1275 = vunpack.c.h.b16 %v245
  %v1276 = vunpack.c.l.b16 %v246
  %v1277 = vunpack.c.h.b16 %v246
  %v1278 = vunpack.c.l.b16 %v247
  %v1279 = vunpack.c.h.b16 %v247
  %v1280 = vunpack.c.l.b16 %v248
  %v1281 = vunpack.c.h.b16 %v248
  %v1282 = vunpack.c.l.b16 %v249
  %v1283 = vunpack.c.h.b16 %v249
  %v1284 = vunpack.c.l.b16 %v250
  %v1285 = vunpack.c.h.b16 %v250
  %v1286 = vunpack.c.l.b16 %v251
  %v1287 = vunpack.c.h.b16 %v251
  %v1288 = vunpack.c.l.b16 %v252
  %v1289 = vunpack.c.h.b16 %v252
  %v1290 = vunpack.c.l.b16 %v253
  %v1291 = vunpack.c.h.b16 %v253
  %v1292 = vunpack.c.l.b16 %v254
  %v1293 = vunpack.c.h.b16 %v254
  %v1294 = vunpack.c.l.b16 %v255
  %v1295 = vunpack.c.h.b16 %v255
  %v1296 = vunpack.c.l.b16 %v256
  %v1297 = vunpack.c.h.b16 %v256
  %v1298 = vunpack.c.l.b16 %v257
  %v1299 = vunpack.c.h.b16 %v257
  %v1300 = vunpack.c.l.b16 %v258
  %v1301 = vunpack.c.h.b16 %v258
  %v1302 = vunpack.c.l.b16 %v259
  %v1303 = vunpack.c.h.b16 %v259
  %v1304 = vunpack.c.l.b16 %v260
  %v1305 = vunpack.c.h.b16 %v260
  %v1306 = vunpack.c.l.b16 %v261
  %v1307 = vunpack.c.h.b16 %v261
  %v1308 = vunpack.c.l.b16 %v262
  %v1309 = vunpack.c.h.b16 %v262
  %v1310 = vunpack.c.l.b16 %v263
  %v1311 = vunpack.c.h.b16 %v263
  %v1312 = vunpack.c.l.b16 %v264
  %v1313 = vunpack.c.h.b16 %v264
  %v1314 = vunpack.c.l.b16 %v265
  %v1315 = vunpack.c.h.b16 %v265
  %v1316 = vunpack.c.l.b16 %v266
  %v1317 = vunpack.c.h.b16 %v266
  %v1318 = vunpack.c.l.b16 %v267
  %v1319 = vunpack.c.h.b16 %v267
  %v1320 = vunpack.c.l.b16 %v268
  %v1321 = vunpack.c.h.b16 %v268
  %v1322 = vunpack.c.l.b16 %v269
  %v1323 = vunpack.c.h.b16 %v269
  %v1324 = vunpack.c.l.b16 %v270
  %v1325 = vunpack.c.h.b16 %v270
  %v1326 = vunpack.c.l.b16 %v271
  %v1327 = vunpack.c.h.b16 %v271
  %v1328 = vunpack.c.l.b16 %v272
  %v1329 = vunpack.c.h.b16 %v272
  %v1330 = vunpack.c.l.b16 %v273
  %v1331 = vunpack.c.h.b16 %v273
  %v1332 = vunpack.c.l.b16 %v274
  %v1333 = vunpack.c.h.b16 %v274
  %v1334 = vunpack.c.l.b16 %v275
  %v1335 = vunpack.c.h.b16 %v275
  %v1336 = vunpack.c.l.b16 %v276
  %v1337 = vunpack.c.h.b16 %v276
  %v1338 = vunpack.c.l.b16 %v277
  %v1339 = vunpack.c.h.b16 %v277
  %v1340 = vunpack.c.l.b16 %v278
  %v1341 = vunpack.c.h.b16 %v278
  %v1342 = vunpack.c.l.b16 %v279
  %v1343 = vunpack.c.h.b16 %v279
  %v1344 = vunpack.c.l.b16 %v280
  %v1345 = vunpack.c.h.b16 %v280
  %v1346 = vunpack.c.l.b16 %v281
  %v1347 = vunpack.c.h.b16 %v281
  %v1348 = vunpack.c.l.b16 %v282
  %v1349 = vunpack.c.h.b16 %v282
  %v1350 = vunpack.c.l.b16 %v283
  %v1351 = vunpack.c.h.b16 %v283
  %v1352 = vunpack.c.l.b16 %v284
  %v1353 = vunpack.c.h.b16 %v284
  %v1354 = vunpack.c.l.b16 %v285
  %v1355 = vunpack.c.h.b16 %v285
  %v1356 = vunpack.c.l.b16 %v286
  %v1357 = vunpack.c.h.b16 %v286
  %v1358 = vunpack.c.l.b16 %v287
  %v1359 = vunpack.c.h.b16 %v287
  %v1360 = vunpack.c.l.b16 %v288
  %v1361 = vunpack.c.h.b16 %v288
  %v1362 = vunpack.c.l.b16 %v289
  %v1363 = vunpack.c.h.b16 %v289
  %v1364 = vunpack.c.l.b16 %v290
  %v1365 = vunpack.c.h.b16 %v290
  %v1366 = vunpack.c.l.b16 %v291
  %v1367 = vunpack.c.h.b16 %v291
  %v1368 = vunpack.c.l.b16 %v292
  %v1369 = vunpack.c.h.b16 %v292
  %v1370 = vunpack.c.l.b16 %v293
  %v1371 = vunpack.c.h.b16 %v293
  %v1372 = vunpack.c.l.b16 %v294
  %v1373 = vunpack.c.h.b16 %v294
  %v1374 = vunpack.c.l.b16 %v295
  %v1375 = vunpack.c.h.b16 %v295
  %v1376 = vunpack.c.l.b16 %v296
  %v1377 = vunpack.c.h.b16 %v296
  %v1378 = vunpack.c.l.b16 %v297
  %v1379 = vunpack.c.h.b16 %v297
  %v1380 = vunpack.c.l.b16 %v298
  %v1381 = vunpack.c.h.b16 %v298
  %v1382 = vunpack.c.l.b16 %v299
  %v1383 = vunpack.c.h.b16 %v299
  %v1384 = vunpack.c.l.b16 %v300
  %v1385 = vunpack.c.h.b16 %v300
  %v1386 = vunpack.c.l.b16 %v301
  %v1387 = vunpack.c.h.b16 %v301
  %v1388 = vunpack.c.l.b16 %v302
  %v1389 = vunpack.c.h.b16 %v302
  %v1390 = vunpack.c.l.b16 %v303
  %v1391 = vunpack.c.h.b16 %v303
  %v1392 = vunpack.c.l.b16 %v304
  %v1393 = vunpack.c.h.b16 %v304
  %v1394 = vunpack.c.l.b16 %v305
  %v1395 = vunpack.c.h.b16 %v305
  %v1396 = vunpack.c.l.b16 %v306
  %v1397 = vunpack.c.h.b16 %v306
  %v1398 = vunpack.c.l.b16 %v307
  %v1399 = vunpack.c.h.b16 %v307
  %v1400 = vunpack.c.l.b16 %v308
  %v1401 = vunpack.c.h.b16 %v308
  %v1402 = vunpack.c.l.b16 %v309
  %v1403 = vunpack.c.h.b16 %v309
  %v1404 = vunpack.c.l.b16 %v310
  %v1405 = vunpack.c.h.b16 %v310
  %v1406 = vunpack.c.l.b16 %v311
  %v1407 = vunpack.c.h.b16 %v311
  %v1408 = vunpack.c.l.b16 %v312
  %v1409 = vunpack.c.h.b16 %v312
  %v1410 = vunpack.c.l.b16 %v313
  %v1411 = vunpack.c.h.b16 %v313
  %v1412 = vunpack.c.l.b16 %v314
  %v1413 = vunpack.c.h.b16 %v314
  %v1414 = vunpack.c.l.b16 %v315
  %v1415 = vunpack.c.h.b16 %v315
  %v1416 = vunpack.c.l.b16 %v316
  %v1417 = vunpack.c.h.b16 %v316
  %v1418 = vunpack.c.l.b16 %v317
  %v1419 = vunpack.c.h.b16 %v317
  %v1420 = vunpack.c.l.b16 %v318
  %v1421 = vunpack.c.h.b16 %v318
  %v1422 = vunpack.c.l.b16 %v319
  %v1423 = vunpack.c.h.b16 %v319
  %v1424 = vunpack.c.l.b16 %v320
  %v1425 = vunpack.c.h.b16 %v320
  %v1426 = vunpack.c.l.b16 %v321
  %v1427 = vunpack.c.h.b16 %v321
  %v1428 = vunpack.c.l.b16 %v322
  %v1429 = vunpack.c.h.b16 %v322
  %v1430 = vunpack.c.l.b16 %v323
  %v1431 = vunpack.c.h.b16 %v323
  %v1432 = vunpack.c.l.b16 %v324
  %v1433 = vunpack.c.h.b16 %v324
  %v1434 = vunpack.c.l.b16 %v325
  %v1435 = vunpack.c.h.b16 %v325
  %v1436 = vunpack.c.l.b16 %v326
  %v1437 = vunpack.c.h.b16 %v326
  %v1438 = vunpack.c.l.b16 %v327
  %v1439 = vunpack.c.h.b16 %v327
  %v1440 = vunpack.c.l.b16 %v328
  %v1441 = vunpack.c.h.b16 %v328
  %v1442 = vunpack.c.l.b16 %v329
  %v1443 = vunpack.c.h.b16 %v329
  %v1444 = vunpack.c.l.b16 %v330
  %v1445 = vunpack.c.h.b16 %v330
  %v1446 = vunpack.c.l.b16 %v331
  %v1447 = vunpack.c.h.b16 %v331
  %v1448 = vunpack.c.l.b16 %v332
  %v1449 = vunpack.c.h.b16 %v332
  %v1450 = vunpack.c.l.b16 %v333
  %v1451 = vunpack.c.h.b16 %v333
  %v1452 = vunpack.c.l.b16 %v334
  %v1453 = vunpack.c.h.b16 %v334
  %v1454 = vunpack.c.l.b16 %v335
  %v1455 = vunpack.c.h.b16 %v335
  %v1456 = vunpack.c.l.b16 %v336
  %v1457 = vunpack.c.h.b16 %v336
  %v1458 = vunpack.c.l.b16 %v337
  %v1459 = vunpack.c.h.b16 %v337
  %v1460 = vunpack.c.l.b16 %v338
  %v1461 = vunpack.c.h.b16 %v338
  %v1462 = vunpack.c.l.b16 %v339
  %v1463 = vunpack.c.h.b16 %v339
  %v1464 = vunpack.c.l.b16 %v340
  %v1465 = vunpack.c.h.b16 %v340
  %v1466 = vunpack.c.l.b16 %v341
  %v1467 = vunpack.c.h.b16 %v341
  %v1468 = vunpack.c.l.b16 %v342
  %v1469 = vunpack.c.h.b16 %v342
  %v1470 = vunpack.c.l.b16 %v343
  %v1471 = vunpack.c.h.b16 %v343
  %v1472 = vunpack.c.l.b16 %v344
  %v1473 = vunpack.c.h.b16 %v344
  %v1474 = vunpack.c.l.b16 %v345
  %v1475 = vunpack.c.h.b16 %v345
  %v1476 = vunpack.c.l.b16 %v346
  %v1477 = vunpack.c.h.b16 %v346
  %v1478 = vunpack.c.l.b16 %v347
  %v1479 = vunpack.c.h.b16 %v347
  %v1480 = vunpack.c.l.b16 %v348
  %v1481 = vunpack.c.h.b16 %v348
  %v1482 = vunpack.c.l.b16 %v349
  %v1483 = vunpack.c.h.b16 %v349
  %v1484 = vunpack.c.l.b16 %v350
  %v1485 = vunpack.c.h.b16 %v350
  %v1486 = vunpack.c.l.b16 %v351
  %v1487 = vunpack.c.h.b16 %v351
  %v1488 = vunpack.c.l.b16 %v352
  %v1489 = vunpack.c.h.b16 %v352
  %v1490 = vunpack.c.l.b16 %v353
  %v1491 = vunpack.c.h.b16 %v353
  %v1492 = vunpack.c.l.b16 %v354
  %v1493 = vunpack.c.h.b16 %v354
  %v1494 = vunpack.c.l.b16 %v355
  %v1495 = vunpack.c.h.b16 %v355
  %v1496 = vunpack.c.l.b16 %v356
  %v1497 = vunpack.c.h.b16 %v356
  %v1498 = vunpack.c.l.b16 %v357
  %v1499 = vunpack.c.h.b16 %v357
  %v1500 = vunpack.c.l.b16 %v358
  %v1501 = vunpack.c.h.b16 %v358
  %v1502 = vunpack.c.l.b16 %v359
  %v1503 = vunpack.c.h.b16 %v359
  %v1504 = vunpack.c.l.b16 %v360
  %v1505 = vunpack.c.h.b16 %v360
  %v1506 = vunpack.c.l.b16 %v361
  %v1507 = vunpack.c.h.b16 %v361
  %v1508 = vunpack.c.l.b16 %v362
  %v1509 = vunpack.c.h.b16 %v362
  %v1510 = vunpack.c.l.b16 %v363
  %v1511 = vunpack.c.h.b16 %v363
  %v1512 = vunpack.c.l.b16 %v364
  %v1513 = vunpack.c.h.b16 %v364
  %v1514 = vunpack.c.l.b16 %v365
  %v1515 = vunpack.c.h.b16 %v365
  %v1516 = vunpack.c.l.b16 %v366
  %v1517 = vunpack.c.h.b16 %v366
  %v1518 = vunpack.c.l.b16 %v367
  %v1519 = vunpack.c.h.b16 %v367
  %v1520 = vunpack.c.l.b16 %v368
  %v1521 = vunpack.c.h.b16 %v368
  %v1522 = vunpack.c.l.b16 %v369
  %v1523 = vunpack.c.h.b16 %v369
  %v1524 = vunpack.c.l.b16 %v370
  %v1525 = vunpack.c.h.b16 %v370
  %v1526 = vunpack.c.l.b16 %v371
  %v1527 = vunpack.c.h.b16 %v371
  %v1528 = vunpack.c.l.b16 %v372
  %v1529 = vunpack.c.h.b16 %v372
  %v1530 = vunpack.c.l.b16 %v373
  %v1531 = vunpack.c.h.b16 %v373
  %v1532 = vunpack.c.l.b16 %v374
  %v1533 = vunpack.c.h.b16 %v374
  %v1534 = vunpack.c.l.b16 %v375
  %v1535 = vunpack.c.h.b16 %v375
  %v1536 = vunpack.c.l.b16 %v376
  %v1537 = vunpack.c.h.b16 %v376
  %v1538 = vunpack.c.l.b16 %v377
  %v1539 = vunpack.c.h.b16 %v377
  %v1540 = vunpack.c.l.b16 %v378
  %v1541 = vunpack.c.h.b16 %v378
  %v1542 = vunpack.c.l.b16 %v379
  %v1543 = vunpack.c.h.b16 %v379
  %v1544 = vunpack.c.l.b16 %v380
  %v1545 = vunpack.c.h.b16 %v380
  %v1546 = vunpack.c.l.b16 %v381
  %v1547 = vunpack.c.h.b16 %v381
  %v1548 = vunpack.c.l.b16 %v382
  %v1549 = vunpack.c.h.b16 %v382
  %v1550 = vunpack.c.l.b16 %v383
  %v1551 = vunpack.c.h.b16 %v383
  %v1552 = vunpack.c.l.b16 %v384
  %v1553 = vunpack.c.h.b16 %v384
  %v1554 = vunpack.c.l.b16 %v385
  %v1555 = vunpack.c.h.b16 %v385
  %v1556 = vpack.c.b16 %v1168, %v1164
  %v1557 = vpack.c.b16 %v1169, %v1165
  %v1558 = vpack.c.b16 %v1170, %v1166
  %v1559 = vpack.c.b16 %v1171, %v1167
  %v1560 = vpack.c.b16 %v1176, %v1172
  %v1561 = vpack.c.b16 %v1177, %v1173
  %v1562 = vpack.c.b16 %v1178, %v1174
  %v1563 = vpack.c.b16 %v1179, %v1175
  %v1564 = vpack.c.b16 %v1184, %v1180
  %v1565 = vpack.c.b16 %v1185, %v1181
  %v1566 = vpack.c.b16 %v1186, %v1182
  %v1567 = vpack.c.b16 %v1187, %v1183
  %v1568 = vpack.c.b16 %v1192, %v1188
  %v1569 = vpack.c.b16 %v1193, %v1189
  %v1570 = vpack.c.b16 %v1194, %v1190
  %v1571 = vpack.c.b16 %v1195, %v1191
  %v1572 = vpack.c.b16 %v1200, %v1196
  %v1573 = vpack.c.b16 %v1201, %v1197
  %v1574 = vpack.c.b16 %v1202, %v1198
  %v1575 = vpack.c.b16 %v1203, %v1199
  %v1576 = vpack.c.b16 %v1208, %v1204
  %v1577 = vpack.c.b16 %v1209, %v1205
  %v1578 = vpack.c.b16 %v1210, %v1206
  %v1579 = vpack.c.b16 %v1211, %v1207
  %v1580 = vpack.c.b16 %v1216, %v1212
  %v1581 = vpack.c.b16 %v1217, %v1213
  %v1582 = vpack.c.b16 %v1218, %v1214
  %v1583 = vpack.c.b16 %v1219, %v1215
  %v1584 = vpack.c.b16 %v1224, %v1220
  %v1585 = vpack.c.b16 %v1225, %v1221
  %v1586 = vpack.c.b16 %v1226, %v1222
  %v1587 = vpack.c.b16 %v1227, %v1223
  %v1588 = vpack.c.b16 %v1232, %v1228
  %v1589 = vpack.c.b16 %v1233, %v1229
  %v1590 = vpack.c.b16 %v1234, %v1230
  %v1591 = vpack.c.b16 %v1235, %v1231
  %v1592 = vpack.c.b16 %v1240, %v1236
  %v1593 = vpack.c.b16 %v1241, %v1237
  %v1594 = vpack.c.b16 %v1242, %v1238
  %v1595 = vpack.c.b16 %v1243, %v1239
  %v1596 = vpack.c.b16 %v1248, %v1244
  %v1597 = vpack.c.b16 %v1249, %v1245
  %v1598 = vpack.c.b16 %v1250, %v1246
  %v1599 = vpack.c.b16 %v1251, %v1247
  %v1600 = vpack.c.b16 %v1256, %v1252
  %v1601 = vpack.c.b16 %v1257, %v1253
  %v1602 = vpack.c.b16 %v1258, %v1254
  %v1603 = vpack.c.b16 %v1259, %v1255
  %v1604 = vpack.c.b16 %v1264, %v1260
  %v1605 = vpack.c.b16 %v1265, %v1261
  %v1606 = vpack.c.b16 %v1266, %v1262
  %v1607 = vpack.c.b16 %v1267, %v1263
  %v1608 = vpack.c.b16 %v1272, %v1268
  %v1609 = vpack.c.b16 %v1273, %v1269
  %v1610 = vpack.c.b16 %v1274, %v1270
  %v1611 = vpack.c.b16 %v1275, %v1271
  %v1612 = vpack.c.b16 %v1280, %v1276
  %v1613 = vpack.c.b16 %v1281, %v1277
  %v1614 = vpack.c.b16 %v1282, %v1278
  %v1615 = vpack.c.b16 %v1283, %v1279
  %v1616 = vpack.c.b16 %v1288, %v1284
  %v1617 = vpack.c.b16 %v1289, %v1285
  %v1618 = vpack.c.b16 %v1290, %v1286
  %v1619 = vpack.c.b16 %v1291, %v1287
  %v1620 = vpack.c.b16 %v1296, %v1292
  %v1621 = vpack.c.b16 %v1297, %v1293
  %v1622 = vpack.c.b16 %v1298, %v1294
  %v1623 = vpack.c.b16 %v1299, %v1295
  %v1624 = vpack.c.b16 %v1304, %v1300
  %v1625 = vpack.c.b16 %v1305, %v1301
  %v1626 = vpack.c.b16 %v1306, %v1302
  %v1627 = vpack.c.b16 %v1307, %v1303
  %v1628 = vpack.c.b16 %v1312, %v1308
  %v1629 = vpack.c.b16 %v1313, %v1309
  %v1630 = vpack.c.b16 %v1314, %v1310
  %v1631 = vpack.c.b16 %v1315, %v1311
  %v1632 = vpack.c.b16 %v1320, %v1316
  %v1633 = vpack.c.b16 %v1321, %v1317
  %v1634 = vpack.c.b16 %v1322, %v1318
  %v1635 = vpack.c.b16 %v1323, %v1319
  %v1636 = vpack.c.b16 %v1328, %v1324
  %v1637 = vpack.c.b16 %v1329, %v1325
  %v1638 = vpack.c.b16 %v1330, %v1326
  %v1639 = vpack.c.b16 %v1331, %v1327
  %v1640 = vpack.c.b16 %v1336, %v1332
  %v1641 = vpack.c.b16 %v1337, %v1333
  %v1642 = vpack.c.b16 %v1338, %v1334
  %v1643 = vpack.c.b16 %v1339, %v1335
  %v1644 = vpack.c.b16 %v1344, %v1340
  %v1645 = vpack.c.b16 %v1345, %v1341
  %v1646 = vpack.c.b16 %v1346, %v1342
  %v1647 = vpack.c.b16 %v1347, %v1343
  %v1648 = vpack.c.b16 %v1352, %v1348
  %v1649 = vpack.c.b16 %v1353, %v1349
  %v1650 = vpack.c.b16 %v1354, %v1350
  %v1651 = vpack.c.b16 %v1355, %v1351
  %v1652 = vpack.c.b16 %v1360, %v1356
  %v1653 = vpack.c.b16 %v1361, %v1357
  %v1654 = vpack.c.b16 %v1362, %v1358
  %v1655 = vpack.c.b16 %v1363, %v1359
  %v1656 = vpack.c.b16 %v1368, %v1364
  %v1657 = vpack.c.b16 %v1369, %v1365
  %v1658 = vpack.c.b16 %v1370, %v1366
  %v1659 = vpack.c.b16 %v1371, %v1367
  %v1660 = vpack.c.b16 %v1376, %v1372
  %v1661 = vpack.c.b16 %v1377, %v1373
  %v1662 = vpack.c.b16 %v1378, %v1374
  %v1663 = vpack.c.b16 %v1379, %v1375
  %v1664 = vpack.c.b16 %v1384, %v1380
  %v1665 = vpack.c.b16 %v1385, %v1381
  %v1666 = vpack.c.b16 %v1386, %v1382
  %v1667 = vpack.c.b16 %v1387, %v1383
  %v1668 = vpack.c.b16 %v1392, %v1388
  %v1669 = vpack.c.b16 %v1393, %v1389
  %v1670 = vpack.c.b16 %v1394, %v1390
  %v1671 = vpack.c.b16 %v1395, %v1391
  %v1672 = vpack.c.b16 %v1400, %v1396
  %v1673 = vpack.c.b16 %v1401, %v1397
  %v1674 = vpack.c.b16 %v1402, %v1398
  %v1675 = vpack.c.b16 %v1403, %v1399
  %v1676 = vpack.c.b16 %v1408, %v1404
  %v1677 = vpack.c.b16 %v1409, %v1405
  %v1678 = vpack.c.b16 %v1410, %v1406
  %v1679 = vpack.c.b16 %v1411, %v1407
  %v1680 = vpack.c.b16 %v1416, %v1412
  %v1681 = vpack.c.b16 %v1417, %v1413
  %v1682 = vpack.c.b16 %v1418, %v1414
  %v1683 = vpack.c.b16 %v1419, %v1415
  %v1684 = vpack.c.b16 %v1424, %v1420
  %v1685 = vpack.c.b16 %v1425, %v1421
  %v1686 = vpack.c.b16 %v1426, %v1422
  %v1687 = vpack.c.b16 %v1427, %v1423
  %v1688 = vpack.c.b16 %v1432, %v1428
  %v1689 = vpack.c.b16 %v1433, %v1429
  %v1690 = vpack.c.b16 %v1434, %v1430
  %v1691 = vpack.c.b16 %v1435, %v1431
  %v1692 = vpack.c.b16 %v1440, %v1436
  %v1693 = vpack.c.b16 %v1441, %v1437
  %v1694 = vpack.c.b16 %v1442, %v1438
  %v1695 = vpack.c.b16 %v1443, %v1439
  %v1696 = vpack.c.b16 %v1448, %v1444
  %v1697 = vpack.c.b16 %v1449, %v1445
  %v1698 = vpack.c.b16 %v1450, %v1446
  %v1699 = vpack.c.b16 %v1451, %v1447
  %v1700 = vpack.c.b16 %v1456, %v1452
  %v1701 = vpack.c.b16 %v1457, %v1453
  %v1702 = vpack.c.b16 %v1458, %v1454
  %v1703 = vpack.c.b16 %v1459, %v1455
  %v1704 = vpack.c.b16 %v1464, %v1460
  %v1705 = vpack.c.b16 %v1465, %v1461
  %v1706 = vpack.c.b16 %v1466, %v1462
  %v1707 = vpack.c.b16 %v1467, %v1463
  %v1708 = vpack.c.b16 %v1472, %v1468
  %v1709 = vpack.c.b16 %v1473, %v1469
  %v1710 = vpack.c.b16 %v1474, %v1470
  %v1711 = vpack.c.b16 %v1475, %v1471
  %v1712 = vpack.c.b16 %v1480, %v1476
  %v1713 = vpack.c.b16 %v1481, %v1477
  %v1714 = vpack.c.b16 %v1482, %v1478
  %v1715 = vpack.c.b16 %v1483, %v1479
  %v1716 = vpack.c.b16 %v1488, %v1484
  %v1717 = vpack.c.b16 %v1489, %v1485
  %v1718 = vpack.c.b16 %v1490, %v1486
  %v1719 = vpack.c.b16 %v1491, %v1487
  %v1720 = vpack.c.b16 %v1496, %v1492
  %v1721 = vpack.c.b16 %v1497, %v1493
  %v1722 = vpack.c.b16 %v1498, %v1494
  %v1723 = vpack.c.b16 %v1499, %v1495
  %v1724 = vpack.c.b16 %v1504, %v1500
  %v1725 = vpack.c.b16 %v1505, %v1501
  %v1726 = vpack.c.b16 %v1506, %v1502
  %v1727 = vpack.c.b16 %v1507, %v1503
  %v1728 = vpack.c.b16 %v1512, %v1508
  %v1729 = vpack.c.b16 %v1513, %v1509
  %v1730 = vpack.c.b16 %v1514, %v1510
  %v1731 = vpack.c.b16 %v1515, %v1511
  %v1732 = vpack.c.b16 %v1520, %v1516
  %v1733 = vpack.c.b16 %v1521, %v1517
  %v1734 = vpack.c.b16 %v1522, %v1518
  %v1735 = vpack.c.b16 %v1523, %v1519
  %v1736 = vpack.c.b16 %v1528, %v1524
  %v1737 = vpack.c.b16 %v1529, %v1525
  %v1738 = vpack.c.b16 %v1530, %v1526
  %v1739 = vpack.c.b16 %v1531, %v1527
  %v1740 = vpack.c.b16 %v1536, %v1532
  %v1741 = vpack.c.b16 %v1537, %v1533
  %v1742 = vpack.c.b16 %v1538, %v1534
  %v1743 = vpack.c.b16 %v1539, %v1535
  %v1744 = vpack.c.b16 %v1544, %v1540
  %v1745 = vpack.c.b16 %v1545, %v1541
  %v1746 = vpack.c.b16 %v1546, %v1542
  %v1747 = vpack.c.b16 %v1547, %v1543
  %v1748 = vpack.c.b16 %v1552, %v1548
  %v1749 = vpack.c.b16 %v1553, %v1549
  %v1750 = vpack.c.b16 %v1554, %v1550
  %v1751 = vpack.c.b16 %v1555, %v1551
  %vm1948 = vcmask 130048
  %v1950 = vsel %vm1948, %v766, 0
  %v1953 = vsel %vm1948, %v773, 0
  %v1956 = vsel %vm1948, %v780, 0
  %v1959 = vsel %vm1948, %v787, 0
  %v1962 = vsel %vm1948, %v794, 0
  %v1965 = vsel %vm1948, %v801, 0
  %v1968 = vsel %vm1948, %v808, 0
  %v1971 = vsel %vm1948, %v815, 0
  %v1974 = vsel %vm1948, %v822, 0
  %v1977 = vsel %vm1948, %v829, 0
  %v1980 = vsel %vm1948, %v836, 0
  %v1983 = vsel %vm1948, %v843, 0
  %v1986 = vsel %vm1948, %v850, 0
  %v1989 = vsel %vm1948, %v857, 0
  %v1992 = vsel %vm1948, %v864, 0
  %v1995 = vsel %vm1948, %v871, 0
  %1997 = vmatprep.subr.bf16.mxu0 %v1557
  %1998 = vmatpush1.bf16.msra.mxu0 %v1556
  %1999 = vmatprep.subr.bf16.mxu0 %v1561
  %2000 = vmatpush1.bf16.msra.mxu0 %v1560
  %2001 = vmatprep.subr.bf16.mxu0 %v1565
  %2002 = vmatpush1.bf16.msra.mxu0 %v1564
  %2003 = vmatprep.subr.bf16.mxu0 %v1569
  %2004 = vmatpush1.bf16.msra.mxu0 %v1568
  %2005 = vmatprep.subr.bf16.mxu0 %v1573
  %2006 = vmatpush1.bf16.msra.mxu0 %v1572
  %2007 = vmatprep.subr.bf16.mxu0 %v1577
  %2008 = vmatpush1.bf16.msra.mxu0 %v1576
  %2009 = vmatprep.subr.bf16.mxu0 %v1581
  %2010 = vmatpush1.bf16.msra.mxu0 %v1580
  %2011 = vmatprep.subr.bf16.mxu0 %v1585
  %2012 = vmatpush1.bf16.msra.mxu0 %v1584
  %2013 = vmatprep.subr.bf16.mxu0 %v1589
  %2014 = vmatpush1.bf16.msra.mxu0 %v1588
  %2015 = vmatprep.subr.bf16.mxu0 %v1593
  %2016 = vmatpush1.bf16.msra.mxu0 %v1592
  %2017 = vmatprep.subr.bf16.mxu0 %v1597
  %2018 = vmatpush1.bf16.msra.mxu0 %v1596
  %2019 = vmatprep.subr.bf16.mxu0 %v1601
  %2020 = vmatpush1.bf16.msra.mxu0 %v1600
  %2021 = vmatprep.subr.bf16.mxu0 %v1605
  %2022 = vmatpush1.bf16.msra.mxu0 %v1604
  %2023 = vmatprep.subr.bf16.mxu0 %v1609
  %2024 = vmatpush1.bf16.msra.mxu0 %v1608
  %2025 = vmatprep.subr.bf16.mxu0 %v1613
  %2026 = vmatpush1.bf16.msra.mxu0 %v1612
  %2027 = vmatprep.subr.bf16.mxu0 %v1617
  %2028 = vmatpush1.bf16.msra.mxu0 %v1616
  %2029 = vmatprep.mubr.bf16.mxu0 %v761
  %2030 = vmatmul.mubr.bf16.gmra.mrb[0].mxu0 %v760
  %v2031 = vpop.f32.mrb[0].mxu0
  %v2032 = vadd.f32 %v391, %v2031
  %v2033 = vpop.f32.mrb[0].mxu0
  %v2034 = vadd.f32 %v395, %v2033
  %v2035 = vpop.f32.mrb[0].mxu0
  %v2036 = vadd.f32 %v391, %v2035
  %v2037 = vpop.f32.mrb[0].mxu0
  %v2038 = vadd.f32 %v395, %v2037
  %2039 = vmatprep.mubr.bf16.mxu0 %v768
  %2040 = vmatmul.mubr.bf16.gmra.mrb[0].mxu0 %v767
  %v2041 = vpop.f32.mrb[0].mxu0
  %v2042 = vadd.f32 %v391, %v2041
  %v2043 = vpop.f32.mrb[0].mxu0
  %v2044 = vadd.f32 %v395, %v2043
  %v2045 = vpop.f32.mrb[0].mxu0
  %v2046 = vadd.f32 %v391, %v2045
  %v2047 = vpop.f32.mrb[0].mxu0
  %v2048 = vadd.f32 %v395, %v2047
  %2049 = vmatprep.mubr.bf16.mxu0 %v775
  %2050 = vmatmul.mubr.bf16.gmra.mrb[0].mxu0 %v774
  %v2051 = vpop.f32.mrb[0].mxu0
  %v2052 = vadd.f32 %v391, %v2051
  %v2053 = vpop.f32.mrb[0].mxu0
  %v2054 = vadd.f32 %v395, %v2053
  %v2055 = vpop.f32.mrb[0].mxu0
  %v2056 = vadd.f32 %v391, %v2055
  %v2057 = vpop.f32.mrb[0].mxu0
  %v2058 = vadd.f32 %v395, %v2057
  %2059 = vmatprep.mubr.bf16.mxu0 %v782
  %2060 = vmatmul.mubr.bf16.gmra.mrb[0].mxu0 %v781
  %v2061 = vpop.f32.mrb[0].mxu0
  %v2062 = vadd.f32 %v391, %v2061
  %v2063 = vpop.f32.mrb[0].mxu0
  %v2064 = vadd.f32 %v395, %v2063
  %v2065 = vpop.f32.mrb[0].mxu0
  %v2066 = vadd.f32 %v391, %v2065
  %v2067 = vpop.f32.mrb[0].mxu0
  %v2068 = vadd.f32 %v395, %v2067
  %2069 = vmatprep.mubr.bf16.mxu0 %v789
  %2070 = vmatmul.mubr.bf16.gmra.mrb[0].mxu0 %v788
  %v2071 = vpop.f32.mrb[0].mxu0
  %v2072 = vadd.f32 %v391, %v2071
  %v2073 = vpop.f32.mrb[0].mxu0
  %v2074 = vadd.f32 %v395, %v2073
  %v2075 = vpop.f32.mrb[0].mxu0
  %v2076 = vadd.f32 %v391, %v2075
  %v2077 = vpop.f32.mrb[0].mxu0
  %v2078 = vadd.f32 %v395, %v2077
  %2079 = vmatprep.mubr.bf16.mxu0 %v796
  %2080 = vmatmul.mubr.bf16.gmra.mrb[0].mxu0 %v795
  %v2081 = vpop.f32.mrb[0].mxu0
  %v2082 = vadd.f32 %v391, %v2081
  %v2083 = vpop.f32.mrb[0].mxu0
  %v2084 = vadd.f32 %v395, %v2083
  %v2085 = vpop.f32.mrb[0].mxu0
  %v2086 = vadd.f32 %v391, %v2085
  %v2087 = vpop.f32.mrb[0].mxu0
  %v2088 = vadd.f32 %v395, %v2087
  %2089 = vmatprep.mubr.bf16.mxu0 %v803
  %2090 = vmatmul.mubr.bf16.gmra.mrb[0].mxu0 %v802
  %v2091 = vpop.f32.mrb[0].mxu0
  %v2092 = vadd.f32 %v391, %v2091
  %v2093 = vpop.f32.mrb[0].mxu0
  %v2094 = vadd.f32 %v395, %v2093
  %v2095 = vpop.f32.mrb[0].mxu0
  %v2096 = vadd.f32 %v391, %v2095
  %v2097 = vpop.f32.mrb[0].mxu0
  %v2098 = vadd.f32 %v395, %v2097
  %2099 = vmatprep.mubr.bf16.mxu0 %v810
  %2100 = vmatmul.mubr.bf16.gmra.mrb[0].mxu0 %v809
  %v2101 = vpop.f32.mrb[0].mxu0
  %v2102 = vadd.f32 %v391, %v2101
  %v2103 = vpop.f32.mrb[0].mxu0
  %v2104 = vadd.f32 %v395, %v2103
  %v2105 = vpop.f32.mrb[0].mxu0
  %v2106 = vadd.f32 %v391, %v2105
  %v2107 = vpop.f32.mrb[0].mxu0
  %v2108 = vadd.f32 %v395, %v2107
  %2109 = vmatprep.mubr.bf16.mxu0 %v817
  %2110 = vmatmul.mubr.bf16.gmra.mrb[0].mxu0 %v816
  %v2111 = vpop.f32.mrb[0].mxu0
  %v2112 = vadd.f32 %v391, %v2111
  %v2113 = vpop.f32.mrb[0].mxu0
  %v2114 = vadd.f32 %v395, %v2113
  %v2115 = vpop.f32.mrb[0].mxu0
  %v2116 = vadd.f32 %v391, %v2115
  %v2117 = vpop.f32.mrb[0].mxu0
  %v2118 = vadd.f32 %v395, %v2117
  %2119 = vmatprep.mubr.bf16.mxu0 %v824
  %2120 = vmatmul.mubr.bf16.gmra.mrb[0].mxu0 %v823
  %v2121 = vpop.f32.mrb[0].mxu0
  %v2122 = vadd.f32 %v391, %v2121
  %v2123 = vpop.f32.mrb[0].mxu0
  %v2124 = vadd.f32 %v395, %v2123
  %v2125 = vpop.f32.mrb[0].mxu0
  %v2126 = vadd.f32 %v391, %v2125
  %v2127 = vpop.f32.mrb[0].mxu0
  %v2128 = vadd.f32 %v395, %v2127
  %2129 = vmatprep.mubr.bf16.mxu0 %v831
  %2130 = vmatmul.mubr.bf16.gmra.mrb[0].mxu0 %v830
  %v2131 = vpop.f32.mrb[0].mxu0
  %v2132 = vadd.f32 %v391, %v2131
  %v2133 = vpop.f32.mrb[0].mxu0
  %v2134 = vadd.f32 %v395, %v2133
  %v2135 = vpop.f32.mrb[0].mxu0
  %v2136 = vadd.f32 %v391, %v2135
  %v2137 = vpop.f32.mrb[0].mxu0
  %v2138 = vadd.f32 %v395, %v2137
  %2139 = vmatprep.mubr.bf16.mxu0 %v838
  %2140 = vmatmul.mubr.bf16.gmra.mrb[0].mxu0 %v837
  %v2141 = vpop.f32.mrb[0].mxu0
  %v2142 = vadd.f32 %v391, %v2141
  %v2143 = vpop.f32.mrb[0].mxu0
  %v2144 = vadd.f32 %v395, %v2143
  %v2145 = vpop.f32.mrb[0].mxu0
  %v2146 = vadd.f32 %v391, %v2145
  %v2147 = vpop.f32.mrb[0].mxu0
  %v2148 = vadd.f32 %v395, %v2147
  %2149 = vmatprep.mubr.bf16.mxu0 %v845
  %2150 = vmatmul.mubr.bf16.gmra.mrb[0].mxu0 %v844
  %v2151 = vpop.f32.mrb[0].mxu0
  %v2152 = vadd.f32 %v391, %v2151
  %v2153 = vpop.f32.mrb[0].mxu0
  %v2154 = vadd.f32 %v395, %v2153
  %v2155 = vpop.f32.mrb[0].mxu0
  %v2156 = vadd.f32 %v391, %v2155
  %v2157 = vpop.f32.mrb[0].mxu0
  %v2158 = vadd.f32 %v395, %v2157
  %2159 = vmatprep.mubr.bf16.mxu0 %v852
  %2160 = vmatmul.mubr.bf16.gmra.mrb[0].mxu0 %v851
  %v2161 = vpop.f32.mrb[0].mxu0
  %v2162 = vadd.f32 %v391, %v2161
  %v2163 = vpop.f32.mrb[0].mxu0
  %v2164 = vadd.f32 %v395, %v2163
  %v2165 = vpop.f32.mrb[0].mxu0
  %v2166 = vadd.f32 %v391, %v2165
  %v2167 = vpop.f32.mrb[0].mxu0
  %v2168 = vadd.f32 %v395, %v2167
  %2169 = vmatprep.mubr.bf16.mxu0 %v859
  %2170 = vmatmul.mubr.bf16.gmra.mrb[0].mxu0 %v858
  %v2171 = vpop.f32.mrb[0].mxu0
  %v2172 = vadd.f32 %v391, %v2171
  %v2173 = vpop.f32.mrb[0].mxu0
  %v2174 = vadd.f32 %v395, %v2173
  %v2175 = vpop.f32.mrb[0].mxu0
  %v2176 = vadd.f32 %v391, %v2175
  %v2177 = vpop.f32.mrb[0].mxu0
  %v2178 = vadd.f32 %v395, %v2177
  %2179 = vmatprep.mubr.bf16.mxu0 %v866
  %2180 = vmatmul.mubr.bf16.gmra.mrb[0].mxu0 %v865
  %v2181 = vpop.f32.mrb[0].mxu0
  %v2182 = vadd.f32 %v391, %v2181
  %v2183 = vpop.f32.mrb[0].mxu0
  %v2184 = vadd.f32 %v395, %v2183
  %v2185 = vpop.f32.mrb[0].mxu0
  %v2186 = vadd.f32 %v391, %v2185
  %v2187 = vpop.f32.mrb[0].mxu0
  %v2188 = vadd.f32 %v395, %v2187
  %2189 = vdwg.mxu0
  %2190 = vmatprep.subr.bf16.mxu0 %v1621
  %2191 = vmatpush1.bf16.msra.mxu0 %v1620
  %2192 = vmatprep.subr.bf16.mxu0 %v1625
  %2193 = vmatpush1.bf16.msra.mxu0 %v1624
  %2194 = vmatprep.subr.bf16.mxu0 %v1629
  %2195 = vmatpush1.bf16.msra.mxu0 %v1628
  %2196 = vmatprep.subr.bf16.mxu0 %v1633
  %2197 = vmatpush1.bf16.msra.mxu0 %v1632
  %2198 = vmatprep.subr.bf16.mxu0 %v1637
  %2199 = vmatpush1.bf16.msra.mxu0 %v1636
  %2200 = vmatprep.subr.bf16.mxu0 %v1641
  %2201 = vmatpush1.bf16.msra.mxu0 %v1640
  %2202 = vmatprep.subr.bf16.mxu0 %v1645
  %2203 = vmatpush1.bf16.msra.mxu0 %v1644
  %2204 = vmatprep.subr.bf16.mxu0 %v1649
  %2205 = vmatpush1.bf16.msra.mxu0 %v1648
  %2206 = vmatprep.subr.bf16.mxu0 %v1653
  %2207 = vmatpush1.bf16.msra.mxu0 %v1652
  %2208 = vmatprep.subr.bf16.mxu0 %v1657
  %2209 = vmatpush1.bf16.msra.mxu0 %v1656
  %2210 = vmatprep.subr.bf16.mxu0 %v1661
  %2211 = vmatpush1.bf16.msra.mxu0 %v1660
  %2212 = vmatprep.subr.bf16.mxu0 %v1665
  %2213 = vmatpush1.bf16.msra.mxu0 %v1664
  %2214 = vmatprep.subr.bf16.mxu0 %v1669
  %2215 = vmatpush1.bf16.msra.mxu0 %v1668
  %2216 = vmatprep.subr.bf16.mxu0 %v1673
  %2217 = vmatpush1.bf16.msra.mxu0 %v1672
  %2218 = vmatprep.subr.bf16.mxu0 %v1677
  %2219 = vmatpush1.bf16.msra.mxu0 %v1676
  %2220 = vmatprep.subr.bf16.mxu0 %v1681
  %2221 = vmatpush1.bf16.msra.mxu0 %v1680
  %2222 = vmatprep.mubr.bf16.mxu0 %v763
  %2223 = vmatmul.mubr.bf16.gmra.mrb[0].mxu0 %v762
  %v2224 = vpop.f32.mrb[0].mxu0
  %v2225 = vadd.f32 %v2032, %v2224
  %v2226 = vpop.f32.mrb[0].mxu0
  %v2227 = vadd.f32 %v2034, %v2226
  %v2228 = vpop.f32.mrb[0].mxu0
  %v2229 = vadd.f32 %v2036, %v2228
  %v2230 = vpop.f32.mrb[0].mxu0
  %v2231 = vadd.f32 %v2038, %v2230
  %2232 = vmatprep.mubr.bf16.mxu0 %v770
  %2233 = vmatmul.mubr.bf16.gmra.mrb[0].mxu0 %v769
  %v2234 = vpop.f32.mrb[0].mxu0
  %v2235 = vadd.f32 %v2042, %v2234
  %v2236 = vpop.f32.mrb[0].mxu0
  %v2237 = vadd.f32 %v2044, %v2236
  %v2238 = vpop.f32.mrb[0].mxu0
  %v2239 = vadd.f32 %v2046, %v2238
  %v2240 = vpop.f32.mrb[0].mxu0
  %v2241 = vadd.f32 %v2048, %v2240
  %2242 = vmatprep.mubr.bf16.mxu0 %v777
  %2243 = vmatmul.mubr.bf16.gmra.mrb[0].mxu0 %v776
  %v2244 = vpop.f32.mrb[0].mxu0
  %v2245 = vadd.f32 %v2052, %v2244
  %v2246 = vpop.f32.mrb[0].mxu0
  %v2247 = vadd.f32 %v2054, %v2246
  %v2248 = vpop.f32.mrb[0].mxu0
  %v2249 = vadd.f32 %v2056, %v2248
  %v2250 = vpop.f32.mrb[0].mxu0
  %v2251 = vadd.f32 %v2058, %v2250
  %2252 = vmatprep.mubr.bf16.mxu0 %v784
  %2253 = vmatmul.mubr.bf16.gmra.mrb[0].mxu0 %v783
  %v2254 = vpop.f32.mrb[0].mxu0
  %v2255 = vadd.f32 %v2062, %v2254
  %v2256 = vpop.f32.mrb[0].mxu0
  %v2257 = vadd.f32 %v2064, %v2256
  %v2258 = vpop.f32.mrb[0].mxu0
  %v2259 = vadd.f32 %v2066, %v2258
  %v2260 = vpop.f32.mrb[0].mxu0
  %v2261 = vadd.f32 %v2068, %v2260
  %2262 = vmatprep.mubr.bf16.mxu0 %v791
  %2263 = vmatmul.mubr.bf16.gmra.mrb[0].mxu0 %v790
  %v2264 = vpop.f32.mrb[0].mxu0
  %v2265 = vadd.f32 %v2072, %v2264
  %v2266 = vpop.f32.mrb[0].mxu0
  %v2267 = vadd.f32 %v2074, %v2266
  %v2268 = vpop.f32.mrb[0].mxu0
  %v2269 = vadd.f32 %v2076, %v2268
  %v2270 = vpop.f32.mrb[0].mxu0
  %v2271 = vadd.f32 %v2078, %v2270
  %2272 = vmatprep.mubr.bf16.mxu0 %v798
  %2273 = vmatmul.mubr.bf16.gmra.mrb[0].mxu0 %v797
  %v2274 = vpop.f32.mrb[0].mxu0
  %v2275 = vadd.f32 %v2082, %v2274
  %v2276 = vpop.f32.mrb[0].mxu0
  %v2277 = vadd.f32 %v2084, %v2276
  %v2278 = vpop.f32.mrb[0].mxu0
  %v2279 = vadd.f32 %v2086, %v2278
  %v2280 = vpop.f32.mrb[0].mxu0
  %v2281 = vadd.f32 %v2088, %v2280
  %2282 = vmatprep.mubr.bf16.mxu0 %v805
  %2283 = vmatmul.mubr.bf16.gmra.mrb[0].mxu0 %v804
  %v2284 = vpop.f32.mrb[0].mxu0
  %v2285 = vadd.f32 %v2092, %v2284
  %v2286 = vpop.f32.mrb[0].mxu0
  %v2287 = vadd.f32 %v2094, %v2286
  %v2288 = vpop.f32.mrb[0].mxu0
  %v2289 = vadd.f32 %v2096, %v2288
  %v2290 = vpop.f32.mrb[0].mxu0
  %v2291 = vadd.f32 %v2098, %v2290
  %2292 = vmatprep.mubr.bf16.mxu0 %v812
  %2293 = vmatmul.mubr.bf16.gmra.mrb[0].mxu0 %v811
  %v2294 = vpop.f32.mrb[0].mxu0
  %v2295 = vadd.f32 %v2102, %v2294
  %v2296 = vpop.f32.mrb[0].mxu0
  %v2297 = vadd.f32 %v2104, %v2296
  %v2298 = vpop.f32.mrb[0].mxu0
  %v2299 = vadd.f32 %v2106, %v2298
  %v2300 = vpop.f32.mrb[0].mxu0
  %v2301 = vadd.f32 %v2108, %v2300
  %2302 = vmatprep.mubr.bf16.mxu0 %v819
  %2303 = vmatmul.mubr.bf16.gmra.mrb[0].mxu0 %v818
  %v2304 = vpop.f32.mrb[0].mxu0
  %v2305 = vadd.f32 %v2112, %v2304
  %v2306 = vpop.f32.mrb[0].mxu0
  %v2307 = vadd.f32 %v2114, %v2306
  %v2308 = vpop.f32.mrb[0].mxu0
  %v2309 = vadd.f32 %v2116, %v2308
  %v2310 = vpop.f32.mrb[0].mxu0
  %v2311 = vadd.f32 %v2118, %v2310
  %2312 = vmatprep.mubr.bf16.mxu0 %v826
  %2313 = vmatmul.mubr.bf16.gmra.mrb[0].mxu0 %v825
  %v2314 = vpop.f32.mrb[0].mxu0
  %v2315 = vadd.f32 %v2122, %v2314
  %v2316 = vpop.f32.mrb[0].mxu0
  %v2317 = vadd.f32 %v2124, %v2316
  %v2318 = vpop.f32.mrb[0].mxu0
  %v2319 = vadd.f32 %v2126, %v2318
  %v2320 = vpop.f32.mrb[0].mxu0
  %v2321 = vadd.f32 %v2128, %v2320
  %2322 = vmatprep.mubr.bf16.mxu0 %v833
  %2323 = vmatmul.mubr.bf16.gmra.mrb[0].mxu0 %v832
  %v2324 = vpop.f32.mrb[0].mxu0
  %v2325 = vadd.f32 %v2132, %v2324
  %v2326 = vpop.f32.mrb[0].mxu0
  %v2327 = vadd.f32 %v2134, %v2326
  %v2328 = vpop.f32.mrb[0].mxu0
  %v2329 = vadd.f32 %v2136, %v2328
  %v2330 = vpop.f32.mrb[0].mxu0
  %v2331 = vadd.f32 %v2138, %v2330
  %2332 = vmatprep.mubr.bf16.mxu0 %v840
  %2333 = vmatmul.mubr.bf16.gmra.mrb[0].mxu0 %v839
  %v2334 = vpop.f32.mrb[0].mxu0
  %v2335 = vadd.f32 %v2142, %v2334
  %v2336 = vpop.f32.mrb[0].mxu0
  %v2337 = vadd.f32 %v2144, %v2336
  %v2338 = vpop.f32.mrb[0].mxu0
  %v2339 = vadd.f32 %v2146, %v2338
  %v2340 = vpop.f32.mrb[0].mxu0
  %v2341 = vadd.f32 %v2148, %v2340
  %2342 = vmatprep.mubr.bf16.mxu0 %v847
  %2343 = vmatmul.mubr.bf16.gmra.mrb[0].mxu0 %v846
  %v2344 = vpop.f32.mrb[0].mxu0
  %v2345 = vadd.f32 %v2152, %v2344
  %v2346 = vpop.f32.mrb[0].mxu0
  %v2347 = vadd.f32 %v2154, %v2346
  %v2348 = vpop.f32.mrb[0].mxu0
  %v2349 = vadd.f32 %v2156, %v2348
  %v2350 = vpop.f32.mrb[0].mxu0
  %v2351 = vadd.f32 %v2158, %v2350
  %2352 = vmatprep.mubr.bf16.mxu0 %v854
  %2353 = vmatmul.mubr.bf16.gmra.mrb[0].mxu0 %v853
  %v2354 = vpop.f32.mrb[0].mxu0
  %v2355 = vadd.f32 %v2162, %v2354
  %v2356 = vpop.f32.mrb[0].mxu0
  %v2357 = vadd.f32 %v2164, %v2356
  %v2358 = vpop.f32.mrb[0].mxu0
  %v2359 = vadd.f32 %v2166, %v2358
  %v2360 = vpop.f32.mrb[0].mxu0
  %v2361 = vadd.f32 %v2168, %v2360
  %2362 = vmatprep.mubr.bf16.mxu0 %v861
  %2363 = vmatmul.mubr.bf16.gmra.mrb[0].mxu0 %v860
  %v2364 = vpop.f32.mrb[0].mxu0
  %v2365 = vadd.f32 %v2172, %v2364
  %v2366 = vpop.f32.mrb[0].mxu0
  %v2367 = vadd.f32 %v2174, %v2366
  %v2368 = vpop.f32.mrb[0].mxu0
  %v2369 = vadd.f32 %v2176, %v2368
  %v2370 = vpop.f32.mrb[0].mxu0
  %v2371 = vadd.f32 %v2178, %v2370
  %2372 = vmatprep.mubr.bf16.mxu0 %v868
  %2373 = vmatmul.mubr.bf16.gmra.mrb[0].mxu0 %v867
  %v2374 = vpop.f32.mrb[0].mxu0
  %v2375 = vadd.f32 %v2182, %v2374
  %v2376 = vpop.f32.mrb[0].mxu0
  %v2377 = vadd.f32 %v2184, %v2376
  %v2378 = vpop.f32.mrb[0].mxu0
  %v2379 = vadd.f32 %v2186, %v2378
  %v2380 = vpop.f32.mrb[0].mxu0
  %v2381 = vadd.f32 %v2188, %v2380
  %2382 = vdwg.mxu0
  %2383 = vmatprep.subr.bf16.mxu0 %v1685
  %2384 = vmatpush1.bf16.msra.mxu0 %v1684
  %2385 = vmatprep.subr.bf16.mxu0 %v1689
  %2386 = vmatpush1.bf16.msra.mxu0 %v1688
  %2387 = vmatprep.subr.bf16.mxu0 %v1693
  %2388 = vmatpush1.bf16.msra.mxu0 %v1692
  %2389 = vmatprep.subr.bf16.mxu0 %v1697
  %2390 = vmatpush1.bf16.msra.mxu0 %v1696
  %2391 = vmatprep.subr.bf16.mxu0 %v1701
  %2392 = vmatpush1.bf16.msra.mxu0 %v1700
  %2393 = vmatprep.subr.bf16.mxu0 %v1705
  %2394 = vmatpush1.bf16.msra.mxu0 %v1704
  %2395 = vmatprep.subr.bf16.mxu0 %v1709
  %2396 = vmatpush1.bf16.msra.mxu0 %v1708
  %2397 = vmatprep.subr.bf16.mxu0 %v1713
  %2398 = vmatpush1.bf16.msra.mxu0 %v1712
  %2399 = vmatprep.subr.bf16.mxu0 %v1717
  %2400 = vmatpush1.bf16.msra.mxu0 %v1716
  %2401 = vmatprep.subr.bf16.mxu0 %v1721
  %2402 = vmatpush1.bf16.msra.mxu0 %v1720
  %2403 = vmatprep.subr.bf16.mxu0 %v1725
  %2404 = vmatpush1.bf16.msra.mxu0 %v1724
  %2405 = vmatprep.subr.bf16.mxu0 %v1729
  %2406 = vmatpush1.bf16.msra.mxu0 %v1728
  %2407 = vmatprep.subr.bf16.mxu0 %v1733
  %2408 = vmatpush1.bf16.msra.mxu0 %v1732
  %2409 = vmatprep.subr.bf16.mxu0 %v1737
  %2410 = vmatpush1.bf16.msra.mxu0 %v1736
  %2411 = vmatprep.subr.bf16.mxu0 %v1741
  %2412 = vmatpush1.bf16.msra.mxu0 %v1740
  %2413 = vmatprep.subr.bf16.mxu0 %v1745
  %2414 = vmatpush1.bf16.msra.mxu0 %v1744
  %2415 = vmatprep.mubr.bf16.mxu0 %v765
  %2416 = vmatmul.mubr.bf16.gmra.mrb[0].mxu0 %v764
  %v2417 = vpop.f32.mrb[0].mxu0
  %v2418 = vadd.f32 %v2225, %v2417
  %v2419 = vpop.f32.mrb[0].mxu0
  %v2420 = vadd.f32 %v2227, %v2419
  %v2421 = vpop.f32.mrb[0].mxu0
  %v2422 = vadd.f32 %v2229, %v2421
  %v2423 = vpop.f32.mrb[0].mxu0
  %v2424 = vadd.f32 %v2231, %v2423
  %2425 = vmatprep.mubr.bf16.mxu0 %v772
  %2426 = vmatmul.mubr.bf16.gmra.mrb[0].mxu0 %v771
  %v2427 = vpop.f32.mrb[0].mxu0
  %v2428 = vadd.f32 %v2235, %v2427
  %v2429 = vpop.f32.mrb[0].mxu0
  %v2430 = vadd.f32 %v2237, %v2429
  %v2431 = vpop.f32.mrb[0].mxu0
  %v2432 = vadd.f32 %v2239, %v2431
  %v2433 = vpop.f32.mrb[0].mxu0
  %v2434 = vadd.f32 %v2241, %v2433
  %2435 = vmatprep.mubr.bf16.mxu0 %v779
  %2436 = vmatmul.mubr.bf16.gmra.mrb[0].mxu0 %v778
  %v2437 = vpop.f32.mrb[0].mxu0
  %v2438 = vadd.f32 %v2245, %v2437
  %v2439 = vpop.f32.mrb[0].mxu0
  %v2440 = vadd.f32 %v2247, %v2439
  %v2441 = vpop.f32.mrb[0].mxu0
  %v2442 = vadd.f32 %v2249, %v2441
  %v2443 = vpop.f32.mrb[0].mxu0
  %v2444 = vadd.f32 %v2251, %v2443
  %2445 = vmatprep.mubr.bf16.mxu0 %v786
  %2446 = vmatmul.mubr.bf16.gmra.mrb[0].mxu0 %v785
  %v2447 = vpop.f32.mrb[0].mxu0
  %v2448 = vadd.f32 %v2255, %v2447
  %v2449 = vpop.f32.mrb[0].mxu0
  %v2450 = vadd.f32 %v2257, %v2449
  %v2451 = vpop.f32.mrb[0].mxu0
  %v2452 = vadd.f32 %v2259, %v2451
  %v2453 = vpop.f32.mrb[0].mxu0
  %v2454 = vadd.f32 %v2261, %v2453
  %2455 = vmatprep.mubr.bf16.mxu0 %v793
  %2456 = vmatmul.mubr.bf16.gmra.mrb[0].mxu0 %v792
  %v2457 = vpop.f32.mrb[0].mxu0
  %v2458 = vadd.f32 %v2265, %v2457
  %v2459 = vpop.f32.mrb[0].mxu0
  %v2460 = vadd.f32 %v2267, %v2459
  %v2461 = vpop.f32.mrb[0].mxu0
  %v2462 = vadd.f32 %v2269, %v2461
  %v2463 = vpop.f32.mrb[0].mxu0
  %v2464 = vadd.f32 %v2271, %v2463
  %2465 = vmatprep.mubr.bf16.mxu0 %v800
  %2466 = vmatmul.mubr.bf16.gmra.mrb[0].mxu0 %v799
  %v2467 = vpop.f32.mrb[0].mxu0
  %v2468 = vadd.f32 %v2275, %v2467
  %v2469 = vpop.f32.mrb[0].mxu0
  %v2470 = vadd.f32 %v2277, %v2469
  %v2471 = vpop.f32.mrb[0].mxu0
  %v2472 = vadd.f32 %v2279, %v2471
  %v2473 = vpop.f32.mrb[0].mxu0
  %v2474 = vadd.f32 %v2281, %v2473
  %2475 = vmatprep.mubr.bf16.mxu0 %v807
  %2476 = vmatmul.mubr.bf16.gmra.mrb[0].mxu0 %v806
  %v2477 = vpop.f32.mrb[0].mxu0
  %v2478 = vadd.f32 %v2285, %v2477
  %v2479 = vpop.f32.mrb[0].mxu0
  %v2480 = vadd.f32 %v2287, %v2479
  %v2481 = vpop.f32.mrb[0].mxu0
  %v2482 = vadd.f32 %v2289, %v2481
  %v2483 = vpop.f32.mrb[0].mxu0
  %v2484 = vadd.f32 %v2291, %v2483
  %2485 = vmatprep.mubr.bf16.mxu0 %v814
  %2486 = vmatmul.mubr.bf16.gmra.mrb[0].mxu0 %v813
  %v2487 = vpop.f32.mrb[0].mxu0
  %v2488 = vadd.f32 %v2295, %v2487
  %v2489 = vpop.f32.mrb[0].mxu0
  %v2490 = vadd.f32 %v2297, %v2489
  %v2491 = vpop.f32.mrb[0].mxu0
  %v2492 = vadd.f32 %v2299, %v2491
  %v2493 = vpop.f32.mrb[0].mxu0
  %v2494 = vadd.f32 %v2301, %v2493
  %2495 = vmatprep.mubr.bf16.mxu0 %v821
  %2496 = vmatmul.mubr.bf16.gmra.mrb[0].mxu0 %v820
  %v2497 = vpop.f32.mrb[0].mxu0
  %v2498 = vadd.f32 %v2305, %v2497
  %v2499 = vpop.f32.mrb[0].mxu0
  %v2500 = vadd.f32 %v2307, %v2499
  %v2501 = vpop.f32.mrb[0].mxu0
  %v2502 = vadd.f32 %v2309, %v2501
  %v2503 = vpop.f32.mrb[0].mxu0
  %v2504 = vadd.f32 %v2311, %v2503
  %2505 = vmatprep.mubr.bf16.mxu0 %v828
  %2506 = vmatmul.mubr.bf16.gmra.mrb[0].mxu0 %v827
  %v2507 = vpop.f32.mrb[0].mxu0
  %v2508 = vadd.f32 %v2315, %v2507
  %v2509 = vpop.f32.mrb[0].mxu0
  %v2510 = vadd.f32 %v2317, %v2509
  %v2511 = vpop.f32.mrb[0].mxu0
  %v2512 = vadd.f32 %v2319, %v2511
  %v2513 = vpop.f32.mrb[0].mxu0
  %v2514 = vadd.f32 %v2321, %v2513
  %2515 = vmatprep.mubr.bf16.mxu0 %v835
  %2516 = vmatmul.mubr.bf16.gmra.mrb[0].mxu0 %v834
  %v2517 = vpop.f32.mrb[0].mxu0
  %v2518 = vadd.f32 %v2325, %v2517
  %v2519 = vpop.f32.mrb[0].mxu0
  %v2520 = vadd.f32 %v2327, %v2519
  %v2521 = vpop.f32.mrb[0].mxu0
  %v2522 = vadd.f32 %v2329, %v2521
  %v2523 = vpop.f32.mrb[0].mxu0
  %v2524 = vadd.f32 %v2331, %v2523
  %2525 = vmatprep.mubr.bf16.mxu0 %v842
  %2526 = vmatmul.mubr.bf16.gmra.mrb[0].mxu0 %v841
  %v2527 = vpop.f32.mrb[0].mxu0
  %v2528 = vadd.f32 %v2335, %v2527
  %v2529 = vpop.f32.mrb[0].mxu0
  %v2530 = vadd.f32 %v2337, %v2529
  %v2531 = vpop.f32.mrb[0].mxu0
  %v2532 = vadd.f32 %v2339, %v2531
  %v2533 = vpop.f32.mrb[0].mxu0
  %v2534 = vadd.f32 %v2341, %v2533
  %2535 = vmatprep.mubr.bf16.mxu0 %v849
  %2536 = vmatmul.mubr.bf16.gmra.mrb[0].mxu0 %v848
  %v2537 = vpop.f32.mrb[0].mxu0
  %v2538 = vadd.f32 %v2345, %v2537
  %v2539 = vpop.f32.mrb[0].mxu0
  %v2540 = vadd.f32 %v2347, %v2539
  %v2541 = vpop.f32.mrb[0].mxu0
  %v2542 = vadd.f32 %v2349, %v2541
  %v2543 = vpop.f32.mrb[0].mxu0
  %v2544 = vadd.f32 %v2351, %v2543
  %2545 = vmatprep.mubr.bf16.mxu0 %v856
  %2546 = vmatmul.mubr.bf16.gmra.mrb[0].mxu0 %v855
  %v2547 = vpop.f32.mrb[0].mxu0
  %v2548 = vadd.f32 %v2355, %v2547
  %v2549 = vpop.f32.mrb[0].mxu0
  %v2550 = vadd.f32 %v2357, %v2549
  %v2551 = vpop.f32.mrb[0].mxu0
  %v2552 = vadd.f32 %v2359, %v2551
  %v2553 = vpop.f32.mrb[0].mxu0
  %v2554 = vadd.f32 %v2361, %v2553
  %2555 = vmatprep.mubr.bf16.mxu0 %v863
  %2556 = vmatmul.mubr.bf16.gmra.mrb[0].mxu0 %v862
  %v2557 = vpop.f32.mrb[0].mxu0
  %v2558 = vadd.f32 %v2365, %v2557
  %v2559 = vpop.f32.mrb[0].mxu0
  %v2560 = vadd.f32 %v2367, %v2559
  %v2561 = vpop.f32.mrb[0].mxu0
  %v2562 = vadd.f32 %v2369, %v2561
  %v2563 = vpop.f32.mrb[0].mxu0
  %v2564 = vadd.f32 %v2371, %v2563
  %2565 = vmatprep.mubr.bf16.mxu0 %v870
  %2566 = vmatmul.mubr.bf16.gmra.mrb[0].mxu0 %v869
  %v2567 = vpop.f32.mrb[0].mxu0
  %v2568 = vadd.f32 %v2375, %v2567
  %v2569 = vpop.f32.mrb[0].mxu0
  %v2570 = vadd.f32 %v2377, %v2569
  %v2571 = vpop.f32.mrb[0].mxu0
  %v2572 = vadd.f32 %v2379, %v2571
  %v2573 = vpop.f32.mrb[0].mxu0
  %v2574 = vadd.f32 %v2381, %v2573
  %2575 = vdwg.mxu0
  %2576 = vmatprep.subr.bf16.mxu0 %v1749
  %2577 = vmatpush1.bf16.msra.mxu0 %v1748
  %2578 = vmatprep.subr.bf16.mxu0 0
  %2579 = vmatpush1.bf16.msra.mxu0 0
  %2580 = vmatprep.subr.bf16.mxu0 0
  %2581 = vmatpush1.bf16.msra.mxu0 0
  %2582 = vmatprep.subr.bf16.mxu0 0
  %2583 = vmatpush1.bf16.msra.mxu0 0
  %2584 = vmatprep.subr.bf16.mxu0 0
  %2585 = vmatpush1.bf16.msra.mxu0 0
  %2586 = vmatprep.subr.bf16.mxu0 0
  %2587 = vmatpush1.bf16.msra.mxu0 0
  %2588 = vmatprep.subr.bf16.mxu0 0
  %2589 = vmatpush1.bf16.msra.mxu0 0
  %2590 = vmatprep.subr.bf16.mxu0 0
  %2591 = vmatpush1.bf16.msra.mxu0 0
  %2592 = vmatprep.subr.bf16.mxu0 0
  %2593 = vmatpush1.bf16.msra.mxu0 0
  %2594 = vmatprep.subr.bf16.mxu0 0
  %2595 = vmatpush1.bf16.msra.mxu0 0
  %2596 = vmatprep.subr.bf16.mxu0 0
  %2597 = vmatpush1.bf16.msra.mxu0 0
  %2598 = vmatprep.subr.bf16.mxu0 0
  %2599 = vmatpush1.bf16.msra.mxu0 0
  %2600 = vmatprep.subr.bf16.mxu0 0
  %2601 = vmatpush1.bf16.msra.mxu0 0
  %2602 = vmatprep.subr.bf16.mxu0 0
  %2603 = vmatpush1.bf16.msra.mxu0 0
  %2604 = vmatprep.subr.bf16.mxu0 0
  %2605 = vmatpush1.bf16.msra.mxu0 0
  %2606 = vmatprep.subr.bf16.mxu0 0
  %2607 = vmatpush1.bf16.msra.mxu0 0
  %2608 = vmatprep.mubr.bf16.mxu0 0
  %2609 = vmatmul.mubr.bf16.gmra.mrb[0].mxu0 %v1950
  %v2610 = vpop.f32.mrb[0].mxu0
  %v2611 = vadd.f32 %v2418, %v2610
  %v2612 = vpop.f32.mrb[0].mxu0
  %v2613 = vadd.f32 %v2420, %v2612
  %v2614 = vpop.f32.mrb[0].mxu0
  %v2615 = vadd.f32 %v2422, %v2614
  %v2616 = vpop.f32.mrb[0].mxu0
  %v2617 = vadd.f32 %v2424, %v2616
  %2618 = vmatprep.mubr.bf16.mxu0 0
  %2619 = vmatmul.mubr.bf16.gmra.mrb[0].mxu0 %v1953
  %v2620 = vpop.f32.mrb[0].mxu0
  %v2621 = vadd.f32 %v2428, %v2620
  %v2622 = vpop.f32.mrb[0].mxu0
  %v2623 = vadd.f32 %v2430, %v2622
  %v2624 = vpop.f32.mrb[0].mxu0
  %v2625 = vadd.f32 %v2432, %v2624
  %v2626 = vpop.f32.mrb[0].mxu0
  %v2627 = vadd.f32 %v2434, %v2626
  %2628 = vmatprep.mubr.bf16.mxu0 0
  %2629 = vmatmul.mubr.bf16.gmra.mrb[0].mxu0 %v1956
  %v2630 = vpop.f32.mrb[0].mxu0
  %v2631 = vadd.f32 %v2438, %v2630
  %v2632 = vpop.f32.mrb[0].mxu0
  %v2633 = vadd.f32 %v2440, %v2632
  %v2634 = vpop.f32.mrb[0].mxu0
  %v2635 = vadd.f32 %v2442, %v2634
  %v2636 = vpop.f32.mrb[0].mxu0
  %v2637 = vadd.f32 %v2444, %v2636
  %2638 = vmatprep.mubr.bf16.mxu0 0
  %2639 = vmatmul.mubr.bf16.gmra.mrb[0].mxu0 %v1959
  %v2640 = vpop.f32.mrb[0].mxu0
  %v2641 = vadd.f32 %v2448, %v2640
  %v2642 = vpop.f32.mrb[0].mxu0
  %v2643 = vadd.f32 %v2450, %v2642
  %v2644 = vpop.f32.mrb[0].mxu0
  %v2645 = vadd.f32 %v2452, %v2644
  %v2646 = vpop.f32.mrb[0].mxu0
  %v2647 = vadd.f32 %v2454, %v2646
  %2648 = vmatprep.mubr.bf16.mxu0 0
  %2649 = vmatmul.mubr.bf16.gmra.mrb[0].mxu0 %v1962
  %v2650 = vpop.f32.mrb[0].mxu0
  %v2651 = vadd.f32 %v2458, %v2650
  %v2652 = vpop.f32.mrb[0].mxu0
  %v2653 = vadd.f32 %v2460, %v2652
  %v2654 = vpop.f32.mrb[0].mxu0
  %v2655 = vadd.f32 %v2462, %v2654
  %v2656 = vpop.f32.mrb[0].mxu0
  %v2657 = vadd.f32 %v2464, %v2656
  %2658 = vmatprep.mubr.bf16.mxu0 0
  %2659 = vmatmul.mubr.bf16.gmra.mrb[0].mxu0 %v1965
  %v2660 = vpop.f32.mrb[0].mxu0
  %v2661 = vadd.f32 %v2468, %v2660
  %v2662 = vpop.f32.mrb[0].mxu0
  %v2663 = vadd.f32 %v2470, %v2662
  %v2664 = vpop.f32.mrb[0].mxu0
  %v2665 = vadd.f32 %v2472, %v2664
  %v2666 = vpop.f32.mrb[0].mxu0
  %v2667 = vadd.f32 %v2474, %v2666
  %2668 = vmatprep.mubr.bf16.mxu0 0
  %2669 = vmatmul.mubr.bf16.gmra.mrb[0].mxu0 %v1968
  %v2670 = vpop.f32.mrb[0].mxu0
  %v2671 = vadd.f32 %v2478, %v2670
  %v2672 = vpop.f32.mrb[0].mxu0
  %v2673 = vadd.f32 %v2480, %v2672
  %v2674 = vpop.f32.mrb[0].mxu0
  %v2675 = vadd.f32 %v2482, %v2674
  %v2676 = vpop.f32.mrb[0].mxu0
  %v2677 = vadd.f32 %v2484, %v2676
  %2678 = vmatprep.mubr.bf16.mxu0 0
  %2679 = vmatmul.mubr.bf16.gmra.mrb[0].mxu0 %v1971
  %v2680 = vpop.f32.mrb[0].mxu0
  %v2681 = vadd.f32 %v2488, %v2680
  %v2682 = vpop.f32.mrb[0].mxu0
  %v2683 = vadd.f32 %v2490, %v2682
  %v2684 = vpop.f32.mrb[0].mxu0
  %v2685 = vadd.f32 %v2492, %v2684
  %v2686 = vpop.f32.mrb[0].mxu0
  %v2687 = vadd.f32 %v2494, %v2686
  %2688 = vmatprep.mubr.bf16.mxu0 0
  %2689 = vmatmul.mubr.bf16.gmra.mrb[0].mxu0 %v1974
  %v2690 = vpop.f32.mrb[0].mxu0
  %v2691 = vadd.f32 %v2498, %v2690
  %v2692 = vpop.f32.mrb[0].mxu0
  %v2693 = vadd.f32 %v2500, %v2692
  %v2694 = vpop.f32.mrb[0].mxu0
  %v2695 = vadd.f32 %v2502, %v2694
  %v2696 = vpop.f32.mrb[0].mxu0
  %v2697 = vadd.f32 %v2504, %v2696
  %2698 = vmatprep.mubr.bf16.mxu0 0
  %2699 = vmatmul.mubr.bf16.gmra.mrb[0].mxu0 %v1977
  %v2700 = vpop.f32.mrb[0].mxu0
  %v2701 = vadd.f32 %v2508, %v2700
  %v2702 = vpop.f32.mrb[0].mxu0
  %v2703 = vadd.f32 %v2510, %v2702
  %v2704 = vpop.f32.mrb[0].mxu0
  %v2705 = vadd.f32 %v2512, %v2704
  %v2706 = vpop.f32.mrb[0].mxu0
  %v2707 = vadd.f32 %v2514, %v2706
  %2708 = vmatprep.mubr.bf16.mxu0 0
  %2709 = vmatmul.mubr.bf16.gmra.mrb[0].mxu0 %v1980
  %v2710 = vpop.f32.mrb[0].mxu0
  %v2711 = vadd.f32 %v2518, %v2710
  %v2712 = vpop.f32.mrb[0].mxu0
  %v2713 = vadd.f32 %v2520, %v2712
  %v2714 = vpop.f32.mrb[0].mxu0
  %v2715 = vadd.f32 %v2522, %v2714
  %v2716 = vpop.f32.mrb[0].mxu0
  %v2717 = vadd.f32 %v2524, %v2716
  %2718 = vmatprep.mubr.bf16.mxu0 0
  %2719 = vmatmul.mubr.bf16.gmra.mrb[0].mxu0 %v1983
  %v2720 = vpop.f32.mrb[0].mxu0
  %v2721 = vadd.f32 %v2528, %v2720
  %v2722 = vpop.f32.mrb[0].mxu0
  %v2723 = vadd.f32 %v2530, %v2722
  %v2724 = vpop.f32.mrb[0].mxu0
  %v2725 = vadd.f32 %v2532, %v2724
  %v2726 = vpop.f32.mrb[0].mxu0
  %v2727 = vadd.f32 %v2534, %v2726
  %2728 = vmatprep.mubr.bf16.mxu0 0
  %2729 = vmatmul.mubr.bf16.gmra.mrb[0].mxu0 %v1986
  %v2730 = vpop.f32.mrb[0].mxu0
  %v2731 = vadd.f32 %v2538, %v2730
  %v2732 = vpop.f32.mrb[0].mxu0
  %v2733 = vadd.f32 %v2540, %v2732
  %v2734 = vpop.f32.mrb[0].mxu0
  %v2735 = vadd.f32 %v2542, %v2734
  %v2736 = vpop.f32.mrb[0].mxu0
  %v2737 = vadd.f32 %v2544, %v2736
  %2738 = vmatprep.mubr.bf16.mxu0 0
  %2739 = vmatmul.mubr.bf16.gmra.mrb[0].mxu0 %v1989
  %v2740 = vpop.f32.mrb[0].mxu0
  %v2741 = vadd.f32 %v2548, %v2740
  %v2742 = vpop.f32.mrb[0].mxu0
  %v2743 = vadd.f32 %v2550, %v2742
  %v2744 = vpop.f32.mrb[0].mxu0
  %v2745 = vadd.f32 %v2552, %v2744
  %v2746 = vpop.f32.mrb[0].mxu0
  %v2747 = vadd.f32 %v2554, %v2746
  %2748 = vmatprep.mubr.bf16.mxu0 0
  %2749 = vmatmul.mubr.bf16.gmra.mrb[0].mxu0 %v1992
  %v2750 = vpop.f32.mrb[0].mxu0
  %v2751 = vadd.f32 %v2558, %v2750
  %v2752 = vpop.f32.mrb[0].mxu0
  %v2753 = vadd.f32 %v2560, %v2752
  %v2754 = vpop.f32.mrb[0].mxu0
  %v2755 = vadd.f32 %v2562, %v2754
  %v2756 = vpop.f32.mrb[0].mxu0
  %v2757 = vadd.f32 %v2564, %v2756
  %2758 = vmatprep.mubr.bf16.mxu0 0
  %2759 = vmatmul.mubr.bf16.gmra.mrb[0].mxu0 %v1995
  %v2760 = vpop.f32.mrb[0].mxu0
  %v2761 = vadd.f32 %v2568, %v2760
  %v2762 = vpop.f32.mrb[0].mxu0
  %v2763 = vadd.f32 %v2570, %v2762
  %v2764 = vpop.f32.mrb[0].mxu0
  %v2765 = vadd.f32 %v2572, %v2764
  %v2766 = vpop.f32.mrb[0].mxu0
  %v2767 = vadd.f32 %v2574, %v2766
  %2768 = vdwg.mxu0
  %2769 = vmatprep.subr.bf16.mxu0 %v1559
  %2770 = vmatpush1.bf16.msra.mxu0 %v1558
  %2771 = vmatprep.subr.bf16.mxu0 %v1563
  %2772 = vmatpush1.bf16.msra.mxu0 %v1562
  %2773 = vmatprep.subr.bf16.mxu0 %v1567
  %2774 = vmatpush1.bf16.msra.mxu0 %v1566
  %2775 = vmatprep.subr.bf16.mxu0 %v1571
  %2776 = vmatpush1.bf16.msra.mxu0 %v1570
  %2777 = vmatprep.subr.bf16.mxu0 %v1575
  %2778 = vmatpush1.bf16.msra.mxu0 %v1574
  %2779 = vmatprep.subr.bf16.mxu0 %v1579
  %2780 = vmatpush1.bf16.msra.mxu0 %v1578
  %2781 = vmatprep.subr.bf16.mxu0 %v1583
  %2782 = vmatpush1.bf16.msra.mxu0 %v1582
  %2783 = vmatprep.subr.bf16.mxu0 %v1587
  %2784 = vmatpush1.bf16.msra.mxu0 %v1586
  %2785 = vmatprep.subr.bf16.mxu0 %v1591
  %2786 = vmatpush1.bf16.msra.mxu0 %v1590
  %2787 = vmatprep.subr.bf16.mxu0 %v1595
  %2788 = vmatpush1.bf16.msra.mxu0 %v1594
  %2789 = vmatprep.subr.bf16.mxu0 %v1599
  %2790 = vmatpush1.bf16.msra.mxu0 %v1598
  %2791 = vmatprep.subr.bf16.mxu0 %v1603
  %2792 = vmatpush1.bf16.msra.mxu0 %v1602
  %2793 = vmatprep.subr.bf16.mxu0 %v1607
  %2794 = vmatpush1.bf16.msra.mxu0 %v1606
  %2795 = vmatprep.subr.bf16.mxu0 %v1611
  %2796 = vmatpush1.bf16.msra.mxu0 %v1610
  %2797 = vmatprep.subr.bf16.mxu0 %v1615
  %2798 = vmatpush1.bf16.msra.mxu0 %v1614
  %2799 = vmatprep.subr.bf16.mxu0 %v1619
  %2800 = vmatpush1.bf16.msra.mxu0 %v1618
  %2801 = vmatprep.mubr.bf16.mxu0 %v761
  %2802 = vmatmul.mubr.bf16.gmra.mrb[0].mxu0 %v760
  %v2803 = vpop.f32.mrb[0].mxu0
  %v2804 = vadd.f32 %v399, %v2803
  %v2805 = vpop.f32.mrb[0].mxu0
  %v2806 = vadd.f32 %v403, %v2805
  %v2807 = vpop.f32.mrb[0].mxu0
  %v2808 = vadd.f32 %v399, %v2807
  %v2809 = vpop.f32.mrb[0].mxu0
  %v2810 = vadd.f32 %v403, %v2809
  %2811 = vmatprep.mubr.bf16.mxu0 %v768
  %2812 = vmatmul.mubr.bf16.gmra.mrb[0].mxu0 %v767
  %v2813 = vpop.f32.mrb[0].mxu0
  %v2814 = vadd.f32 %v399, %v2813
  %v2815 = vpop.f32.mrb[0].mxu0
  %v2816 = vadd.f32 %v403, %v2815
  %v2817 = vpop.f32.mrb[0].mxu0
  %v2818 = vadd.f32 %v399, %v2817
  %v2819 = vpop.f32.mrb[0].mxu0
  %v2820 = vadd.f32 %v403, %v2819
  %2821 = vmatprep.mubr.bf16.mxu0 %v775
  %2822 = vmatmul.mubr.bf16.gmra.mrb[0].mxu0 %v774
  %v2823 = vpop.f32.mrb[0].mxu0
  %v2824 = vadd.f32 %v399, %v2823
  %v2825 = vpop.f32.mrb[0].mxu0
  %v2826 = vadd.f32 %v403, %v2825
  %v2827 = vpop.f32.mrb[0].mxu0
  %v2828 = vadd.f32 %v399, %v2827
  %v2829 = vpop.f32.mrb[0].mxu0
  %v2830 = vadd.f32 %v403, %v2829
  %2831 = vmatprep.mubr.bf16.mxu0 %v782
  %2832 = vmatmul.mubr.bf16.gmra.mrb[0].mxu0 %v781
  %v2833 = vpop.f32.mrb[0].mxu0
  %v2834 = vadd.f32 %v399, %v2833
  %v2835 = vpop.f32.mrb[0].mxu0
  %v2836 = vadd.f32 %v403, %v2835
  %v2837 = vpop.f32.mrb[0].mxu0
  %v2838 = vadd.f32 %v399, %v2837
  %v2839 = vpop.f32.mrb[0].mxu0
  %v2840 = vadd.f32 %v403, %v2839
  %2841 = vmatprep.mubr.bf16.mxu0 %v789
  %2842 = vmatmul.mubr.bf16.gmra.mrb[0].mxu0 %v788
  %v2843 = vpop.f32.mrb[0].mxu0
  %v2844 = vadd.f32 %v399, %v2843
  %v2845 = vpop.f32.mrb[0].mxu0
  %v2846 = vadd.f32 %v403, %v2845
  %v2847 = vpop.f32.mrb[0].mxu0
  %v2848 = vadd.f32 %v399, %v2847
  %v2849 = vpop.f32.mrb[0].mxu0
  %v2850 = vadd.f32 %v403, %v2849
  %2851 = vmatprep.mubr.bf16.mxu0 %v796
  %2852 = vmatmul.mubr.bf16.gmra.mrb[0].mxu0 %v795
  %v2853 = vpop.f32.mrb[0].mxu0
  %v2854 = vadd.f32 %v399, %v2853
  %v2855 = vpop.f32.mrb[0].mxu0
  %v2856 = vadd.f32 %v403, %v2855
  %v2857 = vpop.f32.mrb[0].mxu0
  %v2858 = vadd.f32 %v399, %v2857
  %v2859 = vpop.f32.mrb[0].mxu0
  %v2860 = vadd.f32 %v403, %v2859
  %2861 = vmatprep.mubr.bf16.mxu0 %v803
  %2862 = vmatmul.mubr.bf16.gmra.mrb[0].mxu0 %v802
  %v2863 = vpop.f32.mrb[0].mxu0
  %v2864 = vadd.f32 %v399, %v2863
  %v2865 = vpop.f32.mrb[0].mxu0
  %v2866 = vadd.f32 %v403, %v2865
  %v2867 = vpop.f32.mrb[0].mxu0
  %v2868 = vadd.f32 %v399, %v2867
  %v2869 = vpop.f32.mrb[0].mxu0
  %v2870 = vadd.f32 %v403, %v2869
  %2871 = vmatprep.mubr.bf16.mxu0 %v810
  %2872 = vmatmul.mubr.bf16.gmra.mrb[0].mxu0 %v809
  %v2873 = vpop.f32.mrb[0].mxu0
  %v2874 = vadd.f32 %v399, %v2873
  %v2875 = vpop.f32.mrb[0].mxu0
  %v2876 = vadd.f32 %v403, %v2875
  %v2877 = vpop.f32.mrb[0].mxu0
  %v2878 = vadd.f32 %v399, %v2877
  %v2879 = vpop.f32.mrb[0].mxu0
  %v2880 = vadd.f32 %v403, %v2879
  %2881 = vmatprep.mubr.bf16.mxu0 %v817
  %2882 = vmatmul.mubr.bf16.gmra.mrb[0].mxu0 %v816
  %v2883 = vpop.f32.mrb[0].mxu0
  %v2884 = vadd.f32 %v399, %v2883
  %v2885 = vpop.f32.mrb[0].mxu0
  %v2886 = vadd.f32 %v403, %v2885
  %v2887 = vpop.f32.mrb[0].mxu0
  %v2888 = vadd.f32 %v399, %v2887
  %v2889 = vpop.f32.mrb[0].mxu0
  %v2890 = vadd.f32 %v403, %v2889
  %2891 = vmatprep.mubr.bf16.mxu0 %v824
  %2892 = vmatmul.mubr.bf16.gmra.mrb[0].mxu0 %v823
  %v2893 = vpop.f32.mrb[0].mxu0
  %v2894 = vadd.f32 %v399, %v2893
  %v2895 = vpop.f32.mrb[0].mxu0
  %v2896 = vadd.f32 %v403, %v2895
  %v2897 = vpop.f32.mrb[0].mxu0
  %v2898 = vadd.f32 %v399, %v2897
  %v2899 = vpop.f32.mrb[0].mxu0
  %v2900 = vadd.f32 %v403, %v2899
  %2901 = vmatprep.mubr.bf16.mxu0 %v831
  %2902 = vmatmul.mubr.bf16.gmra.mrb[0].mxu0 %v830
  %v2903 = vpop.f32.mrb[0].mxu0
  %v2904 = vadd.f32 %v399, %v2903
  %v2905 = vpop.f32.mrb[0].mxu0
  %v2906 = vadd.f32 %v403, %v2905
  %v2907 = vpop.f32.mrb[0].mxu0
  %v2908 = vadd.f32 %v399, %v2907
  %v2909 = vpop.f32.mrb[0].mxu0
  %v2910 = vadd.f32 %v403, %v2909
  %2911 = vmatprep.mubr.bf16.mxu0 %v838
  %2912 = vmatmul.mubr.bf16.gmra.mrb[0].mxu0 %v837
  %v2913 = vpop.f32.mrb[0].mxu0
  %v2914 = vadd.f32 %v399, %v2913
  %v2915 = vpop.f32.mrb[0].mxu0
  %v2916 = vadd.f32 %v403, %v2915
  %v2917 = vpop.f32.mrb[0].mxu0
  %v2918 = vadd.f32 %v399, %v2917
  %v2919 = vpop.f32.mrb[0].mxu0
  %v2920 = vadd.f32 %v403, %v2919
  %2921 = vmatprep.mubr.bf16.mxu0 %v845
  %2922 = vmatmul.mubr.bf16.gmra.mrb[0].mxu0 %v844
  %v2923 = vpop.f32.mrb[0].mxu0
  %v2924 = vadd.f32 %v399, %v2923
  %v2925 = vpop.f32.mrb[0].mxu0
  %v2926 = vadd.f32 %v403, %v2925
  %v2927 = vpop.f32.mrb[0].mxu0
  %v2928 = vadd.f32 %v399, %v2927
  %v2929 = vpop.f32.mrb[0].mxu0
  %v2930 = vadd.f32 %v403, %v2929
  %2931 = vmatprep.mubr.bf16.mxu0 %v852
  %2932 = vmatmul.mubr.bf16.gmra.mrb[0].mxu0 %v851
  %v2933 = vpop.f32.mrb[0].mxu0
  %v2934 = vadd.f32 %v399, %v2933
  %v2935 = vpop.f32.mrb[0].mxu0
  %v2936 = vadd.f32 %v403, %v2935
  %v2937 = vpop.f32.mrb[0].mxu0
  %v2938 = vadd.f32 %v399, %v2937
  %v2939 = vpop.f32.mrb[0].mxu0
  %v2940 = vadd.f32 %v403, %v2939
  %2941 = vmatprep.mubr.bf16.mxu0 %v859
  %2942 = vmatmul.mubr.bf16.gmra.mrb[0].mxu0 %v858
  %v2943 = vpop.f32.mrb[0].mxu0
  %v2944 = vadd.f32 %v399, %v2943
  %v2945 = vpop.f32.mrb[0].mxu0
  %v2946 = vadd.f32 %v403, %v2945
  %v2947 = vpop.f32.mrb[0].mxu0
  %v2948 = vadd.f32 %v399, %v2947
  %v2949 = vpop.f32.mrb[0].mxu0
  %v2950 = vadd.f32 %v403, %v2949
  %2951 = vmatprep.mubr.bf16.mxu0 %v866
  %2952 = vmatmul.mubr.bf16.gmra.mrb[0].mxu0 %v865
  %v2953 = vpop.f32.mrb[0].mxu0
  %v2954 = vadd.f32 %v399, %v2953
  %v2955 = vpop.f32.mrb[0].mxu0
  %v2956 = vadd.f32 %v403, %v2955
  %v2957 = vpop.f32.mrb[0].mxu0
  %v2958 = vadd.f32 %v399, %v2957
  %v2959 = vpop.f32.mrb[0].mxu0
  %v2960 = vadd.f32 %v403, %v2959
  %2961 = vdwg.mxu0
  %2962 = vmatprep.subr.bf16.mxu0 %v1623
  %2963 = vmatpush1.bf16.msra.mxu0 %v1622
  %2964 = vmatprep.subr.bf16.mxu0 %v1627
  %2965 = vmatpush1.bf16.msra.mxu0 %v1626
  %2966 = vmatprep.subr.bf16.mxu0 %v1631
  %2967 = vmatpush1.bf16.msra.mxu0 %v1630
  %2968 = vmatprep.subr.bf16.mxu0 %v1635
  %2969 = vmatpush1.bf16.msra.mxu0 %v1634
  %2970 = vmatprep.subr.bf16.mxu0 %v1639
  %2971 = vmatpush1.bf16.msra.mxu0 %v1638
  %2972 = vmatprep.subr.bf16.mxu0 %v1643
  %2973 = vmatpush1.bf16.msra.mxu0 %v1642
  %2974 = vmatprep.subr.bf16.mxu0 %v1647
  %2975 = vmatpush1.bf16.msra.mxu0 %v1646
  %2976 = vmatprep.subr.bf16.mxu0 %v1651
  %2977 = vmatpush1.bf16.msra.mxu0 %v1650
  %2978 = vmatprep.subr.bf16.mxu0 %v1655
  %2979 = vmatpush1.bf16.msra.mxu0 %v1654
  %2980 = vmatprep.subr.bf16.mxu0 %v1659
  %2981 = vmatpush1.bf16.msra.mxu0 %v1658
  %2982 = vmatprep.subr.bf16.mxu0 %v1663
  %2983 = vmatpush1.bf16.msra.mxu0 %v1662
  %2984 = vmatprep.subr.bf16.mxu0 %v1667
  %2985 = vmatpush1.bf16.msra.mxu0 %v1666
  %2986 = vmatprep.subr.bf16.mxu0 %v1671
  %2987 = vmatpush1.bf16.msra.mxu0 %v1670
  %2988 = vmatprep.subr.bf16.mxu0 %v1675
  %2989 = vmatpush1.bf16.msra.mxu0 %v1674
  %2990 = vmatprep.subr.bf16.mxu0 %v1679
  %2991 = vmatpush1.bf16.msra.mxu0 %v1678
  %2992 = vmatprep.subr.bf16.mxu0 %v1683
  %2993 = vmatpush1.bf16.msra.mxu0 %v1682
  %2994 = vmatprep.mubr.bf16.mxu0 %v763
  %2995 = vmatmul.mubr.bf16.gmra.mrb[0].mxu0 %v762
  %v2996 = vpop.f32.mrb[0].mxu0
  %v2997 = vadd.f32 %v2804, %v2996
  %v2998 = vpop.f32.mrb[0].mxu0
  %v2999 = vadd.f32 %v2806, %v2998
  %v3000 = vpop.f32.mrb[0].mxu0
  %v3001 = vadd.f32 %v2808, %v3000
  %v3002 = vpop.f32.mrb[0].mxu0
  %v3003 = vadd.f32 %v2810, %v3002
  %3004 = vmatprep.mubr.bf16.mxu0 %v770
  %3005 = vmatmul.mubr.bf16.gmra.mrb[0].mxu0 %v769
  %v3006 = vpop.f32.mrb[0].mxu0
  %v3007 = vadd.f32 %v2814, %v3006
  %v3008 = vpop.f32.mrb[0].mxu0
  %v3009 = vadd.f32 %v2816, %v3008
  %v3010 = vpop.f32.mrb[0].mxu0
  %v3011 = vadd.f32 %v2818, %v3010
  %v3012 = vpop.f32.mrb[0].mxu0
  %v3013 = vadd.f32 %v2820, %v3012
  %3014 = vmatprep.mubr.bf16.mxu0 %v777
  %3015 = vmatmul.mubr.bf16.gmra.mrb[0].mxu0 %v776
  %v3016 = vpop.f32.mrb[0].mxu0
  %v3017 = vadd.f32 %v2824, %v3016
  %v3018 = vpop.f32.mrb[0].mxu0
  %v3019 = vadd.f32 %v2826, %v3018
  %v3020 = vpop.f32.mrb[0].mxu0
  %v3021 = vadd.f32 %v2828, %v3020
  %v3022 = vpop.f32.mrb[0].mxu0
  %v3023 = vadd.f32 %v2830, %v3022
  %3024 = vmatprep.mubr.bf16.mxu0 %v784
  %3025 = vmatmul.mubr.bf16.gmra.mrb[0].mxu0 %v783
  %v3026 = vpop.f32.mrb[0].mxu0
  %v3027 = vadd.f32 %v2834, %v3026
  %v3028 = vpop.f32.mrb[0].mxu0
  %v3029 = vadd.f32 %v2836, %v3028
  %v3030 = vpop.f32.mrb[0].mxu0
  %v3031 = vadd.f32 %v2838, %v3030
  %v3032 = vpop.f32.mrb[0].mxu0
  %v3033 = vadd.f32 %v2840, %v3032
  %3034 = vmatprep.mubr.bf16.mxu0 %v791
  %3035 = vmatmul.mubr.bf16.gmra.mrb[0].mxu0 %v790
  %v3036 = vpop.f32.mrb[0].mxu0
  %v3037 = vadd.f32 %v2844, %v3036
  %v3038 = vpop.f32.mrb[0].mxu0
  %v3039 = vadd.f32 %v2846, %v3038
  %v3040 = vpop.f32.mrb[0].mxu0
  %v3041 = vadd.f32 %v2848, %v3040
  %v3042 = vpop.f32.mrb[0].mxu0
  %v3043 = vadd.f32 %v2850, %v3042
  %3044 = vmatprep.mubr.bf16.mxu0 %v798
  %3045 = vmatmul.mubr.bf16.gmra.mrb[0].mxu0 %v797
  %v3046 = vpop.f32.mrb[0].mxu0
  %v3047 = vadd.f32 %v2854, %v3046
  %v3048 = vpop.f32.mrb[0].mxu0
  %v3049 = vadd.f32 %v2856, %v3048
  %v3050 = vpop.f32.mrb[0].mxu0
  %v3051 = vadd.f32 %v2858, %v3050
  %v3052 = vpop.f32.mrb[0].mxu0
  %v3053 = vadd.f32 %v2860, %v3052
  %3054 = vmatprep.mubr.bf16.mxu0 %v805
  %3055 = vmatmul.mubr.bf16.gmra.mrb[0].mxu0 %v804
  %v3056 = vpop.f32.mrb[0].mxu0
  %v3057 = vadd.f32 %v2864, %v3056
  %v3058 = vpop.f32.mrb[0].mxu0
  %v3059 = vadd.f32 %v2866, %v3058
  %v3060 = vpop.f32.mrb[0].mxu0
  %v3061 = vadd.f32 %v2868, %v3060
  %v3062 = vpop.f32.mrb[0].mxu0
  %v3063 = vadd.f32 %v2870, %v3062
  %3064 = vmatprep.mubr.bf16.mxu0 %v812
  %3065 = vmatmul.mubr.bf16.gmra.mrb[0].mxu0 %v811
  %v3066 = vpop.f32.mrb[0].mxu0
  %v3067 = vadd.f32 %v2874, %v3066
  %v3068 = vpop.f32.mrb[0].mxu0
  %v3069 = vadd.f32 %v2876, %v3068
  %v3070 = vpop.f32.mrb[0].mxu0
  %v3071 = vadd.f32 %v2878, %v3070
  %v3072 = vpop.f32.mrb[0].mxu0
  %v3073 = vadd.f32 %v2880, %v3072
  %3074 = vmatprep.mubr.bf16.mxu0 %v819
  %3075 = vmatmul.mubr.bf16.gmra.mrb[0].mxu0 %v818
  %v3076 = vpop.f32.mrb[0].mxu0
  %v3077 = vadd.f32 %v2884, %v3076
  %v3078 = vpop.f32.mrb[0].mxu0
  %v3079 = vadd.f32 %v2886, %v3078
  %v3080 = vpop.f32.mrb[0].mxu0
  %v3081 = vadd.f32 %v2888, %v3080
  %v3082 = vpop.f32.mrb[0].mxu0
  %v3083 = vadd.f32 %v2890, %v3082
  %3084 = vmatprep.mubr.bf16.mxu0 %v826
  %3085 = vmatmul.mubr.bf16.gmra.mrb[0].mxu0 %v825
  %v3086 = vpop.f32.mrb[0].mxu0
  %v3087 = vadd.f32 %v2894, %v3086
  %v3088 = vpop.f32.mrb[0].mxu0
  %v3089 = vadd.f32 %v2896, %v3088
  %v3090 = vpop.f32.mrb[0].mxu0
  %v3091 = vadd.f32 %v2898, %v3090
  %v3092 = vpop.f32.mrb[0].mxu0
  %v3093 = vadd.f32 %v2900, %v3092
  %3094 = vmatprep.mubr.bf16.mxu0 %v833
  %3095 = vmatmul.mubr.bf16.gmra.mrb[0].mxu0 %v832
  %v3096 = vpop.f32.mrb[0].mxu0
  %v3097 = vadd.f32 %v2904, %v3096
  %v3098 = vpop.f32.mrb[0].mxu0
  %v3099 = vadd.f32 %v2906, %v3098
  %v3100 = vpop.f32.mrb[0].mxu0
  %v3101 = vadd.f32 %v2908, %v3100
  %v3102 = vpop.f32.mrb[0].mxu0
  %v3103 = vadd.f32 %v2910, %v3102
  %3104 = vmatprep.mubr.bf16.mxu0 %v840
  %3105 = vmatmul.mubr.bf16.gmra.mrb[0].mxu0 %v839
  %v3106 = vpop.f32.mrb[0].mxu0
  %v3107 = vadd.f32 %v2914, %v3106
  %v3108 = vpop.f32.mrb[0].mxu0
  %v3109 = vadd.f32 %v2916, %v3108
  %v3110 = vpop.f32.mrb[0].mxu0
  %v3111 = vadd.f32 %v2918, %v3110
  %v3112 = vpop.f32.mrb[0].mxu0
  %v3113 = vadd.f32 %v2920, %v3112
  %3114 = vmatprep.mubr.bf16.mxu0 %v847
  %3115 = vmatmul.mubr.bf16.gmra.mrb[0].mxu0 %v846
  %v3116 = vpop.f32.mrb[0].mxu0
  %v3117 = vadd.f32 %v2924, %v3116
  %v3118 = vpop.f32.mrb[0].mxu0
  %v3119 = vadd.f32 %v2926, %v3118
  %v3120 = vpop.f32.mrb[0].mxu0
  %v3121 = vadd.f32 %v2928, %v3120
  %v3122 = vpop.f32.mrb[0].mxu0
  %v3123 = vadd.f32 %v2930, %v3122
  %3124 = vmatprep.mubr.bf16.mxu0 %v854
  %3125 = vmatmul.mubr.bf16.gmra.mrb[0].mxu0 %v853
  %v3126 = vpop.f32.mrb[0].mxu0
  %v3127 = vadd.f32 %v2934, %v3126
  %v3128 = vpop.f32.mrb[0].mxu0
  %v3129 = vadd.f32 %v2936, %v3128
  %v3130 = vpop.f32.mrb[0].mxu0
  %v3131 = vadd.f32 %v2938, %v3130
  %v3132 = vpop.f32.mrb[0].mxu0
  %v3133 = vadd.f32 %v2940, %v3132
  %3134 = vmatprep.mubr.bf16.mxu0 %v861
  %3135 = vmatmul.mubr.bf16.gmra.mrb[0].mxu0 %v860
  %v3136 = vpop.f32.mrb[0].mxu0
  %v3137 = vadd.f32 %v2944, %v3136
  %v3138 = vpop.f32.mrb[0].mxu0
  %v3139 = vadd.f32 %v2946, %v3138
  %v3140 = vpop.f32.mrb[0].mxu0
  %v3141 = vadd.f32 %v2948, %v3140
  %v3142 = vpop.f32.mrb[0].mxu0
  %v3143 = vadd.f32 %v2950, %v3142
  %3144 = vmatprep.mubr.bf16.mxu0 %v868
  %3145 = vmatmul.mubr.bf16.gmra.mrb[0].mxu0 %v867
  %v3146 = vpop.f32.mrb[0].mxu0
  %v3147 = vadd.f32 %v2954, %v3146
  %v3148 = vpop.f32.mrb[0].mxu0
  %v3149 = vadd.f32 %v2956, %v3148
  %v3150 = vpop.f32.mrb[0].mxu0
  %v3151 = vadd.f32 %v2958, %v3150
  %v3152 = vpop.f32.mrb[0].mxu0
  %v3153 = vadd.f32 %v2960, %v3152
  %3154 = vdwg.mxu0
  %3155 = vmatprep.subr.bf16.mxu0 %v1687
  %3156 = vmatpush1.bf16.msra.mxu0 %v1686
  %3157 = vmatprep.subr.bf16.mxu0 %v1691
  %3158 = vmatpush1.bf16.msra.mxu0 %v1690
  %3159 = vmatprep.subr.bf16.mxu0 %v1695
  %3160 = vmatpush1.bf16.msra.mxu0 %v1694
  %3161 = vmatprep.subr.bf16.mxu0 %v1699
  %3162 = vmatpush1.bf16.msra.mxu0 %v1698
  %3163 = vmatprep.subr.bf16.mxu0 %v1703
  %3164 = vmatpush1.bf16.msra.mxu0 %v1702
  %3165 = vmatprep.subr.bf16.mxu0 %v1707
  %3166 = vmatpush1.bf16.msra.mxu0 %v1706
  %3167 = vmatprep.subr.bf16.mxu0 %v1711
  %3168 = vmatpush1.bf16.msra.mxu0 %v1710
  %3169 = vmatprep.subr.bf16.mxu0 %v1715
  %3170 = vmatpush1.bf16.msra.mxu0 %v1714
  %3171 = vmatprep.subr.bf16.mxu0 %v1719
  %3172 = vmatpush1.bf16.msra.mxu0 %v1718
  %3173 = vmatprep.subr.bf16.mxu0 %v1723
  %3174 = vmatpush1.bf16.msra.mxu0 %v1722
  %3175 = vmatprep.subr.bf16.mxu0 %v1727
  %3176 = vmatpush1.bf16.msra.mxu0 %v1726
  %3177 = vmatprep.subr.bf16.mxu0 %v1731
  %3178 = vmatpush1.bf16.msra.mxu0 %v1730
  %3179 = vmatprep.subr.bf16.mxu0 %v1735
  %3180 = vmatpush1.bf16.msra.mxu0 %v1734
  %3181 = vmatprep.subr.bf16.mxu0 %v1739
  %3182 = vmatpush1.bf16.msra.mxu0 %v1738
  %3183 = vmatprep.subr.bf16.mxu0 %v1743
  %3184 = vmatpush1.bf16.msra.mxu0 %v1742
  %3185 = vmatprep.subr.bf16.mxu0 %v1747
  %3186 = vmatpush1.bf16.msra.mxu0 %v1746
  %3187 = vmatprep.mubr.bf16.mxu0 %v765
  %3188 = vmatmul.mubr.bf16.gmra.mrb[0].mxu0 %v764
  %v3189 = vpop.f32.mrb[0].mxu0
  %v3190 = vadd.f32 %v2997, %v3189
  %v3191 = vpop.f32.mrb[0].mxu0
  %v3192 = vadd.f32 %v2999, %v3191
  %v3193 = vpop.f32.mrb[0].mxu0
  %v3194 = vadd.f32 %v3001, %v3193
  %v3195 = vpop.f32.mrb[0].mxu0
  %v3196 = vadd.f32 %v3003, %v3195
  %3197 = vmatprep.mubr.bf16.mxu0 %v772
  %3198 = vmatmul.mubr.bf16.gmra.mrb[0].mxu0 %v771
  %v3199 = vpop.f32.mrb[0].mxu0
  %v3200 = vadd.f32 %v3007, %v3199
  %v3201 = vpop.f32.mrb[0].mxu0
  %v3202 = vadd.f32 %v3009, %v3201
  %v3203 = vpop.f32.mrb[0].mxu0
  %v3204 = vadd.f32 %v3011, %v3203
  %v3205 = vpop.f32.mrb[0].mxu0
  %v3206 = vadd.f32 %v3013, %v3205
  %3207 = vmatprep.mubr.bf16.mxu0 %v779
  %3208 = vmatmul.mubr.bf16.gmra.mrb[0].mxu0 %v778
  %v3209 = vpop.f32.mrb[0].mxu0
  %v3210 = vadd.f32 %v3017, %v3209
  %v3211 = vpop.f32.mrb[0].mxu0
  %v3212 = vadd.f32 %v3019, %v3211
  %v3213 = vpop.f32.mrb[0].mxu0
  %v3214 = vadd.f32 %v3021, %v3213
  %v3215 = vpop.f32.mrb[0].mxu0
  %v3216 = vadd.f32 %v3023, %v3215
  %3217 = vmatprep.mubr.bf16.mxu0 %v786
  %3218 = vmatmul.mubr.bf16.gmra.mrb[0].mxu0 %v785
  %v3219 = vpop.f32.mrb[0].mxu0
  %v3220 = vadd.f32 %v3027, %v3219
  %v3221 = vpop.f32.mrb[0].mxu0
  %v3222 = vadd.f32 %v3029, %v3221
  %v3223 = vpop.f32.mrb[0].mxu0
  %v3224 = vadd.f32 %v3031, %v3223
  %v3225 = vpop.f32.mrb[0].mxu0
  %v3226 = vadd.f32 %v3033, %v3225
  %3227 = vmatprep.mubr.bf16.mxu0 %v793
  %3228 = vmatmul.mubr.bf16.gmra.mrb[0].mxu0 %v792
  %v3229 = vpop.f32.mrb[0].mxu0
  %v3230 = vadd.f32 %v3037, %v3229
  %v3231 = vpop.f32.mrb[0].mxu0
  %v3232 = vadd.f32 %v3039, %v3231
  %v3233 = vpop.f32.mrb[0].mxu0
  %v3234 = vadd.f32 %v3041, %v3233
  %v3235 = vpop.f32.mrb[0].mxu0
  %v3236 = vadd.f32 %v3043, %v3235
  %3237 = vmatprep.mubr.bf16.mxu0 %v800
  %3238 = vmatmul.mubr.bf16.gmra.mrb[0].mxu0 %v799
  %v3239 = vpop.f32.mrb[0].mxu0
  %v3240 = vadd.f32 %v3047, %v3239
  %v3241 = vpop.f32.mrb[0].mxu0
  %v3242 = vadd.f32 %v3049, %v3241
  %v3243 = vpop.f32.mrb[0].mxu0
  %v3244 = vadd.f32 %v3051, %v3243
  %v3245 = vpop.f32.mrb[0].mxu0
  %v3246 = vadd.f32 %v3053, %v3245
  %3247 = vmatprep.mubr.bf16.mxu0 %v807
  %3248 = vmatmul.mubr.bf16.gmra.mrb[0].mxu0 %v806
  %v3249 = vpop.f32.mrb[0].mxu0
  %v3250 = vadd.f32 %v3057, %v3249
  %v3251 = vpop.f32.mrb[0].mxu0
  %v3252 = vadd.f32 %v3059, %v3251
  %v3253 = vpop.f32.mrb[0].mxu0
  %v3254 = vadd.f32 %v3061, %v3253
  %v3255 = vpop.f32.mrb[0].mxu0
  %v3256 = vadd.f32 %v3063, %v3255
  %3257 = vmatprep.mubr.bf16.mxu0 %v814
  %3258 = vmatmul.mubr.bf16.gmra.mrb[0].mxu0 %v813
  %v3259 = vpop.f32.mrb[0].mxu0
  %v3260 = vadd.f32 %v3067, %v3259
  %v3261 = vpop.f32.mrb[0].mxu0
  %v3262 = vadd.f32 %v3069, %v3261
  %v3263 = vpop.f32.mrb[0].mxu0
  %v3264 = vadd.f32 %v3071, %v3263
  %v3265 = vpop.f32.mrb[0].mxu0
  %v3266 = vadd.f32 %v3073, %v3265
  %3267 = vmatprep.mubr.bf16.mxu0 %v821
  %3268 = vmatmul.mubr.bf16.gmra.mrb[0].mxu0 %v820
  %v3269 = vpop.f32.mrb[0].mxu0
  %v3270 = vadd.f32 %v3077, %v3269
  %v3271 = vpop.f32.mrb[0].mxu0
  %v3272 = vadd.f32 %v3079, %v3271
  %v3273 = vpop.f32.mrb[0].mxu0
  %v3274 = vadd.f32 %v3081, %v3273
  %v3275 = vpop.f32.mrb[0].mxu0
  %v3276 = vadd.f32 %v3083, %v3275
  %3277 = vmatprep.mubr.bf16.mxu0 %v828
  %3278 = vmatmul.mubr.bf16.gmra.mrb[0].mxu0 %v827
  %v3279 = vpop.f32.mrb[0].mxu0
  %v3280 = vadd.f32 %v3087, %v3279
  %v3281 = vpop.f32.mrb[0].mxu0
  %v3282 = vadd.f32 %v3089, %v3281
  %v3283 = vpop.f32.mrb[0].mxu0
  %v3284 = vadd.f32 %v3091, %v3283
  %v3285 = vpop.f32.mrb[0].mxu0
  %v3286 = vadd.f32 %v3093, %v3285
  %3287 = vmatprep.mubr.bf16.mxu0 %v835
  %3288 = vmatmul.mubr.bf16.gmra.mrb[0].mxu0 %v834
  %v3289 = vpop.f32.mrb[0].mxu0
  %v3290 = vadd.f32 %v3097, %v3289
  %v3291 = vpop.f32.mrb[0].mxu0
  %v3292 = vadd.f32 %v3099, %v3291
  %v3293 = vpop.f32.mrb[0].mxu0
  %v3294 = vadd.f32 %v3101, %v3293
  %v3295 = vpop.f32.mrb[0].mxu0
  %v3296 = vadd.f32 %v3103, %v3295
  %3297 = vmatprep.mubr.bf16.mxu0 %v842
  %3298 = vmatmul.mubr.bf16.gmra.mrb[0].mxu0 %v841
  %v3299 = vpop.f32.mrb[0].mxu0
  %v3300 = vadd.f32 %v3107, %v3299
  %v3301 = vpop.f32.mrb[0].mxu0
  %v3302 = vadd.f32 %v3109, %v3301
  %v3303 = vpop.f32.mrb[0].mxu0
  %v3304 = vadd.f32 %v3111, %v3303
  %v3305 = vpop.f32.mrb[0].mxu0
  %v3306 = vadd.f32 %v3113, %v3305
  %3307 = vmatprep.mubr.bf16.mxu0 %v849
  %3308 = vmatmul.mubr.bf16.gmra.mrb[0].mxu0 %v848
  %v3309 = vpop.f32.mrb[0].mxu0
  %v3310 = vadd.f32 %v3117, %v3309
  %v3311 = vpop.f32.mrb[0].mxu0
  %v3312 = vadd.f32 %v3119, %v3311
  %v3313 = vpop.f32.mrb[0].mxu0
  %v3314 = vadd.f32 %v3121, %v3313
  %v3315 = vpop.f32.mrb[0].mxu0
  %v3316 = vadd.f32 %v3123, %v3315
  %3317 = vmatprep.mubr.bf16.mxu0 %v856
  %3318 = vmatmul.mubr.bf16.gmra.mrb[0].mxu0 %v855
  %v3319 = vpop.f32.mrb[0].mxu0
  %v3320 = vadd.f32 %v3127, %v3319
  %v3321 = vpop.f32.mrb[0].mxu0
  %v3322 = vadd.f32 %v3129, %v3321
  %v3323 = vpop.f32.mrb[0].mxu0
  %v3324 = vadd.f32 %v3131, %v3323
  %v3325 = vpop.f32.mrb[0].mxu0
  %v3326 = vadd.f32 %v3133, %v3325
  %3327 = vmatprep.mubr.bf16.mxu0 %v863
  %3328 = vmatmul.mubr.bf16.gmra.mrb[0].mxu0 %v862
  %v3329 = vpop.f32.mrb[0].mxu0
  %v3330 = vadd.f32 %v3137, %v3329
  %v3331 = vpop.f32.mrb[0].mxu0
  %v3332 = vadd.f32 %v3139, %v3331
  %v3333 = vpop.f32.mrb[0].mxu0
  %v3334 = vadd.f32 %v3141, %v3333
  %v3335 = vpop.f32.mrb[0].mxu0
  %v3336 = vadd.f32 %v3143, %v3335
  %3337 = vmatprep.mubr.bf16.mxu0 %v870
  %3338 = vmatmul.mubr.bf16.gmra.mrb[0].mxu0 %v869
  %v3339 = vpop.f32.mrb[0].mxu0
  %v3340 = vadd.f32 %v3147, %v3339
  %v3341 = vpop.f32.mrb[0].mxu0
  %v3342 = vadd.f32 %v3149, %v3341
  %v3343 = vpop.f32.mrb[0].mxu0
  %v3344 = vadd.f32 %v3151, %v3343
  %v3345 = vpop.f32.mrb[0].mxu0
  %v3346 = vadd.f32 %v3153, %v3345
  %3347 = vdwg.mxu0
  %3348 = vmatprep.subr.bf16.mxu0 %v1751
  %3349 = vmatpush1.bf16.msra.mxu0 %v1750
  %3350 = vmatprep.subr.bf16.mxu0 0
  %3351 = vmatpush1.bf16.msra.mxu0 0
  %3352 = vmatprep.subr.bf16.mxu0 0
  %3353 = vmatpush1.bf16.msra.mxu0 0
  %3354 = vmatprep.subr.bf16.mxu0 0
  %3355 = vmatpush1.bf16.msra.mxu0 0
  %3356 = vmatprep.subr.bf16.mxu0 0
  %3357 = vmatpush1.bf16.msra.mxu0 0
  %3358 = vmatprep.subr.bf16.mxu0 0
  %3359 = vmatpush1.bf16.msra.mxu0 0
  %3360 = vmatprep.subr.bf16.mxu0 0
  %3361 = vmatpush1.bf16.msra.mxu0 0
  %3362 = vmatprep.subr.bf16.mxu0 0
  %3363 = vmatpush1.bf16.msra.mxu0 0
  %3364 = vmatprep.subr.bf16.mxu0 0
  %3365 = vmatpush1.bf16.msra.mxu0 0
  %3366 = vmatprep.subr.bf16.mxu0 0
  %3367 = vmatpush1.bf16.msra.mxu0 0
  %3368 = vmatprep.subr.bf16.mxu0 0
  %3369 = vmatpush1.bf16.msra.mxu0 0
  %3370 = vmatprep.subr.bf16.mxu0 0
  %3371 = vmatpush1.bf16.msra.mxu0 0
  %3372 = vmatprep.subr.bf16.mxu0 0
  %3373 = vmatpush1.bf16.msra.mxu0 0
  %3374 = vmatprep.subr.bf16.mxu0 0
  %3375 = vmatpush1.bf16.msra.mxu0 0
  %3376 = vmatprep.subr.bf16.mxu0 0
  %3377 = vmatpush1.bf16.msra.mxu0 0
  %3378 = vmatprep.subr.bf16.mxu0 0
  %3379 = vmatpush1.bf16.msra.mxu0 0
  %3380 = vmatprep.mubr.bf16.mxu0 0
  %3381 = vmatmul.mubr.bf16.gmra.mrb[0].mxu0 %v1950
  %v3382 = vpop.f32.mrb[0].mxu0
  %v3383 = vadd.f32 %v3190, %v3382
  %v3384 = vpop.f32.mrb[0].mxu0
  %v3385 = vadd.f32 %v3192, %v3384
  %v3386 = vpop.f32.mrb[0].mxu0
  %v3387 = vadd.f32 %v3194, %v3386
  %v3388 = vpop.f32.mrb[0].mxu0
  %v3389 = vadd.f32 %v3196, %v3388
  %3390 = vmatprep.mubr.bf16.mxu0 0
  %3391 = vmatmul.mubr.bf16.gmra.mrb[0].mxu0 %v1953
  %v3392 = vpop.f32.mrb[0].mxu0
  %v3393 = vadd.f32 %v3200, %v3392
  %v3394 = vpop.f32.mrb[0].mxu0
  %v3395 = vadd.f32 %v3202, %v3394
  %v3396 = vpop.f32.mrb[0].mxu0
  %v3397 = vadd.f32 %v3204, %v3396
  %v3398 = vpop.f32.mrb[0].mxu0
  %v3399 = vadd.f32 %v3206, %v3398
  %3400 = vmatprep.mubr.bf16.mxu0 0
  %3401 = vmatmul.mubr.bf16.gmra.mrb[0].mxu0 %v1956
  %v3402 = vpop.f32.mrb[0].mxu0
  %v3403 = vadd.f32 %v3210, %v3402
  %v3404 = vpop.f32.mrb[0].mxu0
  %v3405 = vadd.f32 %v3212, %v3404
  %v3406 = vpop.f32.mrb[0].mxu0
  %v3407 = vadd.f32 %v3214, %v3406
  %v3408 = vpop.f32.mrb[0].mxu0
  %v3409 = vadd.f32 %v3216, %v3408
  %3410 = vmatprep.mubr.bf16.mxu0 0
  %3411 = vmatmul.mubr.bf16.gmra.mrb[0].mxu0 %v1959
  %v3412 = vpop.f32.mrb[0].mxu0
  %v3413 = vadd.f32 %v3220, %v3412
  %v3414 = vpop.f32.mrb[0].mxu0
  %v3415 = vadd.f32 %v3222, %v3414
  %v3416 = vpop.f32.mrb[0].mxu0
  %v3417 = vadd.f32 %v3224, %v3416
  %v3418 = vpop.f32.mrb[0].mxu0
  %v3419 = vadd.f32 %v3226, %v3418
  %3420 = vmatprep.mubr.bf16.mxu0 0
  %3421 = vmatmul.mubr.bf16.gmra.mrb[0].mxu0 %v1962
  %v3422 = vpop.f32.mrb[0].mxu0
  %v3423 = vadd.f32 %v3230, %v3422
  %v3424 = vpop.f32.mrb[0].mxu0
  %v3425 = vadd.f32 %v3232, %v3424
  %v3426 = vpop.f32.mrb[0].mxu0
  %v3427 = vadd.f32 %v3234, %v3426
  %v3428 = vpop.f32.mrb[0].mxu0
  %v3429 = vadd.f32 %v3236, %v3428
  %3430 = vmatprep.mubr.bf16.mxu0 0
  %3431 = vmatmul.mubr.bf16.gmra.mrb[0].mxu0 %v1965
  %v3432 = vpop.f32.mrb[0].mxu0
  %v3433 = vadd.f32 %v3240, %v3432
  %v3434 = vpop.f32.mrb[0].mxu0
  %v3435 = vadd.f32 %v3242, %v3434
  %v3436 = vpop.f32.mrb[0].mxu0
  %v3437 = vadd.f32 %v3244, %v3436
  %v3438 = vpop.f32.mrb[0].mxu0
  %v3439 = vadd.f32 %v3246, %v3438
  %3440 = vmatprep.mubr.bf16.mxu0 0
  %3441 = vmatmul.mubr.bf16.gmra.mrb[0].mxu0 %v1968
  %v3442 = vpop.f32.mrb[0].mxu0
  %v3443 = vadd.f32 %v3250, %v3442
  %v3444 = vpop.f32.mrb[0].mxu0
  %v3445 = vadd.f32 %v3252, %v3444
  %v3446 = vpop.f32.mrb[0].mxu0
  %v3447 = vadd.f32 %v3254, %v3446
  %v3448 = vpop.f32.mrb[0].mxu0
  %v3449 = vadd.f32 %v3256, %v3448
  %3450 = vmatprep.mubr.bf16.mxu0 0
  %3451 = vmatmul.mubr.bf16.gmra.mrb[0].mxu0 %v1971
  %v3452 = vpop.f32.mrb[0].mxu0
  %v3453 = vadd.f32 %v3260, %v3452
  %v3454 = vpop.f32.mrb[0].mxu0
  %v3455 = vadd.f32 %v3262, %v3454
  %v3456 = vpop.f32.mrb[0].mxu0
  %v3457 = vadd.f32 %v3264, %v3456
  %v3458 = vpop.f32.mrb[0].mxu0
  %v3459 = vadd.f32 %v3266, %v3458
  %3460 = vmatprep.mubr.bf16.mxu0 0
  %3461 = vmatmul.mubr.bf16.gmra.mrb[0].mxu0 %v1974
  %v3462 = vpop.f32.mrb[0].mxu0
  %v3463 = vadd.f32 %v3270, %v3462
  %v3464 = vpop.f32.mrb[0].mxu0
  %v3465 = vadd.f32 %v3272, %v3464
  %v3466 = vpop.f32.mrb[0].mxu0
  %v3467 = vadd.f32 %v3274, %v3466
  %v3468 = vpop.f32.mrb[0].mxu0
  %v3469 = vadd.f32 %v3276, %v3468
  %3470 = vmatprep.mubr.bf16.mxu0 0
  %3471 = vmatmul.mubr.bf16.gmra.mrb[0].mxu0 %v1977
  %v3472 = vpop.f32.mrb[0].mxu0
  %v3473 = vadd.f32 %v3280, %v3472
  %v3474 = vpop.f32.mrb[0].mxu0
  %v3475 = vadd.f32 %v3282, %v3474
  %v3476 = vpop.f32.mrb[0].mxu0
  %v3477 = vadd.f32 %v3284, %v3476
  %v3478 = vpop.f32.mrb[0].mxu0
  %v3479 = vadd.f32 %v3286, %v3478
  %3480 = vmatprep.mubr.bf16.mxu0 0
  %3481 = vmatmul.mubr.bf16.gmra.mrb[0].mxu0 %v1980
  %v3482 = vpop.f32.mrb[0].mxu0
  %v3483 = vadd.f32 %v3290, %v3482
  %v3484 = vpop.f32.mrb[0].mxu0
  %v3485 = vadd.f32 %v3292, %v3484
  %v3486 = vpop.f32.mrb[0].mxu0
  %v3487 = vadd.f32 %v3294, %v3486
  %v3488 = vpop.f32.mrb[0].mxu0
  %v3489 = vadd.f32 %v3296, %v3488
  %3490 = vmatprep.mubr.bf16.mxu0 0
  %3491 = vmatmul.mubr.bf16.gmra.mrb[0].mxu0 %v1983
  %v3492 = vpop.f32.mrb[0].mxu0
  %v3493 = vadd.f32 %v3300, %v3492
  %v3494 = vpop.f32.mrb[0].mxu0
  %v3495 = vadd.f32 %v3302, %v3494
  %v3496 = vpop.f32.mrb[0].mxu0
  %v3497 = vadd.f32 %v3304, %v3496
  %v3498 = vpop.f32.mrb[0].mxu0
  %v3499 = vadd.f32 %v3306, %v3498
  %3500 = vmatprep.mubr.bf16.mxu0 0
  %3501 = vmatmul.mubr.bf16.gmra.mrb[0].mxu0 %v1986
  %v3502 = vpop.f32.mrb[0].mxu0
  %v3503 = vadd.f32 %v3310, %v3502
  %v3504 = vpop.f32.mrb[0].mxu0
  %v3505 = vadd.f32 %v3312, %v3504
  %v3506 = vpop.f32.mrb[0].mxu0
  %v3507 = vadd.f32 %v3314, %v3506
  %v3508 = vpop.f32.mrb[0].mxu0
  %v3509 = vadd.f32 %v3316, %v3508
  %3510 = vmatprep.mubr.bf16.mxu0 0
  %3511 = vmatmul.mubr.bf16.gmra.mrb[0].mxu0 %v1989
  %v3512 = vpop.f32.mrb[0].mxu0
  %v3513 = vadd.f32 %v3320, %v3512
  %v3514 = vpop.f32.mrb[0].mxu0
  %v3515 = vadd.f32 %v3322, %v3514
  %v3516 = vpop.f32.mrb[0].mxu0
  %v3517 = vadd.f32 %v3324, %v3516
  %v3518 = vpop.f32.mrb[0].mxu0
  %v3519 = vadd.f32 %v3326, %v3518
  %3520 = vmatprep.mubr.bf16.mxu0 0
  %3521 = vmatmul.mubr.bf16.gmra.mrb[0].mxu0 %v1992
  %v3522 = vpop.f32.mrb[0].mxu0
  %v3523 = vadd.f32 %v3330, %v3522
  %v3524 = vpop.f32.mrb[0].mxu0
  %v3525 = vadd.f32 %v3332, %v3524
  %v3526 = vpop.f32.mrb[0].mxu0
  %v3527 = vadd.f32 %v3334, %v3526
  %v3528 = vpop.f32.mrb[0].mxu0
  %v3529 = vadd.f32 %v3336, %v3528
  %3530 = vmatprep.mubr.bf16.mxu0 0
  %3531 = vmatmul.mubr.bf16.gmra.mrb[0].mxu0 %v1995
  %v3532 = vpop.f32.mrb[0].mxu0
  %v3533 = vadd.f32 %v3340, %v3532
  %v3534 = vpop.f32.mrb[0].mxu0
  %v3535 = vadd.f32 %v3342, %v3534
  %v3536 = vpop.f32.mrb[0].mxu0
  %v3537 = vadd.f32 %v3344, %v3536
  %v3538 = vpop.f32.mrb[0].mxu0
  %v3539 = vadd.f32 %v3346, %v3538
  %3540 = vdwg.mxu0
  %vm3541 = vcmp.ge.f32.partialorder %v2611, 0.0
  %vm3542 = vcmp.ge.f32.partialorder %v2613, 0.0
  %vm3543 = vcmp.ge.f32.partialorder %v3383, 0.0
  %vm3544 = vcmp.ge.f32.partialorder %v3385, 0.0
  %vm3545 = vcmp.ge.f32.partialorder %v2615, 0.0
  %vm3546 = vcmp.ge.f32.partialorder %v2617, 0.0
  %vm3547 = vcmp.ge.f32.partialorder %v3387, 0.0
  %vm3548 = vcmp.ge.f32.partialorder %v3389, 0.0
  %vm3549 = vcmp.ge.f32.partialorder %v2621, 0.0
  %vm3550 = vcmp.ge.f32.partialorder %v2623, 0.0
  %vm3551 = vcmp.ge.f32.partialorder %v3393, 0.0
  %vm3552 = vcmp.ge.f32.partialorder %v3395, 0.0
  %vm3553 = vcmp.ge.f32.partialorder %v2625, 0.0
  %vm3554 = vcmp.ge.f32.partialorder %v2627, 0.0
  %vm3555 = vcmp.ge.f32.partialorder %v3397, 0.0
  %vm3556 = vcmp.ge.f32.partialorder %v3399, 0.0
  %vm3557 = vcmp.ge.f32.partialorder %v2631, 0.0
  %vm3558 = vcmp.ge.f32.partialorder %v2633, 0.0
  %vm3559 = vcmp.ge.f32.partialorder %v3403, 0.0
  %vm3560 = vcmp.ge.f32.partialorder %v3405, 0.0
  %vm3561 = vcmp.ge.f32.partialorder %v2635, 0.0
  %vm3562 = vcmp.ge.f32.partialorder %v2637, 0.0
  %vm3563 = vcmp.ge.f32.partialorder %v3407, 0.0
  %vm3564 = vcmp.ge.f32.partialorder %v3409, 0.0
  %vm3565 = vcmp.ge.f32.partialorder %v2641, 0.0
  %vm3566 = vcmp.ge.f32.partialorder %v2643, 0.0
  %vm3567 = vcmp.ge.f32.partialorder %v3413, 0.0
  %vm3568 = vcmp.ge.f32.partialorder %v3415, 0.0
  %vm3569 = vcmp.ge.f32.partialorder %v2645, 0.0
  %vm3570 = vcmp.ge.f32.partialorder %v2647, 0.0
  %vm3571 = vcmp.ge.f32.partialorder %v3417, 0.0
  %vm3572 = vcmp.ge.f32.partialorder %v3419, 0.0
  %vm3573 = vcmp.ge.f32.partialorder %v2651, 0.0
  %vm3574 = vcmp.ge.f32.partialorder %v2653, 0.0
  %vm3575 = vcmp.ge.f32.partialorder %v3423, 0.0
  %vm3576 = vcmp.ge.f32.partialorder %v3425, 0.0
  %vm3577 = vcmp.ge.f32.partialorder %v2655, 0.0
  %vm3578 = vcmp.ge.f32.partialorder %v2657, 0.0
  %vm3579 = vcmp.ge.f32.partialorder %v3427, 0.0
  %vm3580 = vcmp.ge.f32.partialorder %v3429, 0.0
  %vm3581 = vcmp.ge.f32.partialorder %v2661, 0.0
  %vm3582 = vcmp.ge.f32.partialorder %v2663, 0.0
  %vm3583 = vcmp.ge.f32.partialorder %v3433, 0.0
  %vm3584 = vcmp.ge.f32.partialorder %v3435, 0.0
  %vm3585 = vcmp.ge.f32.partialorder %v2665, 0.0
  %vm3586 = vcmp.ge.f32.partialorder %v2667, 0.0
  %vm3587 = vcmp.ge.f32.partialorder %v3437, 0.0
  %vm3588 = vcmp.ge.f32.partialorder %v3439, 0.0
  %vm3589 = vcmp.ge.f32.partialorder %v2671, 0.0
  %vm3590 = vcmp.ge.f32.partialorder %v2673, 0.0
  %vm3591 = vcmp.ge.f32.partialorder %v3443, 0.0
  %vm3592 = vcmp.ge.f32.partialorder %v3445, 0.0
  %vm3593 = vcmp.ge.f32.partialorder %v2675, 0.0
  %vm3594 = vcmp.ge.f32.partialorder %v2677, 0.0
  %vm3595 = vcmp.ge.f32.partialorder %v3447, 0.0
  %vm3596 = vcmp.ge.f32.partialorder %v3449, 0.0
  %vm3597 = vcmp.ge.f32.partialorder %v2681, 0.0
  %vm3598 = vcmp.ge.f32.partialorder %v2683, 0.0
  %vm3599 = vcmp.ge.f32.partialorder %v3453, 0.0
  %vm3600 = vcmp.ge.f32.partialorder %v3455, 0.0
  %vm3601 = vcmp.ge.f32.partialorder %v2685, 0.0
  %vm3602 = vcmp.ge.f32.partialorder %v2687, 0.0
  %vm3603 = vcmp.ge.f32.partialorder %v3457, 0.0
  %vm3604 = vcmp.ge.f32.partialorder %v3459, 0.0
  %vm3605 = vcmp.ge.f32.partialorder %v2691, 0.0
  %vm3606 = vcmp.ge.f32.partialorder %v2693, 0.0
  %vm3607 = vcmp.ge.f32.partialorder %v3463, 0.0
  %vm3608 = vcmp.ge.f32.partialorder %v3465, 0.0
  %vm3609 = vcmp.ge.f32.partialorder %v2695, 0.0
  %vm3610 = vcmp.ge.f32.partialorder %v2697, 0.0
  %vm3611 = vcmp.ge.f32.partialorder %v3467, 0.0
  %vm3612 = vcmp.ge.f32.partialorder %v3469, 0.0
  %vm3613 = vcmp.ge.f32.partialorder %v2701, 0.0
  %vm3614 = vcmp.ge.f32.partialorder %v2703, 0.0
  %vm3615 = vcmp.ge.f32.partialorder %v3473, 0.0
  %vm3616 = vcmp.ge.f32.partialorder %v3475, 0.0
  %vm3617 = vcmp.ge.f32.partialorder %v2705, 0.0
  %vm3618 = vcmp.ge.f32.partialorder %v2707, 0.0
  %vm3619 = vcmp.ge.f32.partialorder %v3477, 0.0
  %vm3620 = vcmp.ge.f32.partialorder %v3479, 0.0
  %vm3621 = vcmp.ge.f32.partialorder %v2711, 0.0
  %vm3622 = vcmp.ge.f32.partialorder %v2713, 0.0
  %vm3623 = vcmp.ge.f32.partialorder %v3483, 0.0
  %vm3624 = vcmp.ge.f32.partialorder %v3485, 0.0
  %vm3625 = vcmp.ge.f32.partialorder %v2715, 0.0
  %vm3626 = vcmp.ge.f32.partialorder %v2717, 0.0
  %vm3627 = vcmp.ge.f32.partialorder %v3487, 0.0
  %vm3628 = vcmp.ge.f32.partialorder %v3489, 0.0
  %vm3629 = vcmp.ge.f32.partialorder %v2721, 0.0
  %vm3630 = vcmp.ge.f32.partialorder %v2723, 0.0
  %vm3631 = vcmp.ge.f32.partialorder %v3493, 0.0
  %vm3632 = vcmp.ge.f32.partialorder %v3495, 0.0
  %vm3633 = vcmp.ge.f32.partialorder %v2725, 0.0
  %vm3634 = vcmp.ge.f32.partialorder %v2727, 0.0
  %vm3635 = vcmp.ge.f32.partialorder %v3497, 0.0
  %vm3636 = vcmp.ge.f32.partialorder %v3499, 0.0
  %vm3637 = vcmp.ge.f32.partialorder %v2731, 0.0
  %vm3638 = vcmp.ge.f32.partialorder %v2733, 0.0
  %vm3639 = vcmp.ge.f32.partialorder %v3503, 0.0
  %vm3640 = vcmp.ge.f32.partialorder %v3505, 0.0
  %vm3641 = vcmp.ge.f32.partialorder %v2735, 0.0
  %vm3642 = vcmp.ge.f32.partialorder %v2737, 0.0
  %vm3643 = vcmp.ge.f32.partialorder %v3507, 0.0
  %vm3644 = vcmp.ge.f32.partialorder %v3509, 0.0
  %vm3645 = vcmp.ge.f32.partialorder %v2741, 0.0
  %vm3646 = vcmp.ge.f32.partialorder %v2743, 0.0
  %vm3647 = vcmp.ge.f32.partialorder %v3513, 0.0
  %vm3648 = vcmp.ge.f32.partialorder %v3515, 0.0
  %vm3649 = vcmp.ge.f32.partialorder %v2745, 0.0
  %vm3650 = vcmp.ge.f32.partialorder %v2747, 0.0
  %vm3651 = vcmp.ge.f32.partialorder %v3517, 0.0
  %vm3652 = vcmp.ge.f32.partialorder %v3519, 0.0
  %vm3653 = vcmp.ge.f32.partialorder %v2751, 0.0
  %vm3654 = vcmp.ge.f32.partialorder %v2753, 0.0
  %vm3655 = vcmp.ge.f32.partialorder %v3523, 0.0
  %vm3656 = vcmp.ge.f32.partialorder %v3525, 0.0
  %vm3657 = vcmp.ge.f32.partialorder %v2755, 0.0
  %vm3658 = vcmp.ge.f32.partialorder %v2757, 0.0
  %vm3659 = vcmp.ge.f32.partialorder %v3527, 0.0
  %vm3660 = vcmp.ge.f32.partialorder %v3529, 0.0
  %vm3661 = vcmp.ge.f32.partialorder %v2761, 0.0
  %vm3662 = vcmp.ge.f32.partialorder %v2763, 0.0
  %vm3663 = vcmp.ge.f32.partialorder %v3533, 0.0
  %vm3664 = vcmp.ge.f32.partialorder %v3535, 0.0
  %vm3665 = vcmp.ge.f32.partialorder %v2765, 0.0
  %vm3666 = vcmp.ge.f32.partialorder %v2767, 0.0
  %vm3667 = vcmp.ge.f32.partialorder %v3537, 0.0
  %vm3668 = vcmp.ge.f32.partialorder %v3539, 0.0
  %v3669 = vmul.f32 %v2611, 0.01
  %v3670 = vmul.f32 %v2613, 0.01
  %v3671 = vmul.f32 %v3383, 0.01
  %v3672 = vmul.f32 %v3385, 0.01
  %v3673 = vmul.f32 %v2615, 0.01
  %v3674 = vmul.f32 %v2617, 0.01
  %v3675 = vmul.f32 %v3387, 0.01
  %v3676 = vmul.f32 %v3389, 0.01
  %v3677 = vmul.f32 %v2621, 0.01
  %v3678 = vmul.f32 %v2623, 0.01
  %v3679 = vmul.f32 %v3393, 0.01
  %v3680 = vmul.f32 %v3395, 0.01
  %v3681 = vmul.f32 %v2625, 0.01
  %v3682 = vmul.f32 %v2627, 0.01
  %v3683 = vmul.f32 %v3397, 0.01
  %v3684 = vmul.f32 %v3399, 0.01
  %v3685 = vmul.f32 %v2631, 0.01
  %v3686 = vmul.f32 %v2633, 0.01
  %v3687 = vmul.f32 %v3403, 0.01
  %v3688 = vmul.f32 %v3405, 0.01
  %v3689 = vmul.f32 %v2635, 0.01
  %v3690 = vmul.f32 %v2637, 0.01
  %v3691 = vmul.f32 %v3407, 0.01
  %v3692 = vmul.f32 %v3409, 0.01
  %v3693 = vmul.f32 %v2641, 0.01
  %v3694 = vmul.f32 %v2643, 0.01
  %v3695 = vmul.f32 %v3413, 0.01
  %v3696 = vmul.f32 %v3415, 0.01
  %v3697 = vmul.f32 %v2645, 0.01
  %v3698 = vmul.f32 %v2647, 0.01
  %v3699 = vmul.f32 %v3417, 0.01
  %v3700 = vmul.f32 %v3419, 0.01
  %v3701 = vmul.f32 %v2651, 0.01
  %v3702 = vmul.f32 %v2653, 0.01
  %v3703 = vmul.f32 %v3423, 0.01
  %v3704 = vmul.f32 %v3425, 0.01
  %v3705 = vmul.f32 %v2655, 0.01
  %v3706 = vmul.f32 %v2657, 0.01
  %v3707 = vmul.f32 %v3427, 0.01
  %v3708 = vmul.f32 %v3429, 0.01
  %v3709 = vmul.f32 %v2661, 0.01
  %v3710 = vmul.f32 %v2663, 0.01
  %v3711 = vmul.f32 %v3433, 0.01
  %v3712 = vmul.f32 %v3435, 0.01
  %v3713 = vmul.f32 %v2665, 0.01
  %v3714 = vmul.f32 %v2667, 0.01
  %v3715 = vmul.f32 %v3437, 0.01
  %v3716 = vmul.f32 %v3439, 0.01
  %v3717 = vmul.f32 %v2671, 0.01
  %v3718 = vmul.f32 %v2673, 0.01
  %v3719 = vmul.f32 %v3443, 0.01
  %v3720 = vmul.f32 %v3445, 0.01
  %v3721 = vmul.f32 %v2675, 0.01
  %v3722 = vmul.f32 %v2677, 0.01
  %v3723 = vmul.f32 %v3447, 0.01
  %v3724 = vmul.f32 %v3449, 0.01
  %v3725 = vmul.f32 %v2681, 0.01
  %v3726 = vmul.f32 %v2683, 0.01
  %v3727 = vmul.f32 %v3453, 0.01
  %v3728 = vmul.f32 %v3455, 0.01
  %v3729 = vmul.f32 %v2685, 0.01
  %v3730 = vmul.f32 %v2687, 0.01
  %v3731 = vmul.f32 %v3457, 0.01
  %v3732 = vmul.f32 %v3459, 0.01
  %v3733 = vmul.f32 %v2691, 0.01
  %v3734 = vmul.f32 %v2693, 0.01
  %v3735 = vmul.f32 %v3463, 0.01
  %v3736 = vmul.f32 %v3465, 0.01
  %v3737 = vmul.f32 %v2695, 0.01
  %v3738 = vmul.f32 %v2697, 0.01
  %v3739 = vmul.f32 %v3467, 0.01
  %v3740 = vmul.f32 %v3469, 0.01
  %v3741 = vmul.f32 %v2701, 0.01
  %v3742 = vmul.f32 %v2703, 0.01
  %v3743 = vmul.f32 %v3473, 0.01
  %v3744 = vmul.f32 %v3475, 0.01
  %v3745 = vmul.f32 %v2705, 0.01
  %v3746 = vmul.f32 %v2707, 0.01
  %v3747 = vmul.f32 %v3477, 0.01
  %v3748 = vmul.f32 %v3479, 0.01
  %v3749 = vmul.f32 %v2711, 0.01
  %v3750 = vmul.f32 %v2713, 0.01
  %v3751 = vmul.f32 %v3483, 0.01
  %v3752 = vmul.f32 %v3485, 0.01
  %v3753 = vmul.f32 %v2715, 0.01
  %v3754 = vmul.f32 %v2717, 0.01
  %v3755 = vmul.f32 %v3487, 0.01
  %v3756 = vmul.f32 %v3489, 0.01
  %v3757 = vmul.f32 %v2721, 0.01
  %v3758 = vmul.f32 %v2723, 0.01
  %v3759 = vmul.f32 %v3493, 0.01
  %v3760 = vmul.f32 %v3495, 0.01
  %v3761 = vmul.f32 %v2725, 0.01
  %v3762 = vmul.f32 %v2727, 0.01
  %v3763 = vmul.f32 %v3497, 0.01
  %v3764 = vmul.f32 %v3499, 0.01
  %v3765 = vmul.f32 %v2731, 0.01
  %v3766 = vmul.f32 %v2733, 0.01
  %v3767 = vmul.f32 %v3503, 0.01
  %v3768 = vmul.f32 %v3505, 0.01
  %v3769 = vmul.f32 %v2735, 0.01
  %v3770 = vmul.f32 %v2737, 0.01
  %v3771 = vmul.f32 %v3507, 0.01
  %v3772 = vmul.f32 %v3509, 0.01
  %v3773 = vmul.f32 %v2741, 0.01
  %v3774 = vmul.f32 %v2743, 0.01
  %v3775 = vmul.f32 %v3513, 0.01
  %v3776 = vmul.f32 %v3515, 0.01
  %v3777 = vmul.f32 %v2745, 0.01
  %v3778 = vmul.f32 %v2747, 0.01
  %v3779 = vmul.f32 %v3517, 0.01
  %v3780 = vmul.f32 %v3519, 0.01
  %v3781 = vmul.f32 %v2751, 0.01
  %v3782 = vmul.f32 %v2753, 0.01
  %v3783 = vmul.f32 %v3523, 0.01
  %v3784 = vmul.f32 %v3525, 0.01
  %v3785 = vmul.f32 %v2755, 0.01
  %v3786 = vmul.f32 %v2757, 0.01
  %v3787 = vmul.f32 %v3527, 0.01
  %v3788 = vmul.f32 %v3529, 0.01
  %v3789 = vmul.f32 %v2761, 0.01
  %v3790 = vmul.f32 %v2763, 0.01
  %v3791 = vmul.f32 %v3533, 0.01
  %v3792 = vmul.f32 %v3535, 0.01
  %v3793 = vmul.f32 %v2765, 0.01
  %v3794 = vmul.f32 %v2767, 0.01
  %v3795 = vmul.f32 %v3537, 0.01
  %v3796 = vmul.f32 %v3539, 0.01
  %v3797 = vsel %vm3541, %v2611, %v3669
  %v3798 = vsel %vm3542, %v2613, %v3670
  %v3799 = vsel %vm3543, %v3383, %v3671
  %v3800 = vsel %vm3544, %v3385, %v3672
  %v3801 = vsel %vm3545, %v2615, %v3673
  %v3802 = vsel %vm3546, %v2617, %v3674
  %v3803 = vsel %vm3547, %v3387, %v3675
  %v3804 = vsel %vm3548, %v3389, %v3676
  %v3805 = vsel %vm3549, %v2621, %v3677
  %v3806 = vsel %vm3550, %v2623, %v3678
  %v3807 = vsel %vm3551, %v3393, %v3679
  %v3808 = vsel %vm3552, %v3395, %v3680
  %v3809 = vsel %vm3553, %v2625, %v3681
  %v3810 = vsel %vm3554, %v2627, %v3682
  %v3811 = vsel %vm3555, %v3397, %v3683
  %v3812 = vsel %vm3556, %v3399, %v3684
  %v3813 = vsel %vm3557, %v2631, %v3685
  %v3814 = vsel %vm3558, %v2633, %v3686
  %v3815 = vsel %vm3559, %v3403, %v3687
  %v3816 = vsel %vm3560, %v3405, %v3688
  %v3817 = vsel %vm3561, %v2635, %v3689
  %v3818 = vsel %vm3562, %v2637, %v3690
  %v3819 = vsel %vm3563, %v3407, %v3691
  %v3820 = vsel %vm3564, %v3409, %v3692
  %v3821 = vsel %vm3565, %v2641, %v3693
  %v3822 = vsel %vm3566, %v2643, %v3694
  %v3823 = vsel %vm3567, %v3413, %v3695
  %v3824 = vsel %vm3568, %v3415, %v3696
  %v3825 = vsel %vm3569, %v2645, %v3697
  %v3826 = vsel %vm3570, %v2647, %v3698
  %v3827 = vsel %vm3571, %v3417, %v3699
  %v3828 = vsel %vm3572, %v3419, %v3700
  %v3829 = vsel %vm3573, %v2651, %v3701
  %v3830 = vsel %vm3574, %v2653, %v3702
  %v3831 = vsel %vm3575, %v3423, %v3703
  %v3832 = vsel %vm3576, %v3425, %v3704
  %v3833 = vsel %vm3577, %v2655, %v3705
  %v3834 = vsel %vm3578, %v2657, %v3706
  %v3835 = vsel %vm3579, %v3427, %v3707
  %v3836 = vsel %vm3580, %v3429, %v3708
  %v3837 = vsel %vm3581, %v2661, %v3709
  %v3838 = vsel %vm3582, %v2663, %v3710
  %v3839 = vsel %vm3583, %v3433, %v3711
  %v3840 = vsel %vm3584, %v3435, %v3712
  %v3841 = vsel %vm3585, %v2665, %v3713
  %v3842 = vsel %vm3586, %v2667, %v3714
  %v3843 = vsel %vm3587, %v3437, %v3715
  %v3844 = vsel %vm3588, %v3439, %v3716
  %v3845 = vsel %vm3589, %v2671, %v3717
  %v3846 = vsel %vm3590, %v2673, %v3718
  %v3847 = vsel %vm3591, %v3443, %v3719
  %v3848 = vsel %vm3592, %v3445, %v3720
  %v3849 = vsel %vm3593, %v2675, %v3721
  %v3850 = vsel %vm3594, %v2677, %v3722
  %v3851 = vsel %vm3595, %v3447, %v3723
  %v3852 = vsel %vm3596, %v3449, %v3724
  %v3853 = vsel %vm3597, %v2681, %v3725
  %v3854 = vsel %vm3598, %v2683, %v3726
  %v3855 = vsel %vm3599, %v3453, %v3727
  %v3856 = vsel %vm3600, %v3455, %v3728
  %v3857 = vsel %vm3601, %v2685, %v3729
  %v3858 = vsel %vm3602, %v2687, %v3730
  %v3859 = vsel %vm3603, %v3457, %v3731
  %v3860 = vsel %vm3604, %v3459, %v3732
  %v3861 = vsel %vm3605, %v2691, %v3733
  %v3862 = vsel %vm3606, %v2693, %v3734
  %v3863 = vsel %vm3607, %v3463, %v3735
  %v3864 = vsel %vm3608, %v3465, %v3736
  %v3865 = vsel %vm3609, %v2695, %v3737
  %v3866 = vsel %vm3610, %v2697, %v3738
  %v3867 = vsel %vm3611, %v3467, %v3739
  %v3868 = vsel %vm3612, %v3469, %v3740
  %v3869 = vsel %vm3613, %v2701, %v3741
  %v3870 = vsel %vm3614, %v2703, %v3742
  %v3871 = vsel %vm3615, %v3473, %v3743
  %v3872 = vsel %vm3616, %v3475, %v3744
  %v3873 = vsel %vm3617, %v2705, %v3745
  %v3874 = vsel %vm3618, %v2707, %v3746
  %v3875 = vsel %vm3619, %v3477, %v3747
  %v3876 = vsel %vm3620, %v3479, %v3748
  %v3877 = vsel %vm3621, %v2711, %v3749
  %v3878 = vsel %vm3622, %v2713, %v3750
  %v3879 = vsel %vm3623, %v3483, %v3751
  %v3880 = vsel %vm3624, %v3485, %v3752
  %v3881 = vsel %vm3625, %v2715, %v3753
  %v3882 = vsel %vm3626, %v2717, %v3754
  %v3883 = vsel %vm3627, %v3487, %v3755
  %v3884 = vsel %vm3628, %v3489, %v3756
  %v3885 = vsel %vm3629, %v2721, %v3757
  %v3886 = vsel %vm3630, %v2723, %v3758
  %v3887 = vsel %vm3631, %v3493, %v3759
  %v3888 = vsel %vm3632, %v3495, %v3760
  %v3889 = vsel %vm3633, %v2725, %v3761
  %v3890 = vsel %vm3634, %v2727, %v3762
  %v3891 = vsel %vm3635, %v3497, %v3763
  %v3892 = vsel %vm3636, %v3499, %v3764
  %v3893 = vsel %vm3637, %v2731, %v3765
  %v3894 = vsel %vm3638, %v2733, %v3766
  %v3895 = vsel %vm3639, %v3503, %v3767
  %v3896 = vsel %vm3640, %v3505, %v3768
  %v3897 = vsel %vm3641, %v2735, %v3769
  %v3898 = vsel %vm3642, %v2737, %v3770
  %v3899 = vsel %vm3643, %v3507, %v3771
  %v3900 = vsel %vm3644, %v3509, %v3772
  %v3901 = vsel %vm3645, %v2741, %v3773
  %v3902 = vsel %vm3646, %v2743, %v3774
  %v3903 = vsel %vm3647, %v3513, %v3775
  %v3904 = vsel %vm3648, %v3515, %v3776
  %v3905 = vsel %vm3649, %v2745, %v3777
  %v3906 = vsel %vm3650, %v2747, %v3778
  %v3907 = vsel %vm3651, %v3517, %v3779
  %v3908 = vsel %vm3652, %v3519, %v3780
  %v3909 = vsel %vm3653, %v2751, %v3781
  %v3910 = vsel %vm3654, %v2753, %v3782
  %v3911 = vsel %vm3655, %v3523, %v3783
  %v3912 = vsel %vm3656, %v3525, %v3784
  %v3913 = vsel %vm3657, %v2755, %v3785
  %v3914 = vsel %vm3658, %v2757, %v3786
  %v3915 = vsel %vm3659, %v3527, %v3787
  %v3916 = vsel %vm3660, %v3529, %v3788
  %v3917 = vsel %vm3661, %v2761, %v3789
  %v3918 = vsel %vm3662, %v2763, %v3790
  %v3919 = vsel %vm3663, %v3533, %v3791
  %v3920 = vsel %vm3664, %v3535, %v3792
  %v3921 = vsel %vm3665, %v2765, %v3793
  %v3922 = vsel %vm3666, %v2767, %v3794
  %v3923 = vsel %vm3667, %v3537, %v3795
  %v3924 = vsel %vm3668, %v3539, %v3796
  %v3925 = vpack.c.bf16 %v3801, %v3797
  %v3926 = vpack.c.bf16 %v3802, %v3798
  %v3927 = vpack.c.bf16 %v3803, %v3799
  %v3928 = vpack.c.bf16 %v3804, %v3800
  %v3929 = vpack.c.bf16 %v3809, %v3805
  %v3930 = vpack.c.bf16 %v3810, %v3806
  %v3931 = vpack.c.bf16 %v3811, %v3807
  %v3932 = vpack.c.bf16 %v3812, %v3808
  %v3933 = vpack.c.bf16 %v3817, %v3813
  %v3934 = vpack.c.bf16 %v3818, %v3814
  %v3935 = vpack.c.bf16 %v3819, %v3815
  %v3936 = vpack.c.bf16 %v3820, %v3816
  %v3937 = vpack.c.bf16 %v3825, %v3821
  %v3938 = vpack.c.bf16 %v3826, %v3822
  %v3939 = vpack.c.bf16 %v3827, %v3823
  %v3940 = vpack.c.bf16 %v3828, %v3824
  %v3941 = vpack.c.bf16 %v3833, %v3829
  %v3942 = vpack.c.bf16 %v3834, %v3830
  %v3943 = vpack.c.bf16 %v3835, %v3831
  %v3944 = vpack.c.bf16 %v3836, %v3832
  %v3945 = vpack.c.bf16 %v3841, %v3837
  %v3946 = vpack.c.bf16 %v3842, %v3838
  %v3947 = vpack.c.bf16 %v3843, %v3839
  %v3948 = vpack.c.bf16 %v3844, %v3840
  %v3949 = vpack.c.bf16 %v3849, %v3845
  %v3950 = vpack.c.bf16 %v3850, %v3846
  %v3951 = vpack.c.bf16 %v3851, %v3847
  %v3952 = vpack.c.bf16 %v3852, %v3848
  %v3953 = vpack.c.bf16 %v3857, %v3853
  %v3954 = vpack.c.bf16 %v3858, %v3854
  %v3955 = vpack.c.bf16 %v3859, %v3855
  %v3956 = vpack.c.bf16 %v3860, %v3856
  %v3957 = vpack.c.bf16 %v3865, %v3861
  %v3958 = vpack.c.bf16 %v3866, %v3862
  %v3959 = vpack.c.bf16 %v3867, %v3863
  %v3960 = vpack.c.bf16 %v3868, %v3864
  %v3961 = vpack.c.bf16 %v3873, %v3869
  %v3962 = vpack.c.bf16 %v3874, %v3870
  %v3963 = vpack.c.bf16 %v3875, %v3871
  %v3964 = vpack.c.bf16 %v3876, %v3872
  %v3965 = vpack.c.bf16 %v3881, %v3877
  %v3966 = vpack.c.bf16 %v3882, %v3878
  %v3967 = vpack.c.bf16 %v3883, %v3879
  %v3968 = vpack.c.bf16 %v3884, %v3880
  %v3969 = vpack.c.bf16 %v3889, %v3885
  %v3970 = vpack.c.bf16 %v3890, %v3886
  %v3971 = vpack.c.bf16 %v3891, %v3887
  %v3972 = vpack.c.bf16 %v3892, %v3888
  %v3973 = vpack.c.bf16 %v3897, %v3893
  %v3974 = vpack.c.bf16 %v3898, %v3894
  %v3975 = vpack.c.bf16 %v3899, %v3895
  %v3976 = vpack.c.bf16 %v3900, %v3896
  %v3977 = vpack.c.bf16 %v3905, %v3901
  %v3978 = vpack.c.bf16 %v3906, %v3902
  %v3979 = vpack.c.bf16 %v3907, %v3903
  %v3980 = vpack.c.bf16 %v3908, %v3904
  %v3981 = vpack.c.bf16 %v3913, %v3909
  %v3982 = vpack.c.bf16 %v3914, %v3910
  %v3983 = vpack.c.bf16 %v3915, %v3911
  %v3984 = vpack.c.bf16 %v3916, %v3912
  %v3985 = vpack.c.bf16 %v3921, %v3917
  %v3986 = vpack.c.bf16 %v3922, %v3918
  %v3987 = vpack.c.bf16 %v3923, %v3919
  %v3988 = vpack.c.bf16 %v3924, %v3920
  %v3989 = vld [vmem:[%s4] sm:$0xff]
  %v3990 = vld [vmem:[%s4 + $0x8] sm:$0xff]
  %v3991 = vld [vmem:[%s4 + $0x10] sm:$0xff]
  %v3992 = vld [vmem:[%s4 + $0x18] sm:$0xff]
  %v3993 = vld [vmem:[%s4 + $0x20] sm:$0xff]
  %v3994 = vld [vmem:[%s4 + $0x28] sm:$0xff]
  %v3995 = vld [vmem:[%s4 + $0x30] sm:$0xff]
  %v3996 = vld [vmem:[%s4 + $0x38] sm:$0xff]
  %v3997 = vld [vmem:[%s4 + $0x40] sm:$0xff]
  %v3998 = vld [vmem:[%s4 + $0x48] sm:$0xff]
  %v3999 = vld [vmem:[%s4 + $0x50] sm:$0xff]
  %v4000 = vld [vmem:[%s4 + $0x58] sm:$0xff]
  %v4001 = vld [vmem:[%s4 + $0x60] sm:$0xff]
  %v4002 = vld [vmem:[%s4 + $0x68] sm:$0xff]
  %v4003 = vld [vmem:[%s4 + $0x70] sm:$0xff]
  %v4004 = vld [vmem:[%s4 + $0x78] sm:$0xff]
  %v4005 = vld [vmem:[%s4 + $0x80] sm:$0xff]
  %v4006 = vld [vmem:[%s4 + $0x88] sm:$0xff]
  %v4007 = vld [vmem:[%s4 + $0x90] sm:$0xff]
  %v4008 = vld [vmem:[%s4 + $0x98] sm:$0xff]
  %v4009 = vld [vmem:[%s4 + $0xa0] sm:$0xff]
  %v4010 = vld [vmem:[%s4 + $0xa8] sm:$0xff]
  %v4011 = vld [vmem:[%s4 + $0xb0] sm:$0xff]
  %v4012 = vld [vmem:[%s4 + $0xb8] sm:$0xff]
  %v4013 = vld [vmem:[%s4 + $0xc0] sm:$0xff]
  %v4014 = vld [vmem:[%s4 + $0xc8] sm:$0xff]
  %v4015 = vld [vmem:[%s4 + $0xd0] sm:$0xff]
  %v4016 = vld [vmem:[%s4 + $0xd8] sm:$0xff]
  %v4017 = vld [vmem:[%s4 + $0xe0] sm:$0xff]
  %v4018 = vld [vmem:[%s4 + $0xe8] sm:$0xff]
  %v4019 = vld [vmem:[%s4 + $0xf0] sm:$0xff]
  %v4020 = vld [vmem:[%s4 + $0xf8] sm:$0xff]
  %v4021 = vld [vmem:[%s4 + $0x100] sm:$0xff]
  %v4022 = vld [vmem:[%s4 + $0x108] sm:$0xff]
  %v4023 = vld [vmem:[%s4 + $0x110] sm:$0xff]
  %v4024 = vld [vmem:[%s4 + $0x118] sm:$0xff]
  %v4025 = vld [vmem:[%s4 + $0x120] sm:$0xff]
  %v4026 = vld [vmem:[%s4 + $0x128] sm:$0xff]
  %v4027 = vld [vmem:[%s4 + $0x130] sm:$0xff]
  %v4028 = vld [vmem:[%s4 + $0x138] sm:$0xff]
  %v4029 = vld [vmem:[%s4 + $0x140] sm:$0xff]
  %v4030 = vld [vmem:[%s4 + $0x148] sm:$0xff]
  %v4031 = vld [vmem:[%s4 + $0x150] sm:$0xff]
  %v4032 = vld [vmem:[%s4 + $0x158] sm:$0xff]
  %v4033 = vld [vmem:[%s4 + $0x160] sm:$0xff]
  %v4034 = vld [vmem:[%s4 + $0x168] sm:$0xff]
  %v4035 = vld [vmem:[%s4 + $0x170] sm:$0xff]
  %v4036 = vld [vmem:[%s4 + $0x178] sm:$0xff]
  %v4037 = vld [vmem:[%s4 + $0x180] sm:$0xff]
  %v4038 = vld [vmem:[%s4 + $0x188] sm:$0xff]
  %v4039 = vld [vmem:[%s5] sm:$0x3]
  %v4041 = vlaneseq
  %v4042 = vshrl.u32 %v4041, 7
  %v4043 = vsub.s32 0, %v4042
  %v4044 = vrot.slane %v4039, %v4043
  %v4045 = vlaneseq
  %v4046 = vshrl.u32 %v4045, 7
  %v4047 = vsub.s32 1, %v4046
  %v4048 = vrot.slane %v4039, %v4047
  %v4101 = vunpack.c.l.b16 %v3989
  %v4102 = vunpack.c.h.b16 %v3989
  %v4103 = vunpack.c.l.b16 %v3990
  %v4104 = vunpack.c.h.b16 %v3990
  %v4105 = vunpack.c.l.b16 %v3991
  %v4106 = vunpack.c.h.b16 %v3991
  %v4107 = vunpack.c.l.b16 %v3992
  %v4108 = vunpack.c.h.b16 %v3992
  %v4109 = vunpack.c.l.b16 %v3993
  %v4110 = vunpack.c.h.b16 %v3993
  %v4111 = vunpack.c.l.b16 %v3994
  %v4112 = vunpack.c.h.b16 %v3994
  %v4113 = vunpack.c.l.b16 %v3995
  %v4114 = vunpack.c.h.b16 %v3995
  %v4115 = vunpack.c.l.b16 %v3996
  %v4116 = vunpack.c.h.b16 %v3996
  %v4117 = vunpack.c.l.b16 %v3997
  %v4118 = vunpack.c.h.b16 %v3997
  %v4119 = vunpack.c.l.b16 %v3998
  %v4120 = vunpack.c.h.b16 %v3998
  %v4121 = vunpack.c.l.b16 %v3999
  %v4122 = vunpack.c.h.b16 %v3999
  %v4123 = vunpack.c.l.b16 %v4000
  %v4124 = vunpack.c.h.b16 %v4000
  %v4125 = vunpack.c.l.b16 %v4001
  %v4126 = vunpack.c.h.b16 %v4001
  %v4127 = vunpack.c.l.b16 %v4002
  %v4128 = vunpack.c.h.b16 %v4002
  %v4129 = vunpack.c.l.b16 %v4003
  %v4130 = vunpack.c.h.b16 %v4003
  %v4131 = vunpack.c.l.b16 %v4004
  %v4132 = vunpack.c.h.b16 %v4004
  %v4133 = vunpack.c.l.b16 %v4005
  %v4134 = vunpack.c.h.b16 %v4005
  %v4135 = vunpack.c.l.b16 %v4006
  %v4136 = vunpack.c.h.b16 %v4006
  %v4137 = vunpack.c.l.b16 %v4007
  %v4138 = vunpack.c.h.b16 %v4007
  %v4139 = vunpack.c.l.b16 %v4008
  %v4140 = vunpack.c.h.b16 %v4008
  %v4141 = vunpack.c.l.b16 %v4009
  %v4142 = vunpack.c.h.b16 %v4009
  %v4143 = vunpack.c.l.b16 %v4010
  %v4144 = vunpack.c.h.b16 %v4010
  %v4145 = vunpack.c.l.b16 %v4011
  %v4146 = vunpack.c.h.b16 %v4011
  %v4147 = vunpack.c.l.b16 %v4012
  %v4148 = vunpack.c.h.b16 %v4012
  %v4149 = vunpack.c.l.b16 %v4013
  %v4150 = vunpack.c.h.b16 %v4013
  %v4151 = vunpack.c.l.b16 %v4014
  %v4152 = vunpack.c.h.b16 %v4014
  %v4153 = vunpack.c.l.b16 %v4015
  %v4154 = vunpack.c.h.b16 %v4015
  %v4155 = vunpack.c.l.b16 %v4016
  %v4156 = vunpack.c.h.b16 %v4016
  %v4157 = vunpack.c.l.b16 %v4017
  %v4158 = vunpack.c.h.b16 %v4017
  %v4159 = vunpack.c.l.b16 %v4018
  %v4160 = vunpack.c.h.b16 %v4018
  %v4161 = vunpack.c.l.b16 %v4019
  %v4162 = vunpack.c.h.b16 %v4019
  %v4163 = vunpack.c.l.b16 %v4020
  %v4164 = vunpack.c.h.b16 %v4020
  %v4165 = vunpack.c.l.b16 %v4021
  %v4166 = vunpack.c.h.b16 %v4021
  %v4167 = vunpack.c.l.b16 %v4022
  %v4168 = vunpack.c.h.b16 %v4022
  %v4169 = vunpack.c.l.b16 %v4023
  %v4170 = vunpack.c.h.b16 %v4023
  %v4171 = vunpack.c.l.b16 %v4024
  %v4172 = vunpack.c.h.b16 %v4024
  %v4173 = vunpack.c.l.b16 %v4025
  %v4174 = vunpack.c.h.b16 %v4025
  %v4175 = vunpack.c.l.b16 %v4026
  %v4176 = vunpack.c.h.b16 %v4026
  %v4177 = vunpack.c.l.b16 %v4027
  %v4178 = vunpack.c.h.b16 %v4027
  %v4179 = vunpack.c.l.b16 %v4028
  %v4180 = vunpack.c.h.b16 %v4028
  %v4181 = vunpack.c.l.b16 %v4029
  %v4182 = vunpack.c.h.b16 %v4029
  %v4183 = vunpack.c.l.b16 %v4030
  %v4184 = vunpack.c.h.b16 %v4030
  %v4185 = vunpack.c.l.b16 %v4031
  %v4186 = vunpack.c.h.b16 %v4031
  %v4187 = vunpack.c.l.b16 %v4032
  %v4188 = vunpack.c.h.b16 %v4032
  %v4189 = vunpack.c.l.b16 %v4033
  %v4190 = vunpack.c.h.b16 %v4033
  %v4191 = vunpack.c.l.b16 %v4034
  %v4192 = vunpack.c.h.b16 %v4034
  %v4193 = vunpack.c.l.b16 %v4035
  %v4194 = vunpack.c.h.b16 %v4035
  %v4195 = vunpack.c.l.b16 %v4036
  %v4196 = vunpack.c.h.b16 %v4036
  %v4197 = vunpack.c.l.b16 %v4037
  %v4198 = vunpack.c.h.b16 %v4037
  %v4199 = vunpack.c.l.b16 %v4038
  %v4200 = vunpack.c.h.b16 %v4038
  %v4201 = vpack.c.b16 %v4103, %v4101
  %v4202 = vpack.c.b16 %v4104, %v4102
  %v4203 = vpack.c.b16 %v4107, %v4105
  %v4204 = vpack.c.b16 %v4108, %v4106
  %v4205 = vpack.c.b16 %v4111, %v4109
  %v4206 = vpack.c.b16 %v4112, %v4110
  %v4207 = vpack.c.b16 %v4115, %v4113
  %v4208 = vpack.c.b16 %v4116, %v4114
  %v4209 = vpack.c.b16 %v4119, %v4117
  %v4210 = vpack.c.b16 %v4120, %v4118
  %v4211 = vpack.c.b16 %v4123, %v4121
  %v4212 = vpack.c.b16 %v4124, %v4122
  %v4213 = vpack.c.b16 %v4127, %v4125
  %v4214 = vpack.c.b16 %v4128, %v4126
  %v4215 = vpack.c.b16 %v4131, %v4129
  %v4216 = vpack.c.b16 %v4132, %v4130
  %v4217 = vpack.c.b16 %v4135, %v4133
  %v4218 = vpack.c.b16 %v4136, %v4134
  %v4219 = vpack.c.b16 %v4139, %v4137
  %v4220 = vpack.c.b16 %v4140, %v4138
  %v4221 = vpack.c.b16 %v4143, %v4141
  %v4222 = vpack.c.b16 %v4144, %v4142
  %v4223 = vpack.c.b16 %v4147, %v4145
  %v4224 = vpack.c.b16 %v4148, %v4146
  %v4225 = vpack.c.b16 %v4151, %v4149
  %v4226 = vpack.c.b16 %v4152, %v4150
  %v4227 = vpack.c.b16 %v4155, %v4153
  %v4228 = vpack.c.b16 %v4156, %v4154
  %v4229 = vpack.c.b16 %v4159, %v4157
  %v4230 = vpack.c.b16 %v4160, %v4158
  %v4231 = vpack.c.b16 %v4163, %v4161
  %v4232 = vpack.c.b16 %v4164, %v4162
  %v4233 = vpack.c.b16 %v4167, %v4165
  %v4234 = vpack.c.b16 %v4168, %v4166
  %v4235 = vpack.c.b16 %v4171, %v4169
  %v4236 = vpack.c.b16 %v4172, %v4170
  %v4237 = vpack.c.b16 %v4175, %v4173
  %v4238 = vpack.c.b16 %v4176, %v4174
  %v4239 = vpack.c.b16 %v4179, %v4177
  %v4240 = vpack.c.b16 %v4180, %v4178
  %v4241 = vpack.c.b16 %v4183, %v4181
  %v4242 = vpack.c.b16 %v4184, %v4182
  %v4243 = vpack.c.b16 %v4187, %v4185
  %v4244 = vpack.c.b16 %v4188, %v4186
  %v4245 = vpack.c.b16 %v4191, %v4189
  %v4246 = vpack.c.b16 %v4192, %v4190
  %v4247 = vpack.c.b16 %v4195, %v4193
  %v4248 = vpack.c.b16 %v4196, %v4194
  %v4249 = vpack.c.b16 %v4199, %v4197
  %v4250 = vpack.c.b16 %v4200, %v4198
  %v4302 = vsel %vm1948, %v3928, 0
  %v4305 = vsel %vm1948, %v3932, 0
  %v4308 = vsel %vm1948, %v3936, 0
  %v4311 = vsel %vm1948, %v3940, 0
  %v4314 = vsel %vm1948, %v3944, 0
  %v4317 = vsel %vm1948, %v3948, 0
  %v4320 = vsel %vm1948, %v3952, 0
  %v4323 = vsel %vm1948, %v3956, 0
  %v4326 = vsel %vm1948, %v3960, 0
  %v4329 = vsel %vm1948, %v3964, 0
  %v4332 = vsel %vm1948, %v3968, 0
  %v4335 = vsel %vm1948, %v3972, 0
  %v4338 = vsel %vm1948, %v3976, 0
  %v4341 = vsel %vm1948, %v3980, 0
  %v4344 = vsel %vm1948, %v3984, 0
  %v4347 = vsel %vm1948, %v3988, 0
  %4349 = vmatprep.subr.bf16.mxu0 %v4202
  %4350 = vmatpush1.bf16.msra.mxu0 %v4201
  %4351 = vmatprep.subr.bf16.mxu0 %v4204
  %4352 = vmatpush1.bf16.msra.mxu0 %v4203
  %4353 = vmatprep.subr.bf16.mxu0 %v4206
  %4354 = vmatpush1.bf16.msra.mxu0 %v4205
  %4355 = vmatprep.subr.bf16.mxu0 %v4208
  %4356 = vmatpush1.bf16.msra.mxu0 %v4207
  %4357 = vmatprep.subr.bf16.mxu0 %v4210
  %4358 = vmatpush1.bf16.msra.mxu0 %v4209
  %4359 = vmatprep.subr.bf16.mxu0 %v4212
  %4360 = vmatpush1.bf16.msra.mxu0 %v4211
  %4361 = vmatprep.subr.bf16.mxu0 %v4214
  %4362 = vmatpush1.bf16.msra.mxu0 %v4213
  %4363 = vmatprep.subr.bf16.mxu0 %v4216
  %4364 = vmatpush1.bf16.msra.mxu0 %v4215
  %4365 = vmatprep.subr.bf16.mxu0 %v4218
  %4366 = vmatpush1.bf16.msra.mxu0 %v4217
  %4367 = vmatprep.subr.bf16.mxu0 %v4220
  %4368 = vmatpush1.bf16.msra.mxu0 %v4219
  %4369 = vmatprep.subr.bf16.mxu0 %v4222
  %4370 = vmatpush1.bf16.msra.mxu0 %v4221
  %4371 = vmatprep.subr.bf16.mxu0 %v4224
  %4372 = vmatpush1.bf16.msra.mxu0 %v4223
  %4373 = vmatprep.subr.bf16.mxu0 %v4226
  %4374 = vmatpush1.bf16.msra.mxu0 %v4225
  %4375 = vmatprep.subr.bf16.mxu0 %v4228
  %4376 = vmatpush1.bf16.msra.mxu0 %v4227
  %4377 = vmatprep.subr.bf16.mxu0 %v4230
  %4378 = vmatpush1.bf16.msra.mxu0 %v4229
  %4379 = vmatprep.subr.bf16.mxu0 %v4232
  %4380 = vmatpush1.bf16.msra.mxu0 %v4231
  %4381 = vmatprep.mubr.bf16.mxu0 %v3926
  %4382 = vmatmul.mubr.bf16.gmra.mrb[0].mxu0 %v3925
  %v4383 = vpop.f32.mrb[0].mxu0
  %v4384 = vadd.f32 %v4044, %v4383
  %v4385 = vpop.f32.mrb[0].mxu0
  %v4386 = vadd.f32 %v4048, %v4385
  %v4387 = vpop.f32.mrb[0].mxu0
  %v4388 = vadd.f32 %v4044, %v4387
  %v4389 = vpop.f32.mrb[0].mxu0
  %v4390 = vadd.f32 %v4048, %v4389
  %4391 = vmatprep.mubr.bf16.mxu0 %v3930
  %4392 = vmatmul.mubr.bf16.gmra.mrb[0].mxu0 %v3929
  %v4393 = vpop.f32.mrb[0].mxu0
  %v4394 = vadd.f32 %v4044, %v4393
  %v4395 = vpop.f32.mrb[0].mxu0
  %v4396 = vadd.f32 %v4048, %v4395
  %v4397 = vpop.f32.mrb[0].mxu0
  %v4398 = vadd.f32 %v4044, %v4397
  %v4399 = vpop.f32.mrb[0].mxu0
  %v4400 = vadd.f32 %v4048, %v4399
  %4401 = vmatprep.mubr.bf16.mxu0 %v3934
  %4402 = vmatmul.mubr.bf16.gmra.mrb[0].mxu0 %v3933
  %v4403 = vpop.f32.mrb[0].mxu0
  %v4404 = vadd.f32 %v4044, %v4403
  %v4405 = vpop.f32.mrb[0].mxu0
  %v4406 = vadd.f32 %v4048, %v4405
  %v4407 = vpop.f32.mrb[0].mxu0
  %v4408 = vadd.f32 %v4044, %v4407
  %v4409 = vpop.f32.mrb[0].mxu0
  %v4410 = vadd.f32 %v4048, %v4409
  %4411 = vmatprep.mubr.bf16.mxu0 %v3938
  %4412 = vmatmul.mubr.bf16.gmra.mrb[0].mxu0 %v3937
  %v4413 = vpop.f32.mrb[0].mxu0
  %v4414 = vadd.f32 %v4044, %v4413
  %v4415 = vpop.f32.mrb[0].mxu0
  %v4416 = vadd.f32 %v4048, %v4415
  %v4417 = vpop.f32.mrb[0].mxu0
  %v4418 = vadd.f32 %v4044, %v4417
  %v4419 = vpop.f32.mrb[0].mxu0
  %v4420 = vadd.f32 %v4048, %v4419
  %4421 = vmatprep.mubr.bf16.mxu0 %v3942
  %4422 = vmatmul.mubr.bf16.gmra.mrb[0].mxu0 %v3941
  %v4423 = vpop.f32.mrb[0].mxu0
  %v4424 = vadd.f32 %v4044, %v4423
  %v4425 = vpop.f32.mrb[0].mxu0
  %v4426 = vadd.f32 %v4048, %v4425
  %v4427 = vpop.f32.mrb[0].mxu0
  %v4428 = vadd.f32 %v4044, %v4427
  %v4429 = vpop.f32.mrb[0].mxu0
  %v4430 = vadd.f32 %v4048, %v4429
  %4431 = vmatprep.mubr.bf16.mxu0 %v3946
  %4432 = vmatmul.mubr.bf16.gmra.mrb[0].mxu0 %v3945
  %v4433 = vpop.f32.mrb[0].mxu0
  %v4434 = vadd.f32 %v4044, %v4433
  %v4435 = vpop.f32.mrb[0].mxu0
  %v4436 = vadd.f32 %v4048, %v4435
  %v4437 = vpop.f32.mrb[0].mxu0
  %v4438 = vadd.f32 %v4044, %v4437
  %v4439 = vpop.f32.mrb[0].mxu0
  %v4440 = vadd.f32 %v4048, %v4439
  %4441 = vmatprep.mubr.bf16.mxu0 %v3950
  %4442 = vmatmul.mubr.bf16.gmra.mrb[0].mxu0 %v3949
  %v4443 = vpop.f32.mrb[0].mxu0
  %v4444 = vadd.f32 %v4044, %v4443
  %v4445 = vpop.f32.mrb[0].mxu0
  %v4446 = vadd.f32 %v4048, %v4445
  %v4447 = vpop.f32.mrb[0].mxu0
  %v4448 = vadd.f32 %v4044, %v4447
  %v4449 = vpop.f32.mrb[0].mxu0
  %v4450 = vadd.f32 %v4048, %v4449
  %4451 = vmatprep.mubr.bf16.mxu0 %v3954
  %4452 = vmatmul.mubr.bf16.gmra.mrb[0].mxu0 %v3953
  %v4453 = vpop.f32.mrb[0].mxu0
  %v4454 = vadd.f32 %v4044, %v4453
  %v4455 = vpop.f32.mrb[0].mxu0
  %v4456 = vadd.f32 %v4048, %v4455
  %v4457 = vpop.f32.mrb[0].mxu0
  %v4458 = vadd.f32 %v4044, %v4457
  %v4459 = vpop.f32.mrb[0].mxu0
  %v4460 = vadd.f32 %v4048, %v4459
  %4461 = vmatprep.mubr.bf16.mxu0 %v3958
  %4462 = vmatmul.mubr.bf16.gmra.mrb[0].mxu0 %v3957
  %v4463 = vpop.f32.mrb[0].mxu0
  %v4464 = vadd.f32 %v4044, %v4463
  %v4465 = vpop.f32.mrb[0].mxu0
  %v4466 = vadd.f32 %v4048, %v4465
  %v4467 = vpop.f32.mrb[0].mxu0
  %v4468 = vadd.f32 %v4044, %v4467
  %v4469 = vpop.f32.mrb[0].mxu0
  %v4470 = vadd.f32 %v4048, %v4469
  %4471 = vmatprep.mubr.bf16.mxu0 %v3962
  %4472 = vmatmul.mubr.bf16.gmra.mrb[0].mxu0 %v3961
  %v4473 = vpop.f32.mrb[0].mxu0
  %v4474 = vadd.f32 %v4044, %v4473
  %v4475 = vpop.f32.mrb[0].mxu0
  %v4476 = vadd.f32 %v4048, %v4475
  %v4477 = vpop.f32.mrb[0].mxu0
  %v4478 = vadd.f32 %v4044, %v4477
  %v4479 = vpop.f32.mrb[0].mxu0
  %v4480 = vadd.f32 %v4048, %v4479
  %4481 = vmatprep.mubr.bf16.mxu0 %v3966
  %4482 = vmatmul.mubr.bf16.gmra.mrb[0].mxu0 %v3965
  %v4483 = vpop.f32.mrb[0].mxu0
  %v4484 = vadd.f32 %v4044, %v4483
  %v4485 = vpop.f32.mrb[0].mxu0
  %v4486 = vadd.f32 %v4048, %v4485
  %v4487 = vpop.f32.mrb[0].mxu0
  %v4488 = vadd.f32 %v4044, %v4487
  %v4489 = vpop.f32.mrb[0].mxu0
  %v4490 = vadd.f32 %v4048, %v4489
  %4491 = vmatprep.mubr.bf16.mxu0 %v3970
  %4492 = vmatmul.mubr.bf16.gmra.mrb[0].mxu0 %v3969
  %v4493 = vpop.f32.mrb[0].mxu0
  %v4494 = vadd.f32 %v4044, %v4493
  %v4495 = vpop.f32.mrb[0].mxu0
  %v4496 = vadd.f32 %v4048, %v4495
  %v4497 = vpop.f32.mrb[0].mxu0
  %v4498 = vadd.f32 %v4044, %v4497
  %v4499 = vpop.f32.mrb[0].mxu0
  %v4500 = vadd.f32 %v4048, %v4499
  %4501 = vmatprep.mubr.bf16.mxu0 %v3974
  %4502 = vmatmul.mubr.bf16.gmra.mrb[0].mxu0 %v3973
  %v4503 = vpop.f32.mrb[0].mxu0
  %v4504 = vadd.f32 %v4044, %v4503
  %v4505 = vpop.f32.mrb[0].mxu0
  %v4506 = vadd.f32 %v4048, %v4505
  %v4507 = vpop.f32.mrb[0].mxu0
  %v4508 = vadd.f32 %v4044, %v4507
  %v4509 = vpop.f32.mrb[0].mxu0
  %v4510 = vadd.f32 %v4048, %v4509
  %4511 = vmatprep.mubr.bf16.mxu0 %v3978
  %4512 = vmatmul.mubr.bf16.gmra.mrb[0].mxu0 %v3977
  %v4513 = vpop.f32.mrb[0].mxu0
  %v4514 = vadd.f32 %v4044, %v4513
  %v4515 = vpop.f32.mrb[0].mxu0
  %v4516 = vadd.f32 %v4048, %v4515
  %v4517 = vpop.f32.mrb[0].mxu0
  %v4518 = vadd.f32 %v4044, %v4517
  %v4519 = vpop.f32.mrb[0].mxu0
  %v4520 = vadd.f32 %v4048, %v4519
  %4521 = vmatprep.mubr.bf16.mxu0 %v3982
  %4522 = vmatmul.mubr.bf16.gmra.mrb[0].mxu0 %v3981
  %v4523 = vpop.f32.mrb[0].mxu0
  %v4524 = vadd.f32 %v4044, %v4523
  %v4525 = vpop.f32.mrb[0].mxu0
  %v4526 = vadd.f32 %v4048, %v4525
  %v4527 = vpop.f32.mrb[0].mxu0
  %v4528 = vadd.f32 %v4044, %v4527
  %v4529 = vpop.f32.mrb[0].mxu0
  %v4530 = vadd.f32 %v4048, %v4529
  %4531 = vmatprep.mubr.bf16.mxu0 %v3986
  %4532 = vmatmul.mubr.bf16.gmra.mrb[0].mxu0 %v3985
  %v4533 = vpop.f32.mrb[0].mxu0
  %v4534 = vadd.f32 %v4044, %v4533
  %v4535 = vpop.f32.mrb[0].mxu0
  %v4536 = vadd.f32 %v4048, %v4535
  %v4537 = vpop.f32.mrb[0].mxu0
  %v4538 = vadd.f32 %v4044, %v4537
  %v4539 = vpop.f32.mrb[0].mxu0
  %v4540 = vadd.f32 %v4048, %v4539
  %4541 = vdwg.mxu0
  %4542 = vmatprep.subr.bf16.mxu0 %v4234
  %4543 = vmatpush1.bf16.msra.mxu0 %v4233
  %4544 = vmatprep.subr.bf16.mxu0 %v4236
  %4545 = vmatpush1.bf16.msra.mxu0 %v4235
  %4546 = vmatprep.subr.bf16.mxu0 %v4238
  %4547 = vmatpush1.bf16.msra.mxu0 %v4237
  %4548 = vmatprep.subr.bf16.mxu0 %v4240
  %4549 = vmatpush1.bf16.msra.mxu0 %v4239
  %4550 = vmatprep.subr.bf16.mxu0 %v4242
  %4551 = vmatpush1.bf16.msra.mxu0 %v4241
  %4552 = vmatprep.subr.bf16.mxu0 %v4244
  %4553 = vmatpush1.bf16.msra.mxu0 %v4243
  %4554 = vmatprep.subr.bf16.mxu0 %v4246
  %4555 = vmatpush1.bf16.msra.mxu0 %v4245
  %4556 = vmatprep.subr.bf16.mxu0 %v4248
  %4557 = vmatpush1.bf16.msra.mxu0 %v4247
  %4558 = vmatprep.subr.bf16.mxu0 %v4250
  %4559 = vmatpush1.bf16.msra.mxu0 %v4249
  %4560 = vmatprep.subr.bf16.mxu0 0
  %4561 = vmatpush1.bf16.msra.mxu0 0
  %4562 = vmatprep.subr.bf16.mxu0 0
  %4563 = vmatpush1.bf16.msra.mxu0 0
  %4564 = vmatprep.subr.bf16.mxu0 0
  %4565 = vmatpush1.bf16.msra.mxu0 0
  %4566 = vmatprep.subr.bf16.mxu0 0
  %4567 = vmatpush1.bf16.msra.mxu0 0
  %4568 = vmatprep.subr.bf16.mxu0 0
  %4569 = vmatpush1.bf16.msra.mxu0 0
  %4570 = vmatprep.subr.bf16.mxu0 0
  %4571 = vmatpush1.bf16.msra.mxu0 0
  %4572 = vmatprep.subr.bf16.mxu0 0
  %4573 = vmatpush1.bf16.msra.mxu0 0
  %4574 = vmatprep.mubr.bf16.mxu0 %v4302
  %4575 = vmatmul.mubr.bf16.gmra.mrb[0].mxu0 %v3927
  %v4576 = vpop.f32.mrb[0].mxu0
  %v4577 = vadd.f32 %v4384, %v4576
  %v4578 = vpop.f32.mrb[0].mxu0
  %v4579 = vadd.f32 %v4386, %v4578
  %v4580 = vpop.f32.mrb[0].mxu0
  %v4581 = vadd.f32 %v4388, %v4580
  %v4582 = vpop.f32.mrb[0].mxu0
  %v4583 = vadd.f32 %v4390, %v4582
  %4584 = vmatprep.mubr.bf16.mxu0 %v4305
  %4585 = vmatmul.mubr.bf16.gmra.mrb[0].mxu0 %v3931
  %v4586 = vpop.f32.mrb[0].mxu0
  %v4587 = vadd.f32 %v4394, %v4586
  %v4588 = vpop.f32.mrb[0].mxu0
  %v4589 = vadd.f32 %v4396, %v4588
  %v4590 = vpop.f32.mrb[0].mxu0
  %v4591 = vadd.f32 %v4398, %v4590
  %v4592 = vpop.f32.mrb[0].mxu0
  %v4593 = vadd.f32 %v4400, %v4592
  %4594 = vmatprep.mubr.bf16.mxu0 %v4308
  %4595 = vmatmul.mubr.bf16.gmra.mrb[0].mxu0 %v3935
  %v4596 = vpop.f32.mrb[0].mxu0
  %v4597 = vadd.f32 %v4404, %v4596
  %v4598 = vpop.f32.mrb[0].mxu0
  %v4599 = vadd.f32 %v4406, %v4598
  %v4600 = vpop.f32.mrb[0].mxu0
  %v4601 = vadd.f32 %v4408, %v4600
  %v4602 = vpop.f32.mrb[0].mxu0
  %v4603 = vadd.f32 %v4410, %v4602
  %4604 = vmatprep.mubr.bf16.mxu0 %v4311
  %4605 = vmatmul.mubr.bf16.gmra.mrb[0].mxu0 %v3939
  %v4606 = vpop.f32.mrb[0].mxu0
  %v4607 = vadd.f32 %v4414, %v4606
  %v4608 = vpop.f32.mrb[0].mxu0
  %v4609 = vadd.f32 %v4416, %v4608
  %v4610 = vpop.f32.mrb[0].mxu0
  %v4611 = vadd.f32 %v4418, %v4610
  %v4612 = vpop.f32.mrb[0].mxu0
  %v4613 = vadd.f32 %v4420, %v4612
  %4614 = vmatprep.mubr.bf16.mxu0 %v4314
  %4615 = vmatmul.mubr.bf16.gmra.mrb[0].mxu0 %v3943
  %v4616 = vpop.f32.mrb[0].mxu0
  %v4617 = vadd.f32 %v4424, %v4616
  %v4618 = vpop.f32.mrb[0].mxu0
  %v4619 = vadd.f32 %v4426, %v4618
  %v4620 = vpop.f32.mrb[0].mxu0
  %v4621 = vadd.f32 %v4428, %v4620
  %v4622 = vpop.f32.mrb[0].mxu0
  %v4623 = vadd.f32 %v4430, %v4622
  %4624 = vmatprep.mubr.bf16.mxu0 %v4317
  %4625 = vmatmul.mubr.bf16.gmra.mrb[0].mxu0 %v3947
  %v4626 = vpop.f32.mrb[0].mxu0
  %v4627 = vadd.f32 %v4434, %v4626
  %v4628 = vpop.f32.mrb[0].mxu0
  %v4629 = vadd.f32 %v4436, %v4628
  %v4630 = vpop.f32.mrb[0].mxu0
  %v4631 = vadd.f32 %v4438, %v4630
  %v4632 = vpop.f32.mrb[0].mxu0
  %v4633 = vadd.f32 %v4440, %v4632
  %4634 = vmatprep.mubr.bf16.mxu0 %v4320
  %4635 = vmatmul.mubr.bf16.gmra.mrb[0].mxu0 %v3951
  %v4636 = vpop.f32.mrb[0].mxu0
  %v4637 = vadd.f32 %v4444, %v4636
  %v4638 = vpop.f32.mrb[0].mxu0
  %v4639 = vadd.f32 %v4446, %v4638
  %v4640 = vpop.f32.mrb[0].mxu0
  %v4641 = vadd.f32 %v4448, %v4640
  %v4642 = vpop.f32.mrb[0].mxu0
  %v4643 = vadd.f32 %v4450, %v4642
  %4644 = vmatprep.mubr.bf16.mxu0 %v4323
  %4645 = vmatmul.mubr.bf16.gmra.mrb[0].mxu0 %v3955
  %v4646 = vpop.f32.mrb[0].mxu0
  %v4647 = vadd.f32 %v4454, %v4646
  %v4648 = vpop.f32.mrb[0].mxu0
  %v4649 = vadd.f32 %v4456, %v4648
  %v4650 = vpop.f32.mrb[0].mxu0
  %v4651 = vadd.f32 %v4458, %v4650
  %v4652 = vpop.f32.mrb[0].mxu0
  %v4653 = vadd.f32 %v4460, %v4652
  %4654 = vmatprep.mubr.bf16.mxu0 %v4326
  %4655 = vmatmul.mubr.bf16.gmra.mrb[0].mxu0 %v3959
  %v4656 = vpop.f32.mrb[0].mxu0
  %v4657 = vadd.f32 %v4464, %v4656
  %v4658 = vpop.f32.mrb[0].mxu0
  %v4659 = vadd.f32 %v4466, %v4658
  %v4660 = vpop.f32.mrb[0].mxu0
  %v4661 = vadd.f32 %v4468, %v4660
  %v4662 = vpop.f32.mrb[0].mxu0
  %v4663 = vadd.f32 %v4470, %v4662
  %4664 = vmatprep.mubr.bf16.mxu0 %v4329
  %4665 = vmatmul.mubr.bf16.gmra.mrb[0].mxu0 %v3963
  %v4666 = vpop.f32.mrb[0].mxu0
  %v4667 = vadd.f32 %v4474, %v4666
  %v4668 = vpop.f32.mrb[0].mxu0
  %v4669 = vadd.f32 %v4476, %v4668
  %v4670 = vpop.f32.mrb[0].mxu0
  %v4671 = vadd.f32 %v4478, %v4670
  %v4672 = vpop.f32.mrb[0].mxu0
  %v4673 = vadd.f32 %v4480, %v4672
  %4674 = vmatprep.mubr.bf16.mxu0 %v4332
  %4675 = vmatmul.mubr.bf16.gmra.mrb[0].mxu0 %v3967
  %v4676 = vpop.f32.mrb[0].mxu0
  %v4677 = vadd.f32 %v4484, %v4676
  %v4678 = vpop.f32.mrb[0].mxu0
  %v4679 = vadd.f32 %v4486, %v4678
  %v4680 = vpop.f32.mrb[0].mxu0
  %v4681 = vadd.f32 %v4488, %v4680
  %v4682 = vpop.f32.mrb[0].mxu0
  %v4683 = vadd.f32 %v4490, %v4682
  %4684 = vmatprep.mubr.bf16.mxu0 %v4335
  %4685 = vmatmul.mubr.bf16.gmra.mrb[0].mxu0 %v3971
  %v4686 = vpop.f32.mrb[0].mxu0
  %v4687 = vadd.f32 %v4494, %v4686
  %v4688 = vpop.f32.mrb[0].mxu0
  %v4689 = vadd.f32 %v4496, %v4688
  %v4690 = vpop.f32.mrb[0].mxu0
  %v4691 = vadd.f32 %v4498, %v4690
  %v4692 = vpop.f32.mrb[0].mxu0
  %v4693 = vadd.f32 %v4500, %v4692
  %4694 = vmatprep.mubr.bf16.mxu0 %v4338
  %4695 = vmatmul.mubr.bf16.gmra.mrb[0].mxu0 %v3975
  %v4696 = vpop.f32.mrb[0].mxu0
  %v4697 = vadd.f32 %v4504, %v4696
  %v4698 = vpop.f32.mrb[0].mxu0
  %v4699 = vadd.f32 %v4506, %v4698
  %v4700 = vpop.f32.mrb[0].mxu0
  %v4701 = vadd.f32 %v4508, %v4700
  %v4702 = vpop.f32.mrb[0].mxu0
  %v4703 = vadd.f32 %v4510, %v4702
  %4704 = vmatprep.mubr.bf16.mxu0 %v4341
  %4705 = vmatmul.mubr.bf16.gmra.mrb[0].mxu0 %v3979
  %v4706 = vpop.f32.mrb[0].mxu0
  %v4707 = vadd.f32 %v4514, %v4706
  %v4708 = vpop.f32.mrb[0].mxu0
  %v4709 = vadd.f32 %v4516, %v4708
  %v4710 = vpop.f32.mrb[0].mxu0
  %v4711 = vadd.f32 %v4518, %v4710
  %v4712 = vpop.f32.mrb[0].mxu0
  %v4713 = vadd.f32 %v4520, %v4712
  %4714 = vmatprep.mubr.bf16.mxu0 %v4344
  %4715 = vmatmul.mubr.bf16.gmra.mrb[0].mxu0 %v3983
  %v4716 = vpop.f32.mrb[0].mxu0
  %v4717 = vadd.f32 %v4524, %v4716
  %v4718 = vpop.f32.mrb[0].mxu0
  %v4719 = vadd.f32 %v4526, %v4718
  %v4720 = vpop.f32.mrb[0].mxu0
  %v4721 = vadd.f32 %v4528, %v4720
  %v4722 = vpop.f32.mrb[0].mxu0
  %v4723 = vadd.f32 %v4530, %v4722
  %4724 = vmatprep.mubr.bf16.mxu0 %v4347
  %4725 = vmatmul.mubr.bf16.gmra.mrb[0].mxu0 %v3987
  %v4726 = vpop.f32.mrb[0].mxu0
  %v4727 = vadd.f32 %v4534, %v4726
  %v4728 = vpop.f32.mrb[0].mxu0
  %v4729 = vadd.f32 %v4536, %v4728
  %v4730 = vpop.f32.mrb[0].mxu0
  %v4731 = vadd.f32 %v4538, %v4730
  %v4732 = vpop.f32.mrb[0].mxu0
  %v4733 = vadd.f32 %v4540, %v4732
  %4734 = vdwg.mxu0
  %vm4735 = vcmp.ge.f32.partialorder %v4577, 0.0
  %vm4736 = vcmp.ge.f32.partialorder %v4579, 0.0
  %vm4737 = vcmp.ge.f32.partialorder %v4581, 0.0
  %vm4738 = vcmp.ge.f32.partialorder %v4583, 0.0
  %vm4739 = vcmp.ge.f32.partialorder %v4587, 0.0
  %vm4740 = vcmp.ge.f32.partialorder %v4589, 0.0
  %vm4741 = vcmp.ge.f32.partialorder %v4591, 0.0
  %vm4742 = vcmp.ge.f32.partialorder %v4593, 0.0
  %vm4743 = vcmp.ge.f32.partialorder %v4597, 0.0
  %vm4744 = vcmp.ge.f32.partialorder %v4599, 0.0
  %vm4745 = vcmp.ge.f32.partialorder %v4601, 0.0
  %vm4746 = vcmp.ge.f32.partialorder %v4603, 0.0
  %vm4747 = vcmp.ge.f32.partialorder %v4607, 0.0
  %vm4748 = vcmp.ge.f32.partialorder %v4609, 0.0
  %vm4749 = vcmp.ge.f32.partialorder %v4611, 0.0
  %vm4750 = vcmp.ge.f32.partialorder %v4613, 0.0
  %vm4751 = vcmp.ge.f32.partialorder %v4617, 0.0
  %vm4752 = vcmp.ge.f32.partialorder %v4619, 0.0
  %vm4753 = vcmp.ge.f32.partialorder %v4621, 0.0
  %vm4754 = vcmp.ge.f32.partialorder %v4623, 0.0
  %vm4755 = vcmp.ge.f32.partialorder %v4627, 0.0
  %vm4756 = vcmp.ge.f32.partialorder %v4629, 0.0
  %vm4757 = vcmp.ge.f32.partialorder %v4631, 0.0
  %vm4758 = vcmp.ge.f32.partialorder %v4633, 0.0
  %vm4759 = vcmp.ge.f32.partialorder %v4637, 0.0
  %vm4760 = vcmp.ge.f32.partialorder %v4639, 0.0
  %vm4761 = vcmp.ge.f32.partialorder %v4641, 0.0
  %vm4762 = vcmp.ge.f32.partialorder %v4643, 0.0
  %vm4763 = vcmp.ge.f32.partialorder %v4647, 0.0
  %vm4764 = vcmp.ge.f32.partialorder %v4649, 0.0
  %vm4765 = vcmp.ge.f32.partialorder %v4651, 0.0
  %vm4766 = vcmp.ge.f32.partialorder %v4653, 0.0
  %vm4767 = vcmp.ge.f32.partialorder %v4657, 0.0
  %vm4768 = vcmp.ge.f32.partialorder %v4659, 0.0
  %vm4769 = vcmp.ge.f32.partialorder %v4661, 0.0
  %vm4770 = vcmp.ge.f32.partialorder %v4663, 0.0
  %vm4771 = vcmp.ge.f32.partialorder %v4667, 0.0
  %vm4772 = vcmp.ge.f32.partialorder %v4669, 0.0
  %vm4773 = vcmp.ge.f32.partialorder %v4671, 0.0
  %vm4774 = vcmp.ge.f32.partialorder %v4673, 0.0
  %vm4775 = vcmp.ge.f32.partialorder %v4677, 0.0
  %vm4776 = vcmp.ge.f32.partialorder %v4679, 0.0
  %vm4777 = vcmp.ge.f32.partialorder %v4681, 0.0
  %vm4778 = vcmp.ge.f32.partialorder %v4683, 0.0
  %vm4779 = vcmp.ge.f32.partialorder %v4687, 0.0
  %vm4780 = vcmp.ge.f32.partialorder %v4689, 0.0
  %vm4781 = vcmp.ge.f32.partialorder %v4691, 0.0
  %vm4782 = vcmp.ge.f32.partialorder %v4693, 0.0
  %vm4783 = vcmp.ge.f32.partialorder %v4697, 0.0
  %vm4784 = vcmp.ge.f32.partialorder %v4699, 0.0
  %vm4785 = vcmp.ge.f32.partialorder %v4701, 0.0
  %vm4786 = vcmp.ge.f32.partialorder %v4703, 0.0
  %vm4787 = vcmp.ge.f32.partialorder %v4707, 0.0
  %vm4788 = vcmp.ge.f32.partialorder %v4709, 0.0
  %vm4789 = vcmp.ge.f32.partialorder %v4711, 0.0
  %vm4790 = vcmp.ge.f32.partialorder %v4713, 0.0
  %vm4791 = vcmp.ge.f32.partialorder %v4717, 0.0
  %vm4792 = vcmp.ge.f32.partialorder %v4719, 0.0
  %vm4793 = vcmp.ge.f32.partialorder %v4721, 0.0
  %vm4794 = vcmp.ge.f32.partialorder %v4723, 0.0
  %vm4795 = vcmp.ge.f32.partialorder %v4727, 0.0
  %vm4796 = vcmp.ge.f32.partialorder %v4729, 0.0
  %vm4797 = vcmp.ge.f32.partialorder %v4731, 0.0
  %vm4798 = vcmp.ge.f32.partialorder %v4733, 0.0
  %v4799 = vmul.f32 %v4577, 0.01
  %v4800 = vmul.f32 %v4579, 0.01
  %v4801 = vmul.f32 %v4581, 0.01
  %v4802 = vmul.f32 %v4583, 0.01
  %v4803 = vmul.f32 %v4587, 0.01
  %v4804 = vmul.f32 %v4589, 0.01
  %v4805 = vmul.f32 %v4591, 0.01
  %v4806 = vmul.f32 %v4593, 0.01
  %v4807 = vmul.f32 %v4597, 0.01
  %v4808 = vmul.f32 %v4599, 0.01
  %v4809 = vmul.f32 %v4601, 0.01
  %v4810 = vmul.f32 %v4603, 0.01
  %v4811 = vmul.f32 %v4607, 0.01
  %v4812 = vmul.f32 %v4609, 0.01
  %v4813 = vmul.f32 %v4611, 0.01
  %v4814 = vmul.f32 %v4613, 0.01
  %v4815 = vmul.f32 %v4617, 0.01
  %v4816 = vmul.f32 %v4619, 0.01
  %v4817 = vmul.f32 %v4621, 0.01
  %v4818 = vmul.f32 %v4623, 0.01
  %v4819 = vmul.f32 %v4627, 0.01
  %v4820 = vmul.f32 %v4629, 0.01
  %v4821 = vmul.f32 %v4631, 0.01
  %v4822 = vmul.f32 %v4633, 0.01
  %v4823 = vmul.f32 %v4637, 0.01
  %v4824 = vmul.f32 %v4639, 0.01
  %v4825 = vmul.f32 %v4641, 0.01
  %v4826 = vmul.f32 %v4643, 0.01
  %v4827 = vmul.f32 %v4647, 0.01
  %v4828 = vmul.f32 %v4649, 0.01
  %v4829 = vmul.f32 %v4651, 0.01
  %v4830 = vmul.f32 %v4653, 0.01
  %v4831 = vmul.f32 %v4657, 0.01
  %v4832 = vmul.f32 %v4659, 0.01
  %v4833 = vmul.f32 %v4661, 0.01
  %v4834 = vmul.f32 %v4663, 0.01
  %v4835 = vmul.f32 %v4667, 0.01
  %v4836 = vmul.f32 %v4669, 0.01
  %v4837 = vmul.f32 %v4671, 0.01
  %v4838 = vmul.f32 %v4673, 0.01
  %v4839 = vmul.f32 %v4677, 0.01
  %v4840 = vmul.f32 %v4679, 0.01
  %v4841 = vmul.f32 %v4681, 0.01
  %v4842 = vmul.f32 %v4683, 0.01
  %v4843 = vmul.f32 %v4687, 0.01
  %v4844 = vmul.f32 %v4689, 0.01
  %v4845 = vmul.f32 %v4691, 0.01
  %v4846 = vmul.f32 %v4693, 0.01
  %v4847 = vmul.f32 %v4697, 0.01
  %v4848 = vmul.f32 %v4699, 0.01
  %v4849 = vmul.f32 %v4701, 0.01
  %v4850 = vmul.f32 %v4703, 0.01
  %v4851 = vmul.f32 %v4707, 0.01
  %v4852 = vmul.f32 %v4709, 0.01
  %v4853 = vmul.f32 %v4711, 0.01
  %v4854 = vmul.f32 %v4713, 0.01
  %v4855 = vmul.f32 %v4717, 0.01
  %v4856 = vmul.f32 %v4719, 0.01
  %v4857 = vmul.f32 %v4721, 0.01
  %v4858 = vmul.f32 %v4723, 0.01
  %v4859 = vmul.f32 %v4727, 0.01
  %v4860 = vmul.f32 %v4729, 0.01
  %v4861 = vmul.f32 %v4731, 0.01
  %v4862 = vmul.f32 %v4733, 0.01
  %v4863 = vsel %vm4735, %v4577, %v4799
  %v4864 = vsel %vm4736, %v4579, %v4800
  %v4865 = vsel %vm4737, %v4581, %v4801
  %v4866 = vsel %vm4738, %v4583, %v4802
  %v4867 = vsel %vm4739, %v4587, %v4803
  %v4868 = vsel %vm4740, %v4589, %v4804
  %v4869 = vsel %vm4741, %v4591, %v4805
  %v4870 = vsel %vm4742, %v4593, %v4806
  %v4871 = vsel %vm4743, %v4597, %v4807
  %v4872 = vsel %vm4744, %v4599, %v4808
  %v4873 = vsel %vm4745, %v4601, %v4809
  %v4874 = vsel %vm4746, %v4603, %v4810
  %v4875 = vsel %vm4747, %v4607, %v4811
  %v4876 = vsel %vm4748, %v4609, %v4812
  %v4877 = vsel %vm4749, %v4611, %v4813
  %v4878 = vsel %vm4750, %v4613, %v4814
  %v4879 = vsel %vm4751, %v4617, %v4815
  %v4880 = vsel %vm4752, %v4619, %v4816
  %v4881 = vsel %vm4753, %v4621, %v4817
  %v4882 = vsel %vm4754, %v4623, %v4818
  %v4883 = vsel %vm4755, %v4627, %v4819
  %v4884 = vsel %vm4756, %v4629, %v4820
  %v4885 = vsel %vm4757, %v4631, %v4821
  %v4886 = vsel %vm4758, %v4633, %v4822
  %v4887 = vsel %vm4759, %v4637, %v4823
  %v4888 = vsel %vm4760, %v4639, %v4824
  %v4889 = vsel %vm4761, %v4641, %v4825
  %v4890 = vsel %vm4762, %v4643, %v4826
  %v4891 = vsel %vm4763, %v4647, %v4827
  %v4892 = vsel %vm4764, %v4649, %v4828
  %v4893 = vsel %vm4765, %v4651, %v4829
  %v4894 = vsel %vm4766, %v4653, %v4830
  %v4895 = vsel %vm4767, %v4657, %v4831
  %v4896 = vsel %vm4768, %v4659, %v4832
  %v4897 = vsel %vm4769, %v4661, %v4833
  %v4898 = vsel %vm4770, %v4663, %v4834
  %v4899 = vsel %vm4771, %v4667, %v4835
  %v4900 = vsel %vm4772, %v4669, %v4836
  %v4901 = vsel %vm4773, %v4671, %v4837
  %v4902 = vsel %vm4774, %v4673, %v4838
  %v4903 = vsel %vm4775, %v4677, %v4839
  %v4904 = vsel %vm4776, %v4679, %v4840
  %v4905 = vsel %vm4777, %v4681, %v4841
  %v4906 = vsel %vm4778, %v4683, %v4842
  %v4907 = vsel %vm4779, %v4687, %v4843
  %v4908 = vsel %vm4780, %v4689, %v4844
  %v4909 = vsel %vm4781, %v4691, %v4845
  %v4910 = vsel %vm4782, %v4693, %v4846
  %v4911 = vsel %vm4783, %v4697, %v4847
  %v4912 = vsel %vm4784, %v4699, %v4848
  %v4913 = vsel %vm4785, %v4701, %v4849
  %v4914 = vsel %vm4786, %v4703, %v4850
  %v4915 = vsel %vm4787, %v4707, %v4851
  %v4916 = vsel %vm4788, %v4709, %v4852
  %v4917 = vsel %vm4789, %v4711, %v4853
  %v4918 = vsel %vm4790, %v4713, %v4854
  %v4919 = vsel %vm4791, %v4717, %v4855
  %v4920 = vsel %vm4792, %v4719, %v4856
  %v4921 = vsel %vm4793, %v4721, %v4857
  %v4922 = vsel %vm4794, %v4723, %v4858
  %v4923 = vsel %vm4795, %v4727, %v4859
  %v4924 = vsel %vm4796, %v4729, %v4860
  %v4925 = vsel %vm4797, %v4731, %v4861
  %v4926 = vsel %vm4798, %v4733, %v4862
  %v4927 = vpack.c.bf16 %v4865, %v4863
  %v4928 = vpack.c.bf16 %v4866, %v4864
  %v4929 = vpack.c.bf16 %v4869, %v4867
  %v4930 = vpack.c.bf16 %v4870, %v4868
  %v4931 = vpack.c.bf16 %v4873, %v4871
  %v4932 = vpack.c.bf16 %v4874, %v4872
  %v4933 = vpack.c.bf16 %v4877, %v4875
  %v4934 = vpack.c.bf16 %v4878, %v4876
  %v4935 = vpack.c.bf16 %v4881, %v4879
  %v4936 = vpack.c.bf16 %v4882, %v4880
  %v4937 = vpack.c.bf16 %v4885, %v4883
  %v4938 = vpack.c.bf16 %v4886, %v4884
  %v4939 = vpack.c.bf16 %v4889, %v4887
  %v4940 = vpack.c.bf16 %v4890, %v4888
  %v4941 = vpack.c.bf16 %v4893, %v4891
  %v4942 = vpack.c.bf16 %v4894, %v4892
  %v4943 = vpack.c.bf16 %v4897, %v4895
  %v4944 = vpack.c.bf16 %v4898, %v4896
  %v4945 = vpack.c.bf16 %v4901, %v4899
  %v4946 = vpack.c.bf16 %v4902, %v4900
  %v4947 = vpack.c.bf16 %v4905, %v4903
  %v4948 = vpack.c.bf16 %v4906, %v4904
  %v4949 = vpack.c.bf16 %v4909, %v4907
  %v4950 = vpack.c.bf16 %v4910, %v4908
  %v4951 = vpack.c.bf16 %v4913, %v4911
  %v4952 = vpack.c.bf16 %v4914, %v4912
  %v4953 = vpack.c.bf16 %v4917, %v4915
  %v4954 = vpack.c.bf16 %v4918, %v4916
  %v4955 = vpack.c.bf16 %v4921, %v4919
  %v4956 = vpack.c.bf16 %v4922, %v4920
  %v4957 = vpack.c.bf16 %v4925, %v4923
  %v4958 = vpack.c.bf16 %v4926, %v4924
  %v4959 = vld [vmem:[%s6] sm:$0xf]
  %v4960 = vld [vmem:[%s6 + $0x4] sm:$0xf]
  %v4961 = vld [vmem:[%s6 + $0x8] sm:$0xf]
  %v4962 = vld [vmem:[%s6 + $0xc] sm:$0xf]
  %v4963 = vld [vmem:[%s6 + $0x10] sm:$0xf]
  %v4964 = vld [vmem:[%s6 + $0x14] sm:$0xf]
  %v4965 = vld [vmem:[%s6 + $0x18] sm:$0xf]
  %v4966 = vld [vmem:[%s6 + $0x1c] sm:$0xf]
  %v4967 = vld [vmem:[%s6 + $0x20] sm:$0xf]
  %v4968 = vld [vmem:[%s6 + $0x24] sm:$0xf]
  %v4969 = vld [vmem:[%s6 + $0x28] sm:$0xf]
  %v4970 = vld [vmem:[%s6 + $0x2c] sm:$0xf]
  %v4971 = vld [vmem:[%s6 + $0x30] sm:$0xf]
  %v4972 = vld [vmem:[%s6 + $0x34] sm:$0xf]
  %v4973 = vld [vmem:[%s6 + $0x38] sm:$0xf]
  %v4974 = vld [vmem:[%s6 + $0x3c] sm:$0xf]
  %v4975 = vld [vmem:[%s6 + $0x40] sm:$0xf]
  %v4976 = vld [vmem:[%s6 + $0x44] sm:$0xf]
  %v4977 = vld [vmem:[%s6 + $0x48] sm:$0xf]
  %v4978 = vld [vmem:[%s6 + $0x4c] sm:$0xf]
  %v4979 = vld [vmem:[%s6 + $0x50] sm:$0xf]
  %v4980 = vld [vmem:[%s6 + $0x54] sm:$0xf]
  %v4981 = vld [vmem:[%s6 + $0x58] sm:$0xf]
  %v4982 = vld [vmem:[%s6 + $0x5c] sm:$0xf]
  %v4983 = vld [vmem:[%s6 + $0x60] sm:$0xf]
  %v4984 = vld [vmem:[%s7] sm:$0x1]
  %v4986 = vlaneseq
  %v4987 = vshrl.u32 %v4986, 7
  %v4988 = vsub.s32 0, %v4987
  %v4989 = vrot.slane %v4984, %v4988
  %v5016 = vunpack.c.l.b16 %v4959
  %v5017 = vunpack.c.l.b16 %v4960
  %v5018 = vunpack.c.l.b16 %v4961
  %v5019 = vunpack.c.l.b16 %v4962
  %v5020 = vunpack.c.l.b16 %v4963
  %v5021 = vunpack.c.l.b16 %v4964
  %v5022 = vunpack.c.l.b16 %v4965
  %v5023 = vunpack.c.l.b16 %v4966
  %v5024 = vunpack.c.l.b16 %v4967
  %v5025 = vunpack.c.l.b16 %v4968
  %v5026 = vunpack.c.l.b16 %v4969
  %v5027 = vunpack.c.l.b16 %v4970
  %v5028 = vunpack.c.l.b16 %v4971
  %v5029 = vunpack.c.l.b16 %v4972
  %v5030 = vunpack.c.l.b16 %v4973
  %v5031 = vunpack.c.l.b16 %v4974
  %v5032 = vunpack.c.l.b16 %v4975
  %v5033 = vunpack.c.l.b16 %v4976
  %v5034 = vunpack.c.l.b16 %v4977
  %v5035 = vunpack.c.l.b16 %v4978
  %v5036 = vunpack.c.l.b16 %v4979
  %v5037 = vunpack.c.l.b16 %v4980
  %v5038 = vunpack.c.l.b16 %v4981
  %v5039 = vunpack.c.l.b16 %v4982
  %v5040 = vunpack.c.l.b16 %v4983
  %v5041 = vpack.c.b16 %v5017, %v5016
  %v5042 = vpack.c.b16 %v5019, %v5018
  %v5043 = vpack.c.b16 %v5021, %v5020
  %v5044 = vpack.c.b16 %v5023, %v5022
  %v5045 = vpack.c.b16 %v5025, %v5024
  %v5046 = vpack.c.b16 %v5027, %v5026
  %v5047 = vpack.c.b16 %v5029, %v5028
  %v5048 = vpack.c.b16 %v5031, %v5030
  %v5049 = vpack.c.b16 %v5033, %v5032
  %v5050 = vpack.c.b16 %v5035, %v5034
  %v5051 = vpack.c.b16 %v5037, %v5036
  %v5052 = vpack.c.b16 %v5039, %v5038
  %v5053 = vpack.c.b16 %v5040, %v5040
  %vm5066 = vcmask 588800
  %v5068 = vsel %vm5066, %v4928, 0
  %v5071 = vsel %vm5066, %v4930, 0
  %v5074 = vsel %vm5066, %v4932, 0
  %v5077 = vsel %vm5066, %v4934, 0
  %v5080 = vsel %vm5066, %v4936, 0
  %v5083 = vsel %vm5066, %v4938, 0
  %v5086 = vsel %vm5066, %v4940, 0
  %v5089 = vsel %vm5066, %v4942, 0
  %v5092 = vsel %vm5066, %v4944, 0
  %v5095 = vsel %vm5066, %v4946, 0
  %v5098 = vsel %vm5066, %v4948, 0
  %v5101 = vsel %vm5066, %v4950, 0
  %v5104 = vsel %vm5066, %v4952, 0
  %v5107 = vsel %vm5066, %v4954, 0
  %v5110 = vsel %vm5066, %v4956, 0
  %v5113 = vsel %vm5066, %v4958, 0
  %vm5115 = vcmask 1043456
  %v5117 = vsel %vm5115, %v5053, 0
  %5119 = vmatprep.subr.bf16.mxu0 0
  %5120 = vmatpush1.bf16.msra.mxu0 %v5041
  %5121 = vmatprep.subr.bf16.mxu0 0
  %5122 = vmatpush1.bf16.msra.mxu0 %v5042
  %5123 = vmatprep.subr.bf16.mxu0 0
  %5124 = vmatpush1.bf16.msra.mxu0 %v5043
  %5125 = vmatprep.subr.bf16.mxu0 0
  %5126 = vmatpush1.bf16.msra.mxu0 %v5044
  %5127 = vmatprep.subr.bf16.mxu0 0
  %5128 = vmatpush1.bf16.msra.mxu0 %v5045
  %5129 = vmatprep.subr.bf16.mxu0 0
  %5130 = vmatpush1.bf16.msra.mxu0 %v5046
  %5131 = vmatprep.subr.bf16.mxu0 0
  %5132 = vmatpush1.bf16.msra.mxu0 %v5047
  %5133 = vmatprep.subr.bf16.mxu0 0
  %5134 = vmatpush1.bf16.msra.mxu0 %v5048
  %5135 = vmatprep.subr.bf16.mxu0 0
  %5136 = vmatpush1.bf16.msra.mxu0 %v5049
  %5137 = vmatprep.subr.bf16.mxu0 0
  %5138 = vmatpush1.bf16.msra.mxu0 %v5050
  %5139 = vmatprep.subr.bf16.mxu0 0
  %5140 = vmatpush1.bf16.msra.mxu0 %v5051
  %5141 = vmatprep.subr.bf16.mxu0 0
  %5142 = vmatpush1.bf16.msra.mxu0 %v5052
  %5143 = vmatprep.subr.bf16.mxu0 0
  %5144 = vmatpush1.bf16.msra.mxu0 %v5117
  %5145 = vmatprep.subr.bf16.mxu0 0
  %5146 = vmatpush1.bf16.msra.mxu0 0
  %5147 = vmatprep.subr.bf16.mxu0 0
  %5148 = vmatpush1.bf16.msra.mxu0 0
  %5149 = vmatprep.subr.bf16.mxu0 0
  %5150 = vmatpush1.bf16.msra.mxu0 0
  %5151 = vmatprep.mubr.bf16.mxu0 %v5068
  %5152 = vmatmul.mubr.bf16.gmra.mrb[0].mxu0 %v4927
  %v5153 = vpop.f32.mrb[0].mxu0
  %v5154 = vadd.f32 %v4989, %v5153
  %v5155 = vpop.f32.mrb[0].mxu0
  %v5156 = vpop.f32.mrb[0].mxu0
  %v5157 = vadd.f32 %v4989, %v5156
  %v5158 = vpop.f32.mrb[0].mxu0
  %5159 = vmatprep.mubr.bf16.mxu0 %v5071
  %5160 = vmatmul.mubr.bf16.gmra.mrb[0].mxu0 %v4929
  %v5161 = vpop.f32.mrb[0].mxu0
  %v5162 = vadd.f32 %v4989, %v5161
  %v5163 = vpop.f32.mrb[0].mxu0
  %v5164 = vpop.f32.mrb[0].mxu0
  %v5165 = vadd.f32 %v4989, %v5164
  %v5166 = vpop.f32.mrb[0].mxu0
  %5167 = vmatprep.mubr.bf16.mxu0 %v5074
  %5168 = vmatmul.mubr.bf16.gmra.mrb[0].mxu0 %v4931
  %v5169 = vpop.f32.mrb[0].mxu0
  %v5170 = vadd.f32 %v4989, %v5169
  %v5171 = vpop.f32.mrb[0].mxu0
  %v5172 = vpop.f32.mrb[0].mxu0
  %v5173 = vadd.f32 %v4989, %v5172
  %v5174 = vpop.f32.mrb[0].mxu0
  %5175 = vmatprep.mubr.bf16.mxu0 %v5077
  %5176 = vmatmul.mubr.bf16.gmra.mrb[0].mxu0 %v4933
  %v5177 = vpop.f32.mrb[0].mxu0
  %v5178 = vadd.f32 %v4989, %v5177
  %v5179 = vpop.f32.mrb[0].mxu0
  %v5180 = vpop.f32.mrb[0].mxu0
  %v5181 = vadd.f32 %v4989, %v5180
  %v5182 = vpop.f32.mrb[0].mxu0
  %5183 = vmatprep.mubr.bf16.mxu0 %v5080
  %5184 = vmatmul.mubr.bf16.gmra.mrb[0].mxu0 %v4935
  %v5185 = vpop.f32.mrb[0].mxu0
  %v5186 = vadd.f32 %v4989, %v5185
  %v5187 = vpop.f32.mrb[0].mxu0
  %v5188 = vpop.f32.mrb[0].mxu0
  %v5189 = vadd.f32 %v4989, %v5188
  %v5190 = vpop.f32.mrb[0].mxu0
  %5191 = vmatprep.mubr.bf16.mxu0 %v5083
  %5192 = vmatmul.mubr.bf16.gmra.mrb[0].mxu0 %v4937
  %v5193 = vpop.f32.mrb[0].mxu0
  %v5194 = vadd.f32 %v4989, %v5193
  %v5195 = vpop.f32.mrb[0].mxu0
  %v5196 = vpop.f32.mrb[0].mxu0
  %v5197 = vadd.f32 %v4989, %v5196
  %v5198 = vpop.f32.mrb[0].mxu0
  %5199 = vmatprep.mubr.bf16.mxu0 %v5086
  %5200 = vmatmul.mubr.bf16.gmra.mrb[0].mxu0 %v4939
  %v5201 = vpop.f32.mrb[0].mxu0
  %v5202 = vadd.f32 %v4989, %v5201
  %v5203 = vpop.f32.mrb[0].mxu0
  %v5204 = vpop.f32.mrb[0].mxu0
  %v5205 = vadd.f32 %v4989, %v5204
  %v5206 = vpop.f32.mrb[0].mxu0
  %5207 = vmatprep.mubr.bf16.mxu0 %v5089
  %5208 = vmatmul.mubr.bf16.gmra.mrb[0].mxu0 %v4941
  %v5209 = vpop.f32.mrb[0].mxu0
  %v5210 = vadd.f32 %v4989, %v5209
  %v5211 = vpop.f32.mrb[0].mxu0
  %v5212 = vpop.f32.mrb[0].mxu0
  %v5213 = vadd.f32 %v4989, %v5212
  %v5214 = vpop.f32.mrb[0].mxu0
  %5215 = vmatprep.mubr.bf16.mxu0 %v5092
  %5216 = vmatmul.mubr.bf16.gmra.mrb[0].mxu0 %v4943
  %v5217 = vpop.f32.mrb[0].mxu0
  %v5218 = vadd.f32 %v4989, %v5217
  %v5219 = vpop.f32.mrb[0].mxu0
  %v5220 = vpop.f32.mrb[0].mxu0
  %v5221 = vadd.f32 %v4989, %v5220
  %v5222 = vpop.f32.mrb[0].mxu0
  %5223 = vmatprep.mubr.bf16.mxu0 %v5095
  %5224 = vmatmul.mubr.bf16.gmra.mrb[0].mxu0 %v4945
  %v5225 = vpop.f32.mrb[0].mxu0
  %v5226 = vadd.f32 %v4989, %v5225
  %v5227 = vpop.f32.mrb[0].mxu0
  %v5228 = vpop.f32.mrb[0].mxu0
  %v5229 = vadd.f32 %v4989, %v5228
  %v5230 = vpop.f32.mrb[0].mxu0
  %5231 = vmatprep.mubr.bf16.mxu0 %v5098
  %5232 = vmatmul.mubr.bf16.gmra.mrb[0].mxu0 %v4947
  %v5233 = vpop.f32.mrb[0].mxu0
  %v5234 = vadd.f32 %v4989, %v5233
  %v5235 = vpop.f32.mrb[0].mxu0
  %v5236 = vpop.f32.mrb[0].mxu0
  %v5237 = vadd.f32 %v4989, %v5236
  %v5238 = vpop.f32.mrb[0].mxu0
  %5239 = vmatprep.mubr.bf16.mxu0 %v5101
  %5240 = vmatmul.mubr.bf16.gmra.mrb[0].mxu0 %v4949
  %v5241 = vpop.f32.mrb[0].mxu0
  %v5242 = vadd.f32 %v4989, %v5241
  %v5243 = vpop.f32.mrb[0].mxu0
  %v5244 = vpop.f32.mrb[0].mxu0
  %v5245 = vadd.f32 %v4989, %v5244
  %v5246 = vpop.f32.mrb[0].mxu0
  %5247 = vmatprep.mubr.bf16.mxu0 %v5104
  %5248 = vmatmul.mubr.bf16.gmra.mrb[0].mxu0 %v4951
  %v5249 = vpop.f32.mrb[0].mxu0
  %v5250 = vadd.f32 %v4989, %v5249
  %v5251 = vpop.f32.mrb[0].mxu0
  %v5252 = vpop.f32.mrb[0].mxu0
  %v5253 = vadd.f32 %v4989, %v5252
  %v5254 = vpop.f32.mrb[0].mxu0
  %5255 = vmatprep.mubr.bf16.mxu0 %v5107
  %5256 = vmatmul.mubr.bf16.gmra.mrb[0].mxu0 %v4953
  %v5257 = vpop.f32.mrb[0].mxu0
  %v5258 = vadd.f32 %v4989, %v5257
  %v5259 = vpop.f32.mrb[0].mxu0
  %v5260 = vpop.f32.mrb[0].mxu0
  %v5261 = vadd.f32 %v4989, %v5260
  %v5262 = vpop.f32.mrb[0].mxu0
  %5263 = vmatprep.mubr.bf16.mxu0 %v5110
  %5264 = vmatmul.mubr.bf16.gmra.mrb[0].mxu0 %v4955
  %v5265 = vpop.f32.mrb[0].mxu0
  %v5266 = vadd.f32 %v4989, %v5265
  %v5267 = vpop.f32.mrb[0].mxu0
  %v5268 = vpop.f32.mrb[0].mxu0
  %v5269 = vadd.f32 %v4989, %v5268
  %v5270 = vpop.f32.mrb[0].mxu0
  %5271 = vmatprep.mubr.bf16.mxu0 %v5113
  %5272 = vmatmul.mubr.bf16.gmra.mrb[0].mxu0 %v4957
  %v5273 = vpop.f32.mrb[0].mxu0
  %v5274 = vadd.f32 %v4989, %v5273
  %v5275 = vpop.f32.mrb[0].mxu0
  %v5276 = vpop.f32.mrb[0].mxu0
  %v5277 = vadd.f32 %v4989, %v5276
  %v5278 = vpop.f32.mrb[0].mxu0
  %5279 = vdwg.mxu0
  %vm5280 = vcmp.ge.f32.partialorder %v5154, 0.0
  %vm5281 = vcmp.ge.f32.partialorder %v5157, 0.0
  %vm5282 = vcmp.ge.f32.partialorder %v5162, 0.0
  %vm5283 = vcmp.ge.f32.partialorder %v5165, 0.0
  %vm5284 = vcmp.ge.f32.partialorder %v5170, 0.0
  %vm5285 = vcmp.ge.f32.partialorder %v5173, 0.0
  %vm5286 = vcmp.ge.f32.partialorder %v5178, 0.0
  %vm5287 = vcmp.ge.f32.partialorder %v5181, 0.0
  %vm5288 = vcmp.ge.f32.partialorder %v5186, 0.0
  %vm5289 = vcmp.ge.f32.partialorder %v5189, 0.0
  %vm5290 = vcmp.ge.f32.partialorder %v5194, 0.0
  %vm5291 = vcmp.ge.f32.partialorder %v5197, 0.0
  %vm5292 = vcmp.ge.f32.partialorder %v5202, 0.0
  %vm5293 = vcmp.ge.f32.partialorder %v5205, 0.0
  %vm5294 = vcmp.ge.f32.partialorder %v5210, 0.0
  %vm5295 = vcmp.ge.f32.partialorder %v5213, 0.0
  %vm5296 = vcmp.ge.f32.partialorder %v5218, 0.0
  %vm5297 = vcmp.ge.f32.partialorder %v5221, 0.0
  %vm5298 = vcmp.ge.f32.partialorder %v5226, 0.0
  %vm5299 = vcmp.ge.f32.partialorder %v5229, 0.0
  %vm5300 = vcmp.ge.f32.partialorder %v5234, 0.0
  %vm5301 = vcmp.ge.f32.partialorder %v5237, 0.0
  %vm5302 = vcmp.ge.f32.partialorder %v5242, 0.0
  %vm5303 = vcmp.ge.f32.partialorder %v5245, 0.0
  %vm5304 = vcmp.ge.f32.partialorder %v5250, 0.0
  %vm5305 = vcmp.ge.f32.partialorder %v5253, 0.0
  %vm5306 = vcmp.ge.f32.partialorder %v5258, 0.0
  %vm5307 = vcmp.ge.f32.partialorder %v5261, 0.0
  %vm5308 = vcmp.ge.f32.partialorder %v5266, 0.0
  %vm5309 = vcmp.ge.f32.partialorder %v5269, 0.0
  %vm5310 = vcmp.ge.f32.partialorder %v5274, 0.0
  %vm5311 = vcmp.ge.f32.partialorder %v5277, 0.0
  %v5312 = vmul.f32 %v5154, 0.01
  %v5313 = vmul.f32 %v5157, 0.01
  %v5314 = vmul.f32 %v5162, 0.01
  %v5315 = vmul.f32 %v5165, 0.01
  %v5316 = vmul.f32 %v5170, 0.01
  %v5317 = vmul.f32 %v5173, 0.01
  %v5318 = vmul.f32 %v5178, 0.01
  %v5319 = vmul.f32 %v5181, 0.01
  %v5320 = vmul.f32 %v5186, 0.01
  %v5321 = vmul.f32 %v5189, 0.01
  %v5322 = vmul.f32 %v5194, 0.01
  %v5323 = vmul.f32 %v5197, 0.01
  %v5324 = vmul.f32 %v5202, 0.01
  %v5325 = vmul.f32 %v5205, 0.01
  %v5326 = vmul.f32 %v5210, 0.01
  %v5327 = vmul.f32 %v5213, 0.01
  %v5328 = vmul.f32 %v5218, 0.01
  %v5329 = vmul.f32 %v5221, 0.01
  %v5330 = vmul.f32 %v5226, 0.01
  %v5331 = vmul.f32 %v5229, 0.01
  %v5332 = vmul.f32 %v5234, 0.01
  %v5333 = vmul.f32 %v5237, 0.01
  %v5334 = vmul.f32 %v5242, 0.01
  %v5335 = vmul.f32 %v5245, 0.01
  %v5336 = vmul.f32 %v5250, 0.01
  %v5337 = vmul.f32 %v5253, 0.01
  %v5338 = vmul.f32 %v5258, 0.01
  %v5339 = vmul.f32 %v5261, 0.01
  %v5340 = vmul.f32 %v5266, 0.01
  %v5341 = vmul.f32 %v5269, 0.01
  %v5342 = vmul.f32 %v5274, 0.01
  %v5343 = vmul.f32 %v5277, 0.01
  %v5344 = vsel %vm5280, %v5154, %v5312
  %v5345 = vsel %vm5281, %v5157, %v5313
  %v5346 = vsel %vm5282, %v5162, %v5314
  %v5347 = vsel %vm5283, %v5165, %v5315
  %v5348 = vsel %vm5284, %v5170, %v5316
  %v5349 = vsel %vm5285, %v5173, %v5317
  %v5350 = vsel %vm5286, %v5178, %v5318
  %v5351 = vsel %vm5287, %v5181, %v5319
  %v5352 = vsel %vm5288, %v5186, %v5320
  %v5353 = vsel %vm5289, %v5189, %v5321
  %v5354 = vsel %vm5290, %v5194, %v5322
  %v5355 = vsel %vm5291, %v5197, %v5323
  %v5356 = vsel %vm5292, %v5202, %v5324
  %v5357 = vsel %vm5293, %v5205, %v5325
  %v5358 = vsel %vm5294, %v5210, %v5326
  %v5359 = vsel %vm5295, %v5213, %v5327
  %v5360 = vsel %vm5296, %v5218, %v5328
  %v5361 = vsel %vm5297, %v5221, %v5329
  %v5362 = vsel %vm5298, %v5226, %v5330
  %v5363 = vsel %vm5299, %v5229, %v5331
  %v5364 = vsel %vm5300, %v5234, %v5332
  %v5365 = vsel %vm5301, %v5237, %v5333
  %v5366 = vsel %vm5302, %v5242, %v5334
  %v5367 = vsel %vm5303, %v5245, %v5335
  %v5368 = vsel %vm5304, %v5250, %v5336
  %v5369 = vsel %vm5305, %v5253, %v5337
  %v5370 = vsel %vm5306, %v5258, %v5338
  %v5371 = vsel %vm5307, %v5261, %v5339
  %v5372 = vsel %vm5308, %v5266, %v5340
  %v5373 = vsel %vm5309, %v5269, %v5341
  %v5374 = vsel %vm5310, %v5274, %v5342
  %v5375 = vsel %vm5311, %v5277, %v5343
  %v5376 = vpack.c.bf16 %v5345, %v5344
  %v5377 = vpack.c.bf16 %v5347, %v5346
  %v5378 = vpack.c.bf16 %v5349, %v5348
  %v5379 = vpack.c.bf16 %v5351, %v5350
  %v5380 = vpack.c.bf16 %v5353, %v5352
  %v5381 = vpack.c.bf16 %v5355, %v5354
  %v5382 = vpack.c.bf16 %v5357, %v5356
  %v5383 = vpack.c.bf16 %v5359, %v5358
  %v5384 = vpack.c.bf16 %v5361, %v5360
  %v5385 = vpack.c.bf16 %v5363, %v5362
  %v5386 = vpack.c.bf16 %v5365, %v5364
  %v5387 = vpack.c.bf16 %v5367, %v5366
  %v5388 = vpack.c.bf16 %v5369, %v5368
  %v5389 = vpack.c.bf16 %v5371, %v5370
  %v5390 = vpack.c.bf16 %v5373, %v5372
  %v5391 = vpack.c.bf16 %v5375, %v5374
  %v5392 = vld [vmem:[%s8] sm:$0xff]
  %v5393 = vld [vmem:[%s8 + $0x8] sm:$0xff]
  %v5394 = vld [vmem:[%s8 + $0x10] sm:$0xff]
  %v5395 = vld [vmem:[%s8 + $0x18] sm:$0xff]
  %v5396 = vld [vmem:[%s8 + $0x20] sm:$0xff]
  %v5397 = vld [vmem:[%s8 + $0x28] sm:$0xff]
  %v5398 = vld [vmem:[%s8 + $0x30] sm:$0xff]
  %v5399 = vld [vmem:[%s8 + $0x38] sm:$0xff]
  %v5400 = vld [vmem:[%s8 + $0x40] sm:$0xff]
  %v5401 = vld [vmem:[%s8 + $0x48] sm:$0xff]
  %v5402 = vld [vmem:[%s8 + $0x50] sm:$0xff]
  %v5403 = vld [vmem:[%s8 + $0x58] sm:$0xff]
  %v5404 = vld [vmem:[%s8 + $0x60] sm:$0xff]
  %v5405 = vld [vmem:[%s8 + $0x68] sm:$0xff]
  %v5406 = vld [vmem:[%s8 + $0x70] sm:$0xff]
  %v5407 = vld [vmem:[%s8 + $0x78] sm:$0xff]
  %v5408 = vld [vmem:[%s9] sm:$0x3]
  %v5410 = vlaneseq
  %v5411 = vshrl.u32 %v5410, 7
  %v5412 = vsub.s32 0, %v5411
  %v5413 = vrot.slane %v5408, %v5412
  %v5414 = vlaneseq
  %v5415 = vshrl.u32 %v5414, 7
  %v5416 = vsub.s32 1, %v5415
  %v5417 = vrot.slane %v5408, %v5416
  %v5436 = vunpack.c.l.b16 %v5392
  %v5437 = vunpack.c.h.b16 %v5392
  %v5438 = vunpack.c.l.b16 %v5393
  %v5439 = vunpack.c.h.b16 %v5393
  %v5440 = vunpack.c.l.b16 %v5394
  %v5441 = vunpack.c.h.b16 %v5394
  %v5442 = vunpack.c.l.b16 %v5395
  %v5443 = vunpack.c.h.b16 %v5395
  %v5444 = vunpack.c.l.b16 %v5396
  %v5445 = vunpack.c.h.b16 %v5396
  %v5446 = vunpack.c.l.b16 %v5397
  %v5447 = vunpack.c.h.b16 %v5397
  %v5448 = vunpack.c.l.b16 %v5398
  %v5449 = vunpack.c.h.b16 %v5398
  %v5450 = vunpack.c.l.b16 %v5399
  %v5451 = vunpack.c.h.b16 %v5399
  %v5452 = vunpack.c.l.b16 %v5400
  %v5453 = vunpack.c.h.b16 %v5400
  %v5454 = vunpack.c.l.b16 %v5401
  %v5455 = vunpack.c.h.b16 %v5401
  %v5456 = vunpack.c.l.b16 %v5402
  %v5457 = vunpack.c.h.b16 %v5402
  %v5458 = vunpack.c.l.b16 %v5403
  %v5459 = vunpack.c.h.b16 %v5403
  %v5460 = vunpack.c.l.b16 %v5404
  %v5461 = vunpack.c.h.b16 %v5404
  %v5462 = vunpack.c.l.b16 %v5405
  %v5463 = vunpack.c.h.b16 %v5405
  %v5464 = vunpack.c.l.b16 %v5406
  %v5465 = vunpack.c.h.b16 %v5406
  %v5466 = vunpack.c.l.b16 %v5407
  %v5467 = vunpack.c.h.b16 %v5407
  %v5468 = vpack.c.b16 %v5438, %v5436
  %v5469 = vpack.c.b16 %v5439, %v5437
  %v5470 = vpack.c.b16 %v5442, %v5440
  %v5471 = vpack.c.b16 %v5443, %v5441
  %v5472 = vpack.c.b16 %v5446, %v5444
  %v5473 = vpack.c.b16 %v5447, %v5445
  %v5474 = vpack.c.b16 %v5450, %v5448
  %v5475 = vpack.c.b16 %v5451, %v5449
  %v5476 = vpack.c.b16 %v5454, %v5452
  %v5477 = vpack.c.b16 %v5455, %v5453
  %v5478 = vpack.c.b16 %v5458, %v5456
  %v5479 = vpack.c.b16 %v5459, %v5457
  %v5480 = vpack.c.b16 %v5462, %v5460
  %v5481 = vpack.c.b16 %v5463, %v5461
  %v5482 = vpack.c.b16 %v5466, %v5464
  %v5483 = vpack.c.b16 %v5467, %v5465
  %5500 = vmatprep.subr.bf16.mxu0 %v5469
  %5501 = vmatpush1.bf16.msra.mxu0 %v5468
  %5502 = vmatprep.subr.bf16.mxu0 %v5471
  %5503 = vmatpush1.bf16.msra.mxu0 %v5470
  %5504 = vmatprep.subr.bf16.mxu0 %v5473
  %5505 = vmatpush1.bf16.msra.mxu0 %v5472
  %5506 = vmatprep.subr.bf16.mxu0 %v5475
  %5507 = vmatpush1.bf16.msra.mxu0 %v5474
  %5508 = vmatprep.subr.bf16.mxu0 %v5477
  %5509 = vmatpush1.bf16.msra.mxu0 %v5476
  %5510 = vmatprep.subr.bf16.mxu0 %v5479
  %5511 = vmatpush1.bf16.msra.mxu0 %v5478
  %5512 = vmatprep.subr.bf16.mxu0 %v5481
  %5513 = vmatpush1.bf16.msra.mxu0 %v5480
  %5514 = vmatprep.subr.bf16.mxu0 %v5483
  %5515 = vmatpush1.bf16.msra.mxu0 %v5482
  %5516 = vmatprep.subr.bf16.mxu0 0
  %5517 = vmatpush1.bf16.msra.mxu0 0
  %5518 = vmatprep.subr.bf16.mxu0 0
  %5519 = vmatpush1.bf16.msra.mxu0 0
  %5520 = vmatprep.subr.bf16.mxu0 0
  %5521 = vmatpush1.bf16.msra.mxu0 0
  %5522 = vmatprep.subr.bf16.mxu0 0
  %5523 = vmatpush1.bf16.msra.mxu0 0
  %5524 = vmatprep.subr.bf16.mxu0 0
  %5525 = vmatpush1.bf16.msra.mxu0 0
  %5526 = vmatprep.subr.bf16.mxu0 0
  %5527 = vmatpush1.bf16.msra.mxu0 0
  %5528 = vmatprep.subr.bf16.mxu0 0
  %5529 = vmatpush1.bf16.msra.mxu0 0
  %5530 = vmatprep.subr.bf16.mxu0 0
  %5531 = vmatpush1.bf16.msra.mxu0 0
  %5532 = vmatprep.mubr.bf16.mxu0 0
  %5533 = vmatmul.mubr.bf16.gmra.mrb[0].mxu0 %v5376
  %v5534 = vpop.f32.mrb[0].mxu0
  %v5535 = vadd.f32 %v5413, %v5534
  %v5536 = vpop.f32.mrb[0].mxu0
  %v5537 = vadd.f32 %v5417, %v5536
  %v5538 = vpop.f32.mrb[0].mxu0
  %v5539 = vadd.f32 %v5413, %v5538
  %v5540 = vpop.f32.mrb[0].mxu0
  %v5541 = vadd.f32 %v5417, %v5540
  %5542 = vmatprep.mubr.bf16.mxu0 0
  %5543 = vmatmul.mubr.bf16.gmra.mrb[0].mxu0 %v5377
  %v5544 = vpop.f32.mrb[0].mxu0
  %v5545 = vadd.f32 %v5413, %v5544
  %v5546 = vpop.f32.mrb[0].mxu0
  %v5547 = vadd.f32 %v5417, %v5546
  %v5548 = vpop.f32.mrb[0].mxu0
  %v5549 = vadd.f32 %v5413, %v5548
  %v5550 = vpop.f32.mrb[0].mxu0
  %v5551 = vadd.f32 %v5417, %v5550
  %5552 = vmatprep.mubr.bf16.mxu0 0
  %5553 = vmatmul.mubr.bf16.gmra.mrb[0].mxu0 %v5378
  %v5554 = vpop.f32.mrb[0].mxu0
  %v5555 = vadd.f32 %v5413, %v5554
  %v5556 = vpop.f32.mrb[0].mxu0
  %v5557 = vadd.f32 %v5417, %v5556
  %v5558 = vpop.f32.mrb[0].mxu0
  %v5559 = vadd.f32 %v5413, %v5558
  %v5560 = vpop.f32.mrb[0].mxu0
  %v5561 = vadd.f32 %v5417, %v5560
  %5562 = vmatprep.mubr.bf16.mxu0 0
  %5563 = vmatmul.mubr.bf16.gmra.mrb[0].mxu0 %v5379
  %v5564 = vpop.f32.mrb[0].mxu0
  %v5565 = vadd.f32 %v5413, %v5564
  %v5566 = vpop.f32.mrb[0].mxu0
  %v5567 = vadd.f32 %v5417, %v5566
  %v5568 = vpop.f32.mrb[0].mxu0
  %v5569 = vadd.f32 %v5413, %v5568
  %v5570 = vpop.f32.mrb[0].mxu0
  %v5571 = vadd.f32 %v5417, %v5570
  %5572 = vmatprep.mubr.bf16.mxu0 0
  %5573 = vmatmul.mubr.bf16.gmra.mrb[0].mxu0 %v5380
  %v5574 = vpop.f32.mrb[0].mxu0
  %v5575 = vadd.f32 %v5413, %v5574
  %v5576 = vpop.f32.mrb[0].mxu0
  %v5577 = vadd.f32 %v5417, %v5576
  %v5578 = vpop.f32.mrb[0].mxu0
  %v5579 = vadd.f32 %v5413, %v5578
  %v5580 = vpop.f32.mrb[0].mxu0
  %v5581 = vadd.f32 %v5417, %v5580
  %5582 = vmatprep.mubr.bf16.mxu0 0
  %5583 = vmatmul.mubr.bf16.gmra.mrb[0].mxu0 %v5381
  %v5584 = vpop.f32.mrb[0].mxu0
  %v5585 = vadd.f32 %v5413, %v5584
  %v5586 = vpop.f32.mrb[0].mxu0
  %v5587 = vadd.f32 %v5417, %v5586
  %v5588 = vpop.f32.mrb[0].mxu0
  %v5589 = vadd.f32 %v5413, %v5588
  %v5590 = vpop.f32.mrb[0].mxu0
  %v5591 = vadd.f32 %v5417, %v5590
  %5592 = vmatprep.mubr.bf16.mxu0 0
  %5593 = vmatmul.mubr.bf16.gmra.mrb[0].mxu0 %v5382
  %v5594 = vpop.f32.mrb[0].mxu0
  %v5595 = vadd.f32 %v5413, %v5594
  %v5596 = vpop.f32.mrb[0].mxu0
  %v5597 = vadd.f32 %v5417, %v5596
  %v5598 = vpop.f32.mrb[0].mxu0
  %v5599 = vadd.f32 %v5413, %v5598
  %v5600 = vpop.f32.mrb[0].mxu0
  %v5601 = vadd.f32 %v5417, %v5600
  %5602 = vmatprep.mubr.bf16.mxu0 0
  %5603 = vmatmul.mubr.bf16.gmra.mrb[0].mxu0 %v5383
  %v5604 = vpop.f32.mrb[0].mxu0
  %v5605 = vadd.f32 %v5413, %v5604
  %v5606 = vpop.f32.mrb[0].mxu0
  %v5607 = vadd.f32 %v5417, %v5606
  %v5608 = vpop.f32.mrb[0].mxu0
  %v5609 = vadd.f32 %v5413, %v5608
  %v5610 = vpop.f32.mrb[0].mxu0
  %v5611 = vadd.f32 %v5417, %v5610
  %5612 = vmatprep.mubr.bf16.mxu0 0
  %5613 = vmatmul.mubr.bf16.gmra.mrb[0].mxu0 %v5384
  %v5614 = vpop.f32.mrb[0].mxu0
  %v5615 = vadd.f32 %v5413, %v5614
  %v5616 = vpop.f32.mrb[0].mxu0
  %v5617 = vadd.f32 %v5417, %v5616
  %v5618 = vpop.f32.mrb[0].mxu0
  %v5619 = vadd.f32 %v5413, %v5618
  %v5620 = vpop.f32.mrb[0].mxu0
  %v5621 = vadd.f32 %v5417, %v5620
  %5622 = vmatprep.mubr.bf16.mxu0 0
  %5623 = vmatmul.mubr.bf16.gmra.mrb[0].mxu0 %v5385
  %v5624 = vpop.f32.mrb[0].mxu0
  %v5625 = vadd.f32 %v5413, %v5624
  %v5626 = vpop.f32.mrb[0].mxu0
  %v5627 = vadd.f32 %v5417, %v5626
  %v5628 = vpop.f32.mrb[0].mxu0
  %v5629 = vadd.f32 %v5413, %v5628
  %v5630 = vpop.f32.mrb[0].mxu0
  %v5631 = vadd.f32 %v5417, %v5630
  %5632 = vmatprep.mubr.bf16.mxu0 0
  %5633 = vmatmul.mubr.bf16.gmra.mrb[0].mxu0 %v5386
  %v5634 = vpop.f32.mrb[0].mxu0
  %v5635 = vadd.f32 %v5413, %v5634
  %v5636 = vpop.f32.mrb[0].mxu0
  %v5637 = vadd.f32 %v5417, %v5636
  %v5638 = vpop.f32.mrb[0].mxu0
  %v5639 = vadd.f32 %v5413, %v5638
  %v5640 = vpop.f32.mrb[0].mxu0
  %v5641 = vadd.f32 %v5417, %v5640
  %5642 = vmatprep.mubr.bf16.mxu0 0
  %5643 = vmatmul.mubr.bf16.gmra.mrb[0].mxu0 %v5387
  %v5644 = vpop.f32.mrb[0].mxu0
  %v5645 = vadd.f32 %v5413, %v5644
  %v5646 = vpop.f32.mrb[0].mxu0
  %v5647 = vadd.f32 %v5417, %v5646
  %v5648 = vpop.f32.mrb[0].mxu0
  %v5649 = vadd.f32 %v5413, %v5648
  %v5650 = vpop.f32.mrb[0].mxu0
  %v5651 = vadd.f32 %v5417, %v5650
  %5652 = vmatprep.mubr.bf16.mxu0 0
  %5653 = vmatmul.mubr.bf16.gmra.mrb[0].mxu0 %v5388
  %v5654 = vpop.f32.mrb[0].mxu0
  %v5655 = vadd.f32 %v5413, %v5654
  %v5656 = vpop.f32.mrb[0].mxu0
  %v5657 = vadd.f32 %v5417, %v5656
  %v5658 = vpop.f32.mrb[0].mxu0
  %v5659 = vadd.f32 %v5413, %v5658
  %v5660 = vpop.f32.mrb[0].mxu0
  %v5661 = vadd.f32 %v5417, %v5660
  %5662 = vmatprep.mubr.bf16.mxu0 0
  %5663 = vmatmul.mubr.bf16.gmra.mrb[0].mxu0 %v5389
  %v5664 = vpop.f32.mrb[0].mxu0
  %v5665 = vadd.f32 %v5413, %v5664
  %v5666 = vpop.f32.mrb[0].mxu0
  %v5667 = vadd.f32 %v5417, %v5666
  %v5668 = vpop.f32.mrb[0].mxu0
  %v5669 = vadd.f32 %v5413, %v5668
  %v5670 = vpop.f32.mrb[0].mxu0
  %v5671 = vadd.f32 %v5417, %v5670
  %5672 = vmatprep.mubr.bf16.mxu0 0
  %5673 = vmatmul.mubr.bf16.gmra.mrb[0].mxu0 %v5390
  %v5674 = vpop.f32.mrb[0].mxu0
  %v5675 = vadd.f32 %v5413, %v5674
  %v5676 = vpop.f32.mrb[0].mxu0
  %v5677 = vadd.f32 %v5417, %v5676
  %v5678 = vpop.f32.mrb[0].mxu0
  %v5679 = vadd.f32 %v5413, %v5678
  %v5680 = vpop.f32.mrb[0].mxu0
  %v5681 = vadd.f32 %v5417, %v5680
  %5682 = vmatprep.mubr.bf16.mxu0 0
  %5683 = vmatmul.mubr.bf16.gmra.mrb[0].mxu0 %v5391
  %v5684 = vpop.f32.mrb[0].mxu0
  %v5685 = vadd.f32 %v5413, %v5684
  %v5686 = vpop.f32.mrb[0].mxu0
  %v5687 = vadd.f32 %v5417, %v5686
  %v5688 = vpop.f32.mrb[0].mxu0
  %v5689 = vadd.f32 %v5413, %v5688
  %v5690 = vpop.f32.mrb[0].mxu0
  %v5691 = vadd.f32 %v5417, %v5690
  %5692 = vdwg.mxu0
  %v5693 = vmul.f32 %v5537, 0.5
  %v5694 = vmul.f32 %v5541, 0.5
  %v5695 = vmul.f32 %v5547, 0.5
  %v5696 = vmul.f32 %v5551, 0.5
  %v5697 = vmul.f32 %v5557, 0.5
  %v5698 = vmul.f32 %v5561, 0.5
  %v5699 = vmul.f32 %v5567, 0.5
  %v5700 = vmul.f32 %v5571, 0.5
  %v5701 = vmul.f32 %v5577, 0.5
  %v5702 = vmul.f32 %v5581, 0.5
  %v5703 = vmul.f32 %v5587, 0.5
  %v5704 = vmul.f32 %v5591, 0.5
  %v5705 = vmul.f32 %v5597, 0.5
  %v5706 = vmul.f32 %v5601, 0.5
  %v5707 = vmul.f32 %v5607, 0.5
  %v5708 = vmul.f32 %v5611, 0.5
  %v5709 = vmul.f32 %v5617, 0.5
  %v5710 = vmul.f32 %v5621, 0.5
  %v5711 = vmul.f32 %v5627, 0.5
  %v5712 = vmul.f32 %v5631, 0.5
  %v5713 = vmul.f32 %v5637, 0.5
  %v5714 = vmul.f32 %v5641, 0.5
  %v5715 = vmul.f32 %v5647, 0.5
  %v5716 = vmul.f32 %v5651, 0.5
  %v5717 = vmul.f32 %v5657, 0.5
  %v5718 = vmul.f32 %v5661, 0.5
  %v5719 = vmul.f32 %v5667, 0.5
  %v5720 = vmul.f32 %v5671, 0.5
  %v5721 = vmul.f32 %v5677, 0.5
  %v5722 = vmul.f32 %v5681, 0.5
  %v5723 = vmul.f32 %v5687, 0.5
  %v5724 = vmul.f32 %v5691, 0.5
  %v5725 = vmul.f32 %v5693, 1.442695
  %v5726 = vpow.pop %v5725
  %v5727 = vmul.f32 %v5694, 1.442695
  %v5728 = vpow.pop %v5727
  %v5729 = vmul.f32 %v5695, 1.442695
  %v5730 = vpow.pop %v5729
  %v5731 = vmul.f32 %v5696, 1.442695
  %v5732 = vpow.pop %v5731
  %v5733 = vmul.f32 %v5697, 1.442695
  %v5734 = vpow.pop %v5733
  %v5735 = vmul.f32 %v5698, 1.442695
  %v5736 = vpow.pop %v5735
  %v5737 = vmul.f32 %v5699, 1.442695
  %v5738 = vpow.pop %v5737
  %v5739 = vmul.f32 %v5700, 1.442695
  %v5740 = vpow.pop %v5739
  %v5741 = vmul.f32 %v5701, 1.442695
  %v5742 = vpow.pop %v5741
  %v5743 = vmul.f32 %v5702, 1.442695
  %v5744 = vpow.pop %v5743
  %v5745 = vmul.f32 %v5703, 1.442695
  %v5746 = vpow.pop %v5745
  %v5747 = vmul.f32 %v5704, 1.442695
  %v5748 = vpow.pop %v5747
  %v5749 = vmul.f32 %v5705, 1.442695
  %v5750 = vpow.pop %v5749
  %v5751 = vmul.f32 %v5706, 1.442695
  %v5752 = vpow.pop %v5751
  %v5753 = vmul.f32 %v5707, 1.442695
  %v5754 = vpow.pop %v5753
  %v5755 = vmul.f32 %v5708, 1.442695
  %v5756 = vpow.pop %v5755
  %v5757 = vmul.f32 %v5709, 1.442695
  %v5758 = vpow.pop %v5757
  %v5759 = vmul.f32 %v5710, 1.442695
  %v5760 = vpow.pop %v5759
  %v5761 = vmul.f32 %v5711, 1.442695
  %v5762 = vpow.pop %v5761
  %v5763 = vmul.f32 %v5712, 1.442695
  %v5764 = vpow.pop %v5763
  %v5765 = vmul.f32 %v5713, 1.442695
  %v5766 = vpow.pop %v5765
  %v5767 = vmul.f32 %v5714, 1.442695
  %v5768 = vpow.pop %v5767
  %v5769 = vmul.f32 %v5715, 1.442695
  %v5770 = vpow.pop %v5769
  %v5771 = vmul.f32 %v5716, 1.442695
  %v5772 = vpow.pop %v5771
  %v5773 = vmul.f32 %v5717, 1.442695
  %v5774 = vpow.pop %v5773
  %v5775 = vmul.f32 %v5718, 1.442695
  %v5776 = vpow.pop %v5775
  %v5777 = vmul.f32 %v5719, 1.442695
  %v5778 = vpow.pop %v5777
  %v5779 = vmul.f32 %v5720, 1.442695
  %v5780 = vpow.pop %v5779
  %v5781 = vmul.f32 %v5721, 1.442695
  %v5782 = vpow.pop %v5781
  %v5783 = vmul.f32 %v5722, 1.442695
  %v5784 = vpow.pop %v5783
  %v5785 = vmul.f32 %v5723, 1.442695
  %v5786 = vpow.pop %v5785
  %v5787 = vmul.f32 %v5724, 1.442695
  %v5788 = vpow.pop %v5787
  %v5789 = vld [vmem:[%s1] sm:$0xff]
  %v5790 = vld [vmem:[%s1 + $0x8] sm:$0xff]
  %v5791 = vld [vmem:[%s1 + $0x10] sm:$0xff]
  %v5792 = vld [vmem:[%s1 + $0x18] sm:$0xff]
  %v5793 = vld [vmem:[%s1 + $0x20] sm:$0xff]
  %v5794 = vld [vmem:[%s1 + $0x28] sm:$0xff]
  %v5795 = vld [vmem:[%s1 + $0x30] sm:$0xff]
  %v5796 = vld [vmem:[%s1 + $0x38] sm:$0xff]
  %v5797 = vld [vmem:[%s1 + $0x40] sm:$0xff]
  %v5798 = vld [vmem:[%s1 + $0x48] sm:$0xff]
  %v5799 = vld [vmem:[%s1 + $0x50] sm:$0xff]
  %v5800 = vld [vmem:[%s1 + $0x58] sm:$0xff]
  %v5801 = vld [vmem:[%s1 + $0x60] sm:$0xff]
  %v5802 = vld [vmem:[%s1 + $0x68] sm:$0xff]
  %v5803 = vld [vmem:[%s1 + $0x70] sm:$0xff]
  %v5804 = vld [vmem:[%s1 + $0x78] sm:$0xff]
  %v5805 = vld [vmem:[%s1 + $0x80] sm:$0xff]
  %v5806 = vld [vmem:[%s1 + $0x88] sm:$0xff]
  %v5807 = vld [vmem:[%s1 + $0x90] sm:$0xff]
  %v5808 = vld [vmem:[%s1 + $0x98] sm:$0xff]
  %v5809 = vld [vmem:[%s1 + $0xa0] sm:$0xff]
  %v5810 = vld [vmem:[%s1 + $0xa8] sm:$0xff]
  %v5811 = vld [vmem:[%s1 + $0xb0] sm:$0xff]
  %v5812 = vld [vmem:[%s1 + $0xb8] sm:$0xff]
  %v5813 = vld [vmem:[%s1 + $0xc0] sm:$0xff]
  %v5814 = vld [vmem:[%s1 + $0xc8] sm:$0xff]
  %v5815 = vld [vmem:[%s1 + $0xd0] sm:$0xff]
  %v5816 = vld [vmem:[%s1 + $0xd8] sm:$0xff]
  %v5817 = vld [vmem:[%s1 + $0xe0] sm:$0xff]
  %v5818 = vld [vmem:[%s1 + $0xe8] sm:$0xff]
  %v5819 = vld [vmem:[%s1 + $0xf0] sm:$0xff]
  %v5820 = vld [vmem:[%s1 + $0xf8] sm:$0xff]
  %v5821 = vmul.f32 %v5726, %v5789
  %v5822 = vmul.f32 %v5728, %v5790
  %v5823 = vmul.f32 %v5730, %v5791
  %v5824 = vmul.f32 %v5732, %v5792
  %v5825 = vmul.f32 %v5734, %v5793
  %v5826 = vmul.f32 %v5736, %v5794
  %v5827 = vmul.f32 %v5738, %v5795
  %v5828 = vmul.f32 %v5740, %v5796
  %v5829 = vmul.f32 %v5742, %v5797
  %v5830 = vmul.f32 %v5744, %v5798
  %v5831 = vmul.f32 %v5746, %v5799
  %v5832 = vmul.f32 %v5748, %v5800
  %v5833 = vmul.f32 %v5750, %v5801
  %v5834 = vmul.f32 %v5752, %v5802
  %v5835 = vmul.f32 %v5754, %v5803
  %v5836 = vmul.f32 %v5756, %v5804
  %v5837 = vmul.f32 %v5758, %v5805
  %v5838 = vmul.f32 %v5760, %v5806
  %v5839 = vmul.f32 %v5762, %v5807
  %v5840 = vmul.f32 %v5764, %v5808
  %v5841 = vmul.f32 %v5766, %v5809
  %v5842 = vmul.f32 %v5768, %v5810
  %v5843 = vmul.f32 %v5770, %v5811
  %v5844 = vmul.f32 %v5772, %v5812
  %v5845 = vmul.f32 %v5774, %v5813
  %v5846 = vmul.f32 %v5776, %v5814
  %v5847 = vmul.f32 %v5778, %v5815
  %v5848 = vmul.f32 %v5780, %v5816
  %v5849 = vmul.f32 %v5782, %v5817
  %v5850 = vmul.f32 %v5784, %v5818
  %v5851 = vmul.f32 %v5786, %v5819
  %v5852 = vmul.f32 %v5788, %v5820
  %v5853 = vadd.f32 %v5535, %v5821
  %v5854 = vadd.f32 %v5539, %v5822
  %v5855 = vadd.f32 %v5545, %v5823
  %v5856 = vadd.f32 %v5549, %v5824
  %v5857 = vadd.f32 %v5555, %v5825
  %v5858 = vadd.f32 %v5559, %v5826
  %v5859 = vadd.f32 %v5565, %v5827
  %v5860 = vadd.f32 %v5569, %v5828
  %v5861 = vadd.f32 %v5575, %v5829
  %v5862 = vadd.f32 %v5579, %v5830
  %v5863 = vadd.f32 %v5585, %v5831
  %v5864 = vadd.f32 %v5589, %v5832
  %v5865 = vadd.f32 %v5595, %v5833
  %v5866 = vadd.f32 %v5599, %v5834
  %v5867 = vadd.f32 %v5605, %v5835
  %v5868 = vadd.f32 %v5609, %v5836
  %v5869 = vadd.f32 %v5615, %v5837
  %v5870 = vadd.f32 %v5619, %v5838
  %v5871 = vadd.f32 %v5625, %v5839
  %v5872 = vadd.f32 %v5629, %v5840
  %v5873 = vadd.f32 %v5635, %v5841
  %v5874 = vadd.f32 %v5639, %v5842
  %v5875 = vadd.f32 %v5645, %v5843
  %v5876 = vadd.f32 %v5649, %v5844
  %v5877 = vadd.f32 %v5655, %v5845
  %v5878 = vadd.f32 %v5659, %v5846
  %v5879 = vadd.f32 %v5665, %v5847
  %v5880 = vadd.f32 %v5669, %v5848
  %v5881 = vadd.f32 %v5675, %v5849
  %v5882 = vadd.f32 %v5679, %v5850
  %v5883 = vadd.f32 %v5685, %v5851
  %v5884 = vadd.f32 %v5689, %v5852
  %5885 = vst [vmem:[%s19] sm:$0xff] %v5535
  %5886 = vst [vmem:[%s19 + $0x10] sm:$0xff] %v5539
  %5887 = vst [vmem:[%s19 + $0x20] sm:$0xff] %v5545
  %5888 = vst [vmem:[%s19 + $0x30] sm:$0xff] %v5549
  %5889 = vst [vmem:[%s19 + $0x40] sm:$0xff] %v5555
  %5890 = vst [vmem:[%s19 + $0x50] sm:$0xff] %v5559
  %5891 = vst [vmem:[%s19 + $0x60] sm:$0xff] %v5565
  %5892 = vst [vmem:[%s19 + $0x70] sm:$0xff] %v5569
  %5893 = vst [vmem:[%s19 + $0x80] sm:$0xff] %v5575
  %5894 = vst [vmem:[%s19 + $0x90] sm:$0xff] %v5579
  %5895 = vst [vmem:[%s19 + $0xa0] sm:$0xff] %v5585
  %5896 = vst [vmem:[%s19 + $0xb0] sm:$0xff] %v5589
  %5897 = vst [vmem:[%s19 + $0xc0] sm:$0xff] %v5595
  %5898 = vst [vmem:[%s19 + $0xd0] sm:$0xff] %v5599
  %5899 = vst [vmem:[%s19 + $0xe0] sm:$0xff] %v5605
  %5900 = vst [vmem:[%s19 + $0xf0] sm:$0xff] %v5609
  %5901 = vst [vmem:[%s19 + $0x100] sm:$0xff] %v5615
  %5902 = vst [vmem:[%s19 + $0x110] sm:$0xff] %v5619
  %5903 = vst [vmem:[%s19 + $0x120] sm:$0xff] %v5625
  %5904 = vst [vmem:[%s19 + $0x130] sm:$0xff] %v5629
  %5905 = vst [vmem:[%s19 + $0x140] sm:$0xff] %v5635
  %5906 = vst [vmem:[%s19 + $0x150] sm:$0xff] %v5639
  %5907 = vst [vmem:[%s19 + $0x160] sm:$0xff] %v5645
  %5908 = vst [vmem:[%s19 + $0x170] sm:$0xff] %v5649
  %5909 = vst [vmem:[%s19 + $0x180] sm:$0xff] %v5655
  %5910 = vst [vmem:[%s19 + $0x190] sm:$0xff] %v5659
  %5911 = vst [vmem:[%s19 + $0x1a0] sm:$0xff] %v5665
  %5912 = vst [vmem:[%s19 + $0x1b0] sm:$0xff] %v5669
  %5913 = vst [vmem:[%s19 + $0x1c0] sm:$0xff] %v5675
  %5914 = vst [vmem:[%s19 + $0x1d0] sm:$0xff] %v5679
  %5915 = vst [vmem:[%s19 + $0x1e0] sm:$0xff] %v5685
  %5916 = vst [vmem:[%s19 + $0x1f0] sm:$0xff] %v5689
  %5917 = vst [vmem:[%s19 + $0x8] sm:$0xff] %v5726
  %5918 = vst [vmem:[%s19 + $0x18] sm:$0xff] %v5728
  %5919 = vst [vmem:[%s19 + $0x28] sm:$0xff] %v5730
  %5920 = vst [vmem:[%s19 + $0x38] sm:$0xff] %v5732
  %5921 = vst [vmem:[%s19 + $0x48] sm:$0xff] %v5734
  %5922 = vst [vmem:[%s19 + $0x58] sm:$0xff] %v5736
  %5923 = vst [vmem:[%s19 + $0x68] sm:$0xff] %v5738
  %5924 = vst [vmem:[%s19 + $0x78] sm:$0xff] %v5740
  %5925 = vst [vmem:[%s19 + $0x88] sm:$0xff] %v5742
  %5926 = vst [vmem:[%s19 + $0x98] sm:$0xff] %v5744
  %5927 = vst [vmem:[%s19 + $0xa8] sm:$0xff] %v5746
  %5928 = vst [vmem:[%s19 + $0xb8] sm:$0xff] %v5748
  %5929 = vst [vmem:[%s19 + $0xc8] sm:$0xff] %v5750
  %5930 = vst [vmem:[%s19 + $0xd8] sm:$0xff] %v5752
  %5931 = vst [vmem:[%s19 + $0xe8] sm:$0xff] %v5754
  %5932 = vst [vmem:[%s19 + $0xf8] sm:$0xff] %v5756
  %5933 = vst [vmem:[%s19 + $0x108] sm:$0xff] %v5758
  %5934 = vst [vmem:[%s19 + $0x118] sm:$0xff] %v5760
  %5935 = vst [vmem:[%s19 + $0x128] sm:$0xff] %v5762
  %5936 = vst [vmem:[%s19 + $0x138] sm:$0xff] %v5764
  %5937 = vst [vmem:[%s19 + $0x148] sm:$0xff] %v5766
  %5938 = vst [vmem:[%s19 + $0x158] sm:$0xff] %v5768
  %5939 = vst [vmem:[%s19 + $0x168] sm:$0xff] %v5770
  %5940 = vst [vmem:[%s19 + $0x178] sm:$0xff] %v5772
  %5941 = vst [vmem:[%s19 + $0x188] sm:$0xff] %v5774
  %5942 = vst [vmem:[%s19 + $0x198] sm:$0xff] %v5776
  %5943 = vst [vmem:[%s19 + $0x1a8] sm:$0xff] %v5778
  %5944 = vst [vmem:[%s19 + $0x1b8] sm:$0xff] %v5780
  %5945 = vst [vmem:[%s19 + $0x1c8] sm:$0xff] %v5782
  %5946 = vst [vmem:[%s19 + $0x1d8] sm:$0xff] %v5784
  %5947 = vst [vmem:[%s19 + $0x1e8] sm:$0xff] %v5786
  %5948 = vst [vmem:[%s19 + $0x1f8] sm:$0xff] %v5788
  %v5949 = vpack.c.bf16 %v5854, %v5853
  %v5950 = vpack.c.bf16 %v5856, %v5855
  %v5951 = vpack.c.bf16 %v5858, %v5857
  %v5952 = vpack.c.bf16 %v5860, %v5859
  %v5953 = vpack.c.bf16 %v5862, %v5861
  %v5954 = vpack.c.bf16 %v5864, %v5863
  %v5955 = vpack.c.bf16 %v5866, %v5865
  %v5956 = vpack.c.bf16 %v5868, %v5867
  %v5957 = vpack.c.bf16 %v5870, %v5869
  %v5958 = vpack.c.bf16 %v5872, %v5871
  %v5959 = vpack.c.bf16 %v5874, %v5873
  %v5960 = vpack.c.bf16 %v5876, %v5875
  %v5961 = vpack.c.bf16 %v5878, %v5877
  %v5962 = vpack.c.bf16 %v5880, %v5879
  %v5963 = vpack.c.bf16 %v5882, %v5881
  %v5964 = vpack.c.bf16 %v5884, %v5883
  %v5965 = vld [vmem:[%s10] sm:$0xf]
  %v5966 = vld [vmem:[%s10 + $0x4] sm:$0xf]
  %v5967 = vld [vmem:[%s10 + $0x8] sm:$0xf]
  %v5968 = vld [vmem:[%s10 + $0xc] sm:$0xf]
  %v5969 = vld [vmem:[%s10 + $0x10] sm:$0xf]
  %v5970 = vld [vmem:[%s10 + $0x14] sm:$0xf]
  %v5971 = vld [vmem:[%s10 + $0x18] sm:$0xf]
  %v5972 = vld [vmem:[%s10 + $0x1c] sm:$0xf]
  %v5973 = vld [vmem:[%s10 + $0x20] sm:$0xf]
  %v5974 = vld [vmem:[%s10 + $0x24] sm:$0xf]
  %v5975 = vld [vmem:[%s10 + $0x28] sm:$0xf]
  %v5976 = vld [vmem:[%s10 + $0x2c] sm:$0xf]
  %v5977 = vld [vmem:[%s10 + $0x30] sm:$0xf]
  %v5978 = vld [vmem:[%s10 + $0x34] sm:$0xf]
  %v5979 = vld [vmem:[%s10 + $0x38] sm:$0xf]
  %v5980 = vld [vmem:[%s10 + $0x3c] sm:$0xf]
  %v5981 = vld [vmem:[%s11] sm:$0x1]
  %v5983 = vlaneseq
  %v5984 = vshrl.u32 %v5983, 7
  %v5985 = vsub.s32 0, %v5984
  %v5986 = vrot.slane %v5981, %v5985
  %v6004 = vunpack.c.l.b16 %v5965
  %v6005 = vunpack.c.l.b16 %v5966
  %v6006 = vunpack.c.l.b16 %v5967
  %v6007 = vunpack.c.l.b16 %v5968
  %v6008 = vunpack.c.l.b16 %v5969
  %v6009 = vunpack.c.l.b16 %v5970
  %v6010 = vunpack.c.l.b16 %v5971
  %v6011 = vunpack.c.l.b16 %v5972
  %v6012 = vunpack.c.l.b16 %v5973
  %v6013 = vunpack.c.l.b16 %v5974
  %v6014 = vunpack.c.l.b16 %v5975
  %v6015 = vunpack.c.l.b16 %v5976
  %v6016 = vunpack.c.l.b16 %v5977
  %v6017 = vunpack.c.l.b16 %v5978
  %v6018 = vunpack.c.l.b16 %v5979
  %v6019 = vunpack.c.l.b16 %v5980
  %v6020 = vpack.c.b16 %v6005, %v6004
  %v6021 = vpack.c.b16 %v6007, %v6006
  %v6022 = vpack.c.b16 %v6009, %v6008
  %v6023 = vpack.c.b16 %v6011, %v6010
  %v6024 = vpack.c.b16 %v6013, %v6012
  %v6025 = vpack.c.b16 %v6015, %v6014
  %v6026 = vpack.c.b16 %v6017, %v6016
  %v6027 = vpack.c.b16 %v6019, %v6018
  %6036 = vmatprep.subr.bf16.mxu0 0
  %6037 = vmatpush1.bf16.msra.mxu0 %v6020
  %6038 = vmatprep.subr.bf16.mxu0 0
  %6039 = vmatpush1.bf16.msra.mxu0 %v6021
  %6040 = vmatprep.subr.bf16.mxu0 0
  %6041 = vmatpush1.bf16.msra.mxu0 %v6022
  %6042 = vmatprep.subr.bf16.mxu0 0
  %6043 = vmatpush1.bf16.msra.mxu0 %v6023
  %6044 = vmatprep.subr.bf16.mxu0 0
  %6045 = vmatpush1.bf16.msra.mxu0 %v6024
  %6046 = vmatprep.subr.bf16.mxu0 0
  %6047 = vmatpush1.bf16.msra.mxu0 %v6025
  %6048 = vmatprep.subr.bf16.mxu0 0
  %6049 = vmatpush1.bf16.msra.mxu0 %v6026
  %6050 = vmatprep.subr.bf16.mxu0 0
  %6051 = vmatpush1.bf16.msra.mxu0 %v6027
  %6052 = vmatprep.subr.bf16.mxu0 0
  %6053 = vmatpush1.bf16.msra.mxu0 0
  %6054 = vmatprep.subr.bf16.mxu0 0
  %6055 = vmatpush1.bf16.msra.mxu0 0
  %6056 = vmatprep.subr.bf16.mxu0 0
  %6057 = vmatpush1.bf16.msra.mxu0 0
  %6058 = vmatprep.subr.bf16.mxu0 0
  %6059 = vmatpush1.bf16.msra.mxu0 0
  %6060 = vmatprep.subr.bf16.mxu0 0
  %6061 = vmatpush1.bf16.msra.mxu0 0
  %6062 = vmatprep.subr.bf16.mxu0 0
  %6063 = vmatpush1.bf16.msra.mxu0 0
  %6064 = vmatprep.subr.bf16.mxu0 0
  %6065 = vmatpush1.bf16.msra.mxu0 0
  %6066 = vmatprep.subr.bf16.mxu0 0
  %6067 = vmatpush1.bf16.msra.mxu0 0
  %6068 = vmatprep.mubr.bf16.mxu0 0
  %6069 = vmatmul.mubr.bf16.gmra.mrb[0].mxu0 %v5949
  %v6070 = vpop.f32.mrb[0].mxu0
  %v6071 = vadd.f32 %v5986, %v6070
  %v6072 = vpop.f32.mrb[0].mxu0
  %v6073 = vpop.f32.mrb[0].mxu0
  %v6074 = vadd.f32 %v5986, %v6073
  %v6075 = vpop.f32.mrb[0].mxu0
  %6076 = vmatprep.mubr.bf16.mxu0 0
  %6077 = vmatmul.mubr.bf16.gmra.mrb[0].mxu0 %v5950
  %v6078 = vpop.f32.mrb[0].mxu0
  %v6079 = vadd.f32 %v5986, %v6078
  %v6080 = vpop.f32.mrb[0].mxu0
  %v6081 = vpop.f32.mrb[0].mxu0
  %v6082 = vadd.f32 %v5986, %v6081
  %v6083 = vpop.f32.mrb[0].mxu0
  %6084 = vmatprep.mubr.bf16.mxu0 0
  %6085 = vmatmul.mubr.bf16.gmra.mrb[0].mxu0 %v5951
  %v6086 = vpop.f32.mrb[0].mxu0
  %v6087 = vadd.f32 %v5986, %v6086
  %v6088 = vpop.f32.mrb[0].mxu0
  %v6089 = vpop.f32.mrb[0].mxu0
  %v6090 = vadd.f32 %v5986, %v6089
  %v6091 = vpop.f32.mrb[0].mxu0
  %6092 = vmatprep.mubr.bf16.mxu0 0
  %6093 = vmatmul.mubr.bf16.gmra.mrb[0].mxu0 %v5952
  %v6094 = vpop.f32.mrb[0].mxu0
  %v6095 = vadd.f32 %v5986, %v6094
  %v6096 = vpop.f32.mrb[0].mxu0
  %v6097 = vpop.f32.mrb[0].mxu0
  %v6098 = vadd.f32 %v5986, %v6097
  %v6099 = vpop.f32.mrb[0].mxu0
  %6100 = vmatprep.mubr.bf16.mxu0 0
  %6101 = vmatmul.mubr.bf16.gmra.mrb[0].mxu0 %v5953
  %v6102 = vpop.f32.mrb[0].mxu0
  %v6103 = vadd.f32 %v5986, %v6102
  %v6104 = vpop.f32.mrb[0].mxu0
  %v6105 = vpop.f32.mrb[0].mxu0
  %v6106 = vadd.f32 %v5986, %v6105
  %v6107 = vpop.f32.mrb[0].mxu0
  %6108 = vmatprep.mubr.bf16.mxu0 0
  %6109 = vmatmul.mubr.bf16.gmra.mrb[0].mxu0 %v5954
  %v6110 = vpop.f32.mrb[0].mxu0
  %v6111 = vadd.f32 %v5986, %v6110
  %v6112 = vpop.f32.mrb[0].mxu0
  %v6113 = vpop.f32.mrb[0].mxu0
  %v6114 = vadd.f32 %v5986, %v6113
  %v6115 = vpop.f32.mrb[0].mxu0
  %6116 = vmatprep.mubr.bf16.mxu0 0
  %6117 = vmatmul.mubr.bf16.gmra.mrb[0].mxu0 %v5955
  %v6118 = vpop.f32.mrb[0].mxu0
  %v6119 = vadd.f32 %v5986, %v6118
  %v6120 = vpop.f32.mrb[0].mxu0
  %v6121 = vpop.f32.mrb[0].mxu0
  %v6122 = vadd.f32 %v5986, %v6121
  %v6123 = vpop.f32.mrb[0].mxu0
  %6124 = vmatprep.mubr.bf16.mxu0 0
  %6125 = vmatmul.mubr.bf16.gmra.mrb[0].mxu0 %v5956
  %v6126 = vpop.f32.mrb[0].mxu0
  %v6127 = vadd.f32 %v5986, %v6126
  %v6128 = vpop.f32.mrb[0].mxu0
  %v6129 = vpop.f32.mrb[0].mxu0
  %v6130 = vadd.f32 %v5986, %v6129
  %v6131 = vpop.f32.mrb[0].mxu0
  %6132 = vmatprep.mubr.bf16.mxu0 0
  %6133 = vmatmul.mubr.bf16.gmra.mrb[0].mxu0 %v5957
  %v6134 = vpop.f32.mrb[0].mxu0
  %v6135 = vadd.f32 %v5986, %v6134
  %v6136 = vpop.f32.mrb[0].mxu0
  %v6137 = vpop.f32.mrb[0].mxu0
  %v6138 = vadd.f32 %v5986, %v6137
  %v6139 = vpop.f32.mrb[0].mxu0
  %6140 = vmatprep.mubr.bf16.mxu0 0
  %6141 = vmatmul.mubr.bf16.gmra.mrb[0].mxu0 %v5958
  %v6142 = vpop.f32.mrb[0].mxu0
  %v6143 = vadd.f32 %v5986, %v6142
  %v6144 = vpop.f32.mrb[0].mxu0
  %v6145 = vpop.f32.mrb[0].mxu0
  %v6146 = vadd.f32 %v5986, %v6145
  %v6147 = vpop.f32.mrb[0].mxu0
  %6148 = vmatprep.mubr.bf16.mxu0 0
  %6149 = vmatmul.mubr.bf16.gmra.mrb[0].mxu0 %v5959
  %v6150 = vpop.f32.mrb[0].mxu0
  %v6151 = vadd.f32 %v5986, %v6150
  %v6152 = vpop.f32.mrb[0].mxu0
  %v6153 = vpop.f32.mrb[0].mxu0
  %v6154 = vadd.f32 %v5986, %v6153
  %v6155 = vpop.f32.mrb[0].mxu0
  %6156 = vmatprep.mubr.bf16.mxu0 0
  %6157 = vmatmul.mubr.bf16.gmra.mrb[0].mxu0 %v5960
  %v6158 = vpop.f32.mrb[0].mxu0
  %v6159 = vadd.f32 %v5986, %v6158
  %v6160 = vpop.f32.mrb[0].mxu0
  %v6161 = vpop.f32.mrb[0].mxu0
  %v6162 = vadd.f32 %v5986, %v6161
  %v6163 = vpop.f32.mrb[0].mxu0
  %6164 = vmatprep.mubr.bf16.mxu0 0
  %6165 = vmatmul.mubr.bf16.gmra.mrb[0].mxu0 %v5961
  %v6166 = vpop.f32.mrb[0].mxu0
  %v6167 = vadd.f32 %v5986, %v6166
  %v6168 = vpop.f32.mrb[0].mxu0
  %v6169 = vpop.f32.mrb[0].mxu0
  %v6170 = vadd.f32 %v5986, %v6169
  %v6171 = vpop.f32.mrb[0].mxu0
  %6172 = vmatprep.mubr.bf16.mxu0 0
  %6173 = vmatmul.mubr.bf16.gmra.mrb[0].mxu0 %v5962
  %v6174 = vpop.f32.mrb[0].mxu0
  %v6175 = vadd.f32 %v5986, %v6174
  %v6176 = vpop.f32.mrb[0].mxu0
  %v6177 = vpop.f32.mrb[0].mxu0
  %v6178 = vadd.f32 %v5986, %v6177
  %v6179 = vpop.f32.mrb[0].mxu0
  %6180 = vmatprep.mubr.bf16.mxu0 0
  %6181 = vmatmul.mubr.bf16.gmra.mrb[0].mxu0 %v5963
  %v6182 = vpop.f32.mrb[0].mxu0
  %v6183 = vadd.f32 %v5986, %v6182
  %v6184 = vpop.f32.mrb[0].mxu0
  %v6185 = vpop.f32.mrb[0].mxu0
  %v6186 = vadd.f32 %v5986, %v6185
  %v6187 = vpop.f32.mrb[0].mxu0
  %6188 = vmatprep.mubr.bf16.mxu0 0
  %6189 = vmatmul.mubr.bf16.gmra.mrb[0].mxu0 %v5964
  %v6190 = vpop.f32.mrb[0].mxu0
  %v6191 = vadd.f32 %v5986, %v6190
  %v6192 = vpop.f32.mrb[0].mxu0
  %v6193 = vpop.f32.mrb[0].mxu0
  %v6194 = vadd.f32 %v5986, %v6193
  %v6195 = vpop.f32.mrb[0].mxu0
  %6196 = vdwg.mxu0
  %vm6197 = vcmp.ge.f32.partialorder %v6071, 0.0
  %vm6198 = vcmp.ge.f32.partialorder %v6074, 0.0
  %vm6199 = vcmp.ge.f32.partialorder %v6079, 0.0
  %vm6200 = vcmp.ge.f32.partialorder %v6082, 0.0
  %vm6201 = vcmp.ge.f32.partialorder %v6087, 0.0
  %vm6202 = vcmp.ge.f32.partialorder %v6090, 0.0
  %vm6203 = vcmp.ge.f32.partialorder %v6095, 0.0
  %vm6204 = vcmp.ge.f32.partialorder %v6098, 0.0
  %vm6205 = vcmp.ge.f32.partialorder %v6103, 0.0
  %vm6206 = vcmp.ge.f32.partialorder %v6106, 0.0
  %vm6207 = vcmp.ge.f32.partialorder %v6111, 0.0
  %vm6208 = vcmp.ge.f32.partialorder %v6114, 0.0
  %vm6209 = vcmp.ge.f32.partialorder %v6119, 0.0
  %vm6210 = vcmp.ge.f32.partialorder %v6122, 0.0
  %vm6211 = vcmp.ge.f32.partialorder %v6127, 0.0
  %vm6212 = vcmp.ge.f32.partialorder %v6130, 0.0
  %vm6213 = vcmp.ge.f32.partialorder %v6135, 0.0
  %vm6214 = vcmp.ge.f32.partialorder %v6138, 0.0
  %vm6215 = vcmp.ge.f32.partialorder %v6143, 0.0
  %vm6216 = vcmp.ge.f32.partialorder %v6146, 0.0
  %vm6217 = vcmp.ge.f32.partialorder %v6151, 0.0
  %vm6218 = vcmp.ge.f32.partialorder %v6154, 0.0
  %vm6219 = vcmp.ge.f32.partialorder %v6159, 0.0
  %vm6220 = vcmp.ge.f32.partialorder %v6162, 0.0
  %vm6221 = vcmp.ge.f32.partialorder %v6167, 0.0
  %vm6222 = vcmp.ge.f32.partialorder %v6170, 0.0
  %vm6223 = vcmp.ge.f32.partialorder %v6175, 0.0
  %vm6224 = vcmp.ge.f32.partialorder %v6178, 0.0
  %vm6225 = vcmp.ge.f32.partialorder %v6183, 0.0
  %vm6226 = vcmp.ge.f32.partialorder %v6186, 0.0
  %vm6227 = vcmp.ge.f32.partialorder %v6191, 0.0
  %vm6228 = vcmp.ge.f32.partialorder %v6194, 0.0
  %v6229 = vmul.f32 %v6071, 0.01
  %v6230 = vmul.f32 %v6074, 0.01
  %v6231 = vmul.f32 %v6079, 0.01
  %v6232 = vmul.f32 %v6082, 0.01
  %v6233 = vmul.f32 %v6087, 0.01
  %v6234 = vmul.f32 %v6090, 0.01
  %v6235 = vmul.f32 %v6095, 0.01
  %v6236 = vmul.f32 %v6098, 0.01
  %v6237 = vmul.f32 %v6103, 0.01
  %v6238 = vmul.f32 %v6106, 0.01
  %v6239 = vmul.f32 %v6111, 0.01
  %v6240 = vmul.f32 %v6114, 0.01
  %v6241 = vmul.f32 %v6119, 0.01
  %v6242 = vmul.f32 %v6122, 0.01
  %v6243 = vmul.f32 %v6127, 0.01
  %v6244 = vmul.f32 %v6130, 0.01
  %v6245 = vmul.f32 %v6135, 0.01
  %v6246 = vmul.f32 %v6138, 0.01
  %v6247 = vmul.f32 %v6143, 0.01
  %v6248 = vmul.f32 %v6146, 0.01
  %v6249 = vmul.f32 %v6151, 0.01
  %v6250 = vmul.f32 %v6154, 0.01
  %v6251 = vmul.f32 %v6159, 0.01
  %v6252 = vmul.f32 %v6162, 0.01
  %v6253 = vmul.f32 %v6167, 0.01
  %v6254 = vmul.f32 %v6170, 0.01
  %v6255 = vmul.f32 %v6175, 0.01
  %v6256 = vmul.f32 %v6178, 0.01
  %v6257 = vmul.f32 %v6183, 0.01
  %v6258 = vmul.f32 %v6186, 0.01
  %v6259 = vmul.f32 %v6191, 0.01
  %v6260 = vmul.f32 %v6194, 0.01
  %v6261 = vsel %vm6197, %v6071, %v6229
  %v6262 = vsel %vm6198, %v6074, %v6230
  %v6263 = vsel %vm6199, %v6079, %v6231
  %v6264 = vsel %vm6200, %v6082, %v6232
  %v6265 = vsel %vm6201, %v6087, %v6233
  %v6266 = vsel %vm6202, %v6090, %v6234
  %v6267 = vsel %vm6203, %v6095, %v6235
  %v6268 = vsel %vm6204, %v6098, %v6236
  %v6269 = vsel %vm6205, %v6103, %v6237
  %v6270 = vsel %vm6206, %v6106, %v6238
  %v6271 = vsel %vm6207, %v6111, %v6239
  %v6272 = vsel %vm6208, %v6114, %v6240
  %v6273 = vsel %vm6209, %v6119, %v6241
  %v6274 = vsel %vm6210, %v6122, %v6242
  %v6275 = vsel %vm6211, %v6127, %v6243
  %v6276 = vsel %vm6212, %v6130, %v6244
  %v6277 = vsel %vm6213, %v6135, %v6245
  %v6278 = vsel %vm6214, %v6138, %v6246
  %v6279 = vsel %vm6215, %v6143, %v6247
  %v6280 = vsel %vm6216, %v6146, %v6248
  %v6281 = vsel %vm6217, %v6151, %v6249
  %v6282 = vsel %vm6218, %v6154, %v6250
  %v6283 = vsel %vm6219, %v6159, %v6251
  %v6284 = vsel %vm6220, %v6162, %v6252
  %v6285 = vsel %vm6221, %v6167, %v6253
  %v6286 = vsel %vm6222, %v6170, %v6254
  %v6287 = vsel %vm6223, %v6175, %v6255
  %v6288 = vsel %vm6224, %v6178, %v6256
  %v6289 = vsel %vm6225, %v6183, %v6257
  %v6290 = vsel %vm6226, %v6186, %v6258
  %v6291 = vsel %vm6227, %v6191, %v6259
  %v6292 = vsel %vm6228, %v6194, %v6260
  %v6293 = vpack.c.bf16 %v6262, %v6261
  %v6294 = vpack.c.bf16 %v6264, %v6263
  %v6295 = vpack.c.bf16 %v6266, %v6265
  %v6296 = vpack.c.bf16 %v6268, %v6267
  %v6297 = vpack.c.bf16 %v6270, %v6269
  %v6298 = vpack.c.bf16 %v6272, %v6271
  %v6299 = vpack.c.bf16 %v6274, %v6273
  %v6300 = vpack.c.bf16 %v6276, %v6275
  %v6301 = vpack.c.bf16 %v6278, %v6277
  %v6302 = vpack.c.bf16 %v6280, %v6279
  %v6303 = vpack.c.bf16 %v6282, %v6281
  %v6304 = vpack.c.bf16 %v6284, %v6283
  %v6305 = vpack.c.bf16 %v6286, %v6285
  %v6306 = vpack.c.bf16 %v6288, %v6287
  %v6307 = vpack.c.bf16 %v6290, %v6289
  %v6308 = vpack.c.bf16 %v6292, %v6291
  %v6309 = vld [vmem:[%s12] sm:$0xff]
  %v6310 = vld [vmem:[%s12 + $0x8] sm:$0xff]
  %v6311 = vld [vmem:[%s12 + $0x10] sm:$0xff]
  %v6312 = vld [vmem:[%s12 + $0x18] sm:$0xff]
  %v6313 = vld [vmem:[%s12 + $0x20] sm:$0xff]
  %v6314 = vld [vmem:[%s12 + $0x28] sm:$0xff]
  %v6315 = vld [vmem:[%s12 + $0x30] sm:$0xff]
  %v6316 = vld [vmem:[%s12 + $0x38] sm:$0xff]
  %v6317 = vld [vmem:[%s12 + $0x40] sm:$0xff]
  %v6318 = vld [vmem:[%s12 + $0x48] sm:$0xff]
  %v6319 = vld [vmem:[%s12 + $0x50] sm:$0xff]
  %v6320 = vld [vmem:[%s12 + $0x58] sm:$0xff]
  %v6321 = vld [vmem:[%s12 + $0x60] sm:$0xff]
  %v6322 = vld [vmem:[%s12 + $0x68] sm:$0xff]
  %v6323 = vld [vmem:[%s12 + $0x70] sm:$0xff]
  %v6324 = vld [vmem:[%s12 + $0x78] sm:$0xff]
  %v6325 = vld [vmem:[%s13] sm:$0x3]
  %v6327 = vlaneseq
  %v6328 = vshrl.u32 %v6327, 7
  %v6329 = vsub.s32 0, %v6328
  %v6330 = vrot.slane %v6325, %v6329
  %v6331 = vlaneseq
  %v6332 = vshrl.u32 %v6331, 7
  %v6333 = vsub.s32 1, %v6332
  %v6334 = vrot.slane %v6325, %v6333
  %v6353 = vunpack.c.l.b16 %v6309
  %v6354 = vunpack.c.h.b16 %v6309
  %v6355 = vunpack.c.l.b16 %v6310
  %v6356 = vunpack.c.h.b16 %v6310
  %v6357 = vunpack.c.l.b16 %v6311
  %v6358 = vunpack.c.h.b16 %v6311
  %v6359 = vunpack.c.l.b16 %v6312
  %v6360 = vunpack.c.h.b16 %v6312
  %v6361 = vunpack.c.l.b16 %v6313
  %v6362 = vunpack.c.h.b16 %v6313
  %v6363 = vunpack.c.l.b16 %v6314
  %v6364 = vunpack.c.h.b16 %v6314
  %v6365 = vunpack.c.l.b16 %v6315
  %v6366 = vunpack.c.h.b16 %v6315
  %v6367 = vunpack.c.l.b16 %v6316
  %v6368 = vunpack.c.h.b16 %v6316
  %v6369 = vunpack.c.l.b16 %v6317
  %v6370 = vunpack.c.h.b16 %v6317
  %v6371 = vunpack.c.l.b16 %v6318
  %v6372 = vunpack.c.h.b16 %v6318
  %v6373 = vunpack.c.l.b16 %v6319
  %v6374 = vunpack.c.h.b16 %v6319
  %v6375 = vunpack.c.l.b16 %v6320
  %v6376 = vunpack.c.h.b16 %v6320
  %v6377 = vunpack.c.l.b16 %v6321
  %v6378 = vunpack.c.h.b16 %v6321
  %v6379 = vunpack.c.l.b16 %v6322
  %v6380 = vunpack.c.h.b16 %v6322
  %v6381 = vunpack.c.l.b16 %v6323
  %v6382 = vunpack.c.h.b16 %v6323
  %v6383 = vunpack.c.l.b16 %v6324
  %v6384 = vunpack.c.h.b16 %v6324
  %v6385 = vpack.c.b16 %v6355, %v6353
  %v6386 = vpack.c.b16 %v6356, %v6354
  %v6387 = vpack.c.b16 %v6359, %v6357
  %v6388 = vpack.c.b16 %v6360, %v6358
  %v6389 = vpack.c.b16 %v6363, %v6361
  %v6390 = vpack.c.b16 %v6364, %v6362
  %v6391 = vpack.c.b16 %v6367, %v6365
  %v6392 = vpack.c.b16 %v6368, %v6366
  %v6393 = vpack.c.b16 %v6371, %v6369
  %v6394 = vpack.c.b16 %v6372, %v6370
  %v6395 = vpack.c.b16 %v6375, %v6373
  %v6396 = vpack.c.b16 %v6376, %v6374
  %v6397 = vpack.c.b16 %v6379, %v6377
  %v6398 = vpack.c.b16 %v6380, %v6378
  %v6399 = vpack.c.b16 %v6383, %v6381
  %v6400 = vpack.c.b16 %v6384, %v6382
  %6417 = vmatprep.subr.bf16.mxu0 %v6386
  %6418 = vmatpush1.bf16.msra.mxu0 %v6385
  %6419 = vmatprep.subr.bf16.mxu0 %v6388
  %6420 = vmatpush1.bf16.msra.mxu0 %v6387
  %6421 = vmatprep.subr.bf16.mxu0 %v6390
  %6422 = vmatpush1.bf16.msra.mxu0 %v6389
  %6423 = vmatprep.subr.bf16.mxu0 %v6392
  %6424 = vmatpush1.bf16.msra.mxu0 %v6391
  %6425 = vmatprep.subr.bf16.mxu0 %v6394
  %6426 = vmatpush1.bf16.msra.mxu0 %v6393
  %6427 = vmatprep.subr.bf16.mxu0 %v6396
  %6428 = vmatpush1.bf16.msra.mxu0 %v6395
  %6429 = vmatprep.subr.bf16.mxu0 %v6398
  %6430 = vmatpush1.bf16.msra.mxu0 %v6397
  %6431 = vmatprep.subr.bf16.mxu0 %v6400
  %6432 = vmatpush1.bf16.msra.mxu0 %v6399
  %6433 = vmatprep.subr.bf16.mxu0 0
  %6434 = vmatpush1.bf16.msra.mxu0 0
  %6435 = vmatprep.subr.bf16.mxu0 0
  %6436 = vmatpush1.bf16.msra.mxu0 0
  %6437 = vmatprep.subr.bf16.mxu0 0
  %6438 = vmatpush1.bf16.msra.mxu0 0
  %6439 = vmatprep.subr.bf16.mxu0 0
  %6440 = vmatpush1.bf16.msra.mxu0 0
  %6441 = vmatprep.subr.bf16.mxu0 0
  %6442 = vmatpush1.bf16.msra.mxu0 0
  %6443 = vmatprep.subr.bf16.mxu0 0
  %6444 = vmatpush1.bf16.msra.mxu0 0
  %6445 = vmatprep.subr.bf16.mxu0 0
  %6446 = vmatpush1.bf16.msra.mxu0 0
  %6447 = vmatprep.subr.bf16.mxu0 0
  %6448 = vmatpush1.bf16.msra.mxu0 0
  %6449 = vmatprep.mubr.bf16.mxu0 0
  %6450 = vmatmul.mubr.bf16.gmra.mrb[0].mxu0 %v6293
  %v6451 = vpop.f32.mrb[0].mxu0
  %v6452 = vadd.f32 %v6330, %v6451
  %v6453 = vpop.f32.mrb[0].mxu0
  %v6454 = vadd.f32 %v6334, %v6453
  %v6455 = vpop.f32.mrb[0].mxu0
  %v6456 = vadd.f32 %v6330, %v6455
  %v6457 = vpop.f32.mrb[0].mxu0
  %v6458 = vadd.f32 %v6334, %v6457
  %6459 = vmatprep.mubr.bf16.mxu0 0
  %6460 = vmatmul.mubr.bf16.gmra.mrb[0].mxu0 %v6294
  %v6461 = vpop.f32.mrb[0].mxu0
  %v6462 = vadd.f32 %v6330, %v6461
  %v6463 = vpop.f32.mrb[0].mxu0
  %v6464 = vadd.f32 %v6334, %v6463
  %v6465 = vpop.f32.mrb[0].mxu0
  %v6466 = vadd.f32 %v6330, %v6465
  %v6467 = vpop.f32.mrb[0].mxu0
  %v6468 = vadd.f32 %v6334, %v6467
  %6469 = vmatprep.mubr.bf16.mxu0 0
  %6470 = vmatmul.mubr.bf16.gmra.mrb[0].mxu0 %v6295
  %v6471 = vpop.f32.mrb[0].mxu0
  %v6472 = vadd.f32 %v6330, %v6471
  %v6473 = vpop.f32.mrb[0].mxu0
  %v6474 = vadd.f32 %v6334, %v6473
  %v6475 = vpop.f32.mrb[0].mxu0
  %v6476 = vadd.f32 %v6330, %v6475
  %v6477 = vpop.f32.mrb[0].mxu0
  %v6478 = vadd.f32 %v6334, %v6477
  %6479 = vmatprep.mubr.bf16.mxu0 0
  %6480 = vmatmul.mubr.bf16.gmra.mrb[0].mxu0 %v6296
  %v6481 = vpop.f32.mrb[0].mxu0
  %v6482 = vadd.f32 %v6330, %v6481
  %v6483 = vpop.f32.mrb[0].mxu0
  %v6484 = vadd.f32 %v6334, %v6483
  %v6485 = vpop.f32.mrb[0].mxu0
  %v6486 = vadd.f32 %v6330, %v6485
  %v6487 = vpop.f32.mrb[0].mxu0
  %v6488 = vadd.f32 %v6334, %v6487
  %6489 = vmatprep.mubr.bf16.mxu0 0
  %6490 = vmatmul.mubr.bf16.gmra.mrb[0].mxu0 %v6297
  %v6491 = vpop.f32.mrb[0].mxu0
  %v6492 = vadd.f32 %v6330, %v6491
  %v6493 = vpop.f32.mrb[0].mxu0
  %v6494 = vadd.f32 %v6334, %v6493
  %v6495 = vpop.f32.mrb[0].mxu0
  %v6496 = vadd.f32 %v6330, %v6495
  %v6497 = vpop.f32.mrb[0].mxu0
  %v6498 = vadd.f32 %v6334, %v6497
  %6499 = vmatprep.mubr.bf16.mxu0 0
  %6500 = vmatmul.mubr.bf16.gmra.mrb[0].mxu0 %v6298
  %v6501 = vpop.f32.mrb[0].mxu0
  %v6502 = vadd.f32 %v6330, %v6501
  %v6503 = vpop.f32.mrb[0].mxu0
  %v6504 = vadd.f32 %v6334, %v6503
  %v6505 = vpop.f32.mrb[0].mxu0
  %v6506 = vadd.f32 %v6330, %v6505
  %v6507 = vpop.f32.mrb[0].mxu0
  %v6508 = vadd.f32 %v6334, %v6507
  %6509 = vmatprep.mubr.bf16.mxu0 0
  %6510 = vmatmul.mubr.bf16.gmra.mrb[0].mxu0 %v6299
  %v6511 = vpop.f32.mrb[0].mxu0
  %v6512 = vadd.f32 %v6330, %v6511
  %v6513 = vpop.f32.mrb[0].mxu0
  %v6514 = vadd.f32 %v6334, %v6513
  %v6515 = vpop.f32.mrb[0].mxu0
  %v6516 = vadd.f32 %v6330, %v6515
  %v6517 = vpop.f32.mrb[0].mxu0
  %v6518 = vadd.f32 %v6334, %v6517
  %6519 = vmatprep.mubr.bf16.mxu0 0
  %6520 = vmatmul.mubr.bf16.gmra.mrb[0].mxu0 %v6300
  %v6521 = vpop.f32.mrb[0].mxu0
  %v6522 = vadd.f32 %v6330, %v6521
  %v6523 = vpop.f32.mrb[0].mxu0
  %v6524 = vadd.f32 %v6334, %v6523
  %v6525 = vpop.f32.mrb[0].mxu0
  %v6526 = vadd.f32 %v6330, %v6525
  %v6527 = vpop.f32.mrb[0].mxu0
  %v6528 = vadd.f32 %v6334, %v6527
  %6529 = vmatprep.mubr.bf16.mxu0 0
  %6530 = vmatmul.mubr.bf16.gmra.mrb[0].mxu0 %v6301
  %v6531 = vpop.f32.mrb[0].mxu0
  %v6532 = vadd.f32 %v6330, %v6531
  %v6533 = vpop.f32.mrb[0].mxu0
  %v6534 = vadd.f32 %v6334, %v6533
  %v6535 = vpop.f32.mrb[0].mxu0
  %v6536 = vadd.f32 %v6330, %v6535
  %v6537 = vpop.f32.mrb[0].mxu0
  %v6538 = vadd.f32 %v6334, %v6537
  %6539 = vmatprep.mubr.bf16.mxu0 0
  %6540 = vmatmul.mubr.bf16.gmra.mrb[0].mxu0 %v6302
  %v6541 = vpop.f32.mrb[0].mxu0
  %v6542 = vadd.f32 %v6330, %v6541
  %v6543 = vpop.f32.mrb[0].mxu0
  %v6544 = vadd.f32 %v6334, %v6543
  %v6545 = vpop.f32.mrb[0].mxu0
  %v6546 = vadd.f32 %v6330, %v6545
  %v6547 = vpop.f32.mrb[0].mxu0
  %v6548 = vadd.f32 %v6334, %v6547
  %6549 = vmatprep.mubr.bf16.mxu0 0
  %6550 = vmatmul.mubr.bf16.gmra.mrb[0].mxu0 %v6303
  %v6551 = vpop.f32.mrb[0].mxu0
  %v6552 = vadd.f32 %v6330, %v6551
  %v6553 = vpop.f32.mrb[0].mxu0
  %v6554 = vadd.f32 %v6334, %v6553
  %v6555 = vpop.f32.mrb[0].mxu0
  %v6556 = vadd.f32 %v6330, %v6555
  %v6557 = vpop.f32.mrb[0].mxu0
  %v6558 = vadd.f32 %v6334, %v6557
  %6559 = vmatprep.mubr.bf16.mxu0 0
  %6560 = vmatmul.mubr.bf16.gmra.mrb[0].mxu0 %v6304
  %v6561 = vpop.f32.mrb[0].mxu0
  %v6562 = vadd.f32 %v6330, %v6561
  %v6563 = vpop.f32.mrb[0].mxu0
  %v6564 = vadd.f32 %v6334, %v6563
  %v6565 = vpop.f32.mrb[0].mxu0
  %v6566 = vadd.f32 %v6330, %v6565
  %v6567 = vpop.f32.mrb[0].mxu0
  %v6568 = vadd.f32 %v6334, %v6567
  %6569 = vmatprep.mubr.bf16.mxu0 0
  %6570 = vmatmul.mubr.bf16.gmra.mrb[0].mxu0 %v6305
  %v6571 = vpop.f32.mrb[0].mxu0
  %v6572 = vadd.f32 %v6330, %v6571
  %v6573 = vpop.f32.mrb[0].mxu0
  %v6574 = vadd.f32 %v6334, %v6573
  %v6575 = vpop.f32.mrb[0].mxu0
  %v6576 = vadd.f32 %v6330, %v6575
  %v6577 = vpop.f32.mrb[0].mxu0
  %v6578 = vadd.f32 %v6334, %v6577
  %6579 = vmatprep.mubr.bf16.mxu0 0
  %6580 = vmatmul.mubr.bf16.gmra.mrb[0].mxu0 %v6306
  %v6581 = vpop.f32.mrb[0].mxu0
  %v6582 = vadd.f32 %v6330, %v6581
  %v6583 = vpop.f32.mrb[0].mxu0
  %v6584 = vadd.f32 %v6334, %v6583
  %v6585 = vpop.f32.mrb[0].mxu0
  %v6586 = vadd.f32 %v6330, %v6585
  %v6587 = vpop.f32.mrb[0].mxu0
  %v6588 = vadd.f32 %v6334, %v6587
  %6589 = vmatprep.mubr.bf16.mxu0 0
  %6590 = vmatmul.mubr.bf16.gmra.mrb[0].mxu0 %v6307
  %v6591 = vpop.f32.mrb[0].mxu0
  %v6592 = vadd.f32 %v6330, %v6591
  %v6593 = vpop.f32.mrb[0].mxu0
  %v6594 = vadd.f32 %v6334, %v6593
  %v6595 = vpop.f32.mrb[0].mxu0
  %v6596 = vadd.f32 %v6330, %v6595
  %v6597 = vpop.f32.mrb[0].mxu0
  %v6598 = vadd.f32 %v6334, %v6597
  %6599 = vmatprep.mubr.bf16.mxu0 0
  %6600 = vmatmul.mubr.bf16.gmra.mrb[0].mxu0 %v6308
  %v6601 = vpop.f32.mrb[0].mxu0
  %v6602 = vadd.f32 %v6330, %v6601
  %v6603 = vpop.f32.mrb[0].mxu0
  %v6604 = vadd.f32 %v6334, %v6603
  %v6605 = vpop.f32.mrb[0].mxu0
  %v6606 = vadd.f32 %v6330, %v6605
  %v6607 = vpop.f32.mrb[0].mxu0
  %v6608 = vadd.f32 %v6334, %v6607
  %6609 = vdwg.mxu0
  %vm6610 = vcmp.ge.f32.partialorder %v6452, 0.0
  %vm6611 = vcmp.ge.f32.partialorder %v6454, 0.0
  %vm6612 = vcmp.ge.f32.partialorder %v6456, 0.0
  %vm6613 = vcmp.ge.f32.partialorder %v6458, 0.0
  %vm6614 = vcmp.ge.f32.partialorder %v6462, 0.0
  %vm6615 = vcmp.ge.f32.partialorder %v6464, 0.0
  %vm6616 = vcmp.ge.f32.partialorder %v6466, 0.0
  %vm6617 = vcmp.ge.f32.partialorder %v6468, 0.0
  %vm6618 = vcmp.ge.f32.partialorder %v6472, 0.0
  %vm6619 = vcmp.ge.f32.partialorder %v6474, 0.0
  %vm6620 = vcmp.ge.f32.partialorder %v6476, 0.0
  %vm6621 = vcmp.ge.f32.partialorder %v6478, 0.0
  %vm6622 = vcmp.ge.f32.partialorder %v6482, 0.0
  %vm6623 = vcmp.ge.f32.partialorder %v6484, 0.0
  %vm6624 = vcmp.ge.f32.partialorder %v6486, 0.0
  %vm6625 = vcmp.ge.f32.partialorder %v6488, 0.0
  %vm6626 = vcmp.ge.f32.partialorder %v6492, 0.0
  %vm6627 = vcmp.ge.f32.partialorder %v6494, 0.0
  %vm6628 = vcmp.ge.f32.partialorder %v6496, 0.0
  %vm6629 = vcmp.ge.f32.partialorder %v6498, 0.0
  %vm6630 = vcmp.ge.f32.partialorder %v6502, 0.0
  %vm6631 = vcmp.ge.f32.partialorder %v6504, 0.0
  %vm6632 = vcmp.ge.f32.partialorder %v6506, 0.0
  %vm6633 = vcmp.ge.f32.partialorder %v6508, 0.0
  %vm6634 = vcmp.ge.f32.partialorder %v6512, 0.0
  %vm6635 = vcmp.ge.f32.partialorder %v6514, 0.0
  %vm6636 = vcmp.ge.f32.partialorder %v6516, 0.0
  %vm6637 = vcmp.ge.f32.partialorder %v6518, 0.0
  %vm6638 = vcmp.ge.f32.partialorder %v6522, 0.0
  %vm6639 = vcmp.ge.f32.partialorder %v6524, 0.0
  %vm6640 = vcmp.ge.f32.partialorder %v6526, 0.0
  %vm6641 = vcmp.ge.f32.partialorder %v6528, 0.0
  %vm6642 = vcmp.ge.f32.partialorder %v6532, 0.0
  %vm6643 = vcmp.ge.f32.partialorder %v6534, 0.0
  %vm6644 = vcmp.ge.f32.partialorder %v6536, 0.0
  %vm6645 = vcmp.ge.f32.partialorder %v6538, 0.0
  %vm6646 = vcmp.ge.f32.partialorder %v6542, 0.0
  %vm6647 = vcmp.ge.f32.partialorder %v6544, 0.0
  %vm6648 = vcmp.ge.f32.partialorder %v6546, 0.0
  %vm6649 = vcmp.ge.f32.partialorder %v6548, 0.0
  %vm6650 = vcmp.ge.f32.partialorder %v6552, 0.0
  %vm6651 = vcmp.ge.f32.partialorder %v6554, 0.0
  %vm6652 = vcmp.ge.f32.partialorder %v6556, 0.0
  %vm6653 = vcmp.ge.f32.partialorder %v6558, 0.0
  %vm6654 = vcmp.ge.f32.partialorder %v6562, 0.0
  %vm6655 = vcmp.ge.f32.partialorder %v6564, 0.0
  %vm6656 = vcmp.ge.f32.partialorder %v6566, 0.0
  %vm6657 = vcmp.ge.f32.partialorder %v6568, 0.0
  %vm6658 = vcmp.ge.f32.partialorder %v6572, 0.0
  %vm6659 = vcmp.ge.f32.partialorder %v6574, 0.0
  %vm6660 = vcmp.ge.f32.partialorder %v6576, 0.0
  %vm6661 = vcmp.ge.f32.partialorder %v6578, 0.0
  %vm6662 = vcmp.ge.f32.partialorder %v6582, 0.0
  %vm6663 = vcmp.ge.f32.partialorder %v6584, 0.0
  %vm6664 = vcmp.ge.f32.partialorder %v6586, 0.0
  %vm6665 = vcmp.ge.f32.partialorder %v6588, 0.0
  %vm6666 = vcmp.ge.f32.partialorder %v6592, 0.0
  %vm6667 = vcmp.ge.f32.partialorder %v6594, 0.0
  %vm6668 = vcmp.ge.f32.partialorder %v6596, 0.0
  %vm6669 = vcmp.ge.f32.partialorder %v6598, 0.0
  %vm6670 = vcmp.ge.f32.partialorder %v6602, 0.0
  %vm6671 = vcmp.ge.f32.partialorder %v6604, 0.0
  %vm6672 = vcmp.ge.f32.partialorder %v6606, 0.0
  %vm6673 = vcmp.ge.f32.partialorder %v6608, 0.0
  %v6674 = vmul.f32 %v6452, 0.01
  %v6675 = vmul.f32 %v6454, 0.01
  %v6676 = vmul.f32 %v6456, 0.01
  %v6677 = vmul.f32 %v6458, 0.01
  %v6678 = vmul.f32 %v6462, 0.01
  %v6679 = vmul.f32 %v6464, 0.01
  %v6680 = vmul.f32 %v6466, 0.01
  %v6681 = vmul.f32 %v6468, 0.01
  %v6682 = vmul.f32 %v6472, 0.01
  %v6683 = vmul.f32 %v6474, 0.01
  %v6684 = vmul.f32 %v6476, 0.01
  %v6685 = vmul.f32 %v6478, 0.01
  %v6686 = vmul.f32 %v6482, 0.01
  %v6687 = vmul.f32 %v6484, 0.01
  %v6688 = vmul.f32 %v6486, 0.01
  %v6689 = vmul.f32 %v6488, 0.01
  %v6690 = vmul.f32 %v6492, 0.01
  %v6691 = vmul.f32 %v6494, 0.01
  %v6692 = vmul.f32 %v6496, 0.01
  %v6693 = vmul.f32 %v6498, 0.01
  %v6694 = vmul.f32 %v6502, 0.01
  %v6695 = vmul.f32 %v6504, 0.01
  %v6696 = vmul.f32 %v6506, 0.01
  %v6697 = vmul.f32 %v6508, 0.01
  %v6698 = vmul.f32 %v6512, 0.01
  %v6699 = vmul.f32 %v6514, 0.01
  %v6700 = vmul.f32 %v6516, 0.01
  %v6701 = vmul.f32 %v6518, 0.01
  %v6702 = vmul.f32 %v6522, 0.01
  %v6703 = vmul.f32 %v6524, 0.01
  %v6704 = vmul.f32 %v6526, 0.01
  %v6705 = vmul.f32 %v6528, 0.01
  %v6706 = vmul.f32 %v6532, 0.01
  %v6707 = vmul.f32 %v6534, 0.01
  %v6708 = vmul.f32 %v6536, 0.01
  %v6709 = vmul.f32 %v6538, 0.01
  %v6710 = vmul.f32 %v6542, 0.01
  %v6711 = vmul.f32 %v6544, 0.01
  %v6712 = vmul.f32 %v6546, 0.01
  %v6713 = vmul.f32 %v6548, 0.01
  %v6714 = vmul.f32 %v6552, 0.01
  %v6715 = vmul.f32 %v6554, 0.01
  %v6716 = vmul.f32 %v6556, 0.01
  %v6717 = vmul.f32 %v6558, 0.01
  %v6718 = vmul.f32 %v6562, 0.01
  %v6719 = vmul.f32 %v6564, 0.01
  %v6720 = vmul.f32 %v6566, 0.01
  %v6721 = vmul.f32 %v6568, 0.01
  %v6722 = vmul.f32 %v6572, 0.01
  %v6723 = vmul.f32 %v6574, 0.01
  %v6724 = vmul.f32 %v6576, 0.01
  %v6725 = vmul.f32 %v6578, 0.01
  %v6726 = vmul.f32 %v6582, 0.01
  %v6727 = vmul.f32 %v6584, 0.01
  %v6728 = vmul.f32 %v6586, 0.01
  %v6729 = vmul.f32 %v6588, 0.01
  %v6730 = vmul.f32 %v6592, 0.01
  %v6731 = vmul.f32 %v6594, 0.01
  %v6732 = vmul.f32 %v6596, 0.01
  %v6733 = vmul.f32 %v6598, 0.01
  %v6734 = vmul.f32 %v6602, 0.01
  %v6735 = vmul.f32 %v6604, 0.01
  %v6736 = vmul.f32 %v6606, 0.01
  %v6737 = vmul.f32 %v6608, 0.01
  %v6738 = vsel %vm6610, %v6452, %v6674
  %v6739 = vsel %vm6611, %v6454, %v6675
  %v6740 = vsel %vm6612, %v6456, %v6676
  %v6741 = vsel %vm6613, %v6458, %v6677
  %v6742 = vsel %vm6614, %v6462, %v6678
  %v6743 = vsel %vm6615, %v6464, %v6679
  %v6744 = vsel %vm6616, %v6466, %v6680
  %v6745 = vsel %vm6617, %v6468, %v6681
  %v6746 = vsel %vm6618, %v6472, %v6682
  %v6747 = vsel %vm6619, %v6474, %v6683
  %v6748 = vsel %vm6620, %v6476, %v6684
  %v6749 = vsel %vm6621, %v6478, %v6685
  %v6750 = vsel %vm6622, %v6482, %v6686
  %v6751 = vsel %vm6623, %v6484, %v6687
  %v6752 = vsel %vm6624, %v6486, %v6688
  %v6753 = vsel %vm6625, %v6488, %v6689
  %v6754 = vsel %vm6626, %v6492, %v6690
  %v6755 = vsel %vm6627, %v6494, %v6691
  %v6756 = vsel %vm6628, %v6496, %v6692
  %v6757 = vsel %vm6629, %v6498, %v6693
  %v6758 = vsel %vm6630, %v6502, %v6694
  %v6759 = vsel %vm6631, %v6504, %v6695
  %v6760 = vsel %vm6632, %v6506, %v6696
  %v6761 = vsel %vm6633, %v6508, %v6697
  %v6762 = vsel %vm6634, %v6512, %v6698
  %v6763 = vsel %vm6635, %v6514, %v6699
  %v6764 = vsel %vm6636, %v6516, %v6700
  %v6765 = vsel %vm6637, %v6518, %v6701
  %v6766 = vsel %vm6638, %v6522, %v6702
  %v6767 = vsel %vm6639, %v6524, %v6703
  %v6768 = vsel %vm6640, %v6526, %v6704
  %v6769 = vsel %vm6641, %v6528, %v6705
  %v6770 = vsel %vm6642, %v6532, %v6706
  %v6771 = vsel %vm6643, %v6534, %v6707
  %v6772 = vsel %vm6644, %v6536, %v6708
  %v6773 = vsel %vm6645, %v6538, %v6709
  %v6774 = vsel %vm6646, %v6542, %v6710
  %v6775 = vsel %vm6647, %v6544, %v6711
  %v6776 = vsel %vm6648, %v6546, %v6712
  %v6777 = vsel %vm6649, %v6548, %v6713
  %v6778 = vsel %vm6650, %v6552, %v6714
  %v6779 = vsel %vm6651, %v6554, %v6715
  %v6780 = vsel %vm6652, %v6556, %v6716
  %v6781 = vsel %vm6653, %v6558, %v6717
  %v6782 = vsel %vm6654, %v6562, %v6718
  %v6783 = vsel %vm6655, %v6564, %v6719
  %v6784 = vsel %vm6656, %v6566, %v6720
  %v6785 = vsel %vm6657, %v6568, %v6721
  %v6786 = vsel %vm6658, %v6572, %v6722
  %v6787 = vsel %vm6659, %v6574, %v6723
  %v6788 = vsel %vm6660, %v6576, %v6724
  %v6789 = vsel %vm6661, %v6578, %v6725
  %v6790 = vsel %vm6662, %v6582, %v6726
  %v6791 = vsel %vm6663, %v6584, %v6727
  %v6792 = vsel %vm6664, %v6586, %v6728
  %v6793 = vsel %vm6665, %v6588, %v6729
  %v6794 = vsel %vm6666, %v6592, %v6730
  %v6795 = vsel %vm6667, %v6594, %v6731
  %v6796 = vsel %vm6668, %v6596, %v6732
  %v6797 = vsel %vm6669, %v6598, %v6733
  %v6798 = vsel %vm6670, %v6602, %v6734
  %v6799 = vsel %vm6671, %v6604, %v6735
  %v6800 = vsel %vm6672, %v6606, %v6736
  %v6801 = vsel %vm6673, %v6608, %v6737
  %v6802 = vpack.c.bf16 %v6740, %v6738
  %v6803 = vpack.c.bf16 %v6741, %v6739
  %v6804 = vpack.c.bf16 %v6744, %v6742
  %v6805 = vpack.c.bf16 %v6745, %v6743
  %v6806 = vpack.c.bf16 %v6748, %v6746
  %v6807 = vpack.c.bf16 %v6749, %v6747
  %v6808 = vpack.c.bf16 %v6752, %v6750
  %v6809 = vpack.c.bf16 %v6753, %v6751
  %v6810 = vpack.c.bf16 %v6756, %v6754
  %v6811 = vpack.c.bf16 %v6757, %v6755
  %v6812 = vpack.c.bf16 %v6760, %v6758
  %v6813 = vpack.c.bf16 %v6761, %v6759
  %v6814 = vpack.c.bf16 %v6764, %v6762
  %v6815 = vpack.c.bf16 %v6765, %v6763
  %v6816 = vpack.c.bf16 %v6768, %v6766
  %v6817 = vpack.c.bf16 %v6769, %v6767
  %v6818 = vpack.c.bf16 %v6772, %v6770
  %v6819 = vpack.c.bf16 %v6773, %v6771
  %v6820 = vpack.c.bf16 %v6776, %v6774
  %v6821 = vpack.c.bf16 %v6777, %v6775
  %v6822 = vpack.c.bf16 %v6780, %v6778
  %v6823 = vpack.c.bf16 %v6781, %v6779
  %v6824 = vpack.c.bf16 %v6784, %v6782
  %v6825 = vpack.c.bf16 %v6785, %v6783
  %v6826 = vpack.c.bf16 %v6788, %v6786
  %v6827 = vpack.c.bf16 %v6789, %v6787
  %v6828 = vpack.c.bf16 %v6792, %v6790
  %v6829 = vpack.c.bf16 %v6793, %v6791
  %v6830 = vpack.c.bf16 %v6796, %v6794
  %v6831 = vpack.c.bf16 %v6797, %v6795
  %v6832 = vpack.c.bf16 %v6800, %v6798
  %v6833 = vpack.c.bf16 %v6801, %v6799
  %v6834 = vld [vmem:[%s14] sm:$0xff]
  %v6835 = vld [vmem:[%s14 + $0x8] sm:$0xff]
  %v6836 = vld [vmem:[%s14 + $0x10] sm:$0xff]
  %v6837 = vld [vmem:[%s14 + $0x18] sm:$0xff]
  %v6838 = vld [vmem:[%s14 + $0x20] sm:$0xff]
  %v6839 = vld [vmem:[%s14 + $0x28] sm:$0xff]
  %v6840 = vld [vmem:[%s14 + $0x30] sm:$0xff]
  %v6841 = vld [vmem:[%s14 + $0x38] sm:$0xff]
  %v6842 = vld [vmem:[%s14 + $0x40] sm:$0xff]
  %v6843 = vld [vmem:[%s14 + $0x48] sm:$0xff]
  %v6844 = vld [vmem:[%s14 + $0x50] sm:$0xff]
  %v6845 = vld [vmem:[%s14 + $0x58] sm:$0xff]
  %v6846 = vld [vmem:[%s14 + $0x60] sm:$0xff]
  %v6847 = vld [vmem:[%s14 + $0x68] sm:$0xff]
  %v6848 = vld [vmem:[%s14 + $0x70] sm:$0xff]
  %v6849 = vld [vmem:[%s14 + $0x78] sm:$0xff]
  %v6850 = vld [vmem:[%s14 + $0x80] sm:$0xff]
  %v6851 = vld [vmem:[%s14 + $0x88] sm:$0xff]
  %v6852 = vld [vmem:[%s14 + $0x90] sm:$0xff]
  %v6853 = vld [vmem:[%s14 + $0x98] sm:$0xff]
  %v6854 = vld [vmem:[%s14 + $0xa0] sm:$0xff]
  %v6855 = vld [vmem:[%s14 + $0xa8] sm:$0xff]
  %v6856 = vld [vmem:[%s14 + $0xb0] sm:$0xff]
  %v6857 = vld [vmem:[%s14 + $0xb8] sm:$0xff]
  %v6858 = vld [vmem:[%s14 + $0xc0] sm:$0xff]
  %v6859 = vld [vmem:[%s14 + $0xc8] sm:$0xff]
  %v6860 = vld [vmem:[%s14 + $0xd0] sm:$0xff]
  %v6861 = vld [vmem:[%s14 + $0xd8] sm:$0xff]
  %v6862 = vld [vmem:[%s14 + $0xe0] sm:$0xff]
  %v6863 = vld [vmem:[%s14 + $0xe8] sm:$0xff]
  %v6864 = vld [vmem:[%s14 + $0xf0] sm:$0xff]
  %v6865 = vld [vmem:[%s14 + $0xf8] sm:$0xff]
  %v6866 = vld [vmem:[%s14 + $0x100] sm:$0xff]
  %v6867 = vld [vmem:[%s14 + $0x108] sm:$0xff]
  %v6868 = vld [vmem:[%s14 + $0x110] sm:$0xff]
  %v6869 = vld [vmem:[%s14 + $0x118] sm:$0xff]
  %v6870 = vld [vmem:[%s14 + $0x120] sm:$0xff]
  %v6871 = vld [vmem:[%s14 + $0x128] sm:$0xff]
  %v6872 = vld [vmem:[%s14 + $0x130] sm:$0xff]
  %v6873 = vld [vmem:[%s14 + $0x138] sm:$0xff]
  %v6874 = vld [vmem:[%s14 + $0x140] sm:$0xff]
  %v6875 = vld [vmem:[%s14 + $0x148] sm:$0xff]
  %v6876 = vld [vmem:[%s14 + $0x150] sm:$0xff]
  %v6877 = vld [vmem:[%s14 + $0x158] sm:$0xff]
  %v6878 = vld [vmem:[%s14 + $0x160] sm:$0xff]
  %v6879 = vld [vmem:[%s14 + $0x168] sm:$0xff]
  %v6880 = vld [vmem:[%s14 + $0x170] sm:$0xff]
  %v6881 = vld [vmem:[%s14 + $0x178] sm:$0xff]
  %v6882 = vld [vmem:[%s14 + $0x180] sm:$0xff]
  %v6883 = vld [vmem:[%s14 + $0x188] sm:$0xff]
  %v6884 = vld [vmem:[%s15] sm:$0xf]
  %v6886 = vlaneseq
  %v6887 = vshrl.u32 %v6886, 7
  %v6888 = vsub.s32 0, %v6887
  %v6889 = vrot.slane %v6884, %v6888
  %v6890 = vlaneseq
  %v6891 = vshrl.u32 %v6890, 7
  %v6892 = vsub.s32 1, %v6891
  %v6893 = vrot.slane %v6884, %v6892
  %v6894 = vlaneseq
  %v6895 = vshrl.u32 %v6894, 7
  %v6896 = vsub.s32 2, %v6895
  %v6897 = vrot.slane %v6884, %v6896
  %v6898 = vlaneseq
  %v6899 = vshrl.u32 %v6898, 7
  %v6900 = vsub.s32 3, %v6899
  %v6901 = vrot.slane %v6884, %v6900
  %v6956 = vunpack.c.l.b16 %v6834
  %v6957 = vunpack.c.h.b16 %v6834
  %v6958 = vunpack.c.l.b16 %v6835
  %v6959 = vunpack.c.h.b16 %v6835
  %v6960 = vunpack.c.l.b16 %v6836
  %v6961 = vunpack.c.h.b16 %v6836
  %v6962 = vunpack.c.l.b16 %v6837
  %v6963 = vunpack.c.h.b16 %v6837
  %v6964 = vunpack.c.l.b16 %v6838
  %v6965 = vunpack.c.h.b16 %v6838
  %v6966 = vunpack.c.l.b16 %v6839
  %v6967 = vunpack.c.h.b16 %v6839
  %v6968 = vunpack.c.l.b16 %v6840
  %v6969 = vunpack.c.h.b16 %v6840
  %v6970 = vunpack.c.l.b16 %v6841
  %v6971 = vunpack.c.h.b16 %v6841
  %v6972 = vunpack.c.l.b16 %v6842
  %v6973 = vunpack.c.h.b16 %v6842
  %v6974 = vunpack.c.l.b16 %v6843
  %v6975 = vunpack.c.h.b16 %v6843
  %v6976 = vunpack.c.l.b16 %v6844
  %v6977 = vunpack.c.h.b16 %v6844
  %v6978 = vunpack.c.l.b16 %v6845
  %v6979 = vunpack.c.h.b16 %v6845
  %v6980 = vunpack.c.l.b16 %v6846
  %v6981 = vunpack.c.h.b16 %v6846
  %v6982 = vunpack.c.l.b16 %v6847
  %v6983 = vunpack.c.h.b16 %v6847
  %v6984 = vunpack.c.l.b16 %v6848
  %v6985 = vunpack.c.h.b16 %v6848
  %v6986 = vunpack.c.l.b16 %v6849
  %v6987 = vunpack.c.h.b16 %v6849
  %v6988 = vunpack.c.l.b16 %v6850
  %v6989 = vunpack.c.h.b16 %v6850
  %v6990 = vunpack.c.l.b16 %v6851
  %v6991 = vunpack.c.h.b16 %v6851
  %v6992 = vunpack.c.l.b16 %v6852
  %v6993 = vunpack.c.h.b16 %v6852
  %v6994 = vunpack.c.l.b16 %v6853
  %v6995 = vunpack.c.h.b16 %v6853
  %v6996 = vunpack.c.l.b16 %v6854
  %v6997 = vunpack.c.h.b16 %v6854
  %v6998 = vunpack.c.l.b16 %v6855
  %v6999 = vunpack.c.h.b16 %v6855
  %v7000 = vunpack.c.l.b16 %v6856
  %v7001 = vunpack.c.h.b16 %v6856
  %v7002 = vunpack.c.l.b16 %v6857
  %v7003 = vunpack.c.h.b16 %v6857
  %v7004 = vunpack.c.l.b16 %v6858
  %v7005 = vunpack.c.h.b16 %v6858
  %v7006 = vunpack.c.l.b16 %v6859
  %v7007 = vunpack.c.h.b16 %v6859
  %v7008 = vunpack.c.l.b16 %v6860
  %v7009 = vunpack.c.h.b16 %v6860
  %v7010 = vunpack.c.l.b16 %v6861
  %v7011 = vunpack.c.h.b16 %v6861
  %v7012 = vunpack.c.l.b16 %v6862
  %v7013 = vunpack.c.h.b16 %v6862
  %v7014 = vunpack.c.l.b16 %v6863
  %v7015 = vunpack.c.h.b16 %v6863
  %v7016 = vunpack.c.l.b16 %v6864
  %v7017 = vunpack.c.h.b16 %v6864
  %v7018 = vunpack.c.l.b16 %v6865
  %v7019 = vunpack.c.h.b16 %v6865
  %v7020 = vunpack.c.l.b16 %v6866
  %v7021 = vunpack.c.h.b16 %v6866
  %v7022 = vunpack.c.l.b16 %v6867
  %v7023 = vunpack.c.h.b16 %v6867
  %v7024 = vunpack.c.l.b16 %v6868
  %v7025 = vunpack.c.h.b16 %v6868
  %v7026 = vunpack.c.l.b16 %v6869
  %v7027 = vunpack.c.h.b16 %v6869
  %v7028 = vunpack.c.l.b16 %v6870
  %v7029 = vunpack.c.h.b16 %v6870
  %v7030 = vunpack.c.l.b16 %v6871
  %v7031 = vunpack.c.h.b16 %v6871
  %v7032 = vunpack.c.l.b16 %v6872
  %v7033 = vunpack.c.h.b16 %v6872
  %v7034 = vunpack.c.l.b16 %v6873
  %v7035 = vunpack.c.h.b16 %v6873
  %v7036 = vunpack.c.l.b16 %v6874
  %v7037 = vunpack.c.h.b16 %v6874
  %v7038 = vunpack.c.l.b16 %v6875
  %v7039 = vunpack.c.h.b16 %v6875
  %v7040 = vunpack.c.l.b16 %v6876
  %v7041 = vunpack.c.h.b16 %v6876
  %v7042 = vunpack.c.l.b16 %v6877
  %v7043 = vunpack.c.h.b16 %v6877
  %v7044 = vunpack.c.l.b16 %v6878
  %v7045 = vunpack.c.h.b16 %v6878
  %v7046 = vunpack.c.l.b16 %v6879
  %v7047 = vunpack.c.h.b16 %v6879
  %v7048 = vunpack.c.l.b16 %v6880
  %v7049 = vunpack.c.h.b16 %v6880
  %v7050 = vunpack.c.l.b16 %v6881
  %v7051 = vunpack.c.h.b16 %v6881
  %v7052 = vunpack.c.l.b16 %v6882
  %v7053 = vunpack.c.h.b16 %v6882
  %v7054 = vunpack.c.l.b16 %v6883
  %v7055 = vunpack.c.h.b16 %v6883
  %v7056 = vpack.c.b16 %v6960, %v6956
  %v7057 = vpack.c.b16 %v6961, %v6957
  %v7058 = vpack.c.b16 %v6962, %v6958
  %v7059 = vpack.c.b16 %v6963, %v6959
  %v7060 = vpack.c.b16 %v6968, %v6964
  %v7061 = vpack.c.b16 %v6969, %v6965
  %v7062 = vpack.c.b16 %v6970, %v6966
  %v7063 = vpack.c.b16 %v6971, %v6967
  %v7064 = vpack.c.b16 %v6976, %v6972
  %v7065 = vpack.c.b16 %v6977, %v6973
  %v7066 = vpack.c.b16 %v6978, %v6974
  %v7067 = vpack.c.b16 %v6979, %v6975
  %v7068 = vpack.c.b16 %v6984, %v6980
  %v7069 = vpack.c.b16 %v6985, %v6981
  %v7070 = vpack.c.b16 %v6986, %v6982
  %v7071 = vpack.c.b16 %v6987, %v6983
  %v7072 = vpack.c.b16 %v6992, %v6988
  %v7073 = vpack.c.b16 %v6993, %v6989
  %v7074 = vpack.c.b16 %v6994, %v6990
  %v7075 = vpack.c.b16 %v6995, %v6991
  %v7076 = vpack.c.b16 %v7000, %v6996
  %v7077 = vpack.c.b16 %v7001, %v6997
  %v7078 = vpack.c.b16 %v7002, %v6998
  %v7079 = vpack.c.b16 %v7003, %v6999
  %v7080 = vpack.c.b16 %v7008, %v7004
  %v7081 = vpack.c.b16 %v7009, %v7005
  %v7082 = vpack.c.b16 %v7010, %v7006
  %v7083 = vpack.c.b16 %v7011, %v7007
  %v7084 = vpack.c.b16 %v7016, %v7012
  %v7085 = vpack.c.b16 %v7017, %v7013
  %v7086 = vpack.c.b16 %v7018, %v7014
  %v7087 = vpack.c.b16 %v7019, %v7015
  %v7088 = vpack.c.b16 %v7024, %v7020
  %v7089 = vpack.c.b16 %v7025, %v7021
  %v7090 = vpack.c.b16 %v7026, %v7022
  %v7091 = vpack.c.b16 %v7027, %v7023
  %v7092 = vpack.c.b16 %v7032, %v7028
  %v7093 = vpack.c.b16 %v7033, %v7029
  %v7094 = vpack.c.b16 %v7034, %v7030
  %v7095 = vpack.c.b16 %v7035, %v7031
  %v7096 = vpack.c.b16 %v7040, %v7036
  %v7097 = vpack.c.b16 %v7041, %v7037
  %v7098 = vpack.c.b16 %v7042, %v7038
  %v7099 = vpack.c.b16 %v7043, %v7039
  %v7100 = vpack.c.b16 %v7048, %v7044
  %v7101 = vpack.c.b16 %v7049, %v7045
  %v7102 = vpack.c.b16 %v7050, %v7046
  %v7103 = vpack.c.b16 %v7051, %v7047
  %v7104 = vpack.c.b16 %v7052, %v7052
  %v7105 = vpack.c.b16 %v7053, %v7053
  %v7106 = vpack.c.b16 %v7054, %v7054
  %v7107 = vpack.c.b16 %v7055, %v7055
  %v7157 = vsel %vm5066, %v6803, 0
  %v7160 = vsel %vm5066, %v6805, 0
  %v7163 = vsel %vm5066, %v6807, 0
  %v7166 = vsel %vm5066, %v6809, 0
  %v7169 = vsel %vm5066, %v6811, 0
  %v7172 = vsel %vm5066, %v6813, 0
  %v7175 = vsel %vm5066, %v6815, 0
  %v7178 = vsel %vm5066, %v6817, 0
  %v7181 = vsel %vm5066, %v6819, 0
  %v7184 = vsel %vm5066, %v6821, 0
  %v7187 = vsel %vm5066, %v6823, 0
  %v7190 = vsel %vm5066, %v6825, 0
  %v7193 = vsel %vm5066, %v6827, 0
  %v7196 = vsel %vm5066, %v6829, 0
  %v7199 = vsel %vm5066, %v6831, 0
  %v7202 = vsel %vm5066, %v6833, 0
  %v7205 = vsel %vm5115, %v7104, 0
  %v7208 = vsel %vm5115, %v7105, 0
  %v7211 = vsel %vm5115, %v7106, 0
  %v7214 = vsel %vm5115, %v7107, 0
  %7216 = vmatprep.subr.bf16.mxu0 %v7057
  %7217 = vmatpush1.bf16.msra.mxu0 %v7056
  %7218 = vmatprep.subr.bf16.mxu0 %v7061
  %7219 = vmatpush1.bf16.msra.mxu0 %v7060
  %7220 = vmatprep.subr.bf16.mxu0 %v7065
  %7221 = vmatpush1.bf16.msra.mxu0 %v7064
  %7222 = vmatprep.subr.bf16.mxu0 %v7069
  %7223 = vmatpush1.bf16.msra.mxu0 %v7068
  %7224 = vmatprep.subr.bf16.mxu0 %v7073
  %7225 = vmatpush1.bf16.msra.mxu0 %v7072
  %7226 = vmatprep.subr.bf16.mxu0 %v7077
  %7227 = vmatpush1.bf16.msra.mxu0 %v7076
  %7228 = vmatprep.subr.bf16.mxu0 %v7081
  %7229 = vmatpush1.bf16.msra.mxu0 %v7080
  %7230 = vmatprep.subr.bf16.mxu0 %v7085
  %7231 = vmatpush1.bf16.msra.mxu0 %v7084
  %7232 = vmatprep.subr.bf16.mxu0 %v7089
  %7233 = vmatpush1.bf16.msra.mxu0 %v7088
  %7234 = vmatprep.subr.bf16.mxu0 %v7093
  %7235 = vmatpush1.bf16.msra.mxu0 %v7092
  %7236 = vmatprep.subr.bf16.mxu0 %v7097
  %7237 = vmatpush1.bf16.msra.mxu0 %v7096
  %7238 = vmatprep.subr.bf16.mxu0 %v7101
  %7239 = vmatpush1.bf16.msra.mxu0 %v7100
  %7240 = vmatprep.subr.bf16.mxu0 %v7208
  %7241 = vmatpush1.bf16.msra.mxu0 %v7205
  %7242 = vmatprep.subr.bf16.mxu0 0
  %7243 = vmatpush1.bf16.msra.mxu0 0
  %7244 = vmatprep.subr.bf16.mxu0 0
  %7245 = vmatpush1.bf16.msra.mxu0 0
  %7246 = vmatprep.subr.bf16.mxu0 0
  %7247 = vmatpush1.bf16.msra.mxu0 0
  %7248 = vmatprep.mubr.bf16.mxu0 %v7157
  %7249 = vmatmul.mubr.bf16.gmra.mrb[0].mxu0 %v6802
  %v7250 = vpop.f32.mrb[0].mxu0
  %v7251 = vadd.f32 %v6889, %v7250
  %v7252 = vpop.f32.mrb[0].mxu0
  %v7253 = vadd.f32 %v6893, %v7252
  %v7254 = vpop.f32.mrb[0].mxu0
  %v7255 = vadd.f32 %v6889, %v7254
  %v7256 = vpop.f32.mrb[0].mxu0
  %v7257 = vadd.f32 %v6893, %v7256
  %7258 = vmatprep.mubr.bf16.mxu0 %v7160
  %7259 = vmatmul.mubr.bf16.gmra.mrb[0].mxu0 %v6804
  %v7260 = vpop.f32.mrb[0].mxu0
  %v7261 = vadd.f32 %v6889, %v7260
  %v7262 = vpop.f32.mrb[0].mxu0
  %v7263 = vadd.f32 %v6893, %v7262
  %v7264 = vpop.f32.mrb[0].mxu0
  %v7265 = vadd.f32 %v6889, %v7264
  %v7266 = vpop.f32.mrb[0].mxu0
  %v7267 = vadd.f32 %v6893, %v7266
  %7268 = vmatprep.mubr.bf16.mxu0 %v7163
  %7269 = vmatmul.mubr.bf16.gmra.mrb[0].mxu0 %v6806
  %v7270 = vpop.f32.mrb[0].mxu0
  %v7271 = vadd.f32 %v6889, %v7270
  %v7272 = vpop.f32.mrb[0].mxu0
  %v7273 = vadd.f32 %v6893, %v7272
  %v7274 = vpop.f32.mrb[0].mxu0
  %v7275 = vadd.f32 %v6889, %v7274
  %v7276 = vpop.f32.mrb[0].mxu0
  %v7277 = vadd.f32 %v6893, %v7276
  %7278 = vmatprep.mubr.bf16.mxu0 %v7166
  %7279 = vmatmul.mubr.bf16.gmra.mrb[0].mxu0 %v6808
  %v7280 = vpop.f32.mrb[0].mxu0
  %v7281 = vadd.f32 %v6889, %v7280
  %v7282 = vpop.f32.mrb[0].mxu0
  %v7283 = vadd.f32 %v6893, %v7282
  %v7284 = vpop.f32.mrb[0].mxu0
  %v7285 = vadd.f32 %v6889, %v7284
  %v7286 = vpop.f32.mrb[0].mxu0
  %v7287 = vadd.f32 %v6893, %v7286
  %7288 = vmatprep.mubr.bf16.mxu0 %v7169
  %7289 = vmatmul.mubr.bf16.gmra.mrb[0].mxu0 %v6810
  %v7290 = vpop.f32.mrb[0].mxu0
  %v7291 = vadd.f32 %v6889, %v7290
  %v7292 = vpop.f32.mrb[0].mxu0
  %v7293 = vadd.f32 %v6893, %v7292
  %v7294 = vpop.f32.mrb[0].mxu0
  %v7295 = vadd.f32 %v6889, %v7294
  %v7296 = vpop.f32.mrb[0].mxu0
  %v7297 = vadd.f32 %v6893, %v7296
  %7298 = vmatprep.mubr.bf16.mxu0 %v7172
  %7299 = vmatmul.mubr.bf16.gmra.mrb[0].mxu0 %v6812
  %v7300 = vpop.f32.mrb[0].mxu0
  %v7301 = vadd.f32 %v6889, %v7300
  %v7302 = vpop.f32.mrb[0].mxu0
  %v7303 = vadd.f32 %v6893, %v7302
  %v7304 = vpop.f32.mrb[0].mxu0
  %v7305 = vadd.f32 %v6889, %v7304
  %v7306 = vpop.f32.mrb[0].mxu0
  %v7307 = vadd.f32 %v6893, %v7306
  %7308 = vmatprep.mubr.bf16.mxu0 %v7175
  %7309 = vmatmul.mubr.bf16.gmra.mrb[0].mxu0 %v6814
  %v7310 = vpop.f32.mrb[0].mxu0
  %v7311 = vadd.f32 %v6889, %v7310
  %v7312 = vpop.f32.mrb[0].mxu0
  %v7313 = vadd.f32 %v6893, %v7312
  %v7314 = vpop.f32.mrb[0].mxu0
  %v7315 = vadd.f32 %v6889, %v7314
  %v7316 = vpop.f32.mrb[0].mxu0
  %v7317 = vadd.f32 %v6893, %v7316
  %7318 = vmatprep.mubr.bf16.mxu0 %v7178
  %7319 = vmatmul.mubr.bf16.gmra.mrb[0].mxu0 %v6816
  %v7320 = vpop.f32.mrb[0].mxu0
  %v7321 = vadd.f32 %v6889, %v7320
  %v7322 = vpop.f32.mrb[0].mxu0
  %v7323 = vadd.f32 %v6893, %v7322
  %v7324 = vpop.f32.mrb[0].mxu0
  %v7325 = vadd.f32 %v6889, %v7324
  %v7326 = vpop.f32.mrb[0].mxu0
  %v7327 = vadd.f32 %v6893, %v7326
  %7328 = vmatprep.mubr.bf16.mxu0 %v7181
  %7329 = vmatmul.mubr.bf16.gmra.mrb[0].mxu0 %v6818
  %v7330 = vpop.f32.mrb[0].mxu0
  %v7331 = vadd.f32 %v6889, %v7330
  %v7332 = vpop.f32.mrb[0].mxu0
  %v7333 = vadd.f32 %v6893, %v7332
  %v7334 = vpop.f32.mrb[0].mxu0
  %v7335 = vadd.f32 %v6889, %v7334
  %v7336 = vpop.f32.mrb[0].mxu0
  %v7337 = vadd.f32 %v6893, %v7336
  %7338 = vmatprep.mubr.bf16.mxu0 %v7184
  %7339 = vmatmul.mubr.bf16.gmra.mrb[0].mxu0 %v6820
  %v7340 = vpop.f32.mrb[0].mxu0
  %v7341 = vadd.f32 %v6889, %v7340
  %v7342 = vpop.f32.mrb[0].mxu0
  %v7343 = vadd.f32 %v6893, %v7342
  %v7344 = vpop.f32.mrb[0].mxu0
  %v7345 = vadd.f32 %v6889, %v7344
  %v7346 = vpop.f32.mrb[0].mxu0
  %v7347 = vadd.f32 %v6893, %v7346
  %7348 = vmatprep.mubr.bf16.mxu0 %v7187
  %7349 = vmatmul.mubr.bf16.gmra.mrb[0].mxu0 %v6822
  %v7350 = vpop.f32.mrb[0].mxu0
  %v7351 = vadd.f32 %v6889, %v7350
  %v7352 = vpop.f32.mrb[0].mxu0
  %v7353 = vadd.f32 %v6893, %v7352
  %v7354 = vpop.f32.mrb[0].mxu0
  %v7355 = vadd.f32 %v6889, %v7354
  %v7356 = vpop.f32.mrb[0].mxu0
  %v7357 = vadd.f32 %v6893, %v7356
  %7358 = vmatprep.mubr.bf16.mxu0 %v7190
  %7359 = vmatmul.mubr.bf16.gmra.mrb[0].mxu0 %v6824
  %v7360 = vpop.f32.mrb[0].mxu0
  %v7361 = vadd.f32 %v6889, %v7360
  %v7362 = vpop.f32.mrb[0].mxu0
  %v7363 = vadd.f32 %v6893, %v7362
  %v7364 = vpop.f32.mrb[0].mxu0
  %v7365 = vadd.f32 %v6889, %v7364
  %v7366 = vpop.f32.mrb[0].mxu0
  %v7367 = vadd.f32 %v6893, %v7366
  %7368 = vmatprep.mubr.bf16.mxu0 %v7193
  %7369 = vmatmul.mubr.bf16.gmra.mrb[0].mxu0 %v6826
  %v7370 = vpop.f32.mrb[0].mxu0
  %v7371 = vadd.f32 %v6889, %v7370
  %v7372 = vpop.f32.mrb[0].mxu0
  %v7373 = vadd.f32 %v6893, %v7372
  %v7374 = vpop.f32.mrb[0].mxu0
  %v7375 = vadd.f32 %v6889, %v7374
  %v7376 = vpop.f32.mrb[0].mxu0
  %v7377 = vadd.f32 %v6893, %v7376
  %7378 = vmatprep.mubr.bf16.mxu0 %v7196
  %7379 = vmatmul.mubr.bf16.gmra.mrb[0].mxu0 %v6828
  %v7380 = vpop.f32.mrb[0].mxu0
  %v7381 = vadd.f32 %v6889, %v7380
  %v7382 = vpop.f32.mrb[0].mxu0
  %v7383 = vadd.f32 %v6893, %v7382
  %v7384 = vpop.f32.mrb[0].mxu0
  %v7385 = vadd.f32 %v6889, %v7384
  %v7386 = vpop.f32.mrb[0].mxu0
  %v7387 = vadd.f32 %v6893, %v7386
  %7388 = vmatprep.mubr.bf16.mxu0 %v7199
  %7389 = vmatmul.mubr.bf16.gmra.mrb[0].mxu0 %v6830
  %v7390 = vpop.f32.mrb[0].mxu0
  %v7391 = vadd.f32 %v6889, %v7390
  %v7392 = vpop.f32.mrb[0].mxu0
  %v7393 = vadd.f32 %v6893, %v7392
  %v7394 = vpop.f32.mrb[0].mxu0
  %v7395 = vadd.f32 %v6889, %v7394
  %v7396 = vpop.f32.mrb[0].mxu0
  %v7397 = vadd.f32 %v6893, %v7396
  %7398 = vmatprep.mubr.bf16.mxu0 %v7202
  %7399 = vmatmul.mubr.bf16.gmra.mrb[0].mxu0 %v6832
  %v7400 = vpop.f32.mrb[0].mxu0
  %v7401 = vadd.f32 %v6889, %v7400
  %v7402 = vpop.f32.mrb[0].mxu0
  %v7403 = vadd.f32 %v6893, %v7402
  %v7404 = vpop.f32.mrb[0].mxu0
  %v7405 = vadd.f32 %v6889, %v7404
  %v7406 = vpop.f32.mrb[0].mxu0
  %v7407 = vadd.f32 %v6893, %v7406
  %7408 = vdwg.mxu0
  %7409 = vmatprep.subr.bf16.mxu0 %v7059
  %7410 = vmatpush1.bf16.msra.mxu0 %v7058
  %7411 = vmatprep.subr.bf16.mxu0 %v7063
  %7412 = vmatpush1.bf16.msra.mxu0 %v7062
  %7413 = vmatprep.subr.bf16.mxu0 %v7067
  %7414 = vmatpush1.bf16.msra.mxu0 %v7066
  %7415 = vmatprep.subr.bf16.mxu0 %v7071
  %7416 = vmatpush1.bf16.msra.mxu0 %v7070
  %7417 = vmatprep.subr.bf16.mxu0 %v7075
  %7418 = vmatpush1.bf16.msra.mxu0 %v7074
  %7419 = vmatprep.subr.bf16.mxu0 %v7079
  %7420 = vmatpush1.bf16.msra.mxu0 %v7078
  %7421 = vmatprep.subr.bf16.mxu0 %v7083
  %7422 = vmatpush1.bf16.msra.mxu0 %v7082
  %7423 = vmatprep.subr.bf16.mxu0 %v7087
  %7424 = vmatpush1.bf16.msra.mxu0 %v7086
  %7425 = vmatprep.subr.bf16.mxu0 %v7091
  %7426 = vmatpush1.bf16.msra.mxu0 %v7090
  %7427 = vmatprep.subr.bf16.mxu0 %v7095
  %7428 = vmatpush1.bf16.msra.mxu0 %v7094
  %7429 = vmatprep.subr.bf16.mxu0 %v7099
  %7430 = vmatpush1.bf16.msra.mxu0 %v7098
  %7431 = vmatprep.subr.bf16.mxu0 %v7103
  %7432 = vmatpush1.bf16.msra.mxu0 %v7102
  %7433 = vmatprep.subr.bf16.mxu0 %v7214
  %7434 = vmatpush1.bf16.msra.mxu0 %v7211
  %7435 = vmatprep.subr.bf16.mxu0 0
  %7436 = vmatpush1.bf16.msra.mxu0 0
  %7437 = vmatprep.subr.bf16.mxu0 0
  %7438 = vmatpush1.bf16.msra.mxu0 0
  %7439 = vmatprep.subr.bf16.mxu0 0
  %7440 = vmatpush1.bf16.msra.mxu0 0
  %7441 = vmatprep.mubr.bf16.mxu0 %v7157
  %7442 = vmatmul.mubr.bf16.gmra.mrb[0].mxu0 %v6802
  %v7443 = vpop.f32.mrb[0].mxu0
  %v7444 = vadd.f32 %v6897, %v7443
  %v7445 = vpop.f32.mrb[0].mxu0
  %v7446 = vadd.f32 %v6901, %v7445
  %v7447 = vpop.f32.mrb[0].mxu0
  %v7448 = vadd.f32 %v6897, %v7447
  %v7449 = vpop.f32.mrb[0].mxu0
  %v7450 = vadd.f32 %v6901, %v7449
  %7451 = vmatprep.mubr.bf16.mxu0 %v7160
  %7452 = vmatmul.mubr.bf16.gmra.mrb[0].mxu0 %v6804
  %v7453 = vpop.f32.mrb[0].mxu0
  %v7454 = vadd.f32 %v6897, %v7453
  %v7455 = vpop.f32.mrb[0].mxu0
  %v7456 = vadd.f32 %v6901, %v7455
  %v7457 = vpop.f32.mrb[0].mxu0
  %v7458 = vadd.f32 %v6897, %v7457
  %v7459 = vpop.f32.mrb[0].mxu0
  %v7460 = vadd.f32 %v6901, %v7459
  %7461 = vmatprep.mubr.bf16.mxu0 %v7163
  %7462 = vmatmul.mubr.bf16.gmra.mrb[0].mxu0 %v6806
  %v7463 = vpop.f32.mrb[0].mxu0
  %v7464 = vadd.f32 %v6897, %v7463
  %v7465 = vpop.f32.mrb[0].mxu0
  %v7466 = vadd.f32 %v6901, %v7465
  %v7467 = vpop.f32.mrb[0].mxu0
  %v7468 = vadd.f32 %v6897, %v7467
  %v7469 = vpop.f32.mrb[0].mxu0
  %v7470 = vadd.f32 %v6901, %v7469
  %7471 = vmatprep.mubr.bf16.mxu0 %v7166
  %7472 = vmatmul.mubr.bf16.gmra.mrb[0].mxu0 %v6808
  %v7473 = vpop.f32.mrb[0].mxu0
  %v7474 = vadd.f32 %v6897, %v7473
  %v7475 = vpop.f32.mrb[0].mxu0
  %v7476 = vadd.f32 %v6901, %v7475
  %v7477 = vpop.f32.mrb[0].mxu0
  %v7478 = vadd.f32 %v6897, %v7477
  %v7479 = vpop.f32.mrb[0].mxu0
  %v7480 = vadd.f32 %v6901, %v7479
  %7481 = vmatprep.mubr.bf16.mxu0 %v7169
  %7482 = vmatmul.mubr.bf16.gmra.mrb[0].mxu0 %v6810
  %v7483 = vpop.f32.mrb[0].mxu0
  %v7484 = vadd.f32 %v6897, %v7483
  %v7485 = vpop.f32.mrb[0].mxu0
  %v7486 = vadd.f32 %v6901, %v7485
  %v7487 = vpop.f32.mrb[0].mxu0
  %v7488 = vadd.f32 %v6897, %v7487
  %v7489 = vpop.f32.mrb[0].mxu0
  %v7490 = vadd.f32 %v6901, %v7489
  %7491 = vmatprep.mubr.bf16.mxu0 %v7172
  %7492 = vmatmul.mubr.bf16.gmra.mrb[0].mxu0 %v6812
  %v7493 = vpop.f32.mrb[0].mxu0
  %v7494 = vadd.f32 %v6897, %v7493
  %v7495 = vpop.f32.mrb[0].mxu0
  %v7496 = vadd.f32 %v6901, %v7495
  %v7497 = vpop.f32.mrb[0].mxu0
  %v7498 = vadd.f32 %v6897, %v7497
  %v7499 = vpop.f32.mrb[0].mxu0
  %v7500 = vadd.f32 %v6901, %v7499
  %7501 = vmatprep.mubr.bf16.mxu0 %v7175
  %7502 = vmatmul.mubr.bf16.gmra.mrb[0].mxu0 %v6814
  %v7503 = vpop.f32.mrb[0].mxu0
  %v7504 = vadd.f32 %v6897, %v7503
  %v7505 = vpop.f32.mrb[0].mxu0
  %v7506 = vadd.f32 %v6901, %v7505
  %v7507 = vpop.f32.mrb[0].mxu0
  %v7508 = vadd.f32 %v6897, %v7507
  %v7509 = vpop.f32.mrb[0].mxu0
  %v7510 = vadd.f32 %v6901, %v7509
  %7511 = vmatprep.mubr.bf16.mxu0 %v7178
  %7512 = vmatmul.mubr.bf16.gmra.mrb[0].mxu0 %v6816
  %v7513 = vpop.f32.mrb[0].mxu0
  %v7514 = vadd.f32 %v6897, %v7513
  %v7515 = vpop.f32.mrb[0].mxu0
  %v7516 = vadd.f32 %v6901, %v7515
  %v7517 = vpop.f32.mrb[0].mxu0
  %v7518 = vadd.f32 %v6897, %v7517
  %v7519 = vpop.f32.mrb[0].mxu0
  %v7520 = vadd.f32 %v6901, %v7519
  %7521 = vmatprep.mubr.bf16.mxu0 %v7181
  %7522 = vmatmul.mubr.bf16.gmra.mrb[0].mxu0 %v6818
  %v7523 = vpop.f32.mrb[0].mxu0
  %v7524 = vadd.f32 %v6897, %v7523
  %v7525 = vpop.f32.mrb[0].mxu0
  %v7526 = vadd.f32 %v6901, %v7525
  %v7527 = vpop.f32.mrb[0].mxu0
  %v7528 = vadd.f32 %v6897, %v7527
  %v7529 = vpop.f32.mrb[0].mxu0
  %v7530 = vadd.f32 %v6901, %v7529
  %7531 = vmatprep.mubr.bf16.mxu0 %v7184
  %7532 = vmatmul.mubr.bf16.gmra.mrb[0].mxu0 %v6820
  %v7533 = vpop.f32.mrb[0].mxu0
  %v7534 = vadd.f32 %v6897, %v7533
  %v7535 = vpop.f32.mrb[0].mxu0
  %v7536 = vadd.f32 %v6901, %v7535
  %v7537 = vpop.f32.mrb[0].mxu0
  %v7538 = vadd.f32 %v6897, %v7537
  %v7539 = vpop.f32.mrb[0].mxu0
  %v7540 = vadd.f32 %v6901, %v7539
  %7541 = vmatprep.mubr.bf16.mxu0 %v7187
  %7542 = vmatmul.mubr.bf16.gmra.mrb[0].mxu0 %v6822
  %v7543 = vpop.f32.mrb[0].mxu0
  %v7544 = vadd.f32 %v6897, %v7543
  %v7545 = vpop.f32.mrb[0].mxu0
  %v7546 = vadd.f32 %v6901, %v7545
  %v7547 = vpop.f32.mrb[0].mxu0
  %v7548 = vadd.f32 %v6897, %v7547
  %v7549 = vpop.f32.mrb[0].mxu0
  %v7550 = vadd.f32 %v6901, %v7549
  %7551 = vmatprep.mubr.bf16.mxu0 %v7190
  %7552 = vmatmul.mubr.bf16.gmra.mrb[0].mxu0 %v6824
  %v7553 = vpop.f32.mrb[0].mxu0
  %v7554 = vadd.f32 %v6897, %v7553
  %v7555 = vpop.f32.mrb[0].mxu0
  %v7556 = vadd.f32 %v6901, %v7555
  %v7557 = vpop.f32.mrb[0].mxu0
  %v7558 = vadd.f32 %v6897, %v7557
  %v7559 = vpop.f32.mrb[0].mxu0
  %v7560 = vadd.f32 %v6901, %v7559
  %7561 = vmatprep.mubr.bf16.mxu0 %v7193
  %7562 = vmatmul.mubr.bf16.gmra.mrb[0].mxu0 %v6826
  %v7563 = vpop.f32.mrb[0].mxu0
  %v7564 = vadd.f32 %v6897, %v7563
  %v7565 = vpop.f32.mrb[0].mxu0
  %v7566 = vadd.f32 %v6901, %v7565
  %v7567 = vpop.f32.mrb[0].mxu0
  %v7568 = vadd.f32 %v6897, %v7567
  %v7569 = vpop.f32.mrb[0].mxu0
  %v7570 = vadd.f32 %v6901, %v7569
  %7571 = vmatprep.mubr.bf16.mxu0 %v7196
  %7572 = vmatmul.mubr.bf16.gmra.mrb[0].mxu0 %v6828
  %v7573 = vpop.f32.mrb[0].mxu0
  %v7574 = vadd.f32 %v6897, %v7573
  %v7575 = vpop.f32.mrb[0].mxu0
  %v7576 = vadd.f32 %v6901, %v7575
  %v7577 = vpop.f32.mrb[0].mxu0
  %v7578 = vadd.f32 %v6897, %v7577
  %v7579 = vpop.f32.mrb[0].mxu0
  %v7580 = vadd.f32 %v6901, %v7579
  %7581 = vmatprep.mubr.bf16.mxu0 %v7199
  %7582 = vmatmul.mubr.bf16.gmra.mrb[0].mxu0 %v6830
  %v7583 = vpop.f32.mrb[0].mxu0
  %v7584 = vadd.f32 %v6897, %v7583
  %v7585 = vpop.f32.mrb[0].mxu0
  %v7586 = vadd.f32 %v6901, %v7585
  %v7587 = vpop.f32.mrb[0].mxu0
  %v7588 = vadd.f32 %v6897, %v7587
  %v7589 = vpop.f32.mrb[0].mxu0
  %v7590 = vadd.f32 %v6901, %v7589
  %7591 = vmatprep.mubr.bf16.mxu0 %v7202
  %7592 = vmatmul.mubr.bf16.gmra.mrb[0].mxu0 %v6832
  %v7593 = vpop.f32.mrb[0].mxu0
  %v7594 = vadd.f32 %v6897, %v7593
  %v7595 = vpop.f32.mrb[0].mxu0
  %v7596 = vadd.f32 %v6901, %v7595
  %v7597 = vpop.f32.mrb[0].mxu0
  %v7598 = vadd.f32 %v6897, %v7597
  %v7599 = vpop.f32.mrb[0].mxu0
  %v7600 = vadd.f32 %v6901, %v7599
  %7601 = vdwg.mxu0
  %vm7602 = vcmp.ge.f32.partialorder %v7251, 0.0
  %vm7603 = vcmp.ge.f32.partialorder %v7253, 0.0
  %vm7604 = vcmp.ge.f32.partialorder %v7444, 0.0
  %vm7605 = vcmp.ge.f32.partialorder %v7446, 0.0
  %vm7606 = vcmp.ge.f32.partialorder %v7255, 0.0
  %vm7607 = vcmp.ge.f32.partialorder %v7257, 0.0
  %vm7608 = vcmp.ge.f32.partialorder %v7448, 0.0
  %vm7609 = vcmp.ge.f32.partialorder %v7450, 0.0
  %vm7610 = vcmp.ge.f32.partialorder %v7261, 0.0
  %vm7611 = vcmp.ge.f32.partialorder %v7263, 0.0
  %vm7612 = vcmp.ge.f32.partialorder %v7454, 0.0
  %vm7613 = vcmp.ge.f32.partialorder %v7456, 0.0
  %vm7614 = vcmp.ge.f32.partialorder %v7265, 0.0
  %vm7615 = vcmp.ge.f32.partialorder %v7267, 0.0
  %vm7616 = vcmp.ge.f32.partialorder %v7458, 0.0
  %vm7617 = vcmp.ge.f32.partialorder %v7460, 0.0
  %vm7618 = vcmp.ge.f32.partialorder %v7271, 0.0
  %vm7619 = vcmp.ge.f32.partialorder %v7273, 0.0
  %vm7620 = vcmp.ge.f32.partialorder %v7464, 0.0
  %vm7621 = vcmp.ge.f32.partialorder %v7466, 0.0
  %vm7622 = vcmp.ge.f32.partialorder %v7275, 0.0
  %vm7623 = vcmp.ge.f32.partialorder %v7277, 0.0
  %vm7624 = vcmp.ge.f32.partialorder %v7468, 0.0
  %vm7625 = vcmp.ge.f32.partialorder %v7470, 0.0
  %vm7626 = vcmp.ge.f32.partialorder %v7281, 0.0
  %vm7627 = vcmp.ge.f32.partialorder %v7283, 0.0
  %vm7628 = vcmp.ge.f32.partialorder %v7474, 0.0
  %vm7629 = vcmp.ge.f32.partialorder %v7476, 0.0
  %vm7630 = vcmp.ge.f32.partialorder %v7285, 0.0
  %vm7631 = vcmp.ge.f32.partialorder %v7287, 0.0
  %vm7632 = vcmp.ge.f32.partialorder %v7478, 0.0
  %vm7633 = vcmp.ge.f32.partialorder %v7480, 0.0
  %vm7634 = vcmp.ge.f32.partialorder %v7291, 0.0
  %vm7635 = vcmp.ge.f32.partialorder %v7293, 0.0
  %vm7636 = vcmp.ge.f32.partialorder %v7484, 0.0
  %vm7637 = vcmp.ge.f32.partialorder %v7486, 0.0
  %vm7638 = vcmp.ge.f32.partialorder %v7295, 0.0
  %vm7639 = vcmp.ge.f32.partialorder %v7297, 0.0
  %vm7640 = vcmp.ge.f32.partialorder %v7488, 0.0
  %vm7641 = vcmp.ge.f32.partialorder %v7490, 0.0
  %vm7642 = vcmp.ge.f32.partialorder %v7301, 0.0
  %vm7643 = vcmp.ge.f32.partialorder %v7303, 0.0
  %vm7644 = vcmp.ge.f32.partialorder %v7494, 0.0
  %vm7645 = vcmp.ge.f32.partialorder %v7496, 0.0
  %vm7646 = vcmp.ge.f32.partialorder %v7305, 0.0
  %vm7647 = vcmp.ge.f32.partialorder %v7307, 0.0
  %vm7648 = vcmp.ge.f32.partialorder %v7498, 0.0
  %vm7649 = vcmp.ge.f32.partialorder %v7500, 0.0
  %vm7650 = vcmp.ge.f32.partialorder %v7311, 0.0
  %vm7651 = vcmp.ge.f32.partialorder %v7313, 0.0
  %vm7652 = vcmp.ge.f32.partialorder %v7504, 0.0
  %vm7653 = vcmp.ge.f32.partialorder %v7506, 0.0
  %vm7654 = vcmp.ge.f32.partialorder %v7315, 0.0
  %vm7655 = vcmp.ge.f32.partialorder %v7317, 0.0
  %vm7656 = vcmp.ge.f32.partialorder %v7508, 0.0
  %vm7657 = vcmp.ge.f32.partialorder %v7510, 0.0
  %vm7658 = vcmp.ge.f32.partialorder %v7321, 0.0
  %vm7659 = vcmp.ge.f32.partialorder %v7323, 0.0
  %vm7660 = vcmp.ge.f32.partialorder %v7514, 0.0
  %vm7661 = vcmp.ge.f32.partialorder %v7516, 0.0
  %vm7662 = vcmp.ge.f32.partialorder %v7325, 0.0
  %vm7663 = vcmp.ge.f32.partialorder %v7327, 0.0
  %vm7664 = vcmp.ge.f32.partialorder %v7518, 0.0
  %vm7665 = vcmp.ge.f32.partialorder %v7520, 0.0
  %vm7666 = vcmp.ge.f32.partialorder %v7331, 0.0
  %vm7667 = vcmp.ge.f32.partialorder %v7333, 0.0
  %vm7668 = vcmp.ge.f32.partialorder %v7524, 0.0
  %vm7669 = vcmp.ge.f32.partialorder %v7526, 0.0
  %vm7670 = vcmp.ge.f32.partialorder %v7335, 0.0
  %vm7671 = vcmp.ge.f32.partialorder %v7337, 0.0
  %vm7672 = vcmp.ge.f32.partialorder %v7528, 0.0
  %vm7673 = vcmp.ge.f32.partialorder %v7530, 0.0
  %vm7674 = vcmp.ge.f32.partialorder %v7341, 0.0
  %vm7675 = vcmp.ge.f32.partialorder %v7343, 0.0
  %vm7676 = vcmp.ge.f32.partialorder %v7534, 0.0
  %vm7677 = vcmp.ge.f32.partialorder %v7536, 0.0
  %vm7678 = vcmp.ge.f32.partialorder %v7345, 0.0
  %vm7679 = vcmp.ge.f32.partialorder %v7347, 0.0
  %vm7680 = vcmp.ge.f32.partialorder %v7538, 0.0
  %vm7681 = vcmp.ge.f32.partialorder %v7540, 0.0
  %vm7682 = vcmp.ge.f32.partialorder %v7351, 0.0
  %vm7683 = vcmp.ge.f32.partialorder %v7353, 0.0
  %vm7684 = vcmp.ge.f32.partialorder %v7544, 0.0
  %vm7685 = vcmp.ge.f32.partialorder %v7546, 0.0
  %vm7686 = vcmp.ge.f32.partialorder %v7355, 0.0
  %vm7687 = vcmp.ge.f32.partialorder %v7357, 0.0
  %vm7688 = vcmp.ge.f32.partialorder %v7548, 0.0
  %vm7689 = vcmp.ge.f32.partialorder %v7550, 0.0
  %vm7690 = vcmp.ge.f32.partialorder %v7361, 0.0
  %vm7691 = vcmp.ge.f32.partialorder %v7363, 0.0
  %vm7692 = vcmp.ge.f32.partialorder %v7554, 0.0
  %vm7693 = vcmp.ge.f32.partialorder %v7556, 0.0
  %vm7694 = vcmp.ge.f32.partialorder %v7365, 0.0
  %vm7695 = vcmp.ge.f32.partialorder %v7367, 0.0
  %vm7696 = vcmp.ge.f32.partialorder %v7558, 0.0
  %vm7697 = vcmp.ge.f32.partialorder %v7560, 0.0
  %vm7698 = vcmp.ge.f32.partialorder %v7371, 0.0
  %vm7699 = vcmp.ge.f32.partialorder %v7373, 0.0
  %vm7700 = vcmp.ge.f32.partialorder %v7564, 0.0
  %vm7701 = vcmp.ge.f32.partialorder %v7566, 0.0
  %vm7702 = vcmp.ge.f32.partialorder %v7375, 0.0
  %vm7703 = vcmp.ge.f32.partialorder %v7377, 0.0
  %vm7704 = vcmp.ge.f32.partialorder %v7568, 0.0
  %vm7705 = vcmp.ge.f32.partialorder %v7570, 0.0
  %vm7706 = vcmp.ge.f32.partialorder %v7381, 0.0
  %vm7707 = vcmp.ge.f32.partialorder %v7383, 0.0
  %vm7708 = vcmp.ge.f32.partialorder %v7574, 0.0
  %vm7709 = vcmp.ge.f32.partialorder %v7576, 0.0
  %vm7710 = vcmp.ge.f32.partialorder %v7385, 0.0
  %vm7711 = vcmp.ge.f32.partialorder %v7387, 0.0
  %vm7712 = vcmp.ge.f32.partialorder %v7578, 0.0
  %vm7713 = vcmp.ge.f32.partialorder %v7580, 0.0
  %vm7714 = vcmp.ge.f32.partialorder %v7391, 0.0
  %vm7715 = vcmp.ge.f32.partialorder %v7393, 0.0
  %vm7716 = vcmp.ge.f32.partialorder %v7584, 0.0
  %vm7717 = vcmp.ge.f32.partialorder %v7586, 0.0
  %vm7718 = vcmp.ge.f32.partialorder %v7395, 0.0
  %vm7719 = vcmp.ge.f32.partialorder %v7397, 0.0
  %vm7720 = vcmp.ge.f32.partialorder %v7588, 0.0
  %vm7721 = vcmp.ge.f32.partialorder %v7590, 0.0
  %vm7722 = vcmp.ge.f32.partialorder %v7401, 0.0
  %vm7723 = vcmp.ge.f32.partialorder %v7403, 0.0
  %vm7724 = vcmp.ge.f32.partialorder %v7594, 0.0
  %vm7725 = vcmp.ge.f32.partialorder %v7596, 0.0
  %vm7726 = vcmp.ge.f32.partialorder %v7405, 0.0
  %vm7727 = vcmp.ge.f32.partialorder %v7407, 0.0
  %vm7728 = vcmp.ge.f32.partialorder %v7598, 0.0
  %vm7729 = vcmp.ge.f32.partialorder %v7600, 0.0
  %v7730 = vmul.f32 %v7251, 0.01
  %v7731 = vmul.f32 %v7253, 0.01
  %v7732 = vmul.f32 %v7444, 0.01
  %v7733 = vmul.f32 %v7446, 0.01
  %v7734 = vmul.f32 %v7255, 0.01
  %v7735 = vmul.f32 %v7257, 0.01
  %v7736 = vmul.f32 %v7448, 0.01
  %v7737 = vmul.f32 %v7450, 0.01
  %v7738 = vmul.f32 %v7261, 0.01
  %v7739 = vmul.f32 %v7263, 0.01
  %v7740 = vmul.f32 %v7454, 0.01
  %v7741 = vmul.f32 %v7456, 0.01
  %v7742 = vmul.f32 %v7265, 0.01
  %v7743 = vmul.f32 %v7267, 0.01
  %v7744 = vmul.f32 %v7458, 0.01
  %v7745 = vmul.f32 %v7460, 0.01
  %v7746 = vmul.f32 %v7271, 0.01
  %v7747 = vmul.f32 %v7273, 0.01
  %v7748 = vmul.f32 %v7464, 0.01
  %v7749 = vmul.f32 %v7466, 0.01
  %v7750 = vmul.f32 %v7275, 0.01
  %v7751 = vmul.f32 %v7277, 0.01
  %v7752 = vmul.f32 %v7468, 0.01
  %v7753 = vmul.f32 %v7470, 0.01
  %v7754 = vmul.f32 %v7281, 0.01
  %v7755 = vmul.f32 %v7283, 0.01
  %v7756 = vmul.f32 %v7474, 0.01
  %v7757 = vmul.f32 %v7476, 0.01
  %v7758 = vmul.f32 %v7285, 0.01
  %v7759 = vmul.f32 %v7287, 0.01
  %v7760 = vmul.f32 %v7478, 0.01
  %v7761 = vmul.f32 %v7480, 0.01
  %v7762 = vmul.f32 %v7291, 0.01
  %v7763 = vmul.f32 %v7293, 0.01
  %v7764 = vmul.f32 %v7484, 0.01
  %v7765 = vmul.f32 %v7486, 0.01
  %v7766 = vmul.f32 %v7295, 0.01
  %v7767 = vmul.f32 %v7297, 0.01
  %v7768 = vmul.f32 %v7488, 0.01
  %v7769 = vmul.f32 %v7490, 0.01
  %v7770 = vmul.f32 %v7301, 0.01
  %v7771 = vmul.f32 %v7303, 0.01
  %v7772 = vmul.f32 %v7494, 0.01
  %v7773 = vmul.f32 %v7496, 0.01
  %v7774 = vmul.f32 %v7305, 0.01
  %v7775 = vmul.f32 %v7307, 0.01
  %v7776 = vmul.f32 %v7498, 0.01
  %v7777 = vmul.f32 %v7500, 0.01
  %v7778 = vmul.f32 %v7311, 0.01
  %v7779 = vmul.f32 %v7313, 0.01
  %v7780 = vmul.f32 %v7504, 0.01
  %v7781 = vmul.f32 %v7506, 0.01
  %v7782 = vmul.f32 %v7315, 0.01
  %v7783 = vmul.f32 %v7317, 0.01
  %v7784 = vmul.f32 %v7508, 0.01
  %v7785 = vmul.f32 %v7510, 0.01
  %v7786 = vmul.f32 %v7321, 0.01
  %v7787 = vmul.f32 %v7323, 0.01
  %v7788 = vmul.f32 %v7514, 0.01
  %v7789 = vmul.f32 %v7516, 0.01
  %v7790 = vmul.f32 %v7325, 0.01
  %v7791 = vmul.f32 %v7327, 0.01
  %v7792 = vmul.f32 %v7518, 0.01
  %v7793 = vmul.f32 %v7520, 0.01
  %v7794 = vmul.f32 %v7331, 0.01
  %v7795 = vmul.f32 %v7333, 0.01
  %v7796 = vmul.f32 %v7524, 0.01
  %v7797 = vmul.f32 %v7526, 0.01
  %v7798 = vmul.f32 %v7335, 0.01
  %v7799 = vmul.f32 %v7337, 0.01
  %v7800 = vmul.f32 %v7528, 0.01
  %v7801 = vmul.f32 %v7530, 0.01
  %v7802 = vmul.f32 %v7341, 0.01
  %v7803 = vmul.f32 %v7343, 0.01
  %v7804 = vmul.f32 %v7534, 0.01
  %v7805 = vmul.f32 %v7536, 0.01
  %v7806 = vmul.f32 %v7345, 0.01
  %v7807 = vmul.f32 %v7347, 0.01
  %v7808 = vmul.f32 %v7538, 0.01
  %v7809 = vmul.f32 %v7540, 0.01
  %v7810 = vmul.f32 %v7351, 0.01
  %v7811 = vmul.f32 %v7353, 0.01
  %v7812 = vmul.f32 %v7544, 0.01
  %v7813 = vmul.f32 %v7546, 0.01
  %v7814 = vmul.f32 %v7355, 0.01
  %v7815 = vmul.f32 %v7357, 0.01
  %v7816 = vmul.f32 %v7548, 0.01
  %v7817 = vmul.f32 %v7550, 0.01
  %v7818 = vmul.f32 %v7361, 0.01
  %v7819 = vmul.f32 %v7363, 0.01
  %v7820 = vmul.f32 %v7554, 0.01
  %v7821 = vmul.f32 %v7556, 0.01
  %v7822 = vmul.f32 %v7365, 0.01
  %v7823 = vmul.f32 %v7367, 0.01
  %v7824 = vmul.f32 %v7558, 0.01
  %v7825 = vmul.f32 %v7560, 0.01
  %v7826 = vmul.f32 %v7371, 0.01
  %v7827 = vmul.f32 %v7373, 0.01
  %v7828 = vmul.f32 %v7564, 0.01
  %v7829 = vmul.f32 %v7566, 0.01
  %v7830 = vmul.f32 %v7375, 0.01
  %v7831 = vmul.f32 %v7377, 0.01
  %v7832 = vmul.f32 %v7568, 0.01
  %v7833 = vmul.f32 %v7570, 0.01
  %v7834 = vmul.f32 %v7381, 0.01
  %v7835 = vmul.f32 %v7383, 0.01
  %v7836 = vmul.f32 %v7574, 0.01
  %v7837 = vmul.f32 %v7576, 0.01
  %v7838 = vmul.f32 %v7385, 0.01
  %v7839 = vmul.f32 %v7387, 0.01
  %v7840 = vmul.f32 %v7578, 0.01
  %v7841 = vmul.f32 %v7580, 0.01
  %v7842 = vmul.f32 %v7391, 0.01
  %v7843 = vmul.f32 %v7393, 0.01
  %v7844 = vmul.f32 %v7584, 0.01
  %v7845 = vmul.f32 %v7586, 0.01
  %v7846 = vmul.f32 %v7395, 0.01
  %v7847 = vmul.f32 %v7397, 0.01
  %v7848 = vmul.f32 %v7588, 0.01
  %v7849 = vmul.f32 %v7590, 0.01
  %v7850 = vmul.f32 %v7401, 0.01
  %v7851 = vmul.f32 %v7403, 0.01
  %v7852 = vmul.f32 %v7594, 0.01
  %v7853 = vmul.f32 %v7596, 0.01
  %v7854 = vmul.f32 %v7405, 0.01
  %v7855 = vmul.f32 %v7407, 0.01
  %v7856 = vmul.f32 %v7598, 0.01
  %v7857 = vmul.f32 %v7600, 0.01
  %v7858 = vsel %vm7602, %v7251, %v7730
  %v7859 = vsel %vm7603, %v7253, %v7731
  %v7860 = vsel %vm7604, %v7444, %v7732
  %v7861 = vsel %vm7605, %v7446, %v7733
  %v7862 = vsel %vm7606, %v7255, %v7734
  %v7863 = vsel %vm7607, %v7257, %v7735
  %v7864 = vsel %vm7608, %v7448, %v7736
  %v7865 = vsel %vm7609, %v7450, %v7737
  %v7866 = vsel %vm7610, %v7261, %v7738
  %v7867 = vsel %vm7611, %v7263, %v7739
  %v7868 = vsel %vm7612, %v7454, %v7740
  %v7869 = vsel %vm7613, %v7456, %v7741
  %v7870 = vsel %vm7614, %v7265, %v7742
  %v7871 = vsel %vm7615, %v7267, %v7743
  %v7872 = vsel %vm7616, %v7458, %v7744
  %v7873 = vsel %vm7617, %v7460, %v7745
  %v7874 = vsel %vm7618, %v7271, %v7746
  %v7875 = vsel %vm7619, %v7273, %v7747
  %v7876 = vsel %vm7620, %v7464, %v7748
  %v7877 = vsel %vm7621, %v7466, %v7749
  %v7878 = vsel %vm7622, %v7275, %v7750
  %v7879 = vsel %vm7623, %v7277, %v7751
  %v7880 = vsel %vm7624, %v7468, %v7752
  %v7881 = vsel %vm7625, %v7470, %v7753
  %v7882 = vsel %vm7626, %v7281, %v7754
  %v7883 = vsel %vm7627, %v7283, %v7755
  %v7884 = vsel %vm7628, %v7474, %v7756
  %v7885 = vsel %vm7629, %v7476, %v7757
  %v7886 = vsel %vm7630, %v7285, %v7758
  %v7887 = vsel %vm7631, %v7287, %v7759
  %v7888 = vsel %vm7632, %v7478, %v7760
  %v7889 = vsel %vm7633, %v7480, %v7761
  %v7890 = vsel %vm7634, %v7291, %v7762
  %v7891 = vsel %vm7635, %v7293, %v7763
  %v7892 = vsel %vm7636, %v7484, %v7764
  %v7893 = vsel %vm7637, %v7486, %v7765
  %v7894 = vsel %vm7638, %v7295, %v7766
  %v7895 = vsel %vm7639, %v7297, %v7767
  %v7896 = vsel %vm7640, %v7488, %v7768
  %v7897 = vsel %vm7641, %v7490, %v7769
  %v7898 = vsel %vm7642, %v7301, %v7770
  %v7899 = vsel %vm7643, %v7303, %v7771
  %v7900 = vsel %vm7644, %v7494, %v7772
  %v7901 = vsel %vm7645, %v7496, %v7773
  %v7902 = vsel %vm7646, %v7305, %v7774
  %v7903 = vsel %vm7647, %v7307, %v7775
  %v7904 = vsel %vm7648, %v7498, %v7776
  %v7905 = vsel %vm7649, %v7500, %v7777
  %v7906 = vsel %vm7650, %v7311, %v7778
  %v7907 = vsel %vm7651, %v7313, %v7779
  %v7908 = vsel %vm7652, %v7504, %v7780
  %v7909 = vsel %vm7653, %v7506, %v7781
  %v7910 = vsel %vm7654, %v7315, %v7782
  %v7911 = vsel %vm7655, %v7317, %v7783
  %v7912 = vsel %vm7656, %v7508, %v7784
  %v7913 = vsel %vm7657, %v7510, %v7785
  %v7914 = vsel %vm7658, %v7321, %v7786
  %v7915 = vsel %vm7659, %v7323, %v7787
  %v7916 = vsel %vm7660, %v7514, %v7788
  %v7917 = vsel %vm7661, %v7516, %v7789
  %v7918 = vsel %vm7662, %v7325, %v7790
  %v7919 = vsel %vm7663, %v7327, %v7791
  %v7920 = vsel %vm7664, %v7518, %v7792
  %v7921 = vsel %vm7665, %v7520, %v7793
  %v7922 = vsel %vm7666, %v7331, %v7794
  %v7923 = vsel %vm7667, %v7333, %v7795
  %v7924 = vsel %vm7668, %v7524, %v7796
  %v7925 = vsel %vm7669, %v7526, %v7797
  %v7926 = vsel %vm7670, %v7335, %v7798
  %v7927 = vsel %vm7671, %v7337, %v7799
  %v7928 = vsel %vm7672, %v7528, %v7800
  %v7929 = vsel %vm7673, %v7530, %v7801
  %v7930 = vsel %vm7674, %v7341, %v7802
  %v7931 = vsel %vm7675, %v7343, %v7803
  %v7932 = vsel %vm7676, %v7534, %v7804
  %v7933 = vsel %vm7677, %v7536, %v7805
  %v7934 = vsel %vm7678, %v7345, %v7806
  %v7935 = vsel %vm7679, %v7347, %v7807
  %v7936 = vsel %vm7680, %v7538, %v7808
  %v7937 = vsel %vm7681, %v7540, %v7809
  %v7938 = vsel %vm7682, %v7351, %v7810
  %v7939 = vsel %vm7683, %v7353, %v7811
  %v7940 = vsel %vm7684, %v7544, %v7812
  %v7941 = vsel %vm7685, %v7546, %v7813
  %v7942 = vsel %vm7686, %v7355, %v7814
  %v7943 = vsel %vm7687, %v7357, %v7815
  %v7944 = vsel %vm7688, %v7548, %v7816
  %v7945 = vsel %vm7689, %v7550, %v7817
  %v7946 = vsel %vm7690, %v7361, %v7818
  %v7947 = vsel %vm7691, %v7363, %v7819
  %v7948 = vsel %vm7692, %v7554, %v7820
  %v7949 = vsel %vm7693, %v7556, %v7821
  %v7950 = vsel %vm7694, %v7365, %v7822
  %v7951 = vsel %vm7695, %v7367, %v7823
  %v7952 = vsel %vm7696, %v7558, %v7824
  %v7953 = vsel %vm7697, %v7560, %v7825
  %v7954 = vsel %vm7698, %v7371, %v7826
  %v7955 = vsel %vm7699, %v7373, %v7827
  %v7956 = vsel %vm7700, %v7564, %v7828
  %v7957 = vsel %vm7701, %v7566, %v7829
  %v7958 = vsel %vm7702, %v7375, %v7830
  %v7959 = vsel %vm7703, %v7377, %v7831
  %v7960 = vsel %vm7704, %v7568, %v7832
  %v7961 = vsel %vm7705, %v7570, %v7833
  %v7962 = vsel %vm7706, %v7381, %v7834
  %v7963 = vsel %vm7707, %v7383, %v7835
  %v7964 = vsel %vm7708, %v7574, %v7836
  %v7965 = vsel %vm7709, %v7576, %v7837
  %v7966 = vsel %vm7710, %v7385, %v7838
  %v7967 = vsel %vm7711, %v7387, %v7839
  %v7968 = vsel %vm7712, %v7578, %v7840
  %v7969 = vsel %vm7713, %v7580, %v7841
  %v7970 = vsel %vm7714, %v7391, %v7842
  %v7971 = vsel %vm7715, %v7393, %v7843
  %v7972 = vsel %vm7716, %v7584, %v7844
  %v7973 = vsel %vm7717, %v7586, %v7845
  %v7974 = vsel %vm7718, %v7395, %v7846
  %v7975 = vsel %vm7719, %v7397, %v7847
  %v7976 = vsel %vm7720, %v7588, %v7848
  %v7977 = vsel %vm7721, %v7590, %v7849
  %v7978 = vsel %vm7722, %v7401, %v7850
  %v7979 = vsel %vm7723, %v7403, %v7851
  %v7980 = vsel %vm7724, %v7594, %v7852
  %v7981 = vsel %vm7725, %v7596, %v7853
  %v7982 = vsel %vm7726, %v7405, %v7854
  %v7983 = vsel %vm7727, %v7407, %v7855
  %v7984 = vsel %vm7728, %v7598, %v7856
  %v7985 = vsel %vm7729, %v7600, %v7857
  %v7986 = vpack.c.bf16 %v7862, %v7858
  %v7987 = vpack.c.bf16 %v7863, %v7859
  %v7988 = vpack.c.bf16 %v7864, %v7860
  %v7989 = vpack.c.bf16 %v7865, %v7861
  %v7990 = vpack.c.bf16 %v7870, %v7866
  %v7991 = vpack.c.bf16 %v7871, %v7867
  %v7992 = vpack.c.bf16 %v7872, %v7868
  %v7993 = vpack.c.bf16 %v7873, %v7869
  %v7994 = vpack.c.bf16 %v7878, %v7874
  %v7995 = vpack.c.bf16 %v7879, %v7875
  %v7996 = vpack.c.bf16 %v7880, %v7876
  %v7997 = vpack.c.bf16 %v7881, %v7877
  %v7998 = vpack.c.bf16 %v7886, %v7882
  %v7999 = vpack.c.bf16 %v7887, %v7883
  %v8000 = vpack.c.bf16 %v7888, %v7884
  %v8001 = vpack.c.bf16 %v7889, %v7885
  %v8002 = vpack.c.bf16 %v7894, %v7890
  %v8003 = vpack.c.bf16 %v7895, %v7891
  %v8004 = vpack.c.bf16 %v7896, %v7892
  %v8005 = vpack.c.bf16 %v7897, %v7893
  %v8006 = vpack.c.bf16 %v7902, %v7898
  %v8007 = vpack.c.bf16 %v7903, %v7899
  %v8008 = vpack.c.bf16 %v7904, %v7900
  %v8009 = vpack.c.bf16 %v7905, %v7901
  %v8010 = vpack.c.bf16 %v7910, %v7906
  %v8011 = vpack.c.bf16 %v7911, %v7907
  %v8012 = vpack.c.bf16 %v7912, %v7908
  %v8013 = vpack.c.bf16 %v7913, %v7909
  %v8014 = vpack.c.bf16 %v7918, %v7914
  %v8015 = vpack.c.bf16 %v7919, %v7915
  %v8016 = vpack.c.bf16 %v7920, %v7916
  %v8017 = vpack.c.bf16 %v7921, %v7917
  %v8018 = vpack.c.bf16 %v7926, %v7922
  %v8019 = vpack.c.bf16 %v7927, %v7923
  %v8020 = vpack.c.bf16 %v7928, %v7924
  %v8021 = vpack.c.bf16 %v7929, %v7925
  %v8022 = vpack.c.bf16 %v7934, %v7930
  %v8023 = vpack.c.bf16 %v7935, %v7931
  %v8024 = vpack.c.bf16 %v7936, %v7932
  %v8025 = vpack.c.bf16 %v7937, %v7933
  %v8026 = vpack.c.bf16 %v7942, %v7938
  %v8027 = vpack.c.bf16 %v7943, %v7939
  %v8028 = vpack.c.bf16 %v7944, %v7940
  %v8029 = vpack.c.bf16 %v7945, %v7941
  %v8030 = vpack.c.bf16 %v7950, %v7946
  %v8031 = vpack.c.bf16 %v7951, %v7947
  %v8032 = vpack.c.bf16 %v7952, %v7948
  %v8033 = vpack.c.bf16 %v7953, %v7949
  %v8034 = vpack.c.bf16 %v7958, %v7954
  %v8035 = vpack.c.bf16 %v7959, %v7955
  %v8036 = vpack.c.bf16 %v7960, %v7956
  %v8037 = vpack.c.bf16 %v7961, %v7957
  %v8038 = vpack.c.bf16 %v7966, %v7962
  %v8039 = vpack.c.bf16 %v7967, %v7963
  %v8040 = vpack.c.bf16 %v7968, %v7964
  %v8041 = vpack.c.bf16 %v7969, %v7965
  %v8042 = vpack.c.bf16 %v7974, %v7970
  %v8043 = vpack.c.bf16 %v7975, %v7971
  %v8044 = vpack.c.bf16 %v7976, %v7972
  %v8045 = vpack.c.bf16 %v7977, %v7973
  %v8046 = vpack.c.bf16 %v7982, %v7978
  %v8047 = vpack.c.bf16 %v7983, %v7979
  %v8048 = vpack.c.bf16 %v7984, %v7980
  %v8049 = vpack.c.bf16 %v7985, %v7981
  %v8050 = vld [vmem:[%s16] sm:$0xff]
  %v8051 = vld [vmem:[%s16 + $0x8] sm:$0xff]
  %v8052 = vld [vmem:[%s16 + $0x10] sm:$0xff]
  %v8053 = vld [vmem:[%s16 + $0x18] sm:$0xf]
  %v8054 = vld [vmem:[%s16 + $0x1c] sm:$0xff]
  %v8055 = vld [vmem:[%s16 + $0x24] sm:$0xff]
  %v8056 = vld [vmem:[%s16 + $0x2c] sm:$0xff]
  %v8057 = vld [vmem:[%s16 + $0x34] sm:$0xf]
  %v8058 = vld [vmem:[%s16 + $0x38] sm:$0xff]
  %v8059 = vld [vmem:[%s16 + $0x40] sm:$0xff]
  %v8060 = vld [vmem:[%s16 + $0x48] sm:$0xff]
  %v8061 = vld [vmem:[%s16 + $0x50] sm:$0xf]
  %v8062 = vld [vmem:[%s16 + $0x54] sm:$0xff]
  %v8063 = vld [vmem:[%s16 + $0x5c] sm:$0xff]
  %v8064 = vld [vmem:[%s16 + $0x64] sm:$0xff]
  %v8065 = vld [vmem:[%s16 + $0x6c] sm:$0xf]
  %v8066 = vld [vmem:[%s16 + $0x70] sm:$0xff]
  %v8067 = vld [vmem:[%s16 + $0x78] sm:$0xff]
  %v8068 = vld [vmem:[%s16 + $0x80] sm:$0xff]
  %v8069 = vld [vmem:[%s16 + $0x88] sm:$0xf]
  %v8070 = vld [vmem:[%s16 + $0x8c] sm:$0xff]
  %v8071 = vld [vmem:[%s16 + $0x94] sm:$0xff]
  %v8072 = vld [vmem:[%s16 + $0x9c] sm:$0xff]
  %v8073 = vld [vmem:[%s16 + $0xa4] sm:$0xf]
  %v8074 = vld [vmem:[%s16 + $0xa8] sm:$0xff]
  %v8075 = vld [vmem:[%s16 + $0xb0] sm:$0xff]
  %v8076 = vld [vmem:[%s16 + $0xb8] sm:$0xff]
  %v8077 = vld [vmem:[%s16 + $0xc0] sm:$0xf]
  %v8078 = vld [vmem:[%s16 + $0xc4] sm:$0xff]
  %v8079 = vld [vmem:[%s16 + $0xcc] sm:$0xff]
  %v8080 = vld [vmem:[%s16 + $0xd4] sm:$0xff]
  %v8081 = vld [vmem:[%s16 + $0xdc] sm:$0xf]
  %v8082 = vld [vmem:[%s16 + $0xe0] sm:$0xff]
  %v8083 = vld [vmem:[%s16 + $0xe8] sm:$0xff]
  %v8084 = vld [vmem:[%s16 + $0xf0] sm:$0xff]
  %v8085 = vld [vmem:[%s16 + $0xf8] sm:$0xf]
  %v8086 = vld [vmem:[%s16 + $0xfc] sm:$0xff]
  %v8087 = vld [vmem:[%s16 + $0x104] sm:$0xff]
  %v8088 = vld [vmem:[%s16 + $0x10c] sm:$0xff]
  %v8089 = vld [vmem:[%s16 + $0x114] sm:$0xf]
  %v8090 = vld [vmem:[%s16 + $0x118] sm:$0xff]
  %v8091 = vld [vmem:[%s16 + $0x120] sm:$0xff]
  %v8092 = vld [vmem:[%s16 + $0x128] sm:$0xff]
  %v8093 = vld [vmem:[%s16 + $0x130] sm:$0xf]
  %v8094 = vld [vmem:[%s16 + $0x134] sm:$0xff]
  %v8095 = vld [vmem:[%s16 + $0x13c] sm:$0xff]
  %v8096 = vld [vmem:[%s16 + $0x144] sm:$0xff]
  %v8097 = vld [vmem:[%s16 + $0x14c] sm:$0xf]
  %v8098 = vld [vmem:[%s16 + $0x150] sm:$0xff]
  %v8099 = vld [vmem:[%s16 + $0x158] sm:$0xff]
  %v8100 = vld [vmem:[%s16 + $0x160] sm:$0xff]
  %v8101 = vld [vmem:[%s16 + $0x168] sm:$0xf]
  %v8102 = vld [vmem:[%s16 + $0x16c] sm:$0xff]
  %v8103 = vld [vmem:[%s16 + $0x174] sm:$0xff]
  %v8104 = vld [vmem:[%s16 + $0x17c] sm:$0xff]
  %v8105 = vld [vmem:[%s16 + $0x184] sm:$0xf]
  %v8106 = vld [vmem:[%s16 + $0x188] sm:$0xff]
  %v8107 = vld [vmem:[%s16 + $0x190] sm:$0xff]
  %v8108 = vld [vmem:[%s16 + $0x198] sm:$0xff]
  %v8109 = vld [vmem:[%s16 + $0x1a0] sm:$0xf]
  %v8110 = vld [vmem:[%s16 + $0x1a4] sm:$0xff]
  %v8111 = vld [vmem:[%s16 + $0x1ac] sm:$0xff]
  %v8112 = vld [vmem:[%s16 + $0x1b4] sm:$0xff]
  %v8113 = vld [vmem:[%s16 + $0x1bc] sm:$0xf]
  %v8114 = vld [vmem:[%s16 + $0x1c0] sm:$0xff]
  %v8115 = vld [vmem:[%s16 + $0x1c8] sm:$0xff]
  %v8116 = vld [vmem:[%s16 + $0x1d0] sm:$0xff]
  %v8117 = vld [vmem:[%s16 + $0x1d8] sm:$0xf]
  %v8118 = vld [vmem:[%s16 + $0x1dc] sm:$0xff]
  %v8119 = vld [vmem:[%s16 + $0x1e4] sm:$0xff]
  %v8120 = vld [vmem:[%s16 + $0x1ec] sm:$0xff]
  %v8121 = vld [vmem:[%s16 + $0x1f4] sm:$0xf]
  %v8122 = vld [vmem:[%s16 + $0x1f8] sm:$0xff]
  %v8123 = vld [vmem:[%s16 + $0x200] sm:$0xff]
  %v8124 = vld [vmem:[%s16 + $0x208] sm:$0xff]
  %v8125 = vld [vmem:[%s16 + $0x210] sm:$0xf]
  %v8126 = vld [vmem:[%s16 + $0x214] sm:$0xff]
  %v8127 = vld [vmem:[%s16 + $0x21c] sm:$0xff]
  %v8128 = vld [vmem:[%s16 + $0x224] sm:$0xff]
  %v8129 = vld [vmem:[%s16 + $0x22c] sm:$0xf]
  %v8130 = vld [vmem:[%s16 + $0x230] sm:$0xff]
  %v8131 = vld [vmem:[%s16 + $0x238] sm:$0xff]
  %v8132 = vld [vmem:[%s16 + $0x240] sm:$0xff]
  %v8133 = vld [vmem:[%s16 + $0x248] sm:$0xf]
  %v8134 = vld [vmem:[%s16 + $0x24c] sm:$0xff]
  %v8135 = vld [vmem:[%s16 + $0x254] sm:$0xff]
  %v8136 = vld [vmem:[%s16 + $0x25c] sm:$0xff]
  %v8137 = vld [vmem:[%s16 + $0x264] sm:$0xf]
  %v8138 = vld [vmem:[%s16 + $0x268] sm:$0xff]
  %v8139 = vld [vmem:[%s16 + $0x270] sm:$0xff]
  %v8140 = vld [vmem:[%s16 + $0x278] sm:$0xff]
  %v8141 = vld [vmem:[%s16 + $0x280] sm:$0xf]
  %v8142 = vld [vmem:[%s16 + $0x284] sm:$0xff]
  %v8143 = vld [vmem:[%s16 + $0x28c] sm:$0xff]
  %v8144 = vld [vmem:[%s16 + $0x294] sm:$0xff]
  %v8145 = vld [vmem:[%s16 + $0x29c] sm:$0xf]
  %v8146 = vld [vmem:[%s16 + $0x2a0] sm:$0xff]
  %v8147 = vld [vmem:[%s16 + $0x2a8] sm:$0xff]
  %v8148 = vld [vmem:[%s16 + $0x2b0] sm:$0xff]
  %v8149 = vld [vmem:[%s16 + $0x2b8] sm:$0xf]
  %v8150 = vld [vmem:[%s16 + $0x2bc] sm:$0xff]
  %v8151 = vld [vmem:[%s16 + $0x2c4] sm:$0xff]
  %v8152 = vld [vmem:[%s16 + $0x2cc] sm:$0xff]
  %v8153 = vld [vmem:[%s16 + $0x2d4] sm:$0xf]
  %v8154 = vld [vmem:[%s16 + $0x2d8] sm:$0xff]
  %v8155 = vld [vmem:[%s16 + $0x2e0] sm:$0xff]
  %v8156 = vld [vmem:[%s16 + $0x2e8] sm:$0xff]
  %v8157 = vld [vmem:[%s16 + $0x2f0] sm:$0xf]
  %v8158 = vld [vmem:[%s16 + $0x2f4] sm:$0xff]
  %v8159 = vld [vmem:[%s16 + $0x2fc] sm:$0xff]
  %v8160 = vld [vmem:[%s16 + $0x304] sm:$0xff]
  %v8161 = vld [vmem:[%s16 + $0x30c] sm:$0xf]
  %v8162 = vld [vmem:[%s16 + $0x310] sm:$0xff]
  %v8163 = vld [vmem:[%s16 + $0x318] sm:$0xff]
  %v8164 = vld [vmem:[%s16 + $0x320] sm:$0xff]
  %v8165 = vld [vmem:[%s16 + $0x328] sm:$0xf]
  %v8166 = vld [vmem:[%s16 + $0x32c] sm:$0xff]
  %v8167 = vld [vmem:[%s16 + $0x334] sm:$0xff]
  %v8168 = vld [vmem:[%s16 + $0x33c] sm:$0xff]
  %v8169 = vld [vmem:[%s16 + $0x344] sm:$0xf]
  %v8170 = vld [vmem:[%s16 + $0x348] sm:$0xff]
  %v8171 = vld [vmem:[%s16 + $0x350] sm:$0xff]
  %v8172 = vld [vmem:[%s16 + $0x358] sm:$0xff]
  %v8173 = vld [vmem:[%s16 + $0x360] sm:$0xf]
  %v8174 = vld [vmem:[%s16 + $0x364] sm:$0xff]
  %v8175 = vld [vmem:[%s16 + $0x36c] sm:$0xff]
  %v8176 = vld [vmem:[%s16 + $0x374] sm:$0xff]
  %v8177 = vld [vmem:[%s16 + $0x37c] sm:$0xf]
  %v8178 = vld [vmem:[%s16 + $0x380] sm:$0xff]
  %v8179 = vld [vmem:[%s16 + $0x388] sm:$0xff]
  %v8180 = vld [vmem:[%s16 + $0x390] sm:$0xff]
  %v8181 = vld [vmem:[%s16 + $0x398] sm:$0xf]
  %v8182 = vld [vmem:[%s16 + $0x39c] sm:$0xff]
  %v8183 = vld [vmem:[%s16 + $0x3a4] sm:$0xff]
  %v8184 = vld [vmem:[%s16 + $0x3ac] sm:$0xff]
  %v8185 = vld [vmem:[%s16 + $0x3b4] sm:$0xf]
  %v8186 = vld [vmem:[%s16 + $0x3b8] sm:$0xff]
  %v8187 = vld [vmem:[%s16 + $0x3c0] sm:$0xff]
  %v8188 = vld [vmem:[%s16 + $0x3c8] sm:$0xff]
  %v8189 = vld [vmem:[%s16 + $0x3d0] sm:$0xf]
  %v8190 = vld [vmem:[%s16 + $0x3d4] sm:$0xff]
  %v8191 = vld [vmem:[%s16 + $0x3dc] sm:$0xff]
  %v8192 = vld [vmem:[%s16 + $0x3e4] sm:$0xff]
  %v8193 = vld [vmem:[%s16 + $0x3ec] sm:$0xf]
  %v8194 = vld [vmem:[%s16 + $0x3f0] sm:$0xff]
  %v8195 = vld [vmem:[%s16 + $0x3f8] sm:$0xff]
  %v8196 = vld [vmem:[%s16 + $0x400] sm:$0xff]
  %v8197 = vld [vmem:[%s16 + $0x408] sm:$0xf]
  %v8198 = vld [vmem:[%s16 + $0x40c] sm:$0xff]
  %v8199 = vld [vmem:[%s16 + $0x414] sm:$0xff]
  %v8200 = vld [vmem:[%s16 + $0x41c] sm:$0xff]
  %v8201 = vld [vmem:[%s16 + $0x424] sm:$0xf]
  %v8202 = vld [vmem:[%s16 + $0x428] sm:$0xff]
  %v8203 = vld [vmem:[%s16 + $0x430] sm:$0xff]
  %v8204 = vld [vmem:[%s16 + $0x438] sm:$0xff]
  %v8205 = vld [vmem:[%s16 + $0x440] sm:$0xf]
  %v8206 = vld [vmem:[%s16 + $0x444] sm:$0xff]
  %v8207 = vld [vmem:[%s16 + $0x44c] sm:$0xff]
  %v8208 = vld [vmem:[%s16 + $0x454] sm:$0xff]
  %v8209 = vld [vmem:[%s16 + $0x45c] sm:$0xf]
  %v8210 = vld [vmem:[%s16 + $0x460] sm:$0xff]
  %v8211 = vld [vmem:[%s16 + $0x468] sm:$0xff]
  %v8212 = vld [vmem:[%s16 + $0x470] sm:$0xff]
  %v8213 = vld [vmem:[%s16 + $0x478] sm:$0xf]
  %v8214 = vld [vmem:[%s16 + $0x47c] sm:$0xff]
  %v8215 = vld [vmem:[%s16 + $0x484] sm:$0xff]
  %v8216 = vld [vmem:[%s16 + $0x48c] sm:$0xff]
  %v8217 = vld [vmem:[%s16 + $0x494] sm:$0xf]
  %v8218 = vld [vmem:[%s16 + $0x498] sm:$0xff]
  %v8219 = vld [vmem:[%s16 + $0x4a0] sm:$0xff]
  %v8220 = vld [vmem:[%s16 + $0x4a8] sm:$0xff]
  %v8221 = vld [vmem:[%s16 + $0x4b0] sm:$0xf]
  %v8222 = vld [vmem:[%s16 + $0x4b4] sm:$0xff]
  %v8223 = vld [vmem:[%s16 + $0x4bc] sm:$0xff]
  %v8224 = vld [vmem:[%s16 + $0x4c4] sm:$0xff]
  %v8225 = vld [vmem:[%s16 + $0x4cc] sm:$0xf]
  %v8226 = vld [vmem:[%s16 + $0x4d0] sm:$0xff]
  %v8227 = vld [vmem:[%s16 + $0x4d8] sm:$0xff]
  %v8228 = vld [vmem:[%s16 + $0x4e0] sm:$0xff]
  %v8229 = vld [vmem:[%s16 + $0x4e8] sm:$0xf]
  %v8230 = vld [vmem:[%s16 + $0x4ec] sm:$0xff]
  %v8231 = vld [vmem:[%s16 + $0x4f4] sm:$0xff]
  %v8232 = vld [vmem:[%s16 + $0x4fc] sm:$0xff]
  %v8233 = vld [vmem:[%s16 + $0x504] sm:$0xf]
  %v8234 = vld [vmem:[%s16 + $0x508] sm:$0xff]
  %v8235 = vld [vmem:[%s16 + $0x510] sm:$0xff]
  %v8236 = vld [vmem:[%s16 + $0x518] sm:$0xff]
  %v8237 = vld [vmem:[%s16 + $0x520] sm:$0xf]
  %v8238 = vld [vmem:[%s16 + $0x524] sm:$0xff]
  %v8239 = vld [vmem:[%s16 + $0x52c] sm:$0xff]
  %v8240 = vld [vmem:[%s16 + $0x534] sm:$0xff]
  %v8241 = vld [vmem:[%s16 + $0x53c] sm:$0xf]
  %v8242 = vld [vmem:[%s16 + $0x540] sm:$0xff]
  %v8243 = vld [vmem:[%s16 + $0x548] sm:$0xff]
  %v8244 = vld [vmem:[%s16 + $0x550] sm:$0xff]
  %v8245 = vld [vmem:[%s16 + $0x558] sm:$0xf]
  %v8246 = vld [vmem:[%s16 + $0x55c] sm:$0xff]
  %v8247 = vld [vmem:[%s16 + $0x564] sm:$0xff]
  %v8248 = vld [vmem:[%s16 + $0x56c] sm:$0xff]
  %v8249 = vld [vmem:[%s16 + $0x574] sm:$0xf]
  %v8250 = vld [vmem:[%s17] sm:$0xff]
  %v8252 = vlaneseq
  %v8253 = vshrl.u32 %v8252, 7
  %v8254 = vsub.s32 0, %v8253
  %v8255 = vrot.slane %v8250, %v8254
  %v8256 = vlaneseq
  %v8257 = vshrl.u32 %v8256, 7
  %v8258 = vsub.s32 1, %v8257
  %v8259 = vrot.slane %v8250, %v8258
  %v8260 = vlaneseq
  %v8261 = vshrl.u32 %v8260, 7
  %v8262 = vsub.s32 2, %v8261
  %v8263 = vrot.slane %v8250, %v8262
  %v8264 = vlaneseq
  %v8265 = vshrl.u32 %v8264, 7
  %v8266 = vsub.s32 3, %v8265
  %v8267 = vrot.slane %v8250, %v8266
  %v8268 = vlaneseq
  %v8269 = vshrl.u32 %v8268, 7
  %v8270 = vsub.s32 4, %v8269
  %v8271 = vrot.slane %v8250, %v8270
  %v8272 = vlaneseq
  %v8273 = vshrl.u32 %v8272, 7
  %v8274 = vsub.s32 5, %v8273
  %v8275 = vrot.slane %v8250, %v8274
  %v8276 = vlaneseq
  %v8277 = vshrl.u32 %v8276, 7
  %v8278 = vsub.s32 6, %v8277
  %v8279 = vrot.slane %v8250, %v8278
  %v8487 = vunpack.c.l.b16 %v8050
  %v8488 = vunpack.c.h.b16 %v8050
  %v8489 = vunpack.c.l.b16 %v8051
  %v8490 = vunpack.c.h.b16 %v8051
  %v8491 = vunpack.c.l.b16 %v8052
  %v8492 = vunpack.c.h.b16 %v8052
  %v8493 = vunpack.c.l.b16 %v8053
  %v8494 = vunpack.c.l.b16 %v8054
  %v8495 = vunpack.c.h.b16 %v8054
  %v8496 = vunpack.c.l.b16 %v8055
  %v8497 = vunpack.c.h.b16 %v8055
  %v8498 = vunpack.c.l.b16 %v8056
  %v8499 = vunpack.c.h.b16 %v8056
  %v8500 = vunpack.c.l.b16 %v8057
  %v8501 = vunpack.c.l.b16 %v8058
  %v8502 = vunpack.c.h.b16 %v8058
  %v8503 = vunpack.c.l.b16 %v8059
  %v8504 = vunpack.c.h.b16 %v8059
  %v8505 = vunpack.c.l.b16 %v8060
  %v8506 = vunpack.c.h.b16 %v8060
  %v8507 = vunpack.c.l.b16 %v8061
  %v8508 = vunpack.c.l.b16 %v8062
  %v8509 = vunpack.c.h.b16 %v8062
  %v8510 = vunpack.c.l.b16 %v8063
  %v8511 = vunpack.c.h.b16 %v8063
  %v8512 = vunpack.c.l.b16 %v8064
  %v8513 = vunpack.c.h.b16 %v8064
  %v8514 = vunpack.c.l.b16 %v8065
  %v8515 = vunpack.c.l.b16 %v8066
  %v8516 = vunpack.c.h.b16 %v8066
  %v8517 = vunpack.c.l.b16 %v8067
  %v8518 = vunpack.c.h.b16 %v8067
  %v8519 = vunpack.c.l.b16 %v8068
  %v8520 = vunpack.c.h.b16 %v8068
  %v8521 = vunpack.c.l.b16 %v8069
  %v8522 = vunpack.c.l.b16 %v8070
  %v8523 = vunpack.c.h.b16 %v8070
  %v8524 = vunpack.c.l.b16 %v8071
  %v8525 = vunpack.c.h.b16 %v8071
  %v8526 = vunpack.c.l.b16 %v8072
  %v8527 = vunpack.c.h.b16 %v8072
  %v8528 = vunpack.c.l.b16 %v8073
  %v8529 = vunpack.c.l.b16 %v8074
  %v8530 = vunpack.c.h.b16 %v8074
  %v8531 = vunpack.c.l.b16 %v8075
  %v8532 = vunpack.c.h.b16 %v8075
  %v8533 = vunpack.c.l.b16 %v8076
  %v8534 = vunpack.c.h.b16 %v8076
  %v8535 = vunpack.c.l.b16 %v8077
  %v8536 = vunpack.c.l.b16 %v8078
  %v8537 = vunpack.c.h.b16 %v8078
  %v8538 = vunpack.c.l.b16 %v8079
  %v8539 = vunpack.c.h.b16 %v8079
  %v8540 = vunpack.c.l.b16 %v8080
  %v8541 = vunpack.c.h.b16 %v8080
  %v8542 = vunpack.c.l.b16 %v8081
  %v8543 = vunpack.c.l.b16 %v8082
  %v8544 = vunpack.c.h.b16 %v8082
  %v8545 = vunpack.c.l.b16 %v8083
  %v8546 = vunpack.c.h.b16 %v8083
  %v8547 = vunpack.c.l.b16 %v8084
  %v8548 = vunpack.c.h.b16 %v8084
  %v8549 = vunpack.c.l.b16 %v8085
  %v8550 = vunpack.c.l.b16 %v8086
  %v8551 = vunpack.c.h.b16 %v8086
  %v8552 = vunpack.c.l.b16 %v8087
  %v8553 = vunpack.c.h.b16 %v8087
  %v8554 = vunpack.c.l.b16 %v8088
  %v8555 = vunpack.c.h.b16 %v8088
  %v8556 = vunpack.c.l.b16 %v8089
  %v8557 = vunpack.c.l.b16 %v8090
  %v8558 = vunpack.c.h.b16 %v8090
  %v8559 = vunpack.c.l.b16 %v8091
  %v8560 = vunpack.c.h.b16 %v8091
  %v8561 = vunpack.c.l.b16 %v8092
  %v8562 = vunpack.c.h.b16 %v8092
  %v8563 = vunpack.c.l.b16 %v8093
  %v8564 = vunpack.c.l.b16 %v8094
  %v8565 = vunpack.c.h.b16 %v8094
  %v8566 = vunpack.c.l.b16 %v8095
  %v8567 = vunpack.c.h.b16 %v8095
  %v8568 = vunpack.c.l.b16 %v8096
  %v8569 = vunpack.c.h.b16 %v8096
  %v8570 = vunpack.c.l.b16 %v8097
  %v8571 = vunpack.c.l.b16 %v8098
  %v8572 = vunpack.c.h.b16 %v8098
  %v8573 = vunpack.c.l.b16 %v8099
  %v8574 = vunpack.c.h.b16 %v8099
  %v8575 = vunpack.c.l.b16 %v8100
  %v8576 = vunpack.c.h.b16 %v8100
  %v8577 = vunpack.c.l.b16 %v8101
  %v8578 = vunpack.c.l.b16 %v8102
  %v8579 = vunpack.c.h.b16 %v8102
  %v8580 = vunpack.c.l.b16 %v8103
  %v8581 = vunpack.c.h.b16 %v8103
  %v8582 = vunpack.c.l.b16 %v8104
  %v8583 = vunpack.c.h.b16 %v8104
  %v8584 = vunpack.c.l.b16 %v8105
  %v8585 = vunpack.c.l.b16 %v8106
  %v8586 = vunpack.c.h.b16 %v8106
  %v8587 = vunpack.c.l.b16 %v8107
  %v8588 = vunpack.c.h.b16 %v8107
  %v8589 = vunpack.c.l.b16 %v8108
  %v8590 = vunpack.c.h.b16 %v8108
  %v8591 = vunpack.c.l.b16 %v8109
  %v8592 = vunpack.c.l.b16 %v8110
  %v8593 = vunpack.c.h.b16 %v8110
  %v8594 = vunpack.c.l.b16 %v8111
  %v8595 = vunpack.c.h.b16 %v8111
  %v8596 = vunpack.c.l.b16 %v8112
  %v8597 = vunpack.c.h.b16 %v8112
  %v8598 = vunpack.c.l.b16 %v8113
  %v8599 = vunpack.c.l.b16 %v8114
  %v8600 = vunpack.c.h.b16 %v8114
  %v8601 = vunpack.c.l.b16 %v8115
  %v8602 = vunpack.c.h.b16 %v8115
  %v8603 = vunpack.c.l.b16 %v8116
  %v8604 = vunpack.c.h.b16 %v8116
  %v8605 = vunpack.c.l.b16 %v8117
  %v8606 = vunpack.c.l.b16 %v8118
  %v8607 = vunpack.c.h.b16 %v8118
  %v8608 = vunpack.c.l.b16 %v8119
  %v8609 = vunpack.c.h.b16 %v8119
  %v8610 = vunpack.c.l.b16 %v8120
  %v8611 = vunpack.c.h.b16 %v8120
  %v8612 = vunpack.c.l.b16 %v8121
  %v8613 = vunpack.c.l.b16 %v8122
  %v8614 = vunpack.c.h.b16 %v8122
  %v8615 = vunpack.c.l.b16 %v8123
  %v8616 = vunpack.c.h.b16 %v8123
  %v8617 = vunpack.c.l.b16 %v8124
  %v8618 = vunpack.c.h.b16 %v8124
  %v8619 = vunpack.c.l.b16 %v8125
  %v8620 = vunpack.c.l.b16 %v8126
  %v8621 = vunpack.c.h.b16 %v8126
  %v8622 = vunpack.c.l.b16 %v8127
  %v8623 = vunpack.c.h.b16 %v8127
  %v8624 = vunpack.c.l.b16 %v8128
  %v8625 = vunpack.c.h.b16 %v8128
  %v8626 = vunpack.c.l.b16 %v8129
  %v8627 = vunpack.c.l.b16 %v8130
  %v8628 = vunpack.c.h.b16 %v8130
  %v8629 = vunpack.c.l.b16 %v8131
  %v8630 = vunpack.c.h.b16 %v8131
  %v8631 = vunpack.c.l.b16 %v8132
  %v8632 = vunpack.c.h.b16 %v8132
  %v8633 = vunpack.c.l.b16 %v8133
  %v8634 = vunpack.c.l.b16 %v8134
  %v8635 = vunpack.c.h.b16 %v8134
  %v8636 = vunpack.c.l.b16 %v8135
  %v8637 = vunpack.c.h.b16 %v8135
  %v8638 = vunpack.c.l.b16 %v8136
  %v8639 = vunpack.c.h.b16 %v8136
  %v8640 = vunpack.c.l.b16 %v8137
  %v8641 = vunpack.c.l.b16 %v8138
  %v8642 = vunpack.c.h.b16 %v8138
  %v8643 = vunpack.c.l.b16 %v8139
  %v8644 = vunpack.c.h.b16 %v8139
  %v8645 = vunpack.c.l.b16 %v8140
  %v8646 = vunpack.c.h.b16 %v8140
  %v8647 = vunpack.c.l.b16 %v8141
  %v8648 = vunpack.c.l.b16 %v8142
  %v8649 = vunpack.c.h.b16 %v8142
  %v8650 = vunpack.c.l.b16 %v8143
  %v8651 = vunpack.c.h.b16 %v8143
  %v8652 = vunpack.c.l.b16 %v8144
  %v8653 = vunpack.c.h.b16 %v8144
  %v8654 = vunpack.c.l.b16 %v8145
  %v8655 = vunpack.c.l.b16 %v8146
  %v8656 = vunpack.c.h.b16 %v8146
  %v8657 = vunpack.c.l.b16 %v8147
  %v8658 = vunpack.c.h.b16 %v8147
  %v8659 = vunpack.c.l.b16 %v8148
  %v8660 = vunpack.c.h.b16 %v8148
  %v8661 = vunpack.c.l.b16 %v8149
  %v8662 = vunpack.c.l.b16 %v8150
  %v8663 = vunpack.c.h.b16 %v8150
  %v8664 = vunpack.c.l.b16 %v8151
  %v8665 = vunpack.c.h.b16 %v8151
  %v8666 = vunpack.c.l.b16 %v8152
  %v8667 = vunpack.c.h.b16 %v8152
  %v8668 = vunpack.c.l.b16 %v8153
  %v8669 = vunpack.c.l.b16 %v8154
  %v8670 = vunpack.c.h.b16 %v8154
  %v8671 = vunpack.c.l.b16 %v8155
  %v8672 = vunpack.c.h.b16 %v8155
  %v8673 = vunpack.c.l.b16 %v8156
  %v8674 = vunpack.c.h.b16 %v8156
  %v8675 = vunpack.c.l.b16 %v8157
  %v8676 = vunpack.c.l.b16 %v8158
  %v8677 = vunpack.c.h.b16 %v8158
  %v8678 = vunpack.c.l.b16 %v8159
  %v8679 = vunpack.c.h.b16 %v8159
  %v8680 = vunpack.c.l.b16 %v8160
  %v8681 = vunpack.c.h.b16 %v8160
  %v8682 = vunpack.c.l.b16 %v8161
  %v8683 = vunpack.c.l.b16 %v8162
  %v8684 = vunpack.c.h.b16 %v8162
  %v8685 = vunpack.c.l.b16 %v8163
  %v8686 = vunpack.c.h.b16 %v8163
  %v8687 = vunpack.c.l.b16 %v8164
  %v8688 = vunpack.c.h.b16 %v8164
  %v8689 = vunpack.c.l.b16 %v8165
  %v8690 = vunpack.c.l.b16 %v8166
  %v8691 = vunpack.c.h.b16 %v8166
  %v8692 = vunpack.c.l.b16 %v8167
  %v8693 = vunpack.c.h.b16 %v8167
  %v8694 = vunpack.c.l.b16 %v8168
  %v8695 = vunpack.c.h.b16 %v8168
  %v8696 = vunpack.c.l.b16 %v8169
  %v8697 = vunpack.c.l.b16 %v8170
  %v8698 = vunpack.c.h.b16 %v8170
  %v8699 = vunpack.c.l.b16 %v8171
  %v8700 = vunpack.c.h.b16 %v8171
  %v8701 = vunpack.c.l.b16 %v8172
  %v8702 = vunpack.c.h.b16 %v8172
  %v8703 = vunpack.c.l.b16 %v8173
  %v8704 = vunpack.c.l.b16 %v8174
  %v8705 = vunpack.c.h.b16 %v8174
  %v8706 = vunpack.c.l.b16 %v8175
  %v8707 = vunpack.c.h.b16 %v8175
  %v8708 = vunpack.c.l.b16 %v8176
  %v8709 = vunpack.c.h.b16 %v8176
  %v8710 = vunpack.c.l.b16 %v8177
  %v8711 = vunpack.c.l.b16 %v8178
  %v8712 = vunpack.c.h.b16 %v8178
  %v8713 = vunpack.c.l.b16 %v8179
  %v8714 = vunpack.c.h.b16 %v8179
  %v8715 = vunpack.c.l.b16 %v8180
  %v8716 = vunpack.c.h.b16 %v8180
  %v8717 = vunpack.c.l.b16 %v8181
  %v8718 = vunpack.c.l.b16 %v8182
  %v8719 = vunpack.c.h.b16 %v8182
  %v8720 = vunpack.c.l.b16 %v8183
  %v8721 = vunpack.c.h.b16 %v8183
  %v8722 = vunpack.c.l.b16 %v8184
  %v8723 = vunpack.c.h.b16 %v8184
  %v8724 = vunpack.c.l.b16 %v8185
  %v8725 = vunpack.c.l.b16 %v8186
  %v8726 = vunpack.c.h.b16 %v8186
  %v8727 = vunpack.c.l.b16 %v8187
  %v8728 = vunpack.c.h.b16 %v8187
  %v8729 = vunpack.c.l.b16 %v8188
  %v8730 = vunpack.c.h.b16 %v8188
  %v8731 = vunpack.c.l.b16 %v8189
  %v8732 = vunpack.c.l.b16 %v8190
  %v8733 = vunpack.c.h.b16 %v8190
  %v8734 = vunpack.c.l.b16 %v8191
  %v8735 = vunpack.c.h.b16 %v8191
  %v8736 = vunpack.c.l.b16 %v8192
  %v8737 = vunpack.c.h.b16 %v8192
  %v8738 = vunpack.c.l.b16 %v8193
  %v8739 = vunpack.c.l.b16 %v8194
  %v8740 = vunpack.c.h.b16 %v8194
  %v8741 = vunpack.c.l.b16 %v8195
  %v8742 = vunpack.c.h.b16 %v8195
  %v8743 = vunpack.c.l.b16 %v8196
  %v8744 = vunpack.c.h.b16 %v8196
  %v8745 = vunpack.c.l.b16 %v8197
  %v8746 = vunpack.c.l.b16 %v8198
  %v8747 = vunpack.c.h.b16 %v8198
  %v8748 = vunpack.c.l.b16 %v8199
  %v8749 = vunpack.c.h.b16 %v8199
  %v8750 = vunpack.c.l.b16 %v8200
  %v8751 = vunpack.c.h.b16 %v8200
  %v8752 = vunpack.c.l.b16 %v8201
  %v8753 = vunpack.c.l.b16 %v8202
  %v8754 = vunpack.c.h.b16 %v8202
  %v8755 = vunpack.c.l.b16 %v8203
  %v8756 = vunpack.c.h.b16 %v8203
  %v8757 = vunpack.c.l.b16 %v8204
  %v8758 = vunpack.c.h.b16 %v8204
  %v8759 = vunpack.c.l.b16 %v8205
  %v8760 = vunpack.c.l.b16 %v8206
  %v8761 = vunpack.c.h.b16 %v8206
  %v8762 = vunpack.c.l.b16 %v8207
  %v8763 = vunpack.c.h.b16 %v8207
  %v8764 = vunpack.c.l.b16 %v8208
  %v8765 = vunpack.c.h.b16 %v8208
  %v8766 = vunpack.c.l.b16 %v8209
  %v8767 = vunpack.c.l.b16 %v8210
  %v8768 = vunpack.c.h.b16 %v8210
  %v8769 = vunpack.c.l.b16 %v8211
  %v8770 = vunpack.c.h.b16 %v8211
  %v8771 = vunpack.c.l.b16 %v8212
  %v8772 = vunpack.c.h.b16 %v8212
  %v8773 = vunpack.c.l.b16 %v8213
  %v8774 = vunpack.c.l.b16 %v8214
  %v8775 = vunpack.c.h.b16 %v8214
  %v8776 = vunpack.c.l.b16 %v8215
  %v8777 = vunpack.c.h.b16 %v8215
  %v8778 = vunpack.c.l.b16 %v8216
  %v8779 = vunpack.c.h.b16 %v8216
  %v8780 = vunpack.c.l.b16 %v8217
  %v8781 = vunpack.c.l.b16 %v8218
  %v8782 = vunpack.c.h.b16 %v8218
  %v8783 = vunpack.c.l.b16 %v8219
  %v8784 = vunpack.c.h.b16 %v8219
  %v8785 = vunpack.c.l.b16 %v8220
  %v8786 = vunpack.c.h.b16 %v8220
  %v8787 = vunpack.c.l.b16 %v8221
  %v8788 = vunpack.c.l.b16 %v8222
  %v8789 = vunpack.c.h.b16 %v8222
  %v8790 = vunpack.c.l.b16 %v8223
  %v8791 = vunpack.c.h.b16 %v8223
  %v8792 = vunpack.c.l.b16 %v8224
  %v8793 = vunpack.c.h.b16 %v8224
  %v8794 = vunpack.c.l.b16 %v8225
  %v8795 = vunpack.c.l.b16 %v8226
  %v8796 = vunpack.c.h.b16 %v8226
  %v8797 = vunpack.c.l.b16 %v8227
  %v8798 = vunpack.c.h.b16 %v8227
  %v8799 = vunpack.c.l.b16 %v8228
  %v8800 = vunpack.c.h.b16 %v8228
  %v8801 = vunpack.c.l.b16 %v8229
  %v8802 = vunpack.c.l.b16 %v8230
  %v8803 = vunpack.c.h.b16 %v8230
  %v8804 = vunpack.c.l.b16 %v8231
  %v8805 = vunpack.c.h.b16 %v8231
  %v8806 = vunpack.c.l.b16 %v8232
  %v8807 = vunpack.c.h.b16 %v8232
  %v8808 = vunpack.c.l.b16 %v8233
  %v8809 = vunpack.c.l.b16 %v8234
  %v8810 = vunpack.c.h.b16 %v8234
  %v8811 = vunpack.c.l.b16 %v8235
  %v8812 = vunpack.c.h.b16 %v8235
  %v8813 = vunpack.c.l.b16 %v8236
  %v8814 = vunpack.c.h.b16 %v8236
  %v8815 = vunpack.c.l.b16 %v8237
  %v8816 = vunpack.c.l.b16 %v8238
  %v8817 = vunpack.c.h.b16 %v8238
  %v8818 = vunpack.c.l.b16 %v8239
  %v8819 = vunpack.c.h.b16 %v8239
  %v8820 = vunpack.c.l.b16 %v8240
  %v8821 = vunpack.c.h.b16 %v8240
  %v8822 = vunpack.c.l.b16 %v8241
  %v8823 = vunpack.c.l.b16 %v8242
  %v8824 = vunpack.c.h.b16 %v8242
  %v8825 = vunpack.c.l.b16 %v8243
  %v8826 = vunpack.c.h.b16 %v8243
  %v8827 = vunpack.c.l.b16 %v8244
  %v8828 = vunpack.c.h.b16 %v8244
  %v8829 = vunpack.c.l.b16 %v8245
  %v8830 = vunpack.c.l.b16 %v8246
  %v8831 = vunpack.c.h.b16 %v8246
  %v8832 = vunpack.c.l.b16 %v8247
  %v8833 = vunpack.c.h.b16 %v8247
  %v8834 = vunpack.c.l.b16 %v8248
  %v8835 = vunpack.c.h.b16 %v8248
  %v8836 = vunpack.c.l.b16 %v8249
  %v8837 = vpack.c.b16 %v8494, %v8487
  %v8838 = vpack.c.b16 %v8495, %v8488
  %v8839 = vpack.c.b16 %v8496, %v8489
  %v8840 = vpack.c.b16 %v8497, %v8490
  %v8841 = vpack.c.b16 %v8498, %v8491
  %v8842 = vpack.c.b16 %v8499, %v8492
  %v8843 = vpack.c.b16 %v8500, %v8493
  %v8844 = vpack.c.b16 %v8508, %v8501
  %v8845 = vpack.c.b16 %v8509, %v8502
  %v8846 = vpack.c.b16 %v8510, %v8503
  %v8847 = vpack.c.b16 %v8511, %v8504
  %v8848 = vpack.c.b16 %v8512, %v8505
  %v8849 = vpack.c.b16 %v8513, %v8506
  %v8850 = vpack.c.b16 %v8514, %v8507
  %v8851 = vpack.c.b16 %v8522, %v8515
  %v8852 = vpack.c.b16 %v8523, %v8516
  %v8853 = vpack.c.b16 %v8524, %v8517
  %v8854 = vpack.c.b16 %v8525, %v8518
  %v8855 = vpack.c.b16 %v8526, %v8519
  %v8856 = vpack.c.b16 %v8527, %v8520
  %v8857 = vpack.c.b16 %v8528, %v8521
  %v8858 = vpack.c.b16 %v8536, %v8529
  %v8859 = vpack.c.b16 %v8537, %v8530
  %v8860 = vpack.c.b16 %v8538, %v8531
  %v8861 = vpack.c.b16 %v8539, %v8532
  %v8862 = vpack.c.b16 %v8540, %v8533
  %v8863 = vpack.c.b16 %v8541, %v8534
  %v8864 = vpack.c.b16 %v8542, %v8535
  %v8865 = vpack.c.b16 %v8550, %v8543
  %v8866 = vpack.c.b16 %v8551, %v8544
  %v8867 = vpack.c.b16 %v8552, %v8545
  %v8868 = vpack.c.b16 %v8553, %v8546
  %v8869 = vpack.c.b16 %v8554, %v8547
  %v8870 = vpack.c.b16 %v8555, %v8548
  %v8871 = vpack.c.b16 %v8556, %v8549
  %v8872 = vpack.c.b16 %v8564, %v8557
  %v8873 = vpack.c.b16 %v8565, %v8558
  %v8874 = vpack.c.b16 %v8566, %v8559
  %v8875 = vpack.c.b16 %v8567, %v8560
  %v8876 = vpack.c.b16 %v8568, %v8561
  %v8877 = vpack.c.b16 %v8569, %v8562
  %v8878 = vpack.c.b16 %v8570, %v8563
  %v8879 = vpack.c.b16 %v8578, %v8571
  %v8880 = vpack.c.b16 %v8579, %v8572
  %v8881 = vpack.c.b16 %v8580, %v8573
  %v8882 = vpack.c.b16 %v8581, %v8574
  %v8883 = vpack.c.b16 %v8582, %v8575
  %v8884 = vpack.c.b16 %v8583, %v8576
  %v8885 = vpack.c.b16 %v8584, %v8577
  %v8886 = vpack.c.b16 %v8592, %v8585
  %v8887 = vpack.c.b16 %v8593, %v8586
  %v8888 = vpack.c.b16 %v8594, %v8587
  %v8889 = vpack.c.b16 %v8595, %v8588
  %v8890 = vpack.c.b16 %v8596, %v8589
  %v8891 = vpack.c.b16 %v8597, %v8590
  %v8892 = vpack.c.b16 %v8598, %v8591
  %v8893 = vpack.c.b16 %v8606, %v8599
  %v8894 = vpack.c.b16 %v8607, %v8600
  %v8895 = vpack.c.b16 %v8608, %v8601
  %v8896 = vpack.c.b16 %v8609, %v8602
  %v8897 = vpack.c.b16 %v8610, %v8603
  %v8898 = vpack.c.b16 %v8611, %v8604
  %v8899 = vpack.c.b16 %v8612, %v8605
  %v8900 = vpack.c.b16 %v8620, %v8613
  %v8901 = vpack.c.b16 %v8621, %v8614
  %v8902 = vpack.c.b16 %v8622, %v8615
  %v8903 = vpack.c.b16 %v8623, %v8616
  %v8904 = vpack.c.b16 %v8624, %v8617
  %v8905 = vpack.c.b16 %v8625, %v8618
  %v8906 = vpack.c.b16 %v8626, %v8619
  %v8907 = vpack.c.b16 %v8634, %v8627
  %v8908 = vpack.c.b16 %v8635, %v8628
  %v8909 = vpack.c.b16 %v8636, %v8629
  %v8910 = vpack.c.b16 %v8637, %v8630
  %v8911 = vpack.c.b16 %v8638, %v8631
  %v8912 = vpack.c.b16 %v8639, %v8632
  %v8913 = vpack.c.b16 %v8640, %v8633
  %v8914 = vpack.c.b16 %v8648, %v8641
  %v8915 = vpack.c.b16 %v8649, %v8642
  %v8916 = vpack.c.b16 %v8650, %v8643
  %v8917 = vpack.c.b16 %v8651, %v8644
  %v8918 = vpack.c.b16 %v8652, %v8645
  %v8919 = vpack.c.b16 %v8653, %v8646
  %v8920 = vpack.c.b16 %v8654, %v8647
  %v8921 = vpack.c.b16 %v8662, %v8655
  %v8922 = vpack.c.b16 %v8663, %v8656
  %v8923 = vpack.c.b16 %v8664, %v8657
  %v8924 = vpack.c.b16 %v8665, %v8658
  %v8925 = vpack.c.b16 %v8666, %v8659
  %v8926 = vpack.c.b16 %v8667, %v8660
  %v8927 = vpack.c.b16 %v8668, %v8661
  %v8928 = vpack.c.b16 %v8676, %v8669
  %v8929 = vpack.c.b16 %v8677, %v8670
  %v8930 = vpack.c.b16 %v8678, %v8671
  %v8931 = vpack.c.b16 %v8679, %v8672
  %v8932 = vpack.c.b16 %v8680, %v8673
  %v8933 = vpack.c.b16 %v8681, %v8674
  %v8934 = vpack.c.b16 %v8682, %v8675
  %v8935 = vpack.c.b16 %v8690, %v8683
  %v8936 = vpack.c.b16 %v8691, %v8684
  %v8937 = vpack.c.b16 %v8692, %v8685
  %v8938 = vpack.c.b16 %v8693, %v8686
  %v8939 = vpack.c.b16 %v8694, %v8687
  %v8940 = vpack.c.b16 %v8695, %v8688
  %v8941 = vpack.c.b16 %v8696, %v8689
  %v8942 = vpack.c.b16 %v8704, %v8697
  %v8943 = vpack.c.b16 %v8705, %v8698
  %v8944 = vpack.c.b16 %v8706, %v8699
  %v8945 = vpack.c.b16 %v8707, %v8700
  %v8946 = vpack.c.b16 %v8708, %v8701
  %v8947 = vpack.c.b16 %v8709, %v8702
  %v8948 = vpack.c.b16 %v8710, %v8703
  %v8949 = vpack.c.b16 %v8718, %v8711
  %v8950 = vpack.c.b16 %v8719, %v8712
  %v8951 = vpack.c.b16 %v8720, %v8713
  %v8952 = vpack.c.b16 %v8721, %v8714
  %v8953 = vpack.c.b16 %v8722, %v8715
  %v8954 = vpack.c.b16 %v8723, %v8716
  %v8955 = vpack.c.b16 %v8724, %v8717
  %v8956 = vpack.c.b16 %v8732, %v8725
  %v8957 = vpack.c.b16 %v8733, %v8726
  %v8958 = vpack.c.b16 %v8734, %v8727
  %v8959 = vpack.c.b16 %v8735, %v8728
  %v8960 = vpack.c.b16 %v8736, %v8729
  %v8961 = vpack.c.b16 %v8737, %v8730
  %v8962 = vpack.c.b16 %v8738, %v8731
  %v8963 = vpack.c.b16 %v8746, %v8739
  %v8964 = vpack.c.b16 %v8747, %v8740
  %v8965 = vpack.c.b16 %v8748, %v8741
  %v8966 = vpack.c.b16 %v8749, %v8742
  %v8967 = vpack.c.b16 %v8750, %v8743
  %v8968 = vpack.c.b16 %v8751, %v8744
  %v8969 = vpack.c.b16 %v8752, %v8745
  %v8970 = vpack.c.b16 %v8760, %v8753
  %v8971 = vpack.c.b16 %v8761, %v8754
  %v8972 = vpack.c.b16 %v8762, %v8755
  %v8973 = vpack.c.b16 %v8763, %v8756
  %v8974 = vpack.c.b16 %v8764, %v8757
  %v8975 = vpack.c.b16 %v8765, %v8758
  %v8976 = vpack.c.b16 %v8766, %v8759
  %v8977 = vpack.c.b16 %v8774, %v8767
  %v8978 = vpack.c.b16 %v8775, %v8768
  %v8979 = vpack.c.b16 %v8776, %v8769
  %v8980 = vpack.c.b16 %v8777, %v8770
  %v8981 = vpack.c.b16 %v8778, %v8771
  %v8982 = vpack.c.b16 %v8779, %v8772
  %v8983 = vpack.c.b16 %v8780, %v8773
  %v8984 = vpack.c.b16 %v8788, %v8781
  %v8985 = vpack.c.b16 %v8789, %v8782
  %v8986 = vpack.c.b16 %v8790, %v8783
  %v8987 = vpack.c.b16 %v8791, %v8784
  %v8988 = vpack.c.b16 %v8792, %v8785
  %v8989 = vpack.c.b16 %v8793, %v8786
  %v8990 = vpack.c.b16 %v8794, %v8787
  %v8991 = vpack.c.b16 %v8802, %v8795
  %v8992 = vpack.c.b16 %v8803, %v8796
  %v8993 = vpack.c.b16 %v8804, %v8797
  %v8994 = vpack.c.b16 %v8805, %v8798
  %v8995 = vpack.c.b16 %v8806, %v8799
  %v8996 = vpack.c.b16 %v8807, %v8800
  %v8997 = vpack.c.b16 %v8808, %v8801
  %v8998 = vpack.c.b16 %v8816, %v8809
  %v8999 = vpack.c.b16 %v8817, %v8810
  %v9000 = vpack.c.b16 %v8818, %v8811
  %v9001 = vpack.c.b16 %v8819, %v8812
  %v9002 = vpack.c.b16 %v8820, %v8813
  %v9003 = vpack.c.b16 %v8821, %v8814
  %v9004 = vpack.c.b16 %v8822, %v8815
  %v9005 = vpack.c.b16 %v8830, %v8823
  %v9006 = vpack.c.b16 %v8831, %v8824
  %v9007 = vpack.c.b16 %v8832, %v8825
  %v9008 = vpack.c.b16 %v8833, %v8826
  %v9009 = vpack.c.b16 %v8834, %v8827
  %v9010 = vpack.c.b16 %v8835, %v8828
  %v9011 = vpack.c.b16 %v8836, %v8829
  %v9188 = vsel %vm1948, %v7989, 0
  %v9191 = vsel %vm1948, %v7993, 0
  %v9194 = vsel %vm1948, %v7997, 0
  %v9197 = vsel %vm1948, %v8001, 0
  %v9200 = vsel %vm1948, %v8005, 0
  %v9203 = vsel %vm1948, %v8009, 0
  %v9206 = vsel %vm1948, %v8013, 0
  %v9209 = vsel %vm1948, %v8017, 0
  %v9212 = vsel %vm1948, %v8021, 0
  %v9215 = vsel %vm1948, %v8025, 0
  %v9218 = vsel %vm1948, %v8029, 0
  %v9221 = vsel %vm1948, %v8033, 0
  %v9224 = vsel %vm1948, %v8037, 0
  %v9227 = vsel %vm1948, %v8041, 0
  %v9230 = vsel %vm1948, %v8045, 0
  %v9233 = vsel %vm1948, %v8049, 0
  %9235 = vmatprep.subr.bf16.mxu0 %v8838
  %9236 = vmatpush1.bf16.msra.mxu0 %v8837
  %9237 = vmatprep.subr.bf16.mxu0 %v8845
  %9238 = vmatpush1.bf16.msra.mxu0 %v8844
  %9239 = vmatprep.subr.bf16.mxu0 %v8852
  %9240 = vmatpush1.bf16.msra.mxu0 %v8851
  %9241 = vmatprep.subr.bf16.mxu0 %v8859
  %9242 = vmatpush1.bf16.msra.mxu0 %v8858
  %9243 = vmatprep.subr.bf16.mxu0 %v8866
  %9244 = vmatpush1.bf16.msra.mxu0 %v8865
  %9245 = vmatprep.subr.bf16.mxu0 %v8873
  %9246 = vmatpush1.bf16.msra.mxu0 %v8872
  %9247 = vmatprep.subr.bf16.mxu0 %v8880
  %9248 = vmatpush1.bf16.msra.mxu0 %v8879
  %9249 = vmatprep.subr.bf16.mxu0 %v8887
  %9250 = vmatpush1.bf16.msra.mxu0 %v8886
  %9251 = vmatprep.subr.bf16.mxu0 %v8894
  %9252 = vmatpush1.bf16.msra.mxu0 %v8893
  %9253 = vmatprep.subr.bf16.mxu0 %v8901
  %9254 = vmatpush1.bf16.msra.mxu0 %v8900
  %9255 = vmatprep.subr.bf16.mxu0 %v8908
  %9256 = vmatpush1.bf16.msra.mxu0 %v8907
  %9257 = vmatprep.subr.bf16.mxu0 %v8915
  %9258 = vmatpush1.bf16.msra.mxu0 %v8914
  %9259 = vmatprep.subr.bf16.mxu0 %v8922
  %9260 = vmatpush1.bf16.msra.mxu0 %v8921
  %9261 = vmatprep.subr.bf16.mxu0 %v8929
  %9262 = vmatpush1.bf16.msra.mxu0 %v8928
  %9263 = vmatprep.subr.bf16.mxu0 %v8936
  %9264 = vmatpush1.bf16.msra.mxu0 %v8935
  %9265 = vmatprep.subr.bf16.mxu0 %v8943
  %9266 = vmatpush1.bf16.msra.mxu0 %v8942
  %9267 = vmatprep.mubr.bf16.mxu0 %v7987
  %9268 = vmatmul.mubr.bf16.gmra.mrb[0].mxu0 %v7986
  %v9269 = vpop.f32.mrb[0].mxu0
  %v9270 = vadd.f32 %v8255, %v9269
  %v9271 = vpop.f32.mrb[0].mxu0
  %v9272 = vadd.f32 %v8259, %v9271
  %v9273 = vpop.f32.mrb[0].mxu0
  %v9274 = vadd.f32 %v8255, %v9273
  %v9275 = vpop.f32.mrb[0].mxu0
  %v9276 = vadd.f32 %v8259, %v9275
  %9277 = vmatprep.mubr.bf16.mxu0 %v7991
  %9278 = vmatmul.mubr.bf16.gmra.mrb[0].mxu0 %v7990
  %v9279 = vpop.f32.mrb[0].mxu0
  %v9280 = vadd.f32 %v8255, %v9279
  %v9281 = vpop.f32.mrb[0].mxu0
  %v9282 = vadd.f32 %v8259, %v9281
  %v9283 = vpop.f32.mrb[0].mxu0
  %v9284 = vadd.f32 %v8255, %v9283
  %v9285 = vpop.f32.mrb[0].mxu0
  %v9286 = vadd.f32 %v8259, %v9285
  %9287 = vmatprep.mubr.bf16.mxu0 %v7995
  %9288 = vmatmul.mubr.bf16.gmra.mrb[0].mxu0 %v7994
  %v9289 = vpop.f32.mrb[0].mxu0
  %v9290 = vadd.f32 %v8255, %v9289
  %v9291 = vpop.f32.mrb[0].mxu0
  %v9292 = vadd.f32 %v8259, %v9291
  %v9293 = vpop.f32.mrb[0].mxu0
  %v9294 = vadd.f32 %v8255, %v9293
  %v9295 = vpop.f32.mrb[0].mxu0
  %v9296 = vadd.f32 %v8259, %v9295
  %9297 = vmatprep.mubr.bf16.mxu0 %v7999
  %9298 = vmatmul.mubr.bf16.gmra.mrb[0].mxu0 %v7998
  %v9299 = vpop.f32.mrb[0].mxu0
  %v9300 = vadd.f32 %v8255, %v9299
  %v9301 = vpop.f32.mrb[0].mxu0
  %v9302 = vadd.f32 %v8259, %v9301
  %v9303 = vpop.f32.mrb[0].mxu0
  %v9304 = vadd.f32 %v8255, %v9303
  %v9305 = vpop.f32.mrb[0].mxu0
  %v9306 = vadd.f32 %v8259, %v9305
  %9307 = vmatprep.mubr.bf16.mxu0 %v8003
  %9308 = vmatmul.mubr.bf16.gmra.mrb[0].mxu0 %v8002
  %v9309 = vpop.f32.mrb[0].mxu0
  %v9310 = vadd.f32 %v8255, %v9309
  %v9311 = vpop.f32.mrb[0].mxu0
  %v9312 = vadd.f32 %v8259, %v9311
  %v9313 = vpop.f32.mrb[0].mxu0
  %v9314 = vadd.f32 %v8255, %v9313
  %v9315 = vpop.f32.mrb[0].mxu0
  %v9316 = vadd.f32 %v8259, %v9315
  %9317 = vmatprep.mubr.bf16.mxu0 %v8007
  %9318 = vmatmul.mubr.bf16.gmra.mrb[0].mxu0 %v8006
  %v9319 = vpop.f32.mrb[0].mxu0
  %v9320 = vadd.f32 %v8255, %v9319
  %v9321 = vpop.f32.mrb[0].mxu0
  %v9322 = vadd.f32 %v8259, %v9321
  %v9323 = vpop.f32.mrb[0].mxu0
  %v9324 = vadd.f32 %v8255, %v9323
  %v9325 = vpop.f32.mrb[0].mxu0
  %v9326 = vadd.f32 %v8259, %v9325
  %9327 = vmatprep.mubr.bf16.mxu0 %v8011
  %9328 = vmatmul.mubr.bf16.gmra.mrb[0].mxu0 %v8010
  %v9329 = vpop.f32.mrb[0].mxu0
  %v9330 = vadd.f32 %v8255, %v9329
  %v9331 = vpop.f32.mrb[0].mxu0
  %v9332 = vadd.f32 %v8259, %v9331
  %v9333 = vpop.f32.mrb[0].mxu0
  %v9334 = vadd.f32 %v8255, %v9333
  %v9335 = vpop.f32.mrb[0].mxu0
  %v9336 = vadd.f32 %v8259, %v9335
  %9337 = vmatprep.mubr.bf16.mxu0 %v8015
  %9338 = vmatmul.mubr.bf16.gmra.mrb[0].mxu0 %v8014
  %v9339 = vpop.f32.mrb[0].mxu0
  %v9340 = vadd.f32 %v8255, %v9339
  %v9341 = vpop.f32.mrb[0].mxu0
  %v9342 = vadd.f32 %v8259, %v9341
  %v9343 = vpop.f32.mrb[0].mxu0
  %v9344 = vadd.f32 %v8255, %v9343
  %v9345 = vpop.f32.mrb[0].mxu0
  %v9346 = vadd.f32 %v8259, %v9345
  %9347 = vmatprep.mubr.bf16.mxu0 %v8019
  %9348 = vmatmul.mubr.bf16.gmra.mrb[0].mxu0 %v8018
  %v9349 = vpop.f32.mrb[0].mxu0
  %v9350 = vadd.f32 %v8255, %v9349
  %v9351 = vpop.f32.mrb[0].mxu0
  %v9352 = vadd.f32 %v8259, %v9351
  %v9353 = vpop.f32.mrb[0].mxu0
  %v9354 = vadd.f32 %v8255, %v9353
  %v9355 = vpop.f32.mrb[0].mxu0
  %v9356 = vadd.f32 %v8259, %v9355
  %9357 = vmatprep.mubr.bf16.mxu0 %v8023
  %9358 = vmatmul.mubr.bf16.gmra.mrb[0].mxu0 %v8022
  %v9359 = vpop.f32.mrb[0].mxu0
  %v9360 = vadd.f32 %v8255, %v9359
  %v9361 = vpop.f32.mrb[0].mxu0
  %v9362 = vadd.f32 %v8259, %v9361
  %v9363 = vpop.f32.mrb[0].mxu0
  %v9364 = vadd.f32 %v8255, %v9363
  %v9365 = vpop.f32.mrb[0].mxu0
  %v9366 = vadd.f32 %v8259, %v9365
  %9367 = vmatprep.mubr.bf16.mxu0 %v8027
  %9368 = vmatmul.mubr.bf16.gmra.mrb[0].mxu0 %v8026
  %v9369 = vpop.f32.mrb[0].mxu0
  %v9370 = vadd.f32 %v8255, %v9369
  %v9371 = vpop.f32.mrb[0].mxu0
  %v9372 = vadd.f32 %v8259, %v9371
  %v9373 = vpop.f32.mrb[0].mxu0
  %v9374 = vadd.f32 %v8255, %v9373
  %v9375 = vpop.f32.mrb[0].mxu0
  %v9376 = vadd.f32 %v8259, %v9375
  %9377 = vmatprep.mubr.bf16.mxu0 %v8031
  %9378 = vmatmul.mubr.bf16.gmra.mrb[0].mxu0 %v8030
  %v9379 = vpop.f32.mrb[0].mxu0
  %v9380 = vadd.f32 %v8255, %v9379
  %v9381 = vpop.f32.mrb[0].mxu0
  %v9382 = vadd.f32 %v8259, %v9381
  %v9383 = vpop.f32.mrb[0].mxu0
  %v9384 = vadd.f32 %v8255, %v9383
  %v9385 = vpop.f32.mrb[0].mxu0
  %v9386 = vadd.f32 %v8259, %v9385
  %9387 = vmatprep.mubr.bf16.mxu0 %v8035
  %9388 = vmatmul.mubr.bf16.gmra.mrb[0].mxu0 %v8034
  %v9389 = vpop.f32.mrb[0].mxu0
  %v9390 = vadd.f32 %v8255, %v9389
  %v9391 = vpop.f32.mrb[0].mxu0
  %v9392 = vadd.f32 %v8259, %v9391
  %v9393 = vpop.f32.mrb[0].mxu0
  %v9394 = vadd.f32 %v8255, %v9393
  %v9395 = vpop.f32.mrb[0].mxu0
  %v9396 = vadd.f32 %v8259, %v9395
  %9397 = vmatprep.mubr.bf16.mxu0 %v8039
  %9398 = vmatmul.mubr.bf16.gmra.mrb[0].mxu0 %v8038
  %v9399 = vpop.f32.mrb[0].mxu0
  %v9400 = vadd.f32 %v8255, %v9399
  %v9401 = vpop.f32.mrb[0].mxu0
  %v9402 = vadd.f32 %v8259, %v9401
  %v9403 = vpop.f32.mrb[0].mxu0
  %v9404 = vadd.f32 %v8255, %v9403
  %v9405 = vpop.f32.mrb[0].mxu0
  %v9406 = vadd.f32 %v8259, %v9405
  %9407 = vmatprep.mubr.bf16.mxu0 %v8043
  %9408 = vmatmul.mubr.bf16.gmra.mrb[0].mxu0 %v8042
  %v9409 = vpop.f32.mrb[0].mxu0
  %v9410 = vadd.f32 %v8255, %v9409
  %v9411 = vpop.f32.mrb[0].mxu0
  %v9412 = vadd.f32 %v8259, %v9411
  %v9413 = vpop.f32.mrb[0].mxu0
  %v9414 = vadd.f32 %v8255, %v9413
  %v9415 = vpop.f32.mrb[0].mxu0
  %v9416 = vadd.f32 %v8259, %v9415
  %9417 = vmatprep.mubr.bf16.mxu0 %v8047
  %9418 = vmatmul.mubr.bf16.gmra.mrb[0].mxu0 %v8046
  %v9419 = vpop.f32.mrb[0].mxu0
  %v9420 = vadd.f32 %v8255, %v9419
  %v9421 = vpop.f32.mrb[0].mxu0
  %v9422 = vadd.f32 %v8259, %v9421
  %v9423 = vpop.f32.mrb[0].mxu0
  %v9424 = vadd.f32 %v8255, %v9423
  %v9425 = vpop.f32.mrb[0].mxu0
  %v9426 = vadd.f32 %v8259, %v9425
  %9427 = vdwg.mxu0
  %9428 = vmatprep.subr.bf16.mxu0 %v8950
  %9429 = vmatpush1.bf16.msra.mxu0 %v8949
  %9430 = vmatprep.subr.bf16.mxu0 %v8957
  %9431 = vmatpush1.bf16.msra.mxu0 %v8956
  %9432 = vmatprep.subr.bf16.mxu0 %v8964
  %9433 = vmatpush1.bf16.msra.mxu0 %v8963
  %9434 = vmatprep.subr.bf16.mxu0 %v8971
  %9435 = vmatpush1.bf16.msra.mxu0 %v8970
  %9436 = vmatprep.subr.bf16.mxu0 %v8978
  %9437 = vmatpush1.bf16.msra.mxu0 %v8977
  %9438 = vmatprep.subr.bf16.mxu0 %v8985
  %9439 = vmatpush1.bf16.msra.mxu0 %v8984
  %9440 = vmatprep.subr.bf16.mxu0 %v8992
  %9441 = vmatpush1.bf16.msra.mxu0 %v8991
  %9442 = vmatprep.subr.bf16.mxu0 %v8999
  %9443 = vmatpush1.bf16.msra.mxu0 %v8998
  %9444 = vmatprep.subr.bf16.mxu0 %v9006
  %9445 = vmatpush1.bf16.msra.mxu0 %v9005
  %9446 = vmatprep.subr.bf16.mxu0 0
  %9447 = vmatpush1.bf16.msra.mxu0 0
  %9448 = vmatprep.subr.bf16.mxu0 0
  %9449 = vmatpush1.bf16.msra.mxu0 0
  %9450 = vmatprep.subr.bf16.mxu0 0
  %9451 = vmatpush1.bf16.msra.mxu0 0
  %9452 = vmatprep.subr.bf16.mxu0 0
  %9453 = vmatpush1.bf16.msra.mxu0 0
  %9454 = vmatprep.subr.bf16.mxu0 0
  %9455 = vmatpush1.bf16.msra.mxu0 0
  %9456 = vmatprep.subr.bf16.mxu0 0
  %9457 = vmatpush1.bf16.msra.mxu0 0
  %9458 = vmatprep.subr.bf16.mxu0 0
  %9459 = vmatpush1.bf16.msra.mxu0 0
  %9460 = vmatprep.mubr.bf16.mxu0 %v9188
  %9461 = vmatmul.mubr.bf16.gmra.mrb[0].mxu0 %v7988
  %v9462 = vpop.f32.mrb[0].mxu0
  %v9463 = vadd.f32 %v9270, %v9462
  %v9464 = vpop.f32.mrb[0].mxu0
  %v9465 = vadd.f32 %v9272, %v9464
  %v9466 = vpop.f32.mrb[0].mxu0
  %v9467 = vadd.f32 %v9274, %v9466
  %v9468 = vpop.f32.mrb[0].mxu0
  %v9469 = vadd.f32 %v9276, %v9468
  %9470 = vmatprep.mubr.bf16.mxu0 %v9191
  %9471 = vmatmul.mubr.bf16.gmra.mrb[0].mxu0 %v7992
  %v9472 = vpop.f32.mrb[0].mxu0
  %v9473 = vadd.f32 %v9280, %v9472
  %v9474 = vpop.f32.mrb[0].mxu0
  %v9475 = vadd.f32 %v9282, %v9474
  %v9476 = vpop.f32.mrb[0].mxu0
  %v9477 = vadd.f32 %v9284, %v9476
  %v9478 = vpop.f32.mrb[0].mxu0
  %v9479 = vadd.f32 %v9286, %v9478
  %9480 = vmatprep.mubr.bf16.mxu0 %v9194
  %9481 = vmatmul.mubr.bf16.gmra.mrb[0].mxu0 %v7996
  %v9482 = vpop.f32.mrb[0].mxu0
  %v9483 = vadd.f32 %v9290, %v9482
  %v9484 = vpop.f32.mrb[0].mxu0
  %v9485 = vadd.f32 %v9292, %v9484
  %v9486 = vpop.f32.mrb[0].mxu0
  %v9487 = vadd.f32 %v9294, %v9486
  %v9488 = vpop.f32.mrb[0].mxu0
  %v9489 = vadd.f32 %v9296, %v9488
  %9490 = vmatprep.mubr.bf16.mxu0 %v9197
  %9491 = vmatmul.mubr.bf16.gmra.mrb[0].mxu0 %v8000
  %v9492 = vpop.f32.mrb[0].mxu0
  %v9493 = vadd.f32 %v9300, %v9492
  %v9494 = vpop.f32.mrb[0].mxu0
  %v9495 = vadd.f32 %v9302, %v9494
  %v9496 = vpop.f32.mrb[0].mxu0
  %v9497 = vadd.f32 %v9304, %v9496
  %v9498 = vpop.f32.mrb[0].mxu0
  %v9499 = vadd.f32 %v9306, %v9498
  %9500 = vmatprep.mubr.bf16.mxu0 %v9200
  %9501 = vmatmul.mubr.bf16.gmra.mrb[0].mxu0 %v8004
  %v9502 = vpop.f32.mrb[0].mxu0
  %v9503 = vadd.f32 %v9310, %v9502
  %v9504 = vpop.f32.mrb[0].mxu0
  %v9505 = vadd.f32 %v9312, %v9504
  %v9506 = vpop.f32.mrb[0].mxu0
  %v9507 = vadd.f32 %v9314, %v9506
  %v9508 = vpop.f32.mrb[0].mxu0
  %v9509 = vadd.f32 %v9316, %v9508
  %9510 = vmatprep.mubr.bf16.mxu0 %v9203
  %9511 = vmatmul.mubr.bf16.gmra.mrb[0].mxu0 %v8008
  %v9512 = vpop.f32.mrb[0].mxu0
  %v9513 = vadd.f32 %v9320, %v9512
  %v9514 = vpop.f32.mrb[0].mxu0
  %v9515 = vadd.f32 %v9322, %v9514
  %v9516 = vpop.f32.mrb[0].mxu0
  %v9517 = vadd.f32 %v9324, %v9516
  %v9518 = vpop.f32.mrb[0].mxu0
  %v9519 = vadd.f32 %v9326, %v9518
  %9520 = vmatprep.mubr.bf16.mxu0 %v9206
  %9521 = vmatmul.mubr.bf16.gmra.mrb[0].mxu0 %v8012
  %v9522 = vpop.f32.mrb[0].mxu0
  %v9523 = vadd.f32 %v9330, %v9522
  %v9524 = vpop.f32.mrb[0].mxu0
  %v9525 = vadd.f32 %v9332, %v9524
  %v9526 = vpop.f32.mrb[0].mxu0
  %v9527 = vadd.f32 %v9334, %v9526
  %v9528 = vpop.f32.mrb[0].mxu0
  %v9529 = vadd.f32 %v9336, %v9528
  %9530 = vmatprep.mubr.bf16.mxu0 %v9209
  %9531 = vmatmul.mubr.bf16.gmra.mrb[0].mxu0 %v8016
  %v9532 = vpop.f32.mrb[0].mxu0
  %v9533 = vadd.f32 %v9340, %v9532
  %v9534 = vpop.f32.mrb[0].mxu0
  %v9535 = vadd.f32 %v9342, %v9534
  %v9536 = vpop.f32.mrb[0].mxu0
  %v9537 = vadd.f32 %v9344, %v9536
  %v9538 = vpop.f32.mrb[0].mxu0
  %v9539 = vadd.f32 %v9346, %v9538
  %9540 = vmatprep.mubr.bf16.mxu0 %v9212
  %9541 = vmatmul.mubr.bf16.gmra.mrb[0].mxu0 %v8020
  %v9542 = vpop.f32.mrb[0].mxu0
  %v9543 = vadd.f32 %v9350, %v9542
  %v9544 = vpop.f32.mrb[0].mxu0
  %v9545 = vadd.f32 %v9352, %v9544
  %v9546 = vpop.f32.mrb[0].mxu0
  %v9547 = vadd.f32 %v9354, %v9546
  %v9548 = vpop.f32.mrb[0].mxu0
  %v9549 = vadd.f32 %v9356, %v9548
  %9550 = vmatprep.mubr.bf16.mxu0 %v9215
  %9551 = vmatmul.mubr.bf16.gmra.mrb[0].mxu0 %v8024
  %v9552 = vpop.f32.mrb[0].mxu0
  %v9553 = vadd.f32 %v9360, %v9552
  %v9554 = vpop.f32.mrb[0].mxu0
  %v9555 = vadd.f32 %v9362, %v9554
  %v9556 = vpop.f32.mrb[0].mxu0
  %v9557 = vadd.f32 %v9364, %v9556
  %v9558 = vpop.f32.mrb[0].mxu0
  %v9559 = vadd.f32 %v9366, %v9558
  %9560 = vmatprep.mubr.bf16.mxu0 %v9218
  %9561 = vmatmul.mubr.bf16.gmra.mrb[0].mxu0 %v8028
  %v9562 = vpop.f32.mrb[0].mxu0
  %v9563 = vadd.f32 %v9370, %v9562
  %v9564 = vpop.f32.mrb[0].mxu0
  %v9565 = vadd.f32 %v9372, %v9564
  %v9566 = vpop.f32.mrb[0].mxu0
  %v9567 = vadd.f32 %v9374, %v9566
  %v9568 = vpop.f32.mrb[0].mxu0
  %v9569 = vadd.f32 %v9376, %v9568
  %9570 = vmatprep.mubr.bf16.mxu0 %v9221
  %9571 = vmatmul.mubr.bf16.gmra.mrb[0].mxu0 %v8032
  %v9572 = vpop.f32.mrb[0].mxu0
  %v9573 = vadd.f32 %v9380, %v9572
  %v9574 = vpop.f32.mrb[0].mxu0
  %v9575 = vadd.f32 %v9382, %v9574
  %v9576 = vpop.f32.mrb[0].mxu0
  %v9577 = vadd.f32 %v9384, %v9576
  %v9578 = vpop.f32.mrb[0].mxu0
  %v9579 = vadd.f32 %v9386, %v9578
  %9580 = vmatprep.mubr.bf16.mxu0 %v9224
  %9581 = vmatmul.mubr.bf16.gmra.mrb[0].mxu0 %v8036
  %v9582 = vpop.f32.mrb[0].mxu0
  %v9583 = vadd.f32 %v9390, %v9582
  %v9584 = vpop.f32.mrb[0].mxu0
  %v9585 = vadd.f32 %v9392, %v9584
  %v9586 = vpop.f32.mrb[0].mxu0
  %v9587 = vadd.f32 %v9394, %v9586
  %v9588 = vpop.f32.mrb[0].mxu0
  %v9589 = vadd.f32 %v9396, %v9588
  %9590 = vmatprep.mubr.bf16.mxu0 %v9227
  %9591 = vmatmul.mubr.bf16.gmra.mrb[0].mxu0 %v8040
  %v9592 = vpop.f32.mrb[0].mxu0
  %v9593 = vadd.f32 %v9400, %v9592
  %v9594 = vpop.f32.mrb[0].mxu0
  %v9595 = vadd.f32 %v9402, %v9594
  %v9596 = vpop.f32.mrb[0].mxu0
  %v9597 = vadd.f32 %v9404, %v9596
  %v9598 = vpop.f32.mrb[0].mxu0
  %v9599 = vadd.f32 %v9406, %v9598
  %9600 = vmatprep.mubr.bf16.mxu0 %v9230
  %9601 = vmatmul.mubr.bf16.gmra.mrb[0].mxu0 %v8044
  %v9602 = vpop.f32.mrb[0].mxu0
  %v9603 = vadd.f32 %v9410, %v9602
  %v9604 = vpop.f32.mrb[0].mxu0
  %v9605 = vadd.f32 %v9412, %v9604
  %v9606 = vpop.f32.mrb[0].mxu0
  %v9607 = vadd.f32 %v9414, %v9606
  %v9608 = vpop.f32.mrb[0].mxu0
  %v9609 = vadd.f32 %v9416, %v9608
  %9610 = vmatprep.mubr.bf16.mxu0 %v9233
  %9611 = vmatmul.mubr.bf16.gmra.mrb[0].mxu0 %v8048
  %v9612 = vpop.f32.mrb[0].mxu0
  %v9613 = vadd.f32 %v9420, %v9612
  %v9614 = vpop.f32.mrb[0].mxu0
  %v9615 = vadd.f32 %v9422, %v9614
  %v9616 = vpop.f32.mrb[0].mxu0
  %v9617 = vadd.f32 %v9424, %v9616
  %v9618 = vpop.f32.mrb[0].mxu0
  %v9619 = vadd.f32 %v9426, %v9618
  %9620 = vdwg.mxu0
  %9621 = vmatprep.subr.bf16.mxu0 %v8840
  %9622 = vmatpush1.bf16.msra.mxu0 %v8839
  %9623 = vmatprep.subr.bf16.mxu0 %v8847
  %9624 = vmatpush1.bf16.msra.mxu0 %v8846
  %9625 = vmatprep.subr.bf16.mxu0 %v8854
  %9626 = vmatpush1.bf16.msra.mxu0 %v8853
  %9627 = vmatprep.subr.bf16.mxu0 %v8861
  %9628 = vmatpush1.bf16.msra.mxu0 %v8860
  %9629 = vmatprep.subr.bf16.mxu0 %v8868
  %9630 = vmatpush1.bf16.msra.mxu0 %v8867
  %9631 = vmatprep.subr.bf16.mxu0 %v8875
  %9632 = vmatpush1.bf16.msra.mxu0 %v8874
  %9633 = vmatprep.subr.bf16.mxu0 %v8882
  %9634 = vmatpush1.bf16.msra.mxu0 %v8881
  %9635 = vmatprep.subr.bf16.mxu0 %v8889
  %9636 = vmatpush1.bf16.msra.mxu0 %v8888
  %9637 = vmatprep.subr.bf16.mxu0 %v8896
  %9638 = vmatpush1.bf16.msra.mxu0 %v8895
  %9639 = vmatprep.subr.bf16.mxu0 %v8903
  %9640 = vmatpush1.bf16.msra.mxu0 %v8902
  %9641 = vmatprep.subr.bf16.mxu0 %v8910
  %9642 = vmatpush1.bf16.msra.mxu0 %v8909
  %9643 = vmatprep.subr.bf16.mxu0 %v8917
  %9644 = vmatpush1.bf16.msra.mxu0 %v8916
  %9645 = vmatprep.subr.bf16.mxu0 %v8924
  %9646 = vmatpush1.bf16.msra.mxu0 %v8923
  %9647 = vmatprep.subr.bf16.mxu0 %v8931
  %9648 = vmatpush1.bf16.msra.mxu0 %v8930
  %9649 = vmatprep.subr.bf16.mxu0 %v8938
  %9650 = vmatpush1.bf16.msra.mxu0 %v8937
  %9651 = vmatprep.subr.bf16.mxu0 %v8945
  %9652 = vmatpush1.bf16.msra.mxu0 %v8944
  %9653 = vmatprep.mubr.bf16.mxu0 %v7987
  %9654 = vmatmul.mubr.bf16.gmra.mrb[0].mxu0 %v7986
  %v9655 = vpop.f32.mrb[0].mxu0
  %v9656 = vadd.f32 %v8263, %v9655
  %v9657 = vpop.f32.mrb[0].mxu0
  %v9658 = vadd.f32 %v8267, %v9657
  %v9659 = vpop.f32.mrb[0].mxu0
  %v9660 = vadd.f32 %v8263, %v9659
  %v9661 = vpop.f32.mrb[0].mxu0
  %v9662 = vadd.f32 %v8267, %v9661
  %9663 = vmatprep.mubr.bf16.mxu0 %v7991
  %9664 = vmatmul.mubr.bf16.gmra.mrb[0].mxu0 %v7990
  %v9665 = vpop.f32.mrb[0].mxu0
  %v9666 = vadd.f32 %v8263, %v9665
  %v9667 = vpop.f32.mrb[0].mxu0
  %v9668 = vadd.f32 %v8267, %v9667
  %v9669 = vpop.f32.mrb[0].mxu0
  %v9670 = vadd.f32 %v8263, %v9669
  %v9671 = vpop.f32.mrb[0].mxu0
  %v9672 = vadd.f32 %v8267, %v9671
  %9673 = vmatprep.mubr.bf16.mxu0 %v7995
  %9674 = vmatmul.mubr.bf16.gmra.mrb[0].mxu0 %v7994
  %v9675 = vpop.f32.mrb[0].mxu0
  %v9676 = vadd.f32 %v8263, %v9675
  %v9677 = vpop.f32.mrb[0].mxu0
  %v9678 = vadd.f32 %v8267, %v9677
  %v9679 = vpop.f32.mrb[0].mxu0
  %v9680 = vadd.f32 %v8263, %v9679
  %v9681 = vpop.f32.mrb[0].mxu0
  %v9682 = vadd.f32 %v8267, %v9681
  %9683 = vmatprep.mubr.bf16.mxu0 %v7999
  %9684 = vmatmul.mubr.bf16.gmra.mrb[0].mxu0 %v7998
  %v9685 = vpop.f32.mrb[0].mxu0
  %v9686 = vadd.f32 %v8263, %v9685
  %v9687 = vpop.f32.mrb[0].mxu0
  %v9688 = vadd.f32 %v8267, %v9687
  %v9689 = vpop.f32.mrb[0].mxu0
  %v9690 = vadd.f32 %v8263, %v9689
  %v9691 = vpop.f32.mrb[0].mxu0
  %v9692 = vadd.f32 %v8267, %v9691
  %9693 = vmatprep.mubr.bf16.mxu0 %v8003
  %9694 = vmatmul.mubr.bf16.gmra.mrb[0].mxu0 %v8002
  %v9695 = vpop.f32.mrb[0].mxu0
  %v9696 = vadd.f32 %v8263, %v9695
  %v9697 = vpop.f32.mrb[0].mxu0
  %v9698 = vadd.f32 %v8267, %v9697
  %v9699 = vpop.f32.mrb[0].mxu0
  %v9700 = vadd.f32 %v8263, %v9699
  %v9701 = vpop.f32.mrb[0].mxu0
  %v9702 = vadd.f32 %v8267, %v9701
  %9703 = vmatprep.mubr.bf16.mxu0 %v8007
  %9704 = vmatmul.mubr.bf16.gmra.mrb[0].mxu0 %v8006
  %v9705 = vpop.f32.mrb[0].mxu0
  %v9706 = vadd.f32 %v8263, %v9705
  %v9707 = vpop.f32.mrb[0].mxu0
  %v9708 = vadd.f32 %v8267, %v9707
  %v9709 = vpop.f32.mrb[0].mxu0
  %v9710 = vadd.f32 %v8263, %v9709
  %v9711 = vpop.f32.mrb[0].mxu0
  %v9712 = vadd.f32 %v8267, %v9711
  %9713 = vmatprep.mubr.bf16.mxu0 %v8011
  %9714 = vmatmul.mubr.bf16.gmra.mrb[0].mxu0 %v8010
  %v9715 = vpop.f32.mrb[0].mxu0
  %v9716 = vadd.f32 %v8263, %v9715
  %v9717 = vpop.f32.mrb[0].mxu0
  %v9718 = vadd.f32 %v8267, %v9717
  %v9719 = vpop.f32.mrb[0].mxu0
  %v9720 = vadd.f32 %v8263, %v9719
  %v9721 = vpop.f32.mrb[0].mxu0
  %v9722 = vadd.f32 %v8267, %v9721
  %9723 = vmatprep.mubr.bf16.mxu0 %v8015
  %9724 = vmatmul.mubr.bf16.gmra.mrb[0].mxu0 %v8014
  %v9725 = vpop.f32.mrb[0].mxu0
  %v9726 = vadd.f32 %v8263, %v9725
  %v9727 = vpop.f32.mrb[0].mxu0
  %v9728 = vadd.f32 %v8267, %v9727
  %v9729 = vpop.f32.mrb[0].mxu0
  %v9730 = vadd.f32 %v8263, %v9729
  %v9731 = vpop.f32.mrb[0].mxu0
  %v9732 = vadd.f32 %v8267, %v9731
  %9733 = vmatprep.mubr.bf16.mxu0 %v8019
  %9734 = vmatmul.mubr.bf16.gmra.mrb[0].mxu0 %v8018
  %v9735 = vpop.f32.mrb[0].mxu0
  %v9736 = vadd.f32 %v8263, %v9735
  %v9737 = vpop.f32.mrb[0].mxu0
  %v9738 = vadd.f32 %v8267, %v9737
  %v9739 = vpop.f32.mrb[0].mxu0
  %v9740 = vadd.f32 %v8263, %v9739
  %v9741 = vpop.f32.mrb[0].mxu0
  %v9742 = vadd.f32 %v8267, %v9741
  %9743 = vmatprep.mubr.bf16.mxu0 %v8023
  %9744 = vmatmul.mubr.bf16.gmra.mrb[0].mxu0 %v8022
  %v9745 = vpop.f32.mrb[0].mxu0
  %v9746 = vadd.f32 %v8263, %v9745
  %v9747 = vpop.f32.mrb[0].mxu0
  %v9748 = vadd.f32 %v8267, %v9747
  %v9749 = vpop.f32.mrb[0].mxu0
  %v9750 = vadd.f32 %v8263, %v9749
  %v9751 = vpop.f32.mrb[0].mxu0
  %v9752 = vadd.f32 %v8267, %v9751
  %9753 = vmatprep.mubr.bf16.mxu0 %v8027
  %9754 = vmatmul.mubr.bf16.gmra.mrb[0].mxu0 %v8026
  %v9755 = vpop.f32.mrb[0].mxu0
  %v9756 = vadd.f32 %v8263, %v9755
  %v9757 = vpop.f32.mrb[0].mxu0
  %v9758 = vadd.f32 %v8267, %v9757
  %v9759 = vpop.f32.mrb[0].mxu0
  %v9760 = vadd.f32 %v8263, %v9759
  %v9761 = vpop.f32.mrb[0].mxu0
  %v9762 = vadd.f32 %v8267, %v9761
  %9763 = vmatprep.mubr.bf16.mxu0 %v8031
  %9764 = vmatmul.mubr.bf16.gmra.mrb[0].mxu0 %v8030
  %v9765 = vpop.f32.mrb[0].mxu0
  %v9766 = vadd.f32 %v8263, %v9765
  %v9767 = vpop.f32.mrb[0].mxu0
  %v9768 = vadd.f32 %v8267, %v9767
  %v9769 = vpop.f32.mrb[0].mxu0
  %v9770 = vadd.f32 %v8263, %v9769
  %v9771 = vpop.f32.mrb[0].mxu0
  %v9772 = vadd.f32 %v8267, %v9771
  %9773 = vmatprep.mubr.bf16.mxu0 %v8035
  %9774 = vmatmul.mubr.bf16.gmra.mrb[0].mxu0 %v8034
  %v9775 = vpop.f32.mrb[0].mxu0
  %v9776 = vadd.f32 %v8263, %v9775
  %v9777 = vpop.f32.mrb[0].mxu0
  %v9778 = vadd.f32 %v8267, %v9777
  %v9779 = vpop.f32.mrb[0].mxu0
  %v9780 = vadd.f32 %v8263, %v9779
  %v9781 = vpop.f32.mrb[0].mxu0
  %v9782 = vadd.f32 %v8267, %v9781
  %9783 = vmatprep.mubr.bf16.mxu0 %v8039
  %9784 = vmatmul.mubr.bf16.gmra.mrb[0].mxu0 %v8038
  %v9785 = vpop.f32.mrb[0].mxu0
  %v9786 = vadd.f32 %v8263, %v9785
  %v9787 = vpop.f32.mrb[0].mxu0
  %v9788 = vadd.f32 %v8267, %v9787
  %v9789 = vpop.f32.mrb[0].mxu0
  %v9790 = vadd.f32 %v8263, %v9789
  %v9791 = vpop.f32.mrb[0].mxu0
  %v9792 = vadd.f32 %v8267, %v9791
  %9793 = vmatprep.mubr.bf16.mxu0 %v8043
  %9794 = vmatmul.mubr.bf16.gmra.mrb[0].mxu0 %v8042
  %v9795 = vpop.f32.mrb[0].mxu0
  %v9796 = vadd.f32 %v8263, %v9795
  %v9797 = vpop.f32.mrb[0].mxu0
  %v9798 = vadd.f32 %v8267, %v9797
  %v9799 = vpop.f32.mrb[0].mxu0
  %v9800 = vadd.f32 %v8263, %v9799
  %v9801 = vpop.f32.mrb[0].mxu0
  %v9802 = vadd.f32 %v8267, %v9801
  %9803 = vmatprep.mubr.bf16.mxu0 %v8047
  %9804 = vmatmul.mubr.bf16.gmra.mrb[0].mxu0 %v8046
  %v9805 = vpop.f32.mrb[0].mxu0
  %v9806 = vadd.f32 %v8263, %v9805
  %v9807 = vpop.f32.mrb[0].mxu0
  %v9808 = vadd.f32 %v8267, %v9807
  %v9809 = vpop.f32.mrb[0].mxu0
  %v9810 = vadd.f32 %v8263, %v9809
  %v9811 = vpop.f32.mrb[0].mxu0
  %v9812 = vadd.f32 %v8267, %v9811
  %9813 = vdwg.mxu0
  %9814 = vmatprep.subr.bf16.mxu0 %v8952
  %9815 = vmatpush1.bf16.msra.mxu0 %v8951
  %9816 = vmatprep.subr.bf16.mxu0 %v8959
  %9817 = vmatpush1.bf16.msra.mxu0 %v8958
  %9818 = vmatprep.subr.bf16.mxu0 %v8966
  %9819 = vmatpush1.bf16.msra.mxu0 %v8965
  %9820 = vmatprep.subr.bf16.mxu0 %v8973
  %9821 = vmatpush1.bf16.msra.mxu0 %v8972
  %9822 = vmatprep.subr.bf16.mxu0 %v8980
  %9823 = vmatpush1.bf16.msra.mxu0 %v8979
  %9824 = vmatprep.subr.bf16.mxu0 %v8987
  %9825 = vmatpush1.bf16.msra.mxu0 %v8986
  %9826 = vmatprep.subr.bf16.mxu0 %v8994
  %9827 = vmatpush1.bf16.msra.mxu0 %v8993
  %9828 = vmatprep.subr.bf16.mxu0 %v9001
  %9829 = vmatpush1.bf16.msra.mxu0 %v9000
  %9830 = vmatprep.subr.bf16.mxu0 %v9008
  %9831 = vmatpush1.bf16.msra.mxu0 %v9007
  %9832 = vmatprep.subr.bf16.mxu0 0
  %9833 = vmatpush1.bf16.msra.mxu0 0
  %9834 = vmatprep.subr.bf16.mxu0 0
  %9835 = vmatpush1.bf16.msra.mxu0 0
  %9836 = vmatprep.subr.bf16.mxu0 0
  %9837 = vmatpush1.bf16.msra.mxu0 0
  %9838 = vmatprep.subr.bf16.mxu0 0
  %9839 = vmatpush1.bf16.msra.mxu0 0
  %9840 = vmatprep.subr.bf16.mxu0 0
  %9841 = vmatpush1.bf16.msra.mxu0 0
  %9842 = vmatprep.subr.bf16.mxu0 0
  %9843 = vmatpush1.bf16.msra.mxu0 0
  %9844 = vmatprep.subr.bf16.mxu0 0
  %9845 = vmatpush1.bf16.msra.mxu0 0
  %9846 = vmatprep.mubr.bf16.mxu0 %v9188
  %9847 = vmatmul.mubr.bf16.gmra.mrb[0].mxu0 %v7988
  %v9848 = vpop.f32.mrb[0].mxu0
  %v9849 = vadd.f32 %v9656, %v9848
  %v9850 = vpop.f32.mrb[0].mxu0
  %v9851 = vadd.f32 %v9658, %v9850
  %v9852 = vpop.f32.mrb[0].mxu0
  %v9853 = vadd.f32 %v9660, %v9852
  %v9854 = vpop.f32.mrb[0].mxu0
  %v9855 = vadd.f32 %v9662, %v9854
  %9856 = vmatprep.mubr.bf16.mxu0 %v9191
  %9857 = vmatmul.mubr.bf16.gmra.mrb[0].mxu0 %v7992
  %v9858 = vpop.f32.mrb[0].mxu0
  %v9859 = vadd.f32 %v9666, %v9858
  %v9860 = vpop.f32.mrb[0].mxu0
  %v9861 = vadd.f32 %v9668, %v9860
  %v9862 = vpop.f32.mrb[0].mxu0
  %v9863 = vadd.f32 %v9670, %v9862
  %v9864 = vpop.f32.mrb[0].mxu0
  %v9865 = vadd.f32 %v9672, %v9864
  %9866 = vmatprep.mubr.bf16.mxu0 %v9194
  %9867 = vmatmul.mubr.bf16.gmra.mrb[0].mxu0 %v7996
  %v9868 = vpop.f32.mrb[0].mxu0
  %v9869 = vadd.f32 %v9676, %v9868
  %v9870 = vpop.f32.mrb[0].mxu0
  %v9871 = vadd.f32 %v9678, %v9870
  %v9872 = vpop.f32.mrb[0].mxu0
  %v9873 = vadd.f32 %v9680, %v9872
  %v9874 = vpop.f32.mrb[0].mxu0
  %v9875 = vadd.f32 %v9682, %v9874
  %9876 = vmatprep.mubr.bf16.mxu0 %v9197
  %9877 = vmatmul.mubr.bf16.gmra.mrb[0].mxu0 %v8000
  %v9878 = vpop.f32.mrb[0].mxu0
  %v9879 = vadd.f32 %v9686, %v9878
  %v9880 = vpop.f32.mrb[0].mxu0
  %v9881 = vadd.f32 %v9688, %v9880
  %v9882 = vpop.f32.mrb[0].mxu0
  %v9883 = vadd.f32 %v9690, %v9882
  %v9884 = vpop.f32.mrb[0].mxu0
  %v9885 = vadd.f32 %v9692, %v9884
  %9886 = vmatprep.mubr.bf16.mxu0 %v9200
  %9887 = vmatmul.mubr.bf16.gmra.mrb[0].mxu0 %v8004
  %v9888 = vpop.f32.mrb[0].mxu0
  %v9889 = vadd.f32 %v9696, %v9888
  %v9890 = vpop.f32.mrb[0].mxu0
  %v9891 = vadd.f32 %v9698, %v9890
  %v9892 = vpop.f32.mrb[0].mxu0
  %v9893 = vadd.f32 %v9700, %v9892
  %v9894 = vpop.f32.mrb[0].mxu0
  %v9895 = vadd.f32 %v9702, %v9894
  %9896 = vmatprep.mubr.bf16.mxu0 %v9203
  %9897 = vmatmul.mubr.bf16.gmra.mrb[0].mxu0 %v8008
  %v9898 = vpop.f32.mrb[0].mxu0
  %v9899 = vadd.f32 %v9706, %v9898
  %v9900 = vpop.f32.mrb[0].mxu0
  %v9901 = vadd.f32 %v9708, %v9900
  %v9902 = vpop.f32.mrb[0].mxu0
  %v9903 = vadd.f32 %v9710, %v9902
  %v9904 = vpop.f32.mrb[0].mxu0
  %v9905 = vadd.f32 %v9712, %v9904
  %9906 = vmatprep.mubr.bf16.mxu0 %v9206
  %9907 = vmatmul.mubr.bf16.gmra.mrb[0].mxu0 %v8012
  %v9908 = vpop.f32.mrb[0].mxu0
  %v9909 = vadd.f32 %v9716, %v9908
  %v9910 = vpop.f32.mrb[0].mxu0
  %v9911 = vadd.f32 %v9718, %v9910
  %v9912 = vpop.f32.mrb[0].mxu0
  %v9913 = vadd.f32 %v9720, %v9912
  %v9914 = vpop.f32.mrb[0].mxu0
  %v9915 = vadd.f32 %v9722, %v9914
  %9916 = vmatprep.mubr.bf16.mxu0 %v9209
  %9917 = vmatmul.mubr.bf16.gmra.mrb[0].mxu0 %v8016
  %v9918 = vpop.f32.mrb[0].mxu0
  %v9919 = vadd.f32 %v9726, %v9918
  %v9920 = vpop.f32.mrb[0].mxu0
  %v9921 = vadd.f32 %v9728, %v9920
  %v9922 = vpop.f32.mrb[0].mxu0
  %v9923 = vadd.f32 %v9730, %v9922
  %v9924 = vpop.f32.mrb[0].mxu0
  %v9925 = vadd.f32 %v9732, %v9924
  %9926 = vmatprep.mubr.bf16.mxu0 %v9212
  %9927 = vmatmul.mubr.bf16.gmra.mrb[0].mxu0 %v8020
  %v9928 = vpop.f32.mrb[0].mxu0
  %v9929 = vadd.f32 %v9736, %v9928
  %v9930 = vpop.f32.mrb[0].mxu0
  %v9931 = vadd.f32 %v9738, %v9930
  %v9932 = vpop.f32.mrb[0].mxu0
  %v9933 = vadd.f32 %v9740, %v9932
  %v9934 = vpop.f32.mrb[0].mxu0
  %v9935 = vadd.f32 %v9742, %v9934
  %9936 = vmatprep.mubr.bf16.mxu0 %v9215
  %9937 = vmatmul.mubr.bf16.gmra.mrb[0].mxu0 %v8024
  %v9938 = vpop.f32.mrb[0].mxu0
  %v9939 = vadd.f32 %v9746, %v9938
  %v9940 = vpop.f32.mrb[0].mxu0
  %v9941 = vadd.f32 %v9748, %v9940
  %v9942 = vpop.f32.mrb[0].mxu0
  %v9943 = vadd.f32 %v9750, %v9942
  %v9944 = vpop.f32.mrb[0].mxu0
  %v9945 = vadd.f32 %v9752, %v9944
  %9946 = vmatprep.mubr.bf16.mxu0 %v9218
  %9947 = vmatmul.mubr.bf16.gmra.mrb[0].mxu0 %v8028
  %v9948 = vpop.f32.mrb[0].mxu0
  %v9949 = vadd.f32 %v9756, %v9948
  %v9950 = vpop.f32.mrb[0].mxu0
  %v9951 = vadd.f32 %v9758, %v9950
  %v9952 = vpop.f32.mrb[0].mxu0
  %v9953 = vadd.f32 %v9760, %v9952
  %v9954 = vpop.f32.mrb[0].mxu0
  %v9955 = vadd.f32 %v9762, %v9954
  %9956 = vmatprep.mubr.bf16.mxu0 %v9221
  %9957 = vmatmul.mubr.bf16.gmra.mrb[0].mxu0 %v8032
  %v9958 = vpop.f32.mrb[0].mxu0
  %v9959 = vadd.f32 %v9766, %v9958
  %v9960 = vpop.f32.mrb[0].mxu0
  %v9961 = vadd.f32 %v9768, %v9960
  %v9962 = vpop.f32.mrb[0].mxu0
  %v9963 = vadd.f32 %v9770, %v9962
  %v9964 = vpop.f32.mrb[0].mxu0
  %v9965 = vadd.f32 %v9772, %v9964
  %9966 = vmatprep.mubr.bf16.mxu0 %v9224
  %9967 = vmatmul.mubr.bf16.gmra.mrb[0].mxu0 %v8036
  %v9968 = vpop.f32.mrb[0].mxu0
  %v9969 = vadd.f32 %v9776, %v9968
  %v9970 = vpop.f32.mrb[0].mxu0
  %v9971 = vadd.f32 %v9778, %v9970
  %v9972 = vpop.f32.mrb[0].mxu0
  %v9973 = vadd.f32 %v9780, %v9972
  %v9974 = vpop.f32.mrb[0].mxu0
  %v9975 = vadd.f32 %v9782, %v9974
  %9976 = vmatprep.mubr.bf16.mxu0 %v9227
  %9977 = vmatmul.mubr.bf16.gmra.mrb[0].mxu0 %v8040
  %v9978 = vpop.f32.mrb[0].mxu0
  %v9979 = vadd.f32 %v9786, %v9978
  %v9980 = vpop.f32.mrb[0].mxu0
  %v9981 = vadd.f32 %v9788, %v9980
  %v9982 = vpop.f32.mrb[0].mxu0
  %v9983 = vadd.f32 %v9790, %v9982
  %v9984 = vpop.f32.mrb[0].mxu0
  %v9985 = vadd.f32 %v9792, %v9984
  %9986 = vmatprep.mubr.bf16.mxu0 %v9230
  %9987 = vmatmul.mubr.bf16.gmra.mrb[0].mxu0 %v8044
  %v9988 = vpop.f32.mrb[0].mxu0
  %v9989 = vadd.f32 %v9796, %v9988
  %v9990 = vpop.f32.mrb[0].mxu0
  %v9991 = vadd.f32 %v9798, %v9990
  %v9992 = vpop.f32.mrb[0].mxu0
  %v9993 = vadd.f32 %v9800, %v9992
  %v9994 = vpop.f32.mrb[0].mxu0
  %v9995 = vadd.f32 %v9802, %v9994
  %9996 = vmatprep.mubr.bf16.mxu0 %v9233
  %9997 = vmatmul.mubr.bf16.gmra.mrb[0].mxu0 %v8048
  %v9998 = vpop.f32.mrb[0].mxu0
  %v9999 = vadd.f32 %v9806, %v9998
  %v10000 = vpop.f32.mrb[0].mxu0
  %v10001 = vadd.f32 %v9808, %v10000
  %v10002 = vpop.f32.mrb[0].mxu0
  %v10003 = vadd.f32 %v9810, %v10002
  %v10004 = vpop.f32.mrb[0].mxu0
  %v10005 = vadd.f32 %v9812, %v10004
  %10006 = vdwg.mxu0
  %10007 = vmatprep.subr.bf16.mxu0 %v8842
  %10008 = vmatpush1.bf16.msra.mxu0 %v8841
  %10009 = vmatprep.subr.bf16.mxu0 %v8849
  %10010 = vmatpush1.bf16.msra.mxu0 %v8848
  %10011 = vmatprep.subr.bf16.mxu0 %v8856
  %10012 = vmatpush1.bf16.msra.mxu0 %v8855
  %10013 = vmatprep.subr.bf16.mxu0 %v8863
  %10014 = vmatpush1.bf16.msra.mxu0 %v8862
  %10015 = vmatprep.subr.bf16.mxu0 %v8870
  %10016 = vmatpush1.bf16.msra.mxu0 %v8869
  %10017 = vmatprep.subr.bf16.mxu0 %v8877
  %10018 = vmatpush1.bf16.msra.mxu0 %v8876
  %10019 = vmatprep.subr.bf16.mxu0 %v8884
  %10020 = vmatpush1.bf16.msra.mxu0 %v8883
  %10021 = vmatprep.subr.bf16.mxu0 %v8891
  %10022 = vmatpush1.bf16.msra.mxu0 %v8890
  %10023 = vmatprep.subr.bf16.mxu0 %v8898
  %10024 = vmatpush1.bf16.msra.mxu0 %v8897
  %10025 = vmatprep.subr.bf16.mxu0 %v8905
  %10026 = vmatpush1.bf16.msra.mxu0 %v8904
  %10027 = vmatprep.subr.bf16.mxu0 %v8912
  %10028 = vmatpush1.bf16.msra.mxu0 %v8911
  %10029 = vmatprep.subr.bf16.mxu0 %v8919
  %10030 = vmatpush1.bf16.msra.mxu0 %v8918
  %10031 = vmatprep.subr.bf16.mxu0 %v8926
  %10032 = vmatpush1.bf16.msra.mxu0 %v8925
  %10033 = vmatprep.subr.bf16.mxu0 %v8933
  %10034 = vmatpush1.bf16.msra.mxu0 %v8932
  %10035 = vmatprep.subr.bf16.mxu0 %v8940
  %10036 = vmatpush1.bf16.msra.mxu0 %v8939
  %10037 = vmatprep.subr.bf16.mxu0 %v8947
  %10038 = vmatpush1.bf16.msra.mxu0 %v8946
  %10039 = vmatprep.mubr.bf16.mxu0 %v7987
  %10040 = vmatmul.mubr.bf16.gmra.mrb[0].mxu0 %v7986
  %v10041 = vpop.f32.mrb[0].mxu0
  %v10042 = vadd.f32 %v8271, %v10041
  %v10043 = vpop.f32.mrb[0].mxu0
  %v10044 = vadd.f32 %v8275, %v10043
  %v10045 = vpop.f32.mrb[0].mxu0
  %v10046 = vadd.f32 %v8271, %v10045
  %v10047 = vpop.f32.mrb[0].mxu0
  %v10048 = vadd.f32 %v8275, %v10047
  %10049 = vmatprep.mubr.bf16.mxu0 %v7991
  %10050 = vmatmul.mubr.bf16.gmra.mrb[0].mxu0 %v7990
  %v10051 = vpop.f32.mrb[0].mxu0
  %v10052 = vadd.f32 %v8271, %v10051
  %v10053 = vpop.f32.mrb[0].mxu0
  %v10054 = vadd.f32 %v8275, %v10053
  %v10055 = vpop.f32.mrb[0].mxu0
  %v10056 = vadd.f32 %v8271, %v10055
  %v10057 = vpop.f32.mrb[0].mxu0
  %v10058 = vadd.f32 %v8275, %v10057
  %10059 = vmatprep.mubr.bf16.mxu0 %v7995
  %10060 = vmatmul.mubr.bf16.gmra.mrb[0].mxu0 %v7994
  %v10061 = vpop.f32.mrb[0].mxu0
  %v10062 = vadd.f32 %v8271, %v10061
  %v10063 = vpop.f32.mrb[0].mxu0
  %v10064 = vadd.f32 %v8275, %v10063
  %v10065 = vpop.f32.mrb[0].mxu0
  %v10066 = vadd.f32 %v8271, %v10065
  %v10067 = vpop.f32.mrb[0].mxu0
  %v10068 = vadd.f32 %v8275, %v10067
  %10069 = vmatprep.mubr.bf16.mxu0 %v7999
  %10070 = vmatmul.mubr.bf16.gmra.mrb[0].mxu0 %v7998
  %v10071 = vpop.f32.mrb[0].mxu0
  %v10072 = vadd.f32 %v8271, %v10071
  %v10073 = vpop.f32.mrb[0].mxu0
  %v10074 = vadd.f32 %v8275, %v10073
  %v10075 = vpop.f32.mrb[0].mxu0
  %v10076 = vadd.f32 %v8271, %v10075
  %v10077 = vpop.f32.mrb[0].mxu0
  %v10078 = vadd.f32 %v8275, %v10077
  %10079 = vmatprep.mubr.bf16.mxu0 %v8003
  %10080 = vmatmul.mubr.bf16.gmra.mrb[0].mxu0 %v8002
  %v10081 = vpop.f32.mrb[0].mxu0
  %v10082 = vadd.f32 %v8271, %v10081
  %v10083 = vpop.f32.mrb[0].mxu0
  %v10084 = vadd.f32 %v8275, %v10083
  %v10085 = vpop.f32.mrb[0].mxu0
  %v10086 = vadd.f32 %v8271, %v10085
  %v10087 = vpop.f32.mrb[0].mxu0
  %v10088 = vadd.f32 %v8275, %v10087
  %10089 = vmatprep.mubr.bf16.mxu0 %v8007
  %10090 = vmatmul.mubr.bf16.gmra.mrb[0].mxu0 %v8006
  %v10091 = vpop.f32.mrb[0].mxu0
  %v10092 = vadd.f32 %v8271, %v10091
  %v10093 = vpop.f32.mrb[0].mxu0
  %v10094 = vadd.f32 %v8275, %v10093
  %v10095 = vpop.f32.mrb[0].mxu0
  %v10096 = vadd.f32 %v8271, %v10095
  %v10097 = vpop.f32.mrb[0].mxu0
  %v10098 = vadd.f32 %v8275, %v10097
  %10099 = vmatprep.mubr.bf16.mxu0 %v8011
  %10100 = vmatmul.mubr.bf16.gmra.mrb[0].mxu0 %v8010
  %v10101 = vpop.f32.mrb[0].mxu0
  %v10102 = vadd.f32 %v8271, %v10101
  %v10103 = vpop.f32.mrb[0].mxu0
  %v10104 = vadd.f32 %v8275, %v10103
  %v10105 = vpop.f32.mrb[0].mxu0
  %v10106 = vadd.f32 %v8271, %v10105
  %v10107 = vpop.f32.mrb[0].mxu0
  %v10108 = vadd.f32 %v8275, %v10107
  %10109 = vmatprep.mubr.bf16.mxu0 %v8015
  %10110 = vmatmul.mubr.bf16.gmra.mrb[0].mxu0 %v8014
  %v10111 = vpop.f32.mrb[0].mxu0
  %v10112 = vadd.f32 %v8271, %v10111
  %v10113 = vpop.f32.mrb[0].mxu0
  %v10114 = vadd.f32 %v8275, %v10113
  %v10115 = vpop.f32.mrb[0].mxu0
  %v10116 = vadd.f32 %v8271, %v10115
  %v10117 = vpop.f32.mrb[0].mxu0
  %v10118 = vadd.f32 %v8275, %v10117
  %10119 = vmatprep.mubr.bf16.mxu0 %v8019
  %10120 = vmatmul.mubr.bf16.gmra.mrb[0].mxu0 %v8018
  %v10121 = vpop.f32.mrb[0].mxu0
  %v10122 = vadd.f32 %v8271, %v10121
  %v10123 = vpop.f32.mrb[0].mxu0
  %v10124 = vadd.f32 %v8275, %v10123
  %v10125 = vpop.f32.mrb[0].mxu0
  %v10126 = vadd.f32 %v8271, %v10125
  %v10127 = vpop.f32.mrb[0].mxu0
  %v10128 = vadd.f32 %v8275, %v10127
  %10129 = vmatprep.mubr.bf16.mxu0 %v8023
  %10130 = vmatmul.mubr.bf16.gmra.mrb[0].mxu0 %v8022
  %v10131 = vpop.f32.mrb[0].mxu0
  %v10132 = vadd.f32 %v8271, %v10131
  %v10133 = vpop.f32.mrb[0].mxu0
  %v10134 = vadd.f32 %v8275, %v10133
  %v10135 = vpop.f32.mrb[0].mxu0
  %v10136 = vadd.f32 %v8271, %v10135
  %v10137 = vpop.f32.mrb[0].mxu0
  %v10138 = vadd.f32 %v8275, %v10137
  %10139 = vmatprep.mubr.bf16.mxu0 %v8027
  %10140 = vmatmul.mubr.bf16.gmra.mrb[0].mxu0 %v8026
  %v10141 = vpop.f32.mrb[0].mxu0
  %v10142 = vadd.f32 %v8271, %v10141
  %v10143 = vpop.f32.mrb[0].mxu0
  %v10144 = vadd.f32 %v8275, %v10143
  %v10145 = vpop.f32.mrb[0].mxu0
  %v10146 = vadd.f32 %v8271, %v10145
  %v10147 = vpop.f32.mrb[0].mxu0
  %v10148 = vadd.f32 %v8275, %v10147
  %10149 = vmatprep.mubr.bf16.mxu0 %v8031
  %10150 = vmatmul.mubr.bf16.gmra.mrb[0].mxu0 %v8030
  %v10151 = vpop.f32.mrb[0].mxu0
  %v10152 = vadd.f32 %v8271, %v10151
  %v10153 = vpop.f32.mrb[0].mxu0
  %v10154 = vadd.f32 %v8275, %v10153
  %v10155 = vpop.f32.mrb[0].mxu0
  %v10156 = vadd.f32 %v8271, %v10155
  %v10157 = vpop.f32.mrb[0].mxu0
  %v10158 = vadd.f32 %v8275, %v10157
  %10159 = vmatprep.mubr.bf16.mxu0 %v8035
  %10160 = vmatmul.mubr.bf16.gmra.mrb[0].mxu0 %v8034
  %v10161 = vpop.f32.mrb[0].mxu0
  %v10162 = vadd.f32 %v8271, %v10161
  %v10163 = vpop.f32.mrb[0].mxu0
  %v10164 = vadd.f32 %v8275, %v10163
  %v10165 = vpop.f32.mrb[0].mxu0
  %v10166 = vadd.f32 %v8271, %v10165
  %v10167 = vpop.f32.mrb[0].mxu0
  %v10168 = vadd.f32 %v8275, %v10167
  %10169 = vmatprep.mubr.bf16.mxu0 %v8039
  %10170 = vmatmul.mubr.bf16.gmra.mrb[0].mxu0 %v8038
  %v10171 = vpop.f32.mrb[0].mxu0
  %v10172 = vadd.f32 %v8271, %v10171
  %v10173 = vpop.f32.mrb[0].mxu0
  %v10174 = vadd.f32 %v8275, %v10173
  %v10175 = vpop.f32.mrb[0].mxu0
  %v10176 = vadd.f32 %v8271, %v10175
  %v10177 = vpop.f32.mrb[0].mxu0
  %v10178 = vadd.f32 %v8275, %v10177
  %10179 = vmatprep.mubr.bf16.mxu0 %v8043
  %10180 = vmatmul.mubr.bf16.gmra.mrb[0].mxu0 %v8042
  %v10181 = vpop.f32.mrb[0].mxu0
  %v10182 = vadd.f32 %v8271, %v10181
  %v10183 = vpop.f32.mrb[0].mxu0
  %v10184 = vadd.f32 %v8275, %v10183
  %v10185 = vpop.f32.mrb[0].mxu0
  %v10186 = vadd.f32 %v8271, %v10185
  %v10187 = vpop.f32.mrb[0].mxu0
  %v10188 = vadd.f32 %v8275, %v10187
  %10189 = vmatprep.mubr.bf16.mxu0 %v8047
  %10190 = vmatmul.mubr.bf16.gmra.mrb[0].mxu0 %v8046
  %v10191 = vpop.f32.mrb[0].mxu0
  %v10192 = vadd.f32 %v8271, %v10191
  %v10193 = vpop.f32.mrb[0].mxu0
  %v10194 = vadd.f32 %v8275, %v10193
  %v10195 = vpop.f32.mrb[0].mxu0
  %v10196 = vadd.f32 %v8271, %v10195
  %v10197 = vpop.f32.mrb[0].mxu0
  %v10198 = vadd.f32 %v8275, %v10197
  %10199 = vdwg.mxu0
  %10200 = vmatprep.subr.bf16.mxu0 %v8954
  %10201 = vmatpush1.bf16.msra.mxu0 %v8953
  %10202 = vmatprep.subr.bf16.mxu0 %v8961
  %10203 = vmatpush1.bf16.msra.mxu0 %v8960
  %10204 = vmatprep.subr.bf16.mxu0 %v8968
  %10205 = vmatpush1.bf16.msra.mxu0 %v8967
  %10206 = vmatprep.subr.bf16.mxu0 %v8975
  %10207 = vmatpush1.bf16.msra.mxu0 %v8974
  %10208 = vmatprep.subr.bf16.mxu0 %v8982
  %10209 = vmatpush1.bf16.msra.mxu0 %v8981
  %10210 = vmatprep.subr.bf16.mxu0 %v8989
  %10211 = vmatpush1.bf16.msra.mxu0 %v8988
  %10212 = vmatprep.subr.bf16.mxu0 %v8996
  %10213 = vmatpush1.bf16.msra.mxu0 %v8995
  %10214 = vmatprep.subr.bf16.mxu0 %v9003
  %10215 = vmatpush1.bf16.msra.mxu0 %v9002
  %10216 = vmatprep.subr.bf16.mxu0 %v9010
  %10217 = vmatpush1.bf16.msra.mxu0 %v9009
  %10218 = vmatprep.subr.bf16.mxu0 0
  %10219 = vmatpush1.bf16.msra.mxu0 0
  %10220 = vmatprep.subr.bf16.mxu0 0
  %10221 = vmatpush1.bf16.msra.mxu0 0
  %10222 = vmatprep.subr.bf16.mxu0 0
  %10223 = vmatpush1.bf16.msra.mxu0 0
  %10224 = vmatprep.subr.bf16.mxu0 0
  %10225 = vmatpush1.bf16.msra.mxu0 0
  %10226 = vmatprep.subr.bf16.mxu0 0
  %10227 = vmatpush1.bf16.msra.mxu0 0
  %10228 = vmatprep.subr.bf16.mxu0 0
  %10229 = vmatpush1.bf16.msra.mxu0 0
  %10230 = vmatprep.subr.bf16.mxu0 0
  %10231 = vmatpush1.bf16.msra.mxu0 0
  %10232 = vmatprep.mubr.bf16.mxu0 %v9188
  %10233 = vmatmul.mubr.bf16.gmra.mrb[0].mxu0 %v7988
  %v10234 = vpop.f32.mrb[0].mxu0
  %v10235 = vadd.f32 %v10042, %v10234
  %v10236 = vpop.f32.mrb[0].mxu0
  %v10237 = vadd.f32 %v10044, %v10236
  %v10238 = vpop.f32.mrb[0].mxu0
  %v10239 = vadd.f32 %v10046, %v10238
  %v10240 = vpop.f32.mrb[0].mxu0
  %v10241 = vadd.f32 %v10048, %v10240
  %10242 = vmatprep.mubr.bf16.mxu0 %v9191
  %10243 = vmatmul.mubr.bf16.gmra.mrb[0].mxu0 %v7992
  %v10244 = vpop.f32.mrb[0].mxu0
  %v10245 = vadd.f32 %v10052, %v10244
  %v10246 = vpop.f32.mrb[0].mxu0
  %v10247 = vadd.f32 %v10054, %v10246
  %v10248 = vpop.f32.mrb[0].mxu0
  %v10249 = vadd.f32 %v10056, %v10248
  %v10250 = vpop.f32.mrb[0].mxu0
  %v10251 = vadd.f32 %v10058, %v10250
  %10252 = vmatprep.mubr.bf16.mxu0 %v9194
  %10253 = vmatmul.mubr.bf16.gmra.mrb[0].mxu0 %v7996
  %v10254 = vpop.f32.mrb[0].mxu0
  %v10255 = vadd.f32 %v10062, %v10254
  %v10256 = vpop.f32.mrb[0].mxu0
  %v10257 = vadd.f32 %v10064, %v10256
  %v10258 = vpop.f32.mrb[0].mxu0
  %v10259 = vadd.f32 %v10066, %v10258
  %v10260 = vpop.f32.mrb[0].mxu0
  %v10261 = vadd.f32 %v10068, %v10260
  %10262 = vmatprep.mubr.bf16.mxu0 %v9197
  %10263 = vmatmul.mubr.bf16.gmra.mrb[0].mxu0 %v8000
  %v10264 = vpop.f32.mrb[0].mxu0
  %v10265 = vadd.f32 %v10072, %v10264
  %v10266 = vpop.f32.mrb[0].mxu0
  %v10267 = vadd.f32 %v10074, %v10266
  %v10268 = vpop.f32.mrb[0].mxu0
  %v10269 = vadd.f32 %v10076, %v10268
  %v10270 = vpop.f32.mrb[0].mxu0
  %v10271 = vadd.f32 %v10078, %v10270
  %10272 = vmatprep.mubr.bf16.mxu0 %v9200
  %10273 = vmatmul.mubr.bf16.gmra.mrb[0].mxu0 %v8004
  %v10274 = vpop.f32.mrb[0].mxu0
  %v10275 = vadd.f32 %v10082, %v10274
  %v10276 = vpop.f32.mrb[0].mxu0
  %v10277 = vadd.f32 %v10084, %v10276
  %v10278 = vpop.f32.mrb[0].mxu0
  %v10279 = vadd.f32 %v10086, %v10278
  %v10280 = vpop.f32.mrb[0].mxu0
  %v10281 = vadd.f32 %v10088, %v10280
  %10282 = vmatprep.mubr.bf16.mxu0 %v9203
  %10283 = vmatmul.mubr.bf16.gmra.mrb[0].mxu0 %v8008
  %v10284 = vpop.f32.mrb[0].mxu0
  %v10285 = vadd.f32 %v10092, %v10284
  %v10286 = vpop.f32.mrb[0].mxu0
  %v10287 = vadd.f32 %v10094, %v10286
  %v10288 = vpop.f32.mrb[0].mxu0
  %v10289 = vadd.f32 %v10096, %v10288
  %v10290 = vpop.f32.mrb[0].mxu0
  %v10291 = vadd.f32 %v10098, %v10290
  %10292 = vmatprep.mubr.bf16.mxu0 %v9206
  %10293 = vmatmul.mubr.bf16.gmra.mrb[0].mxu0 %v8012
  %v10294 = vpop.f32.mrb[0].mxu0
  %v10295 = vadd.f32 %v10102, %v10294
  %v10296 = vpop.f32.mrb[0].mxu0
  %v10297 = vadd.f32 %v10104, %v10296
  %v10298 = vpop.f32.mrb[0].mxu0
  %v10299 = vadd.f32 %v10106, %v10298
  %v10300 = vpop.f32.mrb[0].mxu0
  %v10301 = vadd.f32 %v10108, %v10300
  %10302 = vmatprep.mubr.bf16.mxu0 %v9209
  %10303 = vmatmul.mubr.bf16.gmra.mrb[0].mxu0 %v8016
  %v10304 = vpop.f32.mrb[0].mxu0
  %v10305 = vadd.f32 %v10112, %v10304
  %v10306 = vpop.f32.mrb[0].mxu0
  %v10307 = vadd.f32 %v10114, %v10306
  %v10308 = vpop.f32.mrb[0].mxu0
  %v10309 = vadd.f32 %v10116, %v10308
  %v10310 = vpop.f32.mrb[0].mxu0
  %v10311 = vadd.f32 %v10118, %v10310
  %10312 = vmatprep.mubr.bf16.mxu0 %v9212
  %10313 = vmatmul.mubr.bf16.gmra.mrb[0].mxu0 %v8020
  %v10314 = vpop.f32.mrb[0].mxu0
  %v10315 = vadd.f32 %v10122, %v10314
  %v10316 = vpop.f32.mrb[0].mxu0
  %v10317 = vadd.f32 %v10124, %v10316
  %v10318 = vpop.f32.mrb[0].mxu0
  %v10319 = vadd.f32 %v10126, %v10318
  %v10320 = vpop.f32.mrb[0].mxu0
  %v10321 = vadd.f32 %v10128, %v10320
  %10322 = vmatprep.mubr.bf16.mxu0 %v9215
  %10323 = vmatmul.mubr.bf16.gmra.mrb[0].mxu0 %v8024
  %v10324 = vpop.f32.mrb[0].mxu0
  %v10325 = vadd.f32 %v10132, %v10324
  %v10326 = vpop.f32.mrb[0].mxu0
  %v10327 = vadd.f32 %v10134, %v10326
  %v10328 = vpop.f32.mrb[0].mxu0
  %v10329 = vadd.f32 %v10136, %v10328
  %v10330 = vpop.f32.mrb[0].mxu0
  %v10331 = vadd.f32 %v10138, %v10330
  %10332 = vmatprep.mubr.bf16.mxu0 %v9218
  %10333 = vmatmul.mubr.bf16.gmra.mrb[0].mxu0 %v8028
  %v10334 = vpop.f32.mrb[0].mxu0
  %v10335 = vadd.f32 %v10142, %v10334
  %v10336 = vpop.f32.mrb[0].mxu0
  %v10337 = vadd.f32 %v10144, %v10336
  %v10338 = vpop.f32.mrb[0].mxu0
  %v10339 = vadd.f32 %v10146, %v10338
  %v10340 = vpop.f32.mrb[0].mxu0
  %v10341 = vadd.f32 %v10148, %v10340
  %10342 = vmatprep.mubr.bf16.mxu0 %v9221
  %10343 = vmatmul.mubr.bf16.gmra.mrb[0].mxu0 %v8032
  %v10344 = vpop.f32.mrb[0].mxu0
  %v10345 = vadd.f32 %v10152, %v10344
  %v10346 = vpop.f32.mrb[0].mxu0
  %v10347 = vadd.f32 %v10154, %v10346
  %v10348 = vpop.f32.mrb[0].mxu0
  %v10349 = vadd.f32 %v10156, %v10348
  %v10350 = vpop.f32.mrb[0].mxu0
  %v10351 = vadd.f32 %v10158, %v10350
  %10352 = vmatprep.mubr.bf16.mxu0 %v9224
  %10353 = vmatmul.mubr.bf16.gmra.mrb[0].mxu0 %v8036
  %v10354 = vpop.f32.mrb[0].mxu0
  %v10355 = vadd.f32 %v10162, %v10354
  %v10356 = vpop.f32.mrb[0].mxu0
  %v10357 = vadd.f32 %v10164, %v10356
  %v10358 = vpop.f32.mrb[0].mxu0
  %v10359 = vadd.f32 %v10166, %v10358
  %v10360 = vpop.f32.mrb[0].mxu0
  %v10361 = vadd.f32 %v10168, %v10360
  %10362 = vmatprep.mubr.bf16.mxu0 %v9227
  %10363 = vmatmul.mubr.bf16.gmra.mrb[0].mxu0 %v8040
  %v10364 = vpop.f32.mrb[0].mxu0
  %v10365 = vadd.f32 %v10172, %v10364
  %v10366 = vpop.f32.mrb[0].mxu0
  %v10367 = vadd.f32 %v10174, %v10366
  %v10368 = vpop.f32.mrb[0].mxu0
  %v10369 = vadd.f32 %v10176, %v10368
  %v10370 = vpop.f32.mrb[0].mxu0
  %v10371 = vadd.f32 %v10178, %v10370
  %10372 = vmatprep.mubr.bf16.mxu0 %v9230
  %10373 = vmatmul.mubr.bf16.gmra.mrb[0].mxu0 %v8044
  %v10374 = vpop.f32.mrb[0].mxu0
  %v10375 = vadd.f32 %v10182, %v10374
  %v10376 = vpop.f32.mrb[0].mxu0
  %v10377 = vadd.f32 %v10184, %v10376
  %v10378 = vpop.f32.mrb[0].mxu0
  %v10379 = vadd.f32 %v10186, %v10378
  %v10380 = vpop.f32.mrb[0].mxu0
  %v10381 = vadd.f32 %v10188, %v10380
  %10382 = vmatprep.mubr.bf16.mxu0 %v9233
  %10383 = vmatmul.mubr.bf16.gmra.mrb[0].mxu0 %v8048
  %v10384 = vpop.f32.mrb[0].mxu0
  %v10385 = vadd.f32 %v10192, %v10384
  %v10386 = vpop.f32.mrb[0].mxu0
  %v10387 = vadd.f32 %v10194, %v10386
  %v10388 = vpop.f32.mrb[0].mxu0
  %v10389 = vadd.f32 %v10196, %v10388
  %v10390 = vpop.f32.mrb[0].mxu0
  %v10391 = vadd.f32 %v10198, %v10390
  %10392 = vdwg.mxu0
  %10393 = vmatprep.subr.bf16.mxu0 0
  %10394 = vmatpush1.bf16.msra.mxu0 %v8843
  %10395 = vmatprep.subr.bf16.mxu0 0
  %10396 = vmatpush1.bf16.msra.mxu0 %v8850
  %10397 = vmatprep.subr.bf16.mxu0 0
  %10398 = vmatpush1.bf16.msra.mxu0 %v8857
  %10399 = vmatprep.subr.bf16.mxu0 0
  %10400 = vmatpush1.bf16.msra.mxu0 %v8864
  %10401 = vmatprep.subr.bf16.mxu0 0
  %10402 = vmatpush1.bf16.msra.mxu0 %v8871
  %10403 = vmatprep.subr.bf16.mxu0 0
  %10404 = vmatpush1.bf16.msra.mxu0 %v8878
  %10405 = vmatprep.subr.bf16.mxu0 0
  %10406 = vmatpush1.bf16.msra.mxu0 %v8885
  %10407 = vmatprep.subr.bf16.mxu0 0
  %10408 = vmatpush1.bf16.msra.mxu0 %v8892
  %10409 = vmatprep.subr.bf16.mxu0 0
  %10410 = vmatpush1.bf16.msra.mxu0 %v8899
  %10411 = vmatprep.subr.bf16.mxu0 0
  %10412 = vmatpush1.bf16.msra.mxu0 %v8906
  %10413 = vmatprep.subr.bf16.mxu0 0
  %10414 = vmatpush1.bf16.msra.mxu0 %v8913
  %10415 = vmatprep.subr.bf16.mxu0 0
  %10416 = vmatpush1.bf16.msra.mxu0 %v8920
  %10417 = vmatprep.subr.bf16.mxu0 0
  %10418 = vmatpush1.bf16.msra.mxu0 %v8927
  %10419 = vmatprep.subr.bf16.mxu0 0
  %10420 = vmatpush1.bf16.msra.mxu0 %v8934
  %10421 = vmatprep.subr.bf16.mxu0 0
  %10422 = vmatpush1.bf16.msra.mxu0 %v8941
  %10423 = vmatprep.subr.bf16.mxu0 0
  %10424 = vmatpush1.bf16.msra.mxu0 %v8948
  %10425 = vmatprep.mubr.bf16.mxu0 %v7987
  %10426 = vmatmul.mubr.bf16.gmra.mrb[0].mxu0 %v7986
  %v10427 = vpop.f32.mrb[0].mxu0
  %v10428 = vadd.f32 %v8279, %v10427
  %v10429 = vpop.f32.mrb[0].mxu0
  %v10430 = vpop.f32.mrb[0].mxu0
  %v10431 = vadd.f32 %v8279, %v10430
  %v10432 = vpop.f32.mrb[0].mxu0
  %10433 = vmatprep.mubr.bf16.mxu0 %v7991
  %10434 = vmatmul.mubr.bf16.gmra.mrb[0].mxu0 %v7990
  %v10435 = vpop.f32.mrb[0].mxu0
  %v10436 = vadd.f32 %v8279, %v10435
  %v10437 = vpop.f32.mrb[0].mxu0
  %v10438 = vpop.f32.mrb[0].mxu0
  %v10439 = vadd.f32 %v8279, %v10438
  %v10440 = vpop.f32.mrb[0].mxu0
  %10441 = vmatprep.mubr.bf16.mxu0 %v7995
  %10442 = vmatmul.mubr.bf16.gmra.mrb[0].mxu0 %v7994
  %v10443 = vpop.f32.mrb[0].mxu0
  %v10444 = vadd.f32 %v8279, %v10443
  %v10445 = vpop.f32.mrb[0].mxu0
  %v10446 = vpop.f32.mrb[0].mxu0
  %v10447 = vadd.f32 %v8279, %v10446
  %v10448 = vpop.f32.mrb[0].mxu0
  %10449 = vmatprep.mubr.bf16.mxu0 %v7999
  %10450 = vmatmul.mubr.bf16.gmra.mrb[0].mxu0 %v7998
  %v10451 = vpop.f32.mrb[0].mxu0
  %v10452 = vadd.f32 %v8279, %v10451
  %v10453 = vpop.f32.mrb[0].mxu0
  %v10454 = vpop.f32.mrb[0].mxu0
  %v10455 = vadd.f32 %v8279, %v10454
  %v10456 = vpop.f32.mrb[0].mxu0
  %10457 = vmatprep.mubr.bf16.mxu0 %v8003
  %10458 = vmatmul.mubr.bf16.gmra.mrb[0].mxu0 %v8002
  %v10459 = vpop.f32.mrb[0].mxu0
  %v10460 = vadd.f32 %v8279, %v10459
  %v10461 = vpop.f32.mrb[0].mxu0
  %v10462 = vpop.f32.mrb[0].mxu0
  %v10463 = vadd.f32 %v8279, %v10462
  %v10464 = vpop.f32.mrb[0].mxu0
  %10465 = vmatprep.mubr.bf16.mxu0 %v8007
  %10466 = vmatmul.mubr.bf16.gmra.mrb[0].mxu0 %v8006
  %v10467 = vpop.f32.mrb[0].mxu0
  %v10468 = vadd.f32 %v8279, %v10467
  %v10469 = vpop.f32.mrb[0].mxu0
  %v10470 = vpop.f32.mrb[0].mxu0
  %v10471 = vadd.f32 %v8279, %v10470
  %v10472 = vpop.f32.mrb[0].mxu0
  %10473 = vmatprep.mubr.bf16.mxu0 %v8011
  %10474 = vmatmul.mubr.bf16.gmra.mrb[0].mxu0 %v8010
  %v10475 = vpop.f32.mrb[0].mxu0
  %v10476 = vadd.f32 %v8279, %v10475
  %v10477 = vpop.f32.mrb[0].mxu0
  %v10478 = vpop.f32.mrb[0].mxu0
  %v10479 = vadd.f32 %v8279, %v10478
  %v10480 = vpop.f32.mrb[0].mxu0
  %10481 = vmatprep.mubr.bf16.mxu0 %v8015
  %10482 = vmatmul.mubr.bf16.gmra.mrb[0].mxu0 %v8014
  %v10483 = vpop.f32.mrb[0].mxu0
  %v10484 = vadd.f32 %v8279, %v10483
  %v10485 = vpop.f32.mrb[0].mxu0
  %v10486 = vpop.f32.mrb[0].mxu0
  %v10487 = vadd.f32 %v8279, %v10486
  %v10488 = vpop.f32.mrb[0].mxu0
  %10489 = vmatprep.mubr.bf16.mxu0 %v8019
  %10490 = vmatmul.mubr.bf16.gmra.mrb[0].mxu0 %v8018
  %v10491 = vpop.f32.mrb[0].mxu0
  %v10492 = vadd.f32 %v8279, %v10491
  %v10493 = vpop.f32.mrb[0].mxu0
  %v10494 = vpop.f32.mrb[0].mxu0
  %v10495 = vadd.f32 %v8279, %v10494
  %v10496 = vpop.f32.mrb[0].mxu0
  %10497 = vmatprep.mubr.bf16.mxu0 %v8023
  %10498 = vmatmul.mubr.bf16.gmra.mrb[0].mxu0 %v8022
  %v10499 = vpop.f32.mrb[0].mxu0
  %v10500 = vadd.f32 %v8279, %v10499
  %v10501 = vpop.f32.mrb[0].mxu0
  %v10502 = vpop.f32.mrb[0].mxu0
  %v10503 = vadd.f32 %v8279, %v10502
  %v10504 = vpop.f32.mrb[0].mxu0
  %10505 = vmatprep.mubr.bf16.mxu0 %v8027
  %10506 = vmatmul.mubr.bf16.gmra.mrb[0].mxu0 %v8026
  %v10507 = vpop.f32.mrb[0].mxu0
  %v10508 = vadd.f32 %v8279, %v10507
  %v10509 = vpop.f32.mrb[0].mxu0
  %v10510 = vpop.f32.mrb[0].mxu0
  %v10511 = vadd.f32 %v8279, %v10510
  %v10512 = vpop.f32.mrb[0].mxu0
  %10513 = vmatprep.mubr.bf16.mxu0 %v8031
  %10514 = vmatmul.mubr.bf16.gmra.mrb[0].mxu0 %v8030
  %v10515 = vpop.f32.mrb[0].mxu0
  %v10516 = vadd.f32 %v8279, %v10515
  %v10517 = vpop.f32.mrb[0].mxu0
  %v10518 = vpop.f32.mrb[0].mxu0
  %v10519 = vadd.f32 %v8279, %v10518
  %v10520 = vpop.f32.mrb[0].mxu0
  %10521 = vmatprep.mubr.bf16.mxu0 %v8035
  %10522 = vmatmul.mubr.bf16.gmra.mrb[0].mxu0 %v8034
  %v10523 = vpop.f32.mrb[0].mxu0
  %v10524 = vadd.f32 %v8279, %v10523
  %v10525 = vpop.f32.mrb[0].mxu0
  %v10526 = vpop.f32.mrb[0].mxu0
  %v10527 = vadd.f32 %v8279, %v10526
  %v10528 = vpop.f32.mrb[0].mxu0
  %10529 = vmatprep.mubr.bf16.mxu0 %v8039
  %10530 = vmatmul.mubr.bf16.gmra.mrb[0].mxu0 %v8038
  %v10531 = vpop.f32.mrb[0].mxu0
  %v10532 = vadd.f32 %v8279, %v10531
  %v10533 = vpop.f32.mrb[0].mxu0
  %v10534 = vpop.f32.mrb[0].mxu0
  %v10535 = vadd.f32 %v8279, %v10534
  %v10536 = vpop.f32.mrb[0].mxu0
  %10537 = vmatprep.mubr.bf16.mxu0 %v8043
  %10538 = vmatmul.mubr.bf16.gmra.mrb[0].mxu0 %v8042
  %v10539 = vpop.f32.mrb[0].mxu0
  %v10540 = vadd.f32 %v8279, %v10539
  %v10541 = vpop.f32.mrb[0].mxu0
  %v10542 = vpop.f32.mrb[0].mxu0
  %v10543 = vadd.f32 %v8279, %v10542
  %v10544 = vpop.f32.mrb[0].mxu0
  %10545 = vmatprep.mubr.bf16.mxu0 %v8047
  %10546 = vmatmul.mubr.bf16.gmra.mrb[0].mxu0 %v8046
  %v10547 = vpop.f32.mrb[0].mxu0
  %v10548 = vadd.f32 %v8279, %v10547
  %v10549 = vpop.f32.mrb[0].mxu0
  %v10550 = vpop.f32.mrb[0].mxu0
  %v10551 = vadd.f32 %v8279, %v10550
  %v10552 = vpop.f32.mrb[0].mxu0
  %10553 = vdwg.mxu0
  %10554 = vmatprep.subr.bf16.mxu0 0
  %10555 = vmatpush1.bf16.msra.mxu0 %v8955
  %10556 = vmatprep.subr.bf16.mxu0 0
  %10557 = vmatpush1.bf16.msra.mxu0 %v8962
  %10558 = vmatprep.subr.bf16.mxu0 0
  %10559 = vmatpush1.bf16.msra.mxu0 %v8969
  %10560 = vmatprep.subr.bf16.mxu0 0
  %10561 = vmatpush1.bf16.msra.mxu0 %v8976
  %10562 = vmatprep.subr.bf16.mxu0 0
  %10563 = vmatpush1.bf16.msra.mxu0 %v8983
  %10564 = vmatprep.subr.bf16.mxu0 0
  %10565 = vmatpush1.bf16.msra.mxu0 %v8990
  %10566 = vmatprep.subr.bf16.mxu0 0
  %10567 = vmatpush1.bf16.msra.mxu0 %v8997
  %10568 = vmatprep.subr.bf16.mxu0 0
  %10569 = vmatpush1.bf16.msra.mxu0 %v9004
  %10570 = vmatprep.subr.bf16.mxu0 0
  %10571 = vmatpush1.bf16.msra.mxu0 %v9011
  %10572 = vmatprep.subr.bf16.mxu0 0
  %10573 = vmatpush1.bf16.msra.mxu0 0
  %10574 = vmatprep.subr.bf16.mxu0 0
  %10575 = vmatpush1.bf16.msra.mxu0 0
  %10576 = vmatprep.subr.bf16.mxu0 0
  %10577 = vmatpush1.bf16.msra.mxu0 0
  %10578 = vmatprep.subr.bf16.mxu0 0
  %10579 = vmatpush1.bf16.msra.mxu0 0
  %10580 = vmatprep.subr.bf16.mxu0 0
  %10581 = vmatpush1.bf16.msra.mxu0 0
  %10582 = vmatprep.subr.bf16.mxu0 0
  %10583 = vmatpush1.bf16.msra.mxu0 0
  %10584 = vmatprep.subr.bf16.mxu0 0
  %10585 = vmatpush1.bf16.msra.mxu0 0
  %10586 = vmatprep.mubr.bf16.mxu0 %v9188
  %10587 = vmatmul.mubr.bf16.gmra.mrb[0].mxu0 %v7988
  %v10588 = vpop.f32.mrb[0].mxu0
  %v10589 = vadd.f32 %v10428, %v10588
  %v10590 = vpop.f32.mrb[0].mxu0
  %v10591 = vpop.f32.mrb[0].mxu0
  %v10592 = vadd.f32 %v10431, %v10591
  %v10593 = vpop.f32.mrb[0].mxu0
  %10594 = vmatprep.mubr.bf16.mxu0 %v9191
  %10595 = vmatmul.mubr.bf16.gmra.mrb[0].mxu0 %v7992
  %v10596 = vpop.f32.mrb[0].mxu0
  %v10597 = vadd.f32 %v10436, %v10596
  %v10598 = vpop.f32.mrb[0].mxu0
  %v10599 = vpop.f32.mrb[0].mxu0
  %v10600 = vadd.f32 %v10439, %v10599
  %v10601 = vpop.f32.mrb[0].mxu0
  %10602 = vmatprep.mubr.bf16.mxu0 %v9194
  %10603 = vmatmul.mubr.bf16.gmra.mrb[0].mxu0 %v7996
  %v10604 = vpop.f32.mrb[0].mxu0
  %v10605 = vadd.f32 %v10444, %v10604
  %v10606 = vpop.f32.mrb[0].mxu0
  %v10607 = vpop.f32.mrb[0].mxu0
  %v10608 = vadd.f32 %v10447, %v10607
  %v10609 = vpop.f32.mrb[0].mxu0
  %10610 = vmatprep.mubr.bf16.mxu0 %v9197
  %10611 = vmatmul.mubr.bf16.gmra.mrb[0].mxu0 %v8000
  %v10612 = vpop.f32.mrb[0].mxu0
  %v10613 = vadd.f32 %v10452, %v10612
  %v10614 = vpop.f32.mrb[0].mxu0
  %v10615 = vpop.f32.mrb[0].mxu0
  %v10616 = vadd.f32 %v10455, %v10615
  %v10617 = vpop.f32.mrb[0].mxu0
  %10618 = vmatprep.mubr.bf16.mxu0 %v9200
  %10619 = vmatmul.mubr.bf16.gmra.mrb[0].mxu0 %v8004
  %v10620 = vpop.f32.mrb[0].mxu0
  %v10621 = vadd.f32 %v10460, %v10620
  %v10622 = vpop.f32.mrb[0].mxu0
  %v10623 = vpop.f32.mrb[0].mxu0
  %v10624 = vadd.f32 %v10463, %v10623
  %v10625 = vpop.f32.mrb[0].mxu0
  %10626 = vmatprep.mubr.bf16.mxu0 %v9203
  %10627 = vmatmul.mubr.bf16.gmra.mrb[0].mxu0 %v8008
  %v10628 = vpop.f32.mrb[0].mxu0
  %v10629 = vadd.f32 %v10468, %v10628
  %v10630 = vpop.f32.mrb[0].mxu0
  %v10631 = vpop.f32.mrb[0].mxu0
  %v10632 = vadd.f32 %v10471, %v10631
  %v10633 = vpop.f32.mrb[0].mxu0
  %10634 = vmatprep.mubr.bf16.mxu0 %v9206
  %10635 = vmatmul.mubr.bf16.gmra.mrb[0].mxu0 %v8012
  %v10636 = vpop.f32.mrb[0].mxu0
  %v10637 = vadd.f32 %v10476, %v10636
  %v10638 = vpop.f32.mrb[0].mxu0
  %v10639 = vpop.f32.mrb[0].mxu0
  %v10640 = vadd.f32 %v10479, %v10639
  %v10641 = vpop.f32.mrb[0].mxu0
  %10642 = vmatprep.mubr.bf16.mxu0 %v9209
  %10643 = vmatmul.mubr.bf16.gmra.mrb[0].mxu0 %v8016
  %v10644 = vpop.f32.mrb[0].mxu0
  %v10645 = vadd.f32 %v10484, %v10644
  %v10646 = vpop.f32.mrb[0].mxu0
  %v10647 = vpop.f32.mrb[0].mxu0
  %v10648 = vadd.f32 %v10487, %v10647
  %v10649 = vpop.f32.mrb[0].mxu0
  %10650 = vmatprep.mubr.bf16.mxu0 %v9212
  %10651 = vmatmul.mubr.bf16.gmra.mrb[0].mxu0 %v8020
  %v10652 = vpop.f32.mrb[0].mxu0
  %v10653 = vadd.f32 %v10492, %v10652
  %v10654 = vpop.f32.mrb[0].mxu0
  %v10655 = vpop.f32.mrb[0].mxu0
  %v10656 = vadd.f32 %v10495, %v10655
  %v10657 = vpop.f32.mrb[0].mxu0
  %10658 = vmatprep.mubr.bf16.mxu0 %v9215
  %10659 = vmatmul.mubr.bf16.gmra.mrb[0].mxu0 %v8024
  %v10660 = vpop.f32.mrb[0].mxu0
  %v10661 = vadd.f32 %v10500, %v10660
  %v10662 = vpop.f32.mrb[0].mxu0
  %v10663 = vpop.f32.mrb[0].mxu0
  %v10664 = vadd.f32 %v10503, %v10663
  %v10665 = vpop.f32.mrb[0].mxu0
  %10666 = vmatprep.mubr.bf16.mxu0 %v9218
  %10667 = vmatmul.mubr.bf16.gmra.mrb[0].mxu0 %v8028
  %v10668 = vpop.f32.mrb[0].mxu0
  %v10669 = vadd.f32 %v10508, %v10668
  %v10670 = vpop.f32.mrb[0].mxu0
  %v10671 = vpop.f32.mrb[0].mxu0
  %v10672 = vadd.f32 %v10511, %v10671
  %v10673 = vpop.f32.mrb[0].mxu0
  %10674 = vmatprep.mubr.bf16.mxu0 %v9221
  %10675 = vmatmul.mubr.bf16.gmra.mrb[0].mxu0 %v8032
  %v10676 = vpop.f32.mrb[0].mxu0
  %v10677 = vadd.f32 %v10516, %v10676
  %v10678 = vpop.f32.mrb[0].mxu0
  %v10679 = vpop.f32.mrb[0].mxu0
  %v10680 = vadd.f32 %v10519, %v10679
  %v10681 = vpop.f32.mrb[0].mxu0
  %10682 = vmatprep.mubr.bf16.mxu0 %v9224
  %10683 = vmatmul.mubr.bf16.gmra.mrb[0].mxu0 %v8036
  %v10684 = vpop.f32.mrb[0].mxu0
  %v10685 = vadd.f32 %v10524, %v10684
  %v10686 = vpop.f32.mrb[0].mxu0
  %v10687 = vpop.f32.mrb[0].mxu0
  %v10688 = vadd.f32 %v10527, %v10687
  %v10689 = vpop.f32.mrb[0].mxu0
  %10690 = vmatprep.mubr.bf16.mxu0 %v9227
  %10691 = vmatmul.mubr.bf16.gmra.mrb[0].mxu0 %v8040
  %v10692 = vpop.f32.mrb[0].mxu0
  %v10693 = vadd.f32 %v10532, %v10692
  %v10694 = vpop.f32.mrb[0].mxu0
  %v10695 = vpop.f32.mrb[0].mxu0
  %v10696 = vadd.f32 %v10535, %v10695
  %v10697 = vpop.f32.mrb[0].mxu0
  %10698 = vmatprep.mubr.bf16.mxu0 %v9230
  %10699 = vmatmul.mubr.bf16.gmra.mrb[0].mxu0 %v8044
  %v10700 = vpop.f32.mrb[0].mxu0
  %v10701 = vadd.f32 %v10540, %v10700
  %v10702 = vpop.f32.mrb[0].mxu0
  %v10703 = vpop.f32.mrb[0].mxu0
  %v10704 = vadd.f32 %v10543, %v10703
  %v10705 = vpop.f32.mrb[0].mxu0
  %10706 = vmatprep.mubr.bf16.mxu0 %v9233
  %10707 = vmatmul.mubr.bf16.gmra.mrb[0].mxu0 %v8048
  %v10708 = vpop.f32.mrb[0].mxu0
  %v10709 = vadd.f32 %v10548, %v10708
  %v10710 = vpop.f32.mrb[0].mxu0
  %v10711 = vpop.f32.mrb[0].mxu0
  %v10712 = vadd.f32 %v10551, %v10711
  %v10713 = vpop.f32.mrb[0].mxu0
  %10714 = vdwg.mxu0
  %10715 = vst [vmem:[%s18] sm:$0xff] %v9463
  %10716 = vst [vmem:[%s18 + $0x8] sm:$0xff] %v9465
  %10717 = vst [vmem:[%s18 + $0x10] sm:$0xff] %v9849
  %10718 = vst [vmem:[%s18 + $0x18] sm:$0xff] %v9851
  %10719 = vst [vmem:[%s18 + $0x20] sm:$0xff] %v10235
  %10720 = vst [vmem:[%s18 + $0x28] sm:$0xff] %v10237
  %10721 = vst [vmem:[%s18 + $0x30] sm:$0xff] %v10589
  %10722 = vst [vmem:[%s18 + $0x38] sm:$0xff] %v9467
  %10723 = vst [vmem:[%s18 + $0x40] sm:$0xff] %v9469
  %10724 = vst [vmem:[%s18 + $0x48] sm:$0xff] %v9853
  %10725 = vst [vmem:[%s18 + $0x50] sm:$0xff] %v9855
  %10726 = vst [vmem:[%s18 + $0x58] sm:$0xff] %v10239
  %10727 = vst [vmem:[%s18 + $0x60] sm:$0xff] %v10241
  %10728 = vst [vmem:[%s18 + $0x68] sm:$0xff] %v10592
  %10729 = vst [vmem:[%s18 + $0x70] sm:$0xff] %v9473
  %10730 = vst [vmem:[%s18 + $0x78] sm:$0xff] %v9475
  %10731 = vst [vmem:[%s18 + $0x80] sm:$0xff] %v9859
  %10732 = vst [vmem:[%s18 + $0x88] sm:$0xff] %v9861
  %10733 = vst [vmem:[%s18 + $0x90] sm:$0xff] %v10245
  %10734 = vst [vmem:[%s18 + $0x98] sm:$0xff] %v10247
  %10735 = vst [vmem:[%s18 + $0xa0] sm:$0xff] %v10597
  %10736 = vst [vmem:[%s18 + $0xa8] sm:$0xff] %v9477
  %10737 = vst [vmem:[%s18 + $0xb0] sm:$0xff] %v9479
  %10738 = vst [vmem:[%s18 + $0xb8] sm:$0xff] %v9863
  %10739 = vst [vmem:[%s18 + $0xc0] sm:$0xff] %v9865
  %10740 = vst [vmem:[%s18 + $0xc8] sm:$0xff] %v10249
  %10741 = vst [vmem:[%s18 + $0xd0] sm:$0xff] %v10251
  %10742 = vst [vmem:[%s18 + $0xd8] sm:$0xff] %v10600
  %10743 = vst [vmem:[%s18 + $0xe0] sm:$0xff] %v9483
  %10744 = vst [vmem:[%s18 + $0xe8] sm:$0xff] %v9485
  %10745 = vst [vmem:[%s18 + $0xf0] sm:$0xff] %v9869
  %10746 = vst [vmem:[%s18 + $0xf8] sm:$0xff] %v9871
  %10747 = vst [vmem:[%s18 + $0x100] sm:$0xff] %v10255
  %10748 = vst [vmem:[%s18 + $0x108] sm:$0xff] %v10257
  %10749 = vst [vmem:[%s18 + $0x110] sm:$0xff] %v10605
  %10750 = vst [vmem:[%s18 + $0x118] sm:$0xff] %v9487
  %10751 = vst [vmem:[%s18 + $0x120] sm:$0xff] %v9489
  %10752 = vst [vmem:[%s18 + $0x128] sm:$0xff] %v9873
  %10753 = vst [vmem:[%s18 + $0x130] sm:$0xff] %v9875
  %10754 = vst [vmem:[%s18 + $0x138] sm:$0xff] %v10259
  %10755 = vst [vmem:[%s18 + $0x140] sm:$0xff] %v10261
  %10756 = vst [vmem:[%s18 + $0x148] sm:$0xff] %v10608
  %10757 = vst [vmem:[%s18 + $0x150] sm:$0xff] %v9493
  %10758 = vst [vmem:[%s18 + $0x158] sm:$0xff] %v9495
  %10759 = vst [vmem:[%s18 + $0x160] sm:$0xff] %v9879
  %10760 = vst [vmem:[%s18 + $0x168] sm:$0xff] %v9881
  %10761 = vst [vmem:[%s18 + $0x170] sm:$0xff] %v10265
  %10762 = vst [vmem:[%s18 + $0x178] sm:$0xff] %v10267
  %10763 = vst [vmem:[%s18 + $0x180] sm:$0xff] %v10613
  %10764 = vst [vmem:[%s18 + $0x188] sm:$0xff] %v9497
  %10765 = vst [vmem:[%s18 + $0x190] sm:$0xff] %v9499
  %10766 = vst [vmem:[%s18 + $0x198] sm:$0xff] %v9883
  %10767 = vst [vmem:[%s18 + $0x1a0] sm:$0xff] %v9885
  %10768 = vst [vmem:[%s18 + $0x1a8] sm:$0xff] %v10269
  %10769 = vst [vmem:[%s18 + $0x1b0] sm:$0xff] %v10271
  %10770 = vst [vmem:[%s18 + $0x1b8] sm:$0xff] %v10616
  %10771 = vst [vmem:[%s18 + $0x1c0] sm:$0xff] %v9503
  %10772 = vst [vmem:[%s18 + $0x1c8] sm:$0xff] %v9505
  %10773 = vst [vmem:[%s18 + $0x1d0] sm:$0xff] %v9889
  %10774 = vst [vmem:[%s18 + $0x1d8] sm:$0xff] %v9891
  %10775 = vst [vmem:[%s18 + $0x1e0] sm:$0xff] %v10275
  %10776 = vst [vmem:[%s18 + $0x1e8] sm:$0xff] %v10277
  %10777 = vst [vmem:[%s18 + $0x1f0] sm:$0xff] %v10621
  %10778 = vst [vmem:[%s18 + $0x1f8] sm:$0xff] %v9507
  %10779 = vst [vmem:[%s18 + $0x200] sm:$0xff] %v9509
  %10780 = vst [vmem:[%s18 + $0x208] sm:$0xff] %v9893
  %10781 = vst [vmem:[%s18 + $0x210] sm:$0xff] %v9895
  %10782 = vst [vmem:[%s18 + $0x218] sm:$0xff] %v10279
  %10783 = vst [vmem:[%s18 + $0x220] sm:$0xff] %v10281
  %10784 = vst [vmem:[%s18 + $0x228] sm:$0xff] %v10624
  %10785 = vst [vmem:[%s18 + $0x230] sm:$0xff] %v9513
  %10786 = vst [vmem:[%s18 + $0x238] sm:$0xff] %v9515
  %10787 = vst [vmem:[%s18 + $0x240] sm:$0xff] %v9899
  %10788 = vst [vmem:[%s18 + $0x248] sm:$0xff] %v9901
  %10789 = vst [vmem:[%s18 + $0x250] sm:$0xff] %v10285
  %10790 = vst [vmem:[%s18 + $0x258] sm:$0xff] %v10287
  %10791 = vst [vmem:[%s18 + $0x260] sm:$0xff] %v10629
  %10792 = vst [vmem:[%s18 + $0x268] sm:$0xff] %v9517
  %10793 = vst [vmem:[%s18 + $0x270] sm:$0xff] %v9519
  %10794 = vst [vmem:[%s18 + $0x278] sm:$0xff] %v9903
  %10795 = vst [vmem:[%s18 + $0x280] sm:$0xff] %v9905
  %10796 = vst [vmem:[%s18 + $0x288] sm:$0xff] %v10289
  %10797 = vst [vmem:[%s18 + $0x290] sm:$0xff] %v10291
  %10798 = vst [vmem:[%s18 + $0x298] sm:$0xff] %v10632
  %10799 = vst [vmem:[%s18 + $0x2a0] sm:$0xff] %v9523
  %10800 = vst [vmem:[%s18 + $0x2a8] sm:$0xff] %v9525
  %10801 = vst [vmem:[%s18 + $0x2b0] sm:$0xff] %v9909
  %10802 = vst [vmem:[%s18 + $0x2b8] sm:$0xff] %v9911
  %10803 = vst [vmem:[%s18 + $0x2c0] sm:$0xff] %v10295
  %10804 = vst [vmem:[%s18 + $0x2c8] sm:$0xff] %v10297
  %10805 = vst [vmem:[%s18 + $0x2d0] sm:$0xff] %v10637
  %10806 = vst [vmem:[%s18 + $0x2d8] sm:$0xff] %v9527
  %10807 = vst [vmem:[%s18 + $0x2e0] sm:$0xff] %v9529
  %10808 = vst [vmem:[%s18 + $0x2e8] sm:$0xff] %v9913
  %10809 = vst [vmem:[%s18 + $0x2f0] sm:$0xff] %v9915
  %10810 = vst [vmem:[%s18 + $0x2f8] sm:$0xff] %v10299
  %10811 = vst [vmem:[%s18 + $0x300] sm:$0xff] %v10301
  %10812 = vst [vmem:[%s18 + $0x308] sm:$0xff] %v10640
  %10813 = vst [vmem:[%s18 + $0x310] sm:$0xff] %v9533
  %10814 = vst [vmem:[%s18 + $0x318] sm:$0xff] %v9535
  %10815 = vst [vmem:[%s18 + $0x320] sm:$0xff] %v9919
  %10816 = vst [vmem:[%s18 + $0x328] sm:$0xff] %v9921
  %10817 = vst [vmem:[%s18 + $0x330] sm:$0xff] %v10305
  %10818 = vst [vmem:[%s18 + $0x338] sm:$0xff] %v10307
  %10819 = vst [vmem:[%s18 + $0x340] sm:$0xff] %v10645
  %10820 = vst [vmem:[%s18 + $0x348] sm:$0xff] %v9537
  %10821 = vst [vmem:[%s18 + $0x350] sm:$0xff] %v9539
  %10822 = vst [vmem:[%s18 + $0x358] sm:$0xff] %v9923
  %10823 = vst [vmem:[%s18 + $0x360] sm:$0xff] %v9925
  %10824 = vst [vmem:[%s18 + $0x368] sm:$0xff] %v10309
  %10825 = vst [vmem:[%s18 + $0x370] sm:$0xff] %v10311
  %10826 = vst [vmem:[%s18 + $0x378] sm:$0xff] %v10648
  %10827 = vst [vmem:[%s18 + $0x380] sm:$0xff] %v9543
  %10828 = vst [vmem:[%s18 + $0x388] sm:$0xff] %v9545
  %10829 = vst [vmem:[%s18 + $0x390] sm:$0xff] %v9929
  %10830 = vst [vmem:[%s18 + $0x398] sm:$0xff] %v9931
  %10831 = vst [vmem:[%s18 + $0x3a0] sm:$0xff] %v10315
  %10832 = vst [vmem:[%s18 + $0x3a8] sm:$0xff] %v10317
  %10833 = vst [vmem:[%s18 + $0x3b0] sm:$0xff] %v10653
  %10834 = vst [vmem:[%s18 + $0x3b8] sm:$0xff] %v9547
  %10835 = vst [vmem:[%s18 + $0x3c0] sm:$0xff] %v9549
  %10836 = vst [vmem:[%s18 + $0x3c8] sm:$0xff] %v9933
  %10837 = vst [vmem:[%s18 + $0x3d0] sm:$0xff] %v9935
  %10838 = vst [vmem:[%s18 + $0x3d8] sm:$0xff] %v10319
  %10839 = vst [vmem:[%s18 + $0x3e0] sm:$0xff] %v10321
  %10840 = vst [vmem:[%s18 + $0x3e8] sm:$0xff] %v10656
  %10841 = vst [vmem:[%s18 + $0x3f0] sm:$0xff] %v9553
  %10842 = vst [vmem:[%s18 + $0x3f8] sm:$0xff] %v9555
  %10843 = vst [vmem:[%s18 + $0x400] sm:$0xff] %v9939
  %10844 = vst [vmem:[%s18 + $0x408] sm:$0xff] %v9941
  %10845 = vst [vmem:[%s18 + $0x410] sm:$0xff] %v10325
  %10846 = vst [vmem:[%s18 + $0x418] sm:$0xff] %v10327
  %10847 = vst [vmem:[%s18 + $0x420] sm:$0xff] %v10661
  %10848 = vst [vmem:[%s18 + $0x428] sm:$0xff] %v9557
  %10849 = vst [vmem:[%s18 + $0x430] sm:$0xff] %v9559
  %10850 = vst [vmem:[%s18 + $0x438] sm:$0xff] %v9943
  %10851 = vst [vmem:[%s18 + $0x440] sm:$0xff] %v9945
  %10852 = vst [vmem:[%s18 + $0x448] sm:$0xff] %v10329
  %10853 = vst [vmem:[%s18 + $0x450] sm:$0xff] %v10331
  %10854 = vst [vmem:[%s18 + $0x458] sm:$0xff] %v10664
  %10855 = vst [vmem:[%s18 + $0x460] sm:$0xff] %v9563
  %10856 = vst [vmem:[%s18 + $0x468] sm:$0xff] %v9565
  %10857 = vst [vmem:[%s18 + $0x470] sm:$0xff] %v9949
  %10858 = vst [vmem:[%s18 + $0x478] sm:$0xff] %v9951
  %10859 = vst [vmem:[%s18 + $0x480] sm:$0xff] %v10335
  %10860 = vst [vmem:[%s18 + $0x488] sm:$0xff] %v10337
  %10861 = vst [vmem:[%s18 + $0x490] sm:$0xff] %v10669
  %10862 = vst [vmem:[%s18 + $0x498] sm:$0xff] %v9567
  %10863 = vst [vmem:[%s18 + $0x4a0] sm:$0xff] %v9569
  %10864 = vst [vmem:[%s18 + $0x4a8] sm:$0xff] %v9953
  %10865 = vst [vmem:[%s18 + $0x4b0] sm:$0xff] %v9955
  %10866 = vst [vmem:[%s18 + $0x4b8] sm:$0xff] %v10339
  %10867 = vst [vmem:[%s18 + $0x4c0] sm:$0xff] %v10341
  %10868 = vst [vmem:[%s18 + $0x4c8] sm:$0xff] %v10672
  %10869 = vst [vmem:[%s18 + $0x4d0] sm:$0xff] %v9573
  %10870 = vst [vmem:[%s18 + $0x4d8] sm:$0xff] %v9575
  %10871 = vst [vmem:[%s18 + $0x4e0] sm:$0xff] %v9959
  %10872 = vst [vmem:[%s18 + $0x4e8] sm:$0xff] %v9961
  %10873 = vst [vmem:[%s18 + $0x4f0] sm:$0xff] %v10345
  %10874 = vst [vmem:[%s18 + $0x4f8] sm:$0xff] %v10347
  %10875 = vst [vmem:[%s18 + $0x500] sm:$0xff] %v10677
  %10876 = vst [vmem:[%s18 + $0x508] sm:$0xff] %v9577
  %10877 = vst [vmem:[%s18 + $0x510] sm:$0xff] %v9579
  %10878 = vst [vmem:[%s18 + $0x518] sm:$0xff] %v9963
  %10879 = vst [vmem:[%s18 + $0x520] sm:$0xff] %v9965
  %10880 = vst [vmem:[%s18 + $0x528] sm:$0xff] %v10349
  %10881 = vst [vmem:[%s18 + $0x530] sm:$0xff] %v10351
  %10882 = vst [vmem:[%s18 + $0x538] sm:$0xff] %v10680
  %10883 = vst [vmem:[%s18 + $0x540] sm:$0xff] %v9583
  %10884 = vst [vmem:[%s18 + $0x548] sm:$0xff] %v9585
  %10885 = vst [vmem:[%s18 + $0x550] sm:$0xff] %v9969
  %10886 = vst [vmem:[%s18 + $0x558] sm:$0xff] %v9971
  %10887 = vst [vmem:[%s18 + $0x560] sm:$0xff] %v10355
  %10888 = vst [vmem:[%s18 + $0x568] sm:$0xff] %v10357
  %10889 = vst [vmem:[%s18 + $0x570] sm:$0xff] %v10685
  %10890 = vst [vmem:[%s18 + $0x578] sm:$0xff] %v9587
  %10891 = vst [vmem:[%s18 + $0x580] sm:$0xff] %v9589
  %10892 = vst [vmem:[%s18 + $0x588] sm:$0xff] %v9973
  %10893 = vst [vmem:[%s18 + $0x590] sm:$0xff] %v9975
  %10894 = vst [vmem:[%s18 + $0x598] sm:$0xff] %v10359
  %10895 = vst [vmem:[%s18 + $0x5a0] sm:$0xff] %v10361
  %10896 = vst [vmem:[%s18 + $0x5a8] sm:$0xff] %v10688
  %10897 = vst [vmem:[%s18 + $0x5b0] sm:$0xff] %v9593
  %10898 = vst [vmem:[%s18 + $0x5b8] sm:$0xff] %v9595
  %10899 = vst [vmem:[%s18 + $0x5c0] sm:$0xff] %v9979
  %10900 = vst [vmem:[%s18 + $0x5c8] sm:$0xff] %v9981
  %10901 = vst [vmem:[%s18 + $0x5d0] sm:$0xff] %v10365
  %10902 = vst [vmem:[%s18 + $0x5d8] sm:$0xff] %v10367
  %10903 = vst [vmem:[%s18 + $0x5e0] sm:$0xff] %v10693
  %10904 = vst [vmem:[%s18 + $0x5e8] sm:$0xff] %v9597
  %10905 = vst [vmem:[%s18 + $0x5f0] sm:$0xff] %v9599
  %10906 = vst [vmem:[%s18 + $0x5f8] sm:$0xff] %v9983
  %10907 = vst [vmem:[%s18 + $0x600] sm:$0xff] %v9985
  %10908 = vst [vmem:[%s18 + $0x608] sm:$0xff] %v10369
  %10909 = vst [vmem:[%s18 + $0x610] sm:$0xff] %v10371
  %10910 = vst [vmem:[%s18 + $0x618] sm:$0xff] %v10696
  %10911 = vst [vmem:[%s18 + $0x620] sm:$0xff] %v9603
  %10912 = vst [vmem:[%s18 + $0x628] sm:$0xff] %v9605
  %10913 = vst [vmem:[%s18 + $0x630] sm:$0xff] %v9989
  %10914 = vst [vmem:[%s18 + $0x638] sm:$0xff] %v9991
  %10915 = vst [vmem:[%s18 + $0x640] sm:$0xff] %v10375
  %10916 = vst [vmem:[%s18 + $0x648] sm:$0xff] %v10377
  %10917 = vst [vmem:[%s18 + $0x650] sm:$0xff] %v10701
  %10918 = vst [vmem:[%s18 + $0x658] sm:$0xff] %v9607
  %10919 = vst [vmem:[%s18 + $0x660] sm:$0xff] %v9609
  %10920 = vst [vmem:[%s18 + $0x668] sm:$0xff] %v9993
  %10921 = vst [vmem:[%s18 + $0x670] sm:$0xff] %v9995
  %10922 = vst [vmem:[%s18 + $0x678] sm:$0xff] %v10379
  %10923 = vst [vmem:[%s18 + $0x680] sm:$0xff] %v10381
  %10924 = vst [vmem:[%s18 + $0x688] sm:$0xff] %v10704
  %10925 = vst [vmem:[%s18 + $0x690] sm:$0xff] %v9613
  %10926 = vst [vmem:[%s18 + $0x698] sm:$0xff] %v9615
  %10927 = vst [vmem:[%s18 + $0x6a0] sm:$0xff] %v9999
  %10928 = vst [vmem:[%s18 + $0x6a8] sm:$0xff] %v10001
  %10929 = vst [vmem:[%s18 + $0x6b0] sm:$0xff] %v10385
  %10930 = vst [vmem:[%s18 + $0x6b8] sm:$0xff] %v10387
  %10931 = vst [vmem:[%s18 + $0x6c0] sm:$0xff] %v10709
  %10932 = vst [vmem:[%s18 + $0x6c8] sm:$0xff] %v9617
  %10933 = vst [vmem:[%s18 + $0x6d0] sm:$0xff] %v9619
  %10934 = vst [vmem:[%s18 + $0x6d8] sm:$0xff] %v10003
  %10935 = vst [vmem:[%s18 + $0x6e0] sm:$0xff] %v10005
  %10936 = vst [vmem:[%s18 + $0x6e8] sm:$0xff] %v10389
  %10937 = vst [vmem:[%s18 + $0x6f0] sm:$0xff] %v10391
  %10938 = vst [vmem:[%s18 + $0x6f8] sm:$0xff] %v10712
  // Predicated region
  $region74: #{deep_dense_vae_mark_iv.1} parent=0 // pred_check
    _
  $region75: #{deep_dense_vae_mark_iv.1} parent=0 // pred_check_branch
    %10940 = sbr.rel (0) target = $region77
  $region76: #{deep_dense_vae_mark_iv.1} parent=0 // pred_region
    _
  $region77: #{deep_dense_vae_mark_iv.1} parent=0 // pred_fallthru
    _
  // Predicated region
  $region78: #{deep_dense_vae_mark_iv.1} parent=0 // pred_check
    _
  $region79: #{deep_dense_vae_mark_iv.1} parent=0 // pred_check_branch
    %10942 = sbr.rel (0) target = $region81
  $region80: #{deep_dense_vae_mark_iv.1} parent=0 // pred_region
    _
  $region81: #{deep_dense_vae_mark_iv.1} parent=0 // pred_fallthru
    _
  // Predicated region
  $region82: #{deep_dense_vae_mark_iv.1} parent=0 // pred_check
    _
  $region83: #{deep_dense_vae_mark_iv.1} parent=0 // pred_check_branch
    %10944 = sbr.rel (0) target = $region85
  $region84: #{deep_dense_vae_mark_iv.1} parent=0 // pred_region
    _
  $region85: #{deep_dense_vae_mark_iv.1} parent=0 // pred_fallthru
    _
  // Predicated region
  $region86: #{deep_dense_vae_mark_iv.1} parent=0 // pred_check
    _
  $region87: #{deep_dense_vae_mark_iv.1} parent=0 // pred_check_branch
    %10946 = sbr.rel (0) target = $region89
  $region88: #{deep_dense_vae_mark_iv.1} parent=0 // pred_region
    _
  $region89: #{deep_dense_vae_mark_iv.1} parent=0 // pred_fallthru
    _

</llo_original>
